<compile_context>
chip_gen: v7x
topology: tpu7x:2x2x1
jax: 0.10.0
libtpu: 0.0.40
codegen_flags: <defaults>
</compile_context>

<pallas_src>
import numpy as np
import jax
import jax.numpy as jnp
from jax import lax
from jax.experimental import pallas as pl
from jax.experimental.pallas import tpu as pltpu

_BN_EPS = 1e-5

_FIRST_LAYERS = ["l1_1", "l2_1", "l3_1"]          # layer-1 of each branch (fused)
_BRANCH_REST = [                                   # (name, pad override, pool?)
    [("l1_2", None, True)],
    [("l2_2", 1, False), ("l2_3", None, True)],
    [("l3_2", 1, False), ("l3_3", 1, False), ("l3_4", None, True)],
]
_BRANCH_FCS = ["fc1", "fc2", "fc3"]
_ALL_BRANCHES = [[(f, None, True)] + r for f, r in zip(_FIRST_LAYERS, _BRANCH_REST)]


# ----------------------------------------------------------------------------
# Host-side weight preparation (tiny, runs at trace time)
# ----------------------------------------------------------------------------
def _fold_bn(w, b, g, beta, m, v):
    """Fold eval-mode BatchNorm (running stats) into the conv weight/bias."""
    scale = g * lax.rsqrt(v + _BN_EPS)                       # (Cout,)
    return w * scale[:, None, None, None], (b - m) * scale + beta


def _banded_conv_weights(wf, bf, w_in, pad):
    """Banded matrices M[kh]: (W_in*Cin, W_out*Cout) so that a 3x3 conv over an
    (H, W_in*Cin) row-major-(w, c) activation is  sum_kh shift_kh(a @ M[kh]) + b."""
    cout, cin = wf.shape[0], wf.shape[1]
    wo = w_in + 2 * pad - 2
    S = np.zeros((3, w_in, wo), np.float32)
    for kw in range(3):
        for j in range(wo):
            w = j + kw - pad
            if 0 <= w < w_in:
                S[kw, w, j] = 1.0
    whw = jnp.transpose(wf, (2, 3, 1, 0))                     # (kh, kw, ci, co)
    M = jnp.einsum("xwj,hxio->hwijo", jnp.asarray(S), whw)    # (kh, w, ci, j, co)
    M = M.reshape(3, w_in * cin, wo * cout)
    brow = jnp.tile(bf, (wo,)).reshape(1, wo * cout)
    return M, brow


def _row_select(tb, stride, sel):
    """Block-diagonal row selector (TB*len(sel), TB*stride):
    out row t*len(sel)+k  <-  in row t*stride + sel[k]."""
    L = len(sel)
    P = np.zeros((tb * L, tb * stride), np.float32)
    for t in range(tb):
        for k, s in enumerate(sel):
            P[t * L + k, t * stride + s] = 1.0
    return P


def _pool_lane_select(in_lanes, offsets, c, wp):
    """0/1 lane-compaction selectors (nseg, in_lanes, wp*c) selecting pooled
    lane (2j)*c+cc of each segment (segment offsets also un-fuse branches)."""
    CS = np.zeros((len(offsets), in_lanes, wp * c), np.float32)
    for s, off in enumerate(offsets):
        for j in range(wp):
            for cc in range(c):
                CS[s, off + (2 * j) * c + cc, j * c + cc] = 1.0
    return CS


def _fc_weights(fc_w, fc_b, c, hf, wf):
    """Torch fc weight (hidden, C*Hf*Wf) [NCHW .view order] -> (Hf, Wf*C, hidden)
    matching the kernel's (rows=Hf, lanes=Wf*C) activation layout."""
    hid = fc_w.shape[0]
    wt = fc_w.reshape(hid, c, hf, wf)
    wt = jnp.transpose(wt, (2, 3, 1, 0)).reshape(hf, wf * c, hid)
    return wt, fc_b.reshape(1, hid)


# ----------------------------------------------------------------------------
# Fused Pallas kernel
# ----------------------------------------------------------------------------
def _make_kernel(cdt, h_in, pad1, cmid, branch_plans, hf_final):
    f32 = jnp.float32

    def dot(u, v):
        return jnp.dot(u, v, preferred_element_type=f32)

    def shift_rows(x, d):
        """result[r, :] = x[(r + d) % R, :] — sublane rotate, stays off the MXU."""
        r = x.shape[0]
        d = d % r
        if d == 0:
            return x
        return jnp.concatenate([x[d:], x[:d]], axis=0)

    def shift_lanes(x, d):
        n = x.shape[1]
        d = d % n
        if d == 0:
            return x
        return jnp.concatenate([x[:, d:], x[:, :d]], axis=1)

    def conv(a, s_in, pad, m_ref, b_ref):
        """3x3 conv + folded-BN bias + ReLU over a (TB*s_in, Win*Cin) slab.
        3 lane matmuls (one per kernel row) + sublane shifts; for pad=0 the
        last 2 rows of each sample block are garbage and get dropped by the
        following pool/compaction selector."""
        taps = []
        for kh in range(3):
            taps.append(shift_rows(dot(a, m_ref[kh]), kh - pad))
        if pad == 1:  # zero the rows whose tap crossed a sample boundary
            rows, lanes = taps[0].shape
            rm = lax.broadcasted_iota(jnp.int32, (rows, lanes), 0) % s_in
            taps[0] = jnp.where(rm == 0, 0.0, taps[0])
            taps[2] = jnp.where(rm == s_in - 1, 0.0, taps[2])
        y = taps[0] + taps[1] + taps[2] + b_ref[...]
        return jnp.maximum(y, 0.0).astype(cdt)

    def pool2x2(w, p_ref, cs_ref, nseg):
        """2x2/stride-2 max pool: row half = sublane shift + max + one
        block-diagonal row-compaction matmul; lane half = lane shift + max +
        one 0/1 lane-compaction matmul per output segment (un-fuses branches)."""
        m1 = jnp.maximum(w, shift_rows(w, 1))
        rows_p = dot(p_ref[...], m1)
        m2 = jnp.maximum(rows_p, shift_lanes(rows_p, cmid)).astype(cdt)
        return [dot(m2, cs_ref[s]).astype(cdt) for s in range(nseg)]

    def kernel(*refs):
        it = iter(refs)
        x_ref = next(it)                      # (1, TB*H, W*Cin)
        srow_ref = next(it)                   # (TB, TB*Hf) fc row-pick selector
        a0 = x_ref[0]

        # --- stage A: layer-1 of all three branches, lane-fused + shared pool
        ma_ref, ba_ref = next(it), next(it)
        w = conv(a0, h_in, pad1, ma_ref, ba_ref)
        pa_ref, csa_ref = next(it), next(it)
        acts = pool2x2(w, pa_ref, csa_ref, 3)

        heads = []
        for bi, plan in enumerate(branch_plans):
            a = acts[bi]
            for step in plan:
                m_ref, b_ref = next(it), next(it)
                w = conv(a, step["s_in"], step["pad"], m_ref, b_ref)
                if step["do_pool"]:
                    p_ref, cs_ref = next(it), next(it)
                    a = pool2x2(w, p_ref, cs_ref, 1)[0]
                elif step["compact"]:
                    a = dot(next(it)[...], w).astype(cdt)
                else:
                    a = w
            # relu(fc_i(flatten)): Hf lane matmuls + sublane shifts + one
            # row-pick matmul over the TB-batched rows (no M=1 matmuls).
            fcw_ref, fcb_ref = next(it), next(it)
            usum = None
            for i in range(hf_final):
                u = shift_rows(dot(a, fcw_ref[i]), i)
                usum = u if usum is None else usum + u
            head = dot(srow_ref[...], usum.astype(cdt)) + fcb_ref[...]
            heads.append(jnp.maximum(head, 0.0))          # (TB, hidden) f32

        ws_ref, bs_ref = next(it), next(it)               # fc_share
        o_ref = next(it)                                  # (1, TB, 1)
        res = bs_ref[...].astype(f32)
        for b in range(len(branch_plans)):
            res = res + jnp.sum(heads[b] * ws_ref[b].astype(f32),
                                axis=1, keepdims=True)
        o_ref[0] = res.astype(f32)

    return kernel


# ----------------------------------------------------------------------------
# Forward wrapper
# ----------------------------------------------------------------------------
def relation_net234_forward(x_nchw, p, *, tb=8, param_dtype=jnp.float32):
    f32 = jnp.float32
    cdt = param_dtype
    x = x_nchw.astype(f32)
    B, cin0, H, W = x.shape
    padding = 1 if (H < 10 and W < 10) else 0
    cmid = p["l1_1"]["w"].shape[0]
    hidden = p["fc1_w"].shape[0]

    # ---- sample batching along the sublane (M) axis --------------------------
    tb = max(1, min(int(tb), B))
    n_steps = pl.cdiv(B, tb)
    if n_steps == 1 and B >= 2:
        # keep >= 2 grid steps so the "parallel" axis spans both v7x TensorCores
        tb = pl.cdiv(B, 2)
        n_steps = pl.cdiv(B, tb)
    b_pad = n_steps * tb
    if b_pad != B:
        x = jnp.concatenate([x, jnp.zeros((b_pad - B,) + x.shape[1:], f32)], 0)
    # NCHW -> (steps, TB*H, W*C): lane-dense (w, c) row-major, samples on rows.
    x2 = jnp.transpose(x, (0, 2, 3, 1)).reshape(n_steps, tb * H, W * cin0).astype(cdt)

    # final per-branch spatial size (identical across branches; == shrink_s)
    shrink = lambda s: ((s + 2 * padding - 2) // 2 + 2 * padding - 2) // 2
    hf_final, wf_final = shrink(H), shrink(W)

    inputs = [x2]
    in_specs = [pl.BlockSpec((1, tb * H, W * cin0), lambda b: (b, 0, 0))]

    def add(arr):
        arr = jnp.asarray(arr, cdt)
        inputs.append(arr)
        in_specs.append(pl.BlockSpec(arr.shape, lambda b, _n=arr.ndim: (0,) * _n))

    folded = {n: _fold_bn(p[n]["w"], p[n]["b"], p[n]["g"], p[n]["beta"],
                          p[n]["m"], p[n]["v"])
              for n in (_FIRST_LAYERS + [l for br in _BRANCH_REST for (l, _, _) in br])}

    # shared fc row-pick selector (TB, TB*Hf)
    add(_row_select(tb, hf_final, [0]))

    # ---- stage A: layer-1 of all three branches fused along output lanes ----
    ho1, wo1 = H + 2 * padding - 2, W + 2 * padding - 2
    hp1, wp1 = ho1 // 2, wo1 // 2
    ma, ba = [], []
    for name in _FIRST_LAYERS:
        wf_, bf_ = folded[name]
        m, brow = _banded_conv_weights(wf_, bf_, W, padding)
        ma.append(m)
        ba.append(brow)
    add(jnp.concatenate(ma, axis=2))                 # (3, W*Cin, 3*Wo*Cmid)
    add(jnp.concatenate(ba, axis=1))                 # (1, 3*Wo*Cmid)
    add(_row_select(tb, H, [2 * i for i in range(hp1)]))
    seg = wo1 * cmid
    add(_pool_lane_select(3 * seg, [0, seg, 2 * seg], cmid, wp1))

    # ---- remaining per-branch layers + fc heads ------------------------------
    branch_plans = []
    for bi, branch in enumerate(_BRANCH_REST):
        s_cur, w_cur = hp1, wp1
        plan_b = []
        for (lname, pad_override, do_pool) in branch:
            pad = padding if pad_override is None else pad_override
            wf_, bf_ = folded[lname]
            m, brow = _banded_conv_weights(wf_, bf_, w_cur, pad)
            add(m)
            add(brow)
            ho, wo = s_cur + 2 * pad - 2, w_cur + 2 * pad - 2
            step = dict(pad=pad, s_in=s_cur, do_pool=do_pool, compact=False)
            if do_pool:
                hp, wp = ho // 2, wo // 2
                add(_row_select(tb, s_cur, [2 * i for i in range(hp)]))
                add(_pool_lane_select(wo * cmid, [0], cmid, wp))
                s_cur, w_cur = hp, wp
            else:
                if ho != s_cur:                      # pad=0 conv without pool
                    step["compact"] = True
                    add(_row_select(tb, s_cur, list(range(ho))))
                s_cur, w_cur = ho, wo
            plan_b.append(step)
        assert (s_cur, w_cur) == (hf_final, wf_final)
        fcw, fcb = _fc_weights(p[_BRANCH_FCS[bi] + "_w"], p[_BRANCH_FCS[bi] + "_b"],
                               cmid, s_cur, w_cur)
        add(fcw)
        add(fcb)
        branch_plans.append(plan_b)

    add(p["fcs_w"].reshape(3, 1, hidden))
    add(p["fcs_b"].reshape(1, 1))

    kernel = _make_kernel(cdt, H, padding, cmid, branch_plans, hf_final)

    out = pl.pallas_call(
        kernel,
        grid=(n_steps,),
        in_specs=in_specs,
        out_specs=pl.BlockSpec((1, tb, 1), lambda b: (b, 0, 0)),
        out_shape=jax.ShapeDtypeStruct((n_steps, tb, 1), f32),
        compiler_params=pltpu.CompilerParams(dimension_semantics=("parallel",)),
    )(*inputs)
    return out.reshape(b_pad, 1)[:B]


# ----------------------------------------------------------------------------
# Pure-JAX reference (XLA conv / reduce_window) for validation
# ----------------------------------------------------------------------------
def relation_net234_reference(x_nchw, p):
    x = jnp.transpose(x_nchw, (0, 2, 3, 1)).astype(jnp.float32)
    B, H, W, _ = x.shape
    padding = 1 if (H < 10 and W < 10) else 0
    hi = lax.Precision.HIGHEST

    def conv_bn_relu(y, lp, pad):
        w_hwio = jnp.transpose(lp["w"], (2, 3, 1, 0))
        y = lax.conv_general_dilated(y, w_hwio, (1, 1), [(pad, pad), (pad, pad)],
                                     dimension_numbers=("NHWC", "HWIO", "NHWC"),
                                     precision=hi)
        y = y + lp["b"]
        y = (y - lp["m"]) * lax.rsqrt(lp["v"] + _BN_EPS) * lp["g"] + lp["beta"]
        return jnp.maximum(y, 0.0)

    def pool(y):
        return lax.reduce_window(y, -jnp.inf, lax.max, (1, 2, 2, 1), (1, 2, 2, 1), "VALID")

    outs = []
    for branch, fc_name in zip(_ALL_BRANCHES, _BRANCH_FCS):
        y = x
        for (lname, pad_override, do_pool) in branch:
            pad = padding if pad_override is None else pad_override
            y = conv_bn_relu(y, p[lname], pad)
            if do_pool:
                y = pool(y)
        feat = jnp.transpose(y, (0, 3, 1, 2)).reshape(y.shape[0], -1)  # torch .view
        outs.append(jnp.maximum(jnp.dot(feat, p[fc_name + "_w"].T, precision=hi)
                                + p[fc_name + "_b"], 0.0))
    cat = jnp.concatenate(outs, axis=1)
    return jnp.dot(cat, p["fcs_w"].T, precision=hi) + p["fcs_b"]


# ----------------------------------------------------------------------------
# Deterministic parameter init (shapes follow the PyTorch module)
# ----------------------------------------------------------------------------
def init_params(key, cin0, cmid, hidden, feat_dim):
    names = [n for br in _ALL_BRANCHES for (n, _, _) in br]
    first = set(_FIRST_LAYERS)
    keys = iter(jax.random.split(key, 64))
    s, f32 = 0.1, jnp.float32
    p = {}
    for n in names:
        cin = cin0 if n in first else cmid
        p[n] = {
            "w": s * jax.random.normal(next(keys), (cmid, cin, 3, 3), f32),
            "b": s * jax.random.normal(next(keys), (cmid,), f32),
            "g": 1.0 + 0.1 * jax.random.normal(next(keys), (cmid,), f32),
            "beta": 0.1 * jax.random.normal(next(keys), (cmid,), f32),
            "m": 0.1 * jax.random.normal(next(keys), (cmid,), f32),
            "v": 1.0 + 0.1 * jax.random.uniform(next(keys), (cmid,), f32),
        }
    for fc in _BRANCH_FCS:
        p[fc + "_w"] = s * jax.random.normal(next(keys), (hidden, feat_dim), f32)
        p[fc + "_b"] = s * jax.random.normal(next(keys), (hidden,), f32)
    p["fcs_w"] = s * jax.random.normal(next(keys), (1, 3 * hidden), f32)
    p["fcs_b"] = s * jax.random.normal(next(keys), (1,), f32)
    return p


if __name__ == "__main__":
    # Config A: input_size=[4, 16, 16] -> module padding=0; middle_dim=8, hidden=8.
    B, C0, H, W = 16, 4, 16, 16
    CMID, HIDDEN = 8, 8
    padding = 1 if (H < 10 and W < 10) else 0
    shrink = lambda s: int((int((s - 2 + 2 * padding) / 2) - 2 + 2 * padding) / 2)
    FEAT = CMID * shrink(H) * shrink(W)

    key = jax.random.PRNGKey(0)
    kx, kp, kx2, kp2 = jax.random.split(key, 4)
    x = jax.random.normal(kx, (B, 2 * C0, H, W), jnp.float32)     # NCHW, like PyTorch
    params = init_params(kp, 2 * C0, CMID, HIDDEN, FEAT)
    ref = relation_net234_reference(x, params)

    # f32 path: exact reformulation, validated tightly (was 2e-2 before).
    fwd32 = jax.jit(lambda a, b: relation_net234_forward(a, b, tb=8,
                                                         param_dtype=jnp.float32))
    out = jax.block_until_ready(fwd32(x, params))
    assert out.shape == (B, 1)
    np.testing.assert_allclose(np.asarray(out), np.asarray(ref), rtol=1e-3, atol=1e-3)

    # bf16 operand path (MXU-native on v5e/v6e/v7x), loose smoke validation.
    fwdbf = jax.jit(lambda a, b: relation_net234_forward(a, b, tb=8,
                                                         param_dtype=jnp.bfloat16))
    out_bf = jax.block_until_ready(fwdbf(x, params))
    np.testing.assert_allclose(np.asarray(out_bf), np.asarray(ref), rtol=1e-1, atol=1e-1)

    # Config B: small spatial input exercises the module's padding=1 path.
    B2, H2, W2 = 8, 8, 8
    padding2 = 1
    shrink2 = lambda s: int((int((s - 2 + 2 * padding2) / 2) - 2 + 2 * padding2) / 2)
    FEAT2 = CMID * shrink2(H2) * shrink2(W2)
    x_s = jax.random.normal(kx2, (B2, 2 * C0, H2, W2), jnp.float32)
    params2 = init_params(kp2, 2 * C0, CMID, HIDDEN, FEAT2)
    fwd_s = jax.jit(lambda a, b: relation_net234_forward(a, b, tb=4,
                                                         param_dtype=jnp.float32))
    out_s = jax.block_until_ready(fwd_s(x_s, params2))
    ref_s = relation_net234_reference(x_s, params2)
    assert out_s.shape == (B2, 1)
    np.testing.assert_allclose(np.asarray(out_s), np.asarray(ref_s), rtol=1e-3, atol=1e-3)

    print("KERNEL_OK")
</pallas_src>

<mosaic_0001>
module attributes {stable_mosaic.version = 11 : i64} {
  func.func @kernel(%arg0: i32, %arg1: memref<1x128x128xf32, #tpu.memory_space<vmem>>, %arg2: memref<8x16xf32, #tpu.memory_space<vmem>>, %arg3: memref<3x128x336xf32, #tpu.memory_space<vmem>>, %arg4: memref<1x336xf32, #tpu.memory_space<vmem>>, %arg5: memref<56x128xf32, #tpu.memory_space<vmem>>, %arg6: memref<3x336x56xf32, #tpu.memory_space<vmem>>, %arg7: memref<3x56x40xf32, #tpu.memory_space<vmem>>, %arg8: memref<1x40xf32, #tpu.memory_space<vmem>>, %arg9: memref<16x56xf32, #tpu.memory_space<vmem>>, %arg10: memref<1x40x16xf32, #tpu.memory_space<vmem>>, %arg11: memref<2x16x8xf32, #tpu.memory_space<vmem>>, %arg12: memref<1x8xf32, #tpu.memory_space<vmem>>, %arg13: memref<3x56x56xf32, #tpu.memory_space<vmem>>, %arg14: memref<1x56xf32, #tpu.memory_space<vmem>>, %arg15: memref<3x56x40xf32, #tpu.memory_space<vmem>>, %arg16: memref<1x40xf32, #tpu.memory_space<vmem>>, %arg17: memref<16x56xf32, #tpu.memory_space<vmem>>, %arg18: memref<1x40x16xf32, #tpu.memory_space<vmem>>, %arg19: memref<2x16x8xf32, #tpu.memory_space<vmem>>, %arg20: memref<1x8xf32, #tpu.memory_space<vmem>>, %arg21: memref<3x56x56xf32, #tpu.memory_space<vmem>>, %arg22: memref<1x56xf32, #tpu.memory_space<vmem>>, %arg23: memref<3x56x56xf32, #tpu.memory_space<vmem>>, %arg24: memref<1x56xf32, #tpu.memory_space<vmem>>, %arg25: memref<3x56x40xf32, #tpu.memory_space<vmem>>, %arg26: memref<1x40xf32, #tpu.memory_space<vmem>>, %arg27: memref<16x56xf32, #tpu.memory_space<vmem>>, %arg28: memref<1x40x16xf32, #tpu.memory_space<vmem>>, %arg29: memref<2x16x8xf32, #tpu.memory_space<vmem>>, %arg30: memref<1x8xf32, #tpu.memory_space<vmem>>, %arg31: memref<3x1x8xf32, #tpu.memory_space<vmem>>, %arg32: memref<1x1xf32, #tpu.memory_space<vmem>>, %arg33: memref<1x8x1xf32, #tpu.memory_space<vmem>>) attributes {dimension_semantics = [#tpu.dimension_semantics<parallel>], iteration_bounds = array<i64: 2>, scalar_prefetch = 0 : i64, scratch_operands = 0 : i64, tpu.core_type = #tpu.core_type<tc>, window_params = [{transform_indices = @transform_0, window_bounds = array<i64: 1, 128, 128>}, {pipeline_mode = #tpu.pipeline_mode<synchronous>, transform_indices = @transform_1, window_bounds = array<i64: 8, 16>}, {pipeline_mode = #tpu.pipeline_mode<synchronous>, transform_indices = @transform_2, window_bounds = array<i64: 3, 128, 336>}, {pipeline_mode = #tpu.pipeline_mode<synchronous>, transform_indices = @transform_3, window_bounds = array<i64: 1, 336>}, {pipeline_mode = #tpu.pipeline_mode<synchronous>, transform_indices = @transform_4, window_bounds = array<i64: 56, 128>}, {pipeline_mode = #tpu.pipeline_mode<synchronous>, transform_indices = @transform_5, window_bounds = array<i64: 3, 336, 56>}, {pipeline_mode = #tpu.pipeline_mode<synchronous>, transform_indices = @transform_6, window_bounds = array<i64: 3, 56, 40>}, {pipeline_mode = #tpu.pipeline_mode<synchronous>, transform_indices = @transform_7, window_bounds = array<i64: 1, 40>}, {pipeline_mode = #tpu.pipeline_mode<synchronous>, transform_indices = @transform_8, window_bounds = array<i64: 16, 56>}, {pipeline_mode = #tpu.pipeline_mode<synchronous>, transform_indices = @transform_9, window_bounds = array<i64: 1, 40, 16>}, {pipeline_mode = #tpu.pipeline_mode<synchronous>, transform_indices = @transform_10, window_bounds = array<i64: 2, 16, 8>}, {pipeline_mode = #tpu.pipeline_mode<synchronous>, transform_indices = @transform_11, window_bounds = array<i64: 1, 8>}, {pipeline_mode = #tpu.pipeline_mode<synchronous>, transform_indices = @transform_12, window_bounds = array<i64: 3, 56, 56>}, {pipeline_mode = #tpu.pipeline_mode<synchronous>, transform_indices = @transform_13, window_bounds = array<i64: 1, 56>}, {pipeline_mode = #tpu.pipeline_mode<synchronous>, transform_indices = @transform_14, window_bounds = array<i64: 3, 56, 40>}, {pipeline_mode = #tpu.pipeline_mode<synchronous>, transform_indices = @transform_15, window_bounds = array<i64: 1, 40>}, {pipeline_mode = #tpu.pipeline_mode<synchronous>, transform_indices = @transform_16, window_bounds = array<i64: 16, 56>}, {pipeline_mode = #tpu.pipeline_mode<synchronous>, transform_indices = @transform_17, window_bounds = array<i64: 1, 40, 16>}, {pipeline_mode = #tpu.pipeline_mode<synchronous>, transform_indices = @transform_18, window_bounds = array<i64: 2, 16, 8>}, {pipeline_mode = #tpu.pipeline_mode<synchronous>, transform_indices = @transform_19, window_bounds = array<i64: 1, 8>}, {pipeline_mode = #tpu.pipeline_mode<synchronous>, transform_indices = @transform_20, window_bounds = array<i64: 3, 56, 56>}, {pipeline_mode = #tpu.pipeline_mode<synchronous>, transform_indices = @transform_21, window_bounds = array<i64: 1, 56>}, {pipeline_mode = #tpu.pipeline_mode<synchronous>, transform_indices = @transform_22, window_bounds = array<i64: 3, 56, 56>}, {pipeline_mode = #tpu.pipeline_mode<synchronous>, transform_indices = @transform_23, window_bounds = array<i64: 1, 56>}, {pipeline_mode = #tpu.pipeline_mode<synchronous>, transform_indices = @transform_24, window_bounds = array<i64: 3, 56, 40>}, {pipeline_mode = #tpu.pipeline_mode<synchronous>, transform_indices = @transform_25, window_bounds = array<i64: 1, 40>}, {pipeline_mode = #tpu.pipeline_mode<synchronous>, transform_indices = @transform_26, window_bounds = array<i64: 16, 56>}, {pipeline_mode = #tpu.pipeline_mode<synchronous>, transform_indices = @transform_27, window_bounds = array<i64: 1, 40, 16>}, {pipeline_mode = #tpu.pipeline_mode<synchronous>, transform_indices = @transform_28, window_bounds = array<i64: 2, 16, 8>}, {pipeline_mode = #tpu.pipeline_mode<synchronous>, transform_indices = @transform_29, window_bounds = array<i64: 1, 8>}, {pipeline_mode = #tpu.pipeline_mode<synchronous>, transform_indices = @transform_30, window_bounds = array<i64: 3, 1, 8>}, {pipeline_mode = #tpu.pipeline_mode<synchronous>, transform_indices = @transform_31, window_bounds = array<i64: 1, 1>}, {transform_indices = @transform_32, window_bounds = array<i64: 1, 8, 1>}]} {
    %c0 = arith.constant 0 : index
    %c0_0 = arith.constant 0 : index
    %c0_1 = arith.constant 0 : index
    %0 = vector.load %arg1[%c0, %c0_0, %c0_1] : memref<1x128x128xf32, #tpu.memory_space<vmem>>, vector<1x128x128xf32>
    %1 = vector.shape_cast %0 : vector<1x128x128xf32> to vector<128x128xf32>
    %c0_2 = arith.constant 0 : index
    %c0_3 = arith.constant 0 : index
    %c0_4 = arith.constant 0 : index
    %2 = vector.load %arg3[%c0_2, %c0_3, %c0_4] : memref<3x128x336xf32, #tpu.memory_space<vmem>>, vector<1x128x336xf32>
    %3 = vector.shape_cast %2 : vector<1x128x336xf32> to vector<128x336xf32>
    %cst = arith.constant dense<0.000000e+00> : vector<128x336xf32>
    %4 = tpu.matmul %1, %3, %cst {dimension_numbers = #tpu.dot_dimension_numbers<[1], [0], [0], [1], [0, 0, 1, 1], [], []>} : vector<128x128xf32>, vector<128x336xf32>, vector<128x336xf32> -> vector<128x336xf32>
    %c1 = arith.constant 1 : index
    %c0_5 = arith.constant 0 : index
    %c0_6 = arith.constant 0 : index
    %5 = vector.load %arg3[%c1, %c0_5, %c0_6] : memref<3x128x336xf32, #tpu.memory_space<vmem>>, vector<1x128x336xf32>
    %6 = vector.shape_cast %5 : vector<1x128x336xf32> to vector<128x336xf32>
    %cst_7 = arith.constant dense<0.000000e+00> : vector<128x336xf32>
    %7 = tpu.matmul %1, %6, %cst_7 {dimension_numbers = #tpu.dot_dimension_numbers<[1], [0], [0], [1], [0, 0, 1, 1], [], []>} : vector<128x128xf32>, vector<128x336xf32>, vector<128x336xf32> -> vector<128x336xf32>
    %8 = vector.extract_strided_slice %7 {offsets = [1, 0], sizes = [127, 336], strides = [1, 1]} : vector<128x336xf32> to vector<127x336xf32>
    %9 = vector.extract_strided_slice %7 {offsets = [0, 0], sizes = [1, 336], strides = [1, 1]} : vector<128x336xf32> to vector<1x336xf32>
    %10 = tpu.concatenate %8, %9 in 0 : vector<127x336xf32>, vector<1x336xf32> -> vector<128x336xf32>
    %c2 = arith.constant 2 : index
    %c0_8 = arith.constant 0 : index
    %c0_9 = arith.constant 0 : index
    %11 = vector.load %arg3[%c2, %c0_8, %c0_9] : memref<3x128x336xf32, #tpu.memory_space<vmem>>, vector<1x128x336xf32>
    %12 = vector.shape_cast %11 : vector<1x128x336xf32> to vector<128x336xf32>
    %cst_10 = arith.constant dense<0.000000e+00> : vector<128x336xf32>
    %13 = tpu.matmul %1, %12, %cst_10 {dimension_numbers = #tpu.dot_dimension_numbers<[1], [0], [0], [1], [0, 0, 1, 1], [], []>} : vector<128x128xf32>, vector<128x336xf32>, vector<128x336xf32> -> vector<128x336xf32>
    %14 = vector.extract_strided_slice %13 {offsets = [2, 0], sizes = [126, 336], strides = [1, 1]} : vector<128x336xf32> to vector<126x336xf32>
    %15 = vector.extract_strided_slice %13 {offsets = [0, 0], sizes = [2, 336], strides = [1, 1]} : vector<128x336xf32> to vector<2x336xf32>
    %16 = tpu.concatenate %14, %15 in 0 : vector<126x336xf32>, vector<2x336xf32> -> vector<128x336xf32>
    %17 = arith.addf %4, %10 : vector<128x336xf32>
    %18 = arith.addf %17, %16 : vector<128x336xf32>
    %c0_11 = arith.constant 0 : index
    %c0_12 = arith.constant 0 : index
    %19 = vector.load %arg4[%c0_11, %c0_12] : memref<1x336xf32, #tpu.memory_space<vmem>>, vector<1x336xf32>
    %20 = vector.broadcast %19 : vector<1x336xf32> to vector<128x336xf32>
    %21 = arith.addf %18, %20 : vector<128x336xf32>
    %cst_13 = arith.constant 0.000000e+00 : f32
    %22 = vector.broadcast %cst_13 : f32 to vector<128x336xf32>
    %23 = arith.maximumf %21, %22 : vector<128x336xf32>
    %24 = vector.extract_strided_slice %23 {offsets = [1, 0], sizes = [127, 336], strides = [1, 1]} : vector<128x336xf32> to vector<127x336xf32>
    %25 = vector.extract_strided_slice %23 {offsets = [0, 0], sizes = [1, 336], strides = [1, 1]} : vector<128x336xf32> to vector<1x336xf32>
    %26 = tpu.concatenate %24, %25 in 0 : vector<127x336xf32>, vector<1x336xf32> -> vector<128x336xf32>
    %27 = arith.maximumf %23, %26 : vector<128x336xf32>
    %c0_14 = arith.constant 0 : index
    %c0_15 = arith.constant 0 : index
    %28 = vector.load %arg5[%c0_14, %c0_15] : memref<56x128xf32, #tpu.memory_space<vmem>>, vector<56x128xf32>
    %cst_16 = arith.constant dense<0.000000e+00> : vector<56x336xf32>
    %29 = tpu.matmul %28, %27, %cst_16 {dimension_numbers = #tpu.dot_dimension_numbers<[1], [0], [0], [1], [0, 0, 1, 1], [], []>} : vector<56x128xf32>, vector<128x336xf32>, vector<56x336xf32> -> vector<56x336xf32>
    %30 = vector.extract_strided_slice %29 {offsets = [0, 8], sizes = [56, 328], strides = [1, 1]} : vector<56x336xf32> to vector<56x328xf32>
    %31 = vector.extract_strided_slice %29 {offsets = [0, 0], sizes = [56, 8], strides = [1, 1]} : vector<56x336xf32> to vector<56x8xf32>
    %32 = tpu.concatenate %30, %31 in 1 : vector<56x328xf32>, vector<56x8xf32> -> vector<56x336xf32>
    %33 = arith.maximumf %29, %32 : vector<56x336xf32>
    %c0_17 = arith.constant 0 : index
    %c0_18 = arith.constant 0 : index
    %c0_19 = arith.constant 0 : index
    %34 = vector.load %arg6[%c0_17, %c0_18, %c0_19] : memref<3x336x56xf32, #tpu.memory_space<vmem>>, vector<1x336x56xf32>
    %35 = vector.shape_cast %34 : vector<1x336x56xf32> to vector<336x56xf32>
    %cst_20 = arith.constant dense<0.000000e+00> : vector<56x56xf32>
    %36 = tpu.matmul %33, %35, %cst_20 {dimension_numbers = #tpu.dot_dimension_numbers<[1], [0], [0], [1], [0, 0, 1, 1], [], []>} : vector<56x336xf32>, vector<336x56xf32>, vector<56x56xf32> -> vector<56x56xf32>
    %c1_21 = arith.constant 1 : index
    %c0_22 = arith.constant 0 : index
    %c0_23 = arith.constant 0 : index
    %37 = vector.load %arg6[%c1_21, %c0_22, %c0_23] : memref<3x336x56xf32, #tpu.memory_space<vmem>>, vector<1x336x56xf32>
    %38 = vector.shape_cast %37 : vector<1x336x56xf32> to vector<336x56xf32>
    %cst_24 = arith.constant dense<0.000000e+00> : vector<56x56xf32>
    %39 = tpu.matmul %33, %38, %cst_24 {dimension_numbers = #tpu.dot_dimension_numbers<[1], [0], [0], [1], [0, 0, 1, 1], [], []>} : vector<56x336xf32>, vector<336x56xf32>, vector<56x56xf32> -> vector<56x56xf32>
    %c2_25 = arith.constant 2 : index
    %c0_26 = arith.constant 0 : index
    %c0_27 = arith.constant 0 : index
    %40 = vector.load %arg6[%c2_25, %c0_26, %c0_27] : memref<3x336x56xf32, #tpu.memory_space<vmem>>, vector<1x336x56xf32>
    %41 = vector.shape_cast %40 : vector<1x336x56xf32> to vector<336x56xf32>
    %cst_28 = arith.constant dense<0.000000e+00> : vector<56x56xf32>
    %42 = tpu.matmul %33, %41, %cst_28 {dimension_numbers = #tpu.dot_dimension_numbers<[1], [0], [0], [1], [0, 0, 1, 1], [], []>} : vector<56x336xf32>, vector<336x56xf32>, vector<56x56xf32> -> vector<56x56xf32>
    %c0_29 = arith.constant 0 : index
    %c0_30 = arith.constant 0 : index
    %c0_31 = arith.constant 0 : index
    %43 = vector.load %arg7[%c0_29, %c0_30, %c0_31] : memref<3x56x40xf32, #tpu.memory_space<vmem>>, vector<1x56x40xf32>
    %44 = vector.shape_cast %43 : vector<1x56x40xf32> to vector<56x40xf32>
    %cst_32 = arith.constant dense<0.000000e+00> : vector<56x40xf32>
    %45 = tpu.matmul %36, %44, %cst_32 {dimension_numbers = #tpu.dot_dimension_numbers<[1], [0], [0], [1], [0, 0, 1, 1], [], []>} : vector<56x56xf32>, vector<56x40xf32>, vector<56x40xf32> -> vector<56x40xf32>
    %c1_33 = arith.constant 1 : index
    %c0_34 = arith.constant 0 : index
    %c0_35 = arith.constant 0 : index
    %46 = vector.load %arg7[%c1_33, %c0_34, %c0_35] : memref<3x56x40xf32, #tpu.memory_space<vmem>>, vector<1x56x40xf32>
    %47 = vector.shape_cast %46 : vector<1x56x40xf32> to vector<56x40xf32>
    %cst_36 = arith.constant dense<0.000000e+00> : vector<56x40xf32>
    %48 = tpu.matmul %36, %47, %cst_36 {dimension_numbers = #tpu.dot_dimension_numbers<[1], [0], [0], [1], [0, 0, 1, 1], [], []>} : vector<56x56xf32>, vector<56x40xf32>, vector<56x40xf32> -> vector<56x40xf32>
    %49 = vector.extract_strided_slice %48 {offsets = [1, 0], sizes = [55, 40], strides = [1, 1]} : vector<56x40xf32> to vector<55x40xf32>
    %50 = vector.extract_strided_slice %48 {offsets = [0, 0], sizes = [1, 40], strides = [1, 1]} : vector<56x40xf32> to vector<1x40xf32>
    %51 = tpu.concatenate %49, %50 in 0 : vector<55x40xf32>, vector<1x40xf32> -> vector<56x40xf32>
    %c2_37 = arith.constant 2 : index
    %c0_38 = arith.constant 0 : index
    %c0_39 = arith.constant 0 : index
    %52 = vector.load %arg7[%c2_37, %c0_38, %c0_39] : memref<3x56x40xf32, #tpu.memory_space<vmem>>, vector<1x56x40xf32>
    %53 = vector.shape_cast %52 : vector<1x56x40xf32> to vector<56x40xf32>
    %cst_40 = arith.constant dense<0.000000e+00> : vector<56x40xf32>
    %54 = tpu.matmul %36, %53, %cst_40 {dimension_numbers = #tpu.dot_dimension_numbers<[1], [0], [0], [1], [0, 0, 1, 1], [], []>} : vector<56x56xf32>, vector<56x40xf32>, vector<56x40xf32> -> vector<56x40xf32>
    %55 = vector.extract_strided_slice %54 {offsets = [2, 0], sizes = [54, 40], strides = [1, 1]} : vector<56x40xf32> to vector<54x40xf32>
    %56 = vector.extract_strided_slice %54 {offsets = [0, 0], sizes = [2, 40], strides = [1, 1]} : vector<56x40xf32> to vector<2x40xf32>
    %57 = tpu.concatenate %55, %56 in 0 : vector<54x40xf32>, vector<2x40xf32> -> vector<56x40xf32>
    %58 = arith.addf %45, %51 : vector<56x40xf32>
    %59 = arith.addf %58, %57 : vector<56x40xf32>
    %c0_41 = arith.constant 0 : index
    %c0_42 = arith.constant 0 : index
    %60 = vector.load %arg8[%c0_41, %c0_42] : memref<1x40xf32, #tpu.memory_space<vmem>>, vector<1x40xf32>
    %61 = vector.broadcast %60 : vector<1x40xf32> to vector<56x40xf32>
    %62 = arith.addf %59, %61 : vector<56x40xf32>
    %cst_43 = arith.constant 0.000000e+00 : f32
    %63 = vector.broadcast %cst_43 : f32 to vector<56x40xf32>
    %64 = arith.maximumf %62, %63 : vector<56x40xf32>
    %65 = vector.extract_strided_slice %64 {offsets = [1, 0], sizes = [55, 40], strides = [1, 1]} : vector<56x40xf32> to vector<55x40xf32>
    %66 = vector.extract_strided_slice %64 {offsets = [0, 0], sizes = [1, 40], strides = [1, 1]} : vector<56x40xf32> to vector<1x40xf32>
    %67 = tpu.concatenate %65, %66 in 0 : vector<55x40xf32>, vector<1x40xf32> -> vector<56x40xf32>
    %68 = arith.maximumf %64, %67 : vector<56x40xf32>
    %c0_44 = arith.constant 0 : index
    %c0_45 = arith.constant 0 : index
    %69 = vector.load %arg9[%c0_44, %c0_45] : memref<16x56xf32, #tpu.memory_space<vmem>>, vector<16x56xf32>
    %cst_46 = arith.constant dense<0.000000e+00> : vector<16x40xf32>
    %70 = tpu.matmul %69, %68, %cst_46 {dimension_numbers = #tpu.dot_dimension_numbers<[1], [0], [0], [1], [0, 0, 1, 1], [], []>} : vector<16x56xf32>, vector<56x40xf32>, vector<16x40xf32> -> vector<16x40xf32>
    %71 = vector.extract_strided_slice %70 {offsets = [0, 8], sizes = [16, 32], strides = [1, 1]} : vector<16x40xf32> to vector<16x32xf32>
    %72 = vector.extract_strided_slice %70 {offsets = [0, 0], sizes = [16, 8], strides = [1, 1]} : vector<16x40xf32> to vector<16x8xf32>
    %73 = tpu.concatenate %71, %72 in 1 : vector<16x32xf32>, vector<16x8xf32> -> vector<16x40xf32>
    %74 = arith.maximumf %70, %73 : vector<16x40xf32>
    %c0_47 = arith.constant 0 : index
    %c0_48 = arith.constant 0 : index
    %c0_49 = arith.constant 0 : index
    %75 = vector.load %arg10[%c0_47, %c0_48, %c0_49] : memref<1x40x16xf32, #tpu.memory_space<vmem>>, vector<1x40x16xf32>
    %76 = vector.shape_cast %75 : vector<1x40x16xf32> to vector<40x16xf32>
    %cst_50 = arith.constant dense<0.000000e+00> : vector<16x16xf32>
    %77 = tpu.matmul %74, %76, %cst_50 {dimension_numbers = #tpu.dot_dimension_numbers<[1], [0], [0], [1], [0, 0, 1, 1], [], []>} : vector<16x40xf32>, vector<40x16xf32>, vector<16x16xf32> -> vector<16x16xf32>
    %c0_51 = arith.constant 0 : index
    %c0_52 = arith.constant 0 : index
    %c0_53 = arith.constant 0 : index
    %78 = vector.load %arg11[%c0_51, %c0_52, %c0_53] : memref<2x16x8xf32, #tpu.memory_space<vmem>>, vector<1x16x8xf32>
    %79 = vector.shape_cast %78 : vector<1x16x8xf32> to vector<16x8xf32>
    %cst_54 = arith.constant dense<0.000000e+00> : vector<16x8xf32>
    %80 = tpu.matmul %77, %79, %cst_54 {dimension_numbers = #tpu.dot_dimension_numbers<[1], [0], [0], [1], [0, 0, 1, 1], [], []>} : vector<16x16xf32>, vector<16x8xf32>, vector<16x8xf32> -> vector<16x8xf32>
    %c1_55 = arith.constant 1 : index
    %c0_56 = arith.constant 0 : index
    %c0_57 = arith.constant 0 : index
    %81 = vector.load %arg11[%c1_55, %c0_56, %c0_57] : memref<2x16x8xf32, #tpu.memory_space<vmem>>, vector<1x16x8xf32>
    %82 = vector.shape_cast %81 : vector<1x16x8xf32> to vector<16x8xf32>
    %cst_58 = arith.constant dense<0.000000e+00> : vector<16x8xf32>
    %83 = tpu.matmul %77, %82, %cst_58 {dimension_numbers = #tpu.dot_dimension_numbers<[1], [0], [0], [1], [0, 0, 1, 1], [], []>} : vector<16x16xf32>, vector<16x8xf32>, vector<16x8xf32> -> vector<16x8xf32>
    %84 = vector.extract_strided_slice %83 {offsets = [1, 0], sizes = [15, 8], strides = [1, 1]} : vector<16x8xf32> to vector<15x8xf32>
    %85 = vector.extract_strided_slice %83 {offsets = [0, 0], sizes = [1, 8], strides = [1, 1]} : vector<16x8xf32> to vector<1x8xf32>
    %86 = tpu.concatenate %84, %85 in 0 : vector<15x8xf32>, vector<1x8xf32> -> vector<16x8xf32>
    %87 = arith.addf %80, %86 : vector<16x8xf32>
    %c0_59 = arith.constant 0 : index
    %c0_60 = arith.constant 0 : index
    %88 = vector.load %arg2[%c0_59, %c0_60] : memref<8x16xf32, #tpu.memory_space<vmem>>, vector<8x16xf32>
    %cst_61 = arith.constant dense<0.000000e+00> : vector<8x8xf32>
    %89 = tpu.matmul %88, %87, %cst_61 {dimension_numbers = #tpu.dot_dimension_numbers<[1], [0], [0], [1], [0, 0, 1, 1], [], []>} : vector<8x16xf32>, vector<16x8xf32>, vector<8x8xf32> -> vector<8x8xf32>
    %c0_62 = arith.constant 0 : index
    %c0_63 = arith.constant 0 : index
    %90 = vector.load %arg12[%c0_62, %c0_63] : memref<1x8xf32, #tpu.memory_space<vmem>>, vector<1x8xf32>
    %91 = vector.broadcast %90 : vector<1x8xf32> to vector<8x8xf32>
    %92 = arith.addf %89, %91 : vector<8x8xf32>
    %cst_64 = arith.constant 0.000000e+00 : f32
    %93 = vector.broadcast %cst_64 : f32 to vector<8x8xf32>
    %94 = arith.maximumf %92, %93 : vector<8x8xf32>
    %c0_65 = arith.constant 0 : index
    %c0_66 = arith.constant 0 : index
    %c0_67 = arith.constant 0 : index
    %95 = vector.load %arg13[%c0_65, %c0_66, %c0_67] : memref<3x56x56xf32, #tpu.memory_space<vmem>>, vector<1x56x56xf32>
    %96 = vector.shape_cast %95 : vector<1x56x56xf32> to vector<56x56xf32>
    %cst_68 = arith.constant dense<0.000000e+00> : vector<56x56xf32>
    %97 = tpu.matmul %39, %96, %cst_68 {dimension_numbers = #tpu.dot_dimension_numbers<[1], [0], [0], [1], [0, 0, 1, 1], [], []>} : vector<56x56xf32>, vector<56x56xf32>, vector<56x56xf32> -> vector<56x56xf32>
    %98 = vector.extract_strided_slice %97 {offsets = [55, 0], sizes = [1, 56], strides = [1, 1]} : vector<56x56xf32> to vector<1x56xf32>
    %99 = vector.extract_strided_slice %97 {offsets = [0, 0], sizes = [55, 56], strides = [1, 1]} : vector<56x56xf32> to vector<55x56xf32>
    %100 = tpu.concatenate %98, %99 in 0 : vector<1x56xf32>, vector<55x56xf32> -> vector<56x56xf32>
    %c1_69 = arith.constant 1 : index
    %c0_70 = arith.constant 0 : index
    %c0_71 = arith.constant 0 : index
    %101 = vector.load %arg13[%c1_69, %c0_70, %c0_71] : memref<3x56x56xf32, #tpu.memory_space<vmem>>, vector<1x56x56xf32>
    %102 = vector.shape_cast %101 : vector<1x56x56xf32> to vector<56x56xf32>
    %cst_72 = arith.constant dense<0.000000e+00> : vector<56x56xf32>
    %103 = tpu.matmul %39, %102, %cst_72 {dimension_numbers = #tpu.dot_dimension_numbers<[1], [0], [0], [1], [0, 0, 1, 1], [], []>} : vector<56x56xf32>, vector<56x56xf32>, vector<56x56xf32> -> vector<56x56xf32>
    %c2_73 = arith.constant 2 : index
    %c0_74 = arith.constant 0 : index
    %c0_75 = arith.constant 0 : index
    %104 = vector.load %arg13[%c2_73, %c0_74, %c0_75] : memref<3x56x56xf32, #tpu.memory_space<vmem>>, vector<1x56x56xf32>
    %105 = vector.shape_cast %104 : vector<1x56x56xf32> to vector<56x56xf32>
    %cst_76 = arith.constant dense<0.000000e+00> : vector<56x56xf32>
    %106 = tpu.matmul %39, %105, %cst_76 {dimension_numbers = #tpu.dot_dimension_numbers<[1], [0], [0], [1], [0, 0, 1, 1], [], []>} : vector<56x56xf32>, vector<56x56xf32>, vector<56x56xf32> -> vector<56x56xf32>
    %107 = vector.extract_strided_slice %106 {offsets = [1, 0], sizes = [55, 56], strides = [1, 1]} : vector<56x56xf32> to vector<55x56xf32>
    %108 = vector.extract_strided_slice %106 {offsets = [0, 0], sizes = [1, 56], strides = [1, 1]} : vector<56x56xf32> to vector<1x56xf32>
    %109 = tpu.concatenate %107, %108 in 0 : vector<55x56xf32>, vector<1x56xf32> -> vector<56x56xf32>
    %110 = tpu.iota {dimensions = array<i32: 0>} : vector<56x56xi32>
    %c7_i32 = arith.constant 7 : i32
    %c0_i32 = arith.constant 0 : i32
    %111 = arith.cmpi eq, %c7_i32, %c0_i32 : i32
    %c1_i32 = arith.constant 1 : i32
    %112 = arith.select %111, %c1_i32, %c7_i32 : i32
    %113 = vector.broadcast %112 : i32 to vector<56x56xi32>
    %114 = arith.remsi %110, %113 : vector<56x56xi32>
    %c0_i32_77 = arith.constant 0 : i32
    %115 = vector.broadcast %c0_i32_77 : i32 to vector<56x56xi32>
    %116 = arith.cmpi ne, %114, %115 : vector<56x56xi32>
    %c0_i32_78 = arith.constant 0 : i32
    %117 = vector.broadcast %c0_i32_78 : i32 to vector<56x56xi32>
    %118 = arith.cmpi slt, %114, %117 : vector<56x56xi32>
    %c0_i32_79 = arith.constant 0 : i32
    %119 = arith.cmpi slt, %112, %c0_i32_79 : i32
    %120 = vector.broadcast %119 : i1 to vector<56x56xi1>
    %121 = vector.broadcast %120 : vector<56x56xi1> to vector<56x56xi1>
    %122 = arith.xori %118, %121 : vector<56x56xi1>
    %123 = arith.andi %122, %116 : vector<56x56xi1>
    %124 = vector.broadcast %112 : i32 to vector<56x56xi32>
    %125 = arith.addi %114, %124 : vector<56x56xi32>
    %126 = arith.select %123, %125, %114 : vector<56x56xi1>, vector<56x56xi32>
    %c0_i32_80 = arith.constant 0 : i32
    %127 = vector.broadcast %c0_i32_80 : i32 to vector<56x56xi32>
    %128 = arith.cmpi eq, %126, %127 : vector<56x56xi32>
    %cst_81 = arith.constant 0.000000e+00 : f32
    %129 = vector.broadcast %cst_81 : f32 to vector<56x56xf32>
    %130 = arith.select %128, %129, %100 : vector<56x56xi1>, vector<56x56xf32>
    %c6_i32 = arith.constant 6 : i32
    %131 = vector.broadcast %c6_i32 : i32 to vector<56x56xi32>
    %132 = arith.cmpi eq, %126, %131 : vector<56x56xi32>
    %cst_82 = arith.constant 0.000000e+00 : f32
    %133 = vector.broadcast %cst_82 : f32 to vector<56x56xf32>
    %134 = arith.select %132, %133, %109 : vector<56x56xi1>, vector<56x56xf32>
    %135 = arith.addf %130, %103 : vector<56x56xf32>
    %136 = arith.addf %135, %134 : vector<56x56xf32>
    %c0_83 = arith.constant 0 : index
    %c0_84 = arith.constant 0 : index
    %137 = vector.load %arg14[%c0_83, %c0_84] : memref<1x56xf32, #tpu.memory_space<vmem>>, vector<1x56xf32>
    %138 = vector.broadcast %137 : vector<1x56xf32> to vector<56x56xf32>
    %139 = arith.addf %136, %138 : vector<56x56xf32>
    %cst_85 = arith.constant 0.000000e+00 : f32
    %140 = vector.broadcast %cst_85 : f32 to vector<56x56xf32>
    %141 = arith.maximumf %139, %140 : vector<56x56xf32>
    %c0_86 = arith.constant 0 : index
    %c0_87 = arith.constant 0 : index
    %c0_88 = arith.constant 0 : index
    %142 = vector.load %arg15[%c0_86, %c0_87, %c0_88] : memref<3x56x40xf32, #tpu.memory_space<vmem>>, vector<1x56x40xf32>
    %143 = vector.shape_cast %142 : vector<1x56x40xf32> to vector<56x40xf32>
    %cst_89 = arith.constant dense<0.000000e+00> : vector<56x40xf32>
    %144 = tpu.matmul %141, %143, %cst_89 {dimension_numbers = #tpu.dot_dimension_numbers<[1], [0], [0], [1], [0, 0, 1, 1], [], []>} : vector<56x56xf32>, vector<56x40xf32>, vector<56x40xf32> -> vector<56x40xf32>
    %c1_90 = arith.constant 1 : index
    %c0_91 = arith.constant 0 : index
    %c0_92 = arith.constant 0 : index
    %145 = vector.load %arg15[%c1_90, %c0_91, %c0_92] : memref<3x56x40xf32, #tpu.memory_space<vmem>>, vector<1x56x40xf32>
    %146 = vector.shape_cast %145 : vector<1x56x40xf32> to vector<56x40xf32>
    %cst_93 = arith.constant dense<0.000000e+00> : vector<56x40xf32>
    %147 = tpu.matmul %141, %146, %cst_93 {dimension_numbers = #tpu.dot_dimension_numbers<[1], [0], [0], [1], [0, 0, 1, 1], [], []>} : vector<56x56xf32>, vector<56x40xf32>, vector<56x40xf32> -> vector<56x40xf32>
    %148 = vector.extract_strided_slice %147 {offsets = [1, 0], sizes = [55, 40], strides = [1, 1]} : vector<56x40xf32> to vector<55x40xf32>
    %149 = vector.extract_strided_slice %147 {offsets = [0, 0], sizes = [1, 40], strides = [1, 1]} : vector<56x40xf32> to vector<1x40xf32>
    %150 = tpu.concatenate %148, %149 in 0 : vector<55x40xf32>, vector<1x40xf32> -> vector<56x40xf32>
    %c2_94 = arith.constant 2 : index
    %c0_95 = arith.constant 0 : index
    %c0_96 = arith.constant 0 : index
    %151 = vector.load %arg15[%c2_94, %c0_95, %c0_96] : memref<3x56x40xf32, #tpu.memory_space<vmem>>, vector<1x56x40xf32>
    %152 = vector.shape_cast %151 : vector<1x56x40xf32> to vector<56x40xf32>
    %cst_97 = arith.constant dense<0.000000e+00> : vector<56x40xf32>
    %153 = tpu.matmul %141, %152, %cst_97 {dimension_numbers = #tpu.dot_dimension_numbers<[1], [0], [0], [1], [0, 0, 1, 1], [], []>} : vector<56x56xf32>, vector<56x40xf32>, vector<56x40xf32> -> vector<56x40xf32>
    %154 = vector.extract_strided_slice %153 {offsets = [2, 0], sizes = [54, 40], strides = [1, 1]} : vector<56x40xf32> to vector<54x40xf32>
    %155 = vector.extract_strided_slice %153 {offsets = [0, 0], sizes = [2, 40], strides = [1, 1]} : vector<56x40xf32> to vector<2x40xf32>
    %156 = tpu.concatenate %154, %155 in 0 : vector<54x40xf32>, vector<2x40xf32> -> vector<56x40xf32>
    %157 = arith.addf %144, %150 : vector<56x40xf32>
    %158 = arith.addf %157, %156 : vector<56x40xf32>
    %c0_98 = arith.constant 0 : index
    %c0_99 = arith.constant 0 : index
    %159 = vector.load %arg16[%c0_98, %c0_99] : memref<1x40xf32, #tpu.memory_space<vmem>>, vector<1x40xf32>
    %160 = vector.broadcast %159 : vector<1x40xf32> to vector<56x40xf32>
    %161 = arith.addf %158, %160 : vector<56x40xf32>
    %cst_100 = arith.constant 0.000000e+00 : f32
    %162 = vector.broadcast %cst_100 : f32 to vector<56x40xf32>
    %163 = arith.maximumf %161, %162 : vector<56x40xf32>
    %164 = vector.extract_strided_slice %163 {offsets = [1, 0], sizes = [55, 40], strides = [1, 1]} : vector<56x40xf32> to vector<55x40xf32>
    %165 = vector.extract_strided_slice %163 {offsets = [0, 0], sizes = [1, 40], strides = [1, 1]} : vector<56x40xf32> to vector<1x40xf32>
    %166 = tpu.concatenate %164, %165 in 0 : vector<55x40xf32>, vector<1x40xf32> -> vector<56x40xf32>
    %167 = arith.maximumf %163, %166 : vector<56x40xf32>
    %c0_101 = arith.constant 0 : index
    %c0_102 = arith.constant 0 : index
    %168 = vector.load %arg17[%c0_101, %c0_102] : memref<16x56xf32, #tpu.memory_space<vmem>>, vector<16x56xf32>
    %cst_103 = arith.constant dense<0.000000e+00> : vector<16x40xf32>
    %169 = tpu.matmul %168, %167, %cst_103 {dimension_numbers = #tpu.dot_dimension_numbers<[1], [0], [0], [1], [0, 0, 1, 1], [], []>} : vector<16x56xf32>, vector<56x40xf32>, vector<16x40xf32> -> vector<16x40xf32>
    %170 = vector.extract_strided_slice %169 {offsets = [0, 8], sizes = [16, 32], strides = [1, 1]} : vector<16x40xf32> to vector<16x32xf32>
    %171 = vector.extract_strided_slice %169 {offsets = [0, 0], sizes = [16, 8], strides = [1, 1]} : vector<16x40xf32> to vector<16x8xf32>
    %172 = tpu.concatenate %170, %171 in 1 : vector<16x32xf32>, vector<16x8xf32> -> vector<16x40xf32>
    %173 = arith.maximumf %169, %172 : vector<16x40xf32>
    %c0_104 = arith.constant 0 : index
    %c0_105 = arith.constant 0 : index
    %c0_106 = arith.constant 0 : index
    %174 = vector.load %arg18[%c0_104, %c0_105, %c0_106] : memref<1x40x16xf32, #tpu.memory_space<vmem>>, vector<1x40x16xf32>
    %175 = vector.shape_cast %174 : vector<1x40x16xf32> to vector<40x16xf32>
    %cst_107 = arith.constant dense<0.000000e+00> : vector<16x16xf32>
    %176 = tpu.matmul %173, %175, %cst_107 {dimension_numbers = #tpu.dot_dimension_numbers<[1], [0], [0], [1], [0, 0, 1, 1], [], []>} : vector<16x40xf32>, vector<40x16xf32>, vector<16x16xf32> -> vector<16x16xf32>
    %c0_108 = arith.constant 0 : index
    %c0_109 = arith.constant 0 : index
    %c0_110 = arith.constant 0 : index
    %177 = vector.load %arg19[%c0_108, %c0_109, %c0_110] : memref<2x16x8xf32, #tpu.memory_space<vmem>>, vector<1x16x8xf32>
    %178 = vector.shape_cast %177 : vector<1x16x8xf32> to vector<16x8xf32>
    %cst_111 = arith.constant dense<0.000000e+00> : vector<16x8xf32>
    %179 = tpu.matmul %176, %178, %cst_111 {dimension_numbers = #tpu.dot_dimension_numbers<[1], [0], [0], [1], [0, 0, 1, 1], [], []>} : vector<16x16xf32>, vector<16x8xf32>, vector<16x8xf32> -> vector<16x8xf32>
    %c1_112 = arith.constant 1 : index
    %c0_113 = arith.constant 0 : index
    %c0_114 = arith.constant 0 : index
    %180 = vector.load %arg19[%c1_112, %c0_113, %c0_114] : memref<2x16x8xf32, #tpu.memory_space<vmem>>, vector<1x16x8xf32>
    %181 = vector.shape_cast %180 : vector<1x16x8xf32> to vector<16x8xf32>
    %cst_115 = arith.constant dense<0.000000e+00> : vector<16x8xf32>
    %182 = tpu.matmul %176, %181, %cst_115 {dimension_numbers = #tpu.dot_dimension_numbers<[1], [0], [0], [1], [0, 0, 1, 1], [], []>} : vector<16x16xf32>, vector<16x8xf32>, vector<16x8xf32> -> vector<16x8xf32>
    %183 = vector.extract_strided_slice %182 {offsets = [1, 0], sizes = [15, 8], strides = [1, 1]} : vector<16x8xf32> to vector<15x8xf32>
    %184 = vector.extract_strided_slice %182 {offsets = [0, 0], sizes = [1, 8], strides = [1, 1]} : vector<16x8xf32> to vector<1x8xf32>
    %185 = tpu.concatenate %183, %184 in 0 : vector<15x8xf32>, vector<1x8xf32> -> vector<16x8xf32>
    %186 = arith.addf %179, %185 : vector<16x8xf32>
    %c0_116 = arith.constant 0 : index
    %c0_117 = arith.constant 0 : index
    %187 = vector.load %arg2[%c0_116, %c0_117] : memref<8x16xf32, #tpu.memory_space<vmem>>, vector<8x16xf32>
    %cst_118 = arith.constant dense<0.000000e+00> : vector<8x8xf32>
    %188 = tpu.matmul %187, %186, %cst_118 {dimension_numbers = #tpu.dot_dimension_numbers<[1], [0], [0], [1], [0, 0, 1, 1], [], []>} : vector<8x16xf32>, vector<16x8xf32>, vector<8x8xf32> -> vector<8x8xf32>
    %c0_119 = arith.constant 0 : index
    %c0_120 = arith.constant 0 : index
    %189 = vector.load %arg20[%c0_119, %c0_120] : memref<1x8xf32, #tpu.memory_space<vmem>>, vector<1x8xf32>
    %190 = vector.broadcast %189 : vector<1x8xf32> to vector<8x8xf32>
    %191 = arith.addf %188, %190 : vector<8x8xf32>
    %cst_121 = arith.constant 0.000000e+00 : f32
    %192 = vector.broadcast %cst_121 : f32 to vector<8x8xf32>
    %193 = arith.maximumf %191, %192 : vector<8x8xf32>
    %c0_122 = arith.constant 0 : index
    %c0_123 = arith.constant 0 : index
    %c0_124 = arith.constant 0 : index
    %194 = vector.load %arg21[%c0_122, %c0_123, %c0_124] : memref<3x56x56xf32, #tpu.memory_space<vmem>>, vector<1x56x56xf32>
    %195 = vector.shape_cast %194 : vector<1x56x56xf32> to vector<56x56xf32>
    %cst_125 = arith.constant dense<0.000000e+00> : vector<56x56xf32>
    %196 = tpu.matmul %42, %195, %cst_125 {dimension_numbers = #tpu.dot_dimension_numbers<[1], [0], [0], [1], [0, 0, 1, 1], [], []>} : vector<56x56xf32>, vector<56x56xf32>, vector<56x56xf32> -> vector<56x56xf32>
    %197 = vector.extract_strided_slice %196 {offsets = [55, 0], sizes = [1, 56], strides = [1, 1]} : vector<56x56xf32> to vector<1x56xf32>
    %198 = vector.extract_strided_slice %196 {offsets = [0, 0], sizes = [55, 56], strides = [1, 1]} : vector<56x56xf32> to vector<55x56xf32>
    %199 = tpu.concatenate %197, %198 in 0 : vector<1x56xf32>, vector<55x56xf32> -> vector<56x56xf32>
    %c1_126 = arith.constant 1 : index
    %c0_127 = arith.constant 0 : index
    %c0_128 = arith.constant 0 : index
    %200 = vector.load %arg21[%c1_126, %c0_127, %c0_128] : memref<3x56x56xf32, #tpu.memory_space<vmem>>, vector<1x56x56xf32>
    %201 = vector.shape_cast %200 : vector<1x56x56xf32> to vector<56x56xf32>
    %cst_129 = arith.constant dense<0.000000e+00> : vector<56x56xf32>
    %202 = tpu.matmul %42, %201, %cst_129 {dimension_numbers = #tpu.dot_dimension_numbers<[1], [0], [0], [1], [0, 0, 1, 1], [], []>} : vector<56x56xf32>, vector<56x56xf32>, vector<56x56xf32> -> vector<56x56xf32>
    %c2_130 = arith.constant 2 : index
    %c0_131 = arith.constant 0 : index
    %c0_132 = arith.constant 0 : index
    %203 = vector.load %arg21[%c2_130, %c0_131, %c0_132] : memref<3x56x56xf32, #tpu.memory_space<vmem>>, vector<1x56x56xf32>
    %204 = vector.shape_cast %203 : vector<1x56x56xf32> to vector<56x56xf32>
    %cst_133 = arith.constant dense<0.000000e+00> : vector<56x56xf32>
    %205 = tpu.matmul %42, %204, %cst_133 {dimension_numbers = #tpu.dot_dimension_numbers<[1], [0], [0], [1], [0, 0, 1, 1], [], []>} : vector<56x56xf32>, vector<56x56xf32>, vector<56x56xf32> -> vector<56x56xf32>
    %206 = vector.extract_strided_slice %205 {offsets = [1, 0], sizes = [55, 56], strides = [1, 1]} : vector<56x56xf32> to vector<55x56xf32>
    %207 = vector.extract_strided_slice %205 {offsets = [0, 0], sizes = [1, 56], strides = [1, 1]} : vector<56x56xf32> to vector<1x56xf32>
    %208 = tpu.concatenate %206, %207 in 0 : vector<55x56xf32>, vector<1x56xf32> -> vector<56x56xf32>
    %209 = tpu.iota {dimensions = array<i32: 0>} : vector<56x56xi32>
    %c7_i32_134 = arith.constant 7 : i32
    %c0_i32_135 = arith.constant 0 : i32
    %210 = arith.cmpi eq, %c7_i32_134, %c0_i32_135 : i32
    %c1_i32_136 = arith.constant 1 : i32
    %211 = arith.select %210, %c1_i32_136, %c7_i32_134 : i32
    %212 = vector.broadcast %211 : i32 to vector<56x56xi32>
    %213 = arith.remsi %209, %212 : vector<56x56xi32>
    %c0_i32_137 = arith.constant 0 : i32
    %214 = vector.broadcast %c0_i32_137 : i32 to vector<56x56xi32>
    %215 = arith.cmpi ne, %213, %214 : vector<56x56xi32>
    %c0_i32_138 = arith.constant 0 : i32
    %216 = vector.broadcast %c0_i32_138 : i32 to vector<56x56xi32>
    %217 = arith.cmpi slt, %213, %216 : vector<56x56xi32>
    %c0_i32_139 = arith.constant 0 : i32
    %218 = arith.cmpi slt, %211, %c0_i32_139 : i32
    %219 = vector.broadcast %218 : i1 to vector<56x56xi1>
    %220 = vector.broadcast %219 : vector<56x56xi1> to vector<56x56xi1>
    %221 = arith.xori %217, %220 : vector<56x56xi1>
    %222 = arith.andi %221, %215 : vector<56x56xi1>
    %223 = vector.broadcast %211 : i32 to vector<56x56xi32>
    %224 = arith.addi %213, %223 : vector<56x56xi32>
    %225 = arith.select %222, %224, %213 : vector<56x56xi1>, vector<56x56xi32>
    %c0_i32_140 = arith.constant 0 : i32
    %226 = vector.broadcast %c0_i32_140 : i32 to vector<56x56xi32>
    %227 = arith.cmpi eq, %225, %226 : vector<56x56xi32>
    %cst_141 = arith.constant 0.000000e+00 : f32
    %228 = vector.broadcast %cst_141 : f32 to vector<56x56xf32>
    %229 = arith.select %227, %228, %199 : vector<56x56xi1>, vector<56x56xf32>
    %c6_i32_142 = arith.constant 6 : i32
    %230 = vector.broadcast %c6_i32_142 : i32 to vector<56x56xi32>
    %231 = arith.cmpi eq, %225, %230 : vector<56x56xi32>
    %cst_143 = arith.constant 0.000000e+00 : f32
    %232 = vector.broadcast %cst_143 : f32 to vector<56x56xf32>
    %233 = arith.select %231, %232, %208 : vector<56x56xi1>, vector<56x56xf32>
    %234 = arith.addf %229, %202 : vector<56x56xf32>
    %235 = arith.addf %234, %233 : vector<56x56xf32>
    %c0_144 = arith.constant 0 : index
    %c0_145 = arith.constant 0 : index
    %236 = vector.load %arg22[%c0_144, %c0_145] : memref<1x56xf32, #tpu.memory_space<vmem>>, vector<1x56xf32>
    %237 = vector.broadcast %236 : vector<1x56xf32> to vector<56x56xf32>
    %238 = arith.addf %235, %237 : vector<56x56xf32>
    %cst_146 = arith.constant 0.000000e+00 : f32
    %239 = vector.broadcast %cst_146 : f32 to vector<56x56xf32>
    %240 = arith.maximumf %238, %239 : vector<56x56xf32>
    %c0_147 = arith.constant 0 : index
    %c0_148 = arith.constant 0 : index
    %c0_149 = arith.constant 0 : index
    %241 = vector.load %arg23[%c0_147, %c0_148, %c0_149] : memref<3x56x56xf32, #tpu.memory_space<vmem>>, vector<1x56x56xf32>
    %242 = vector.shape_cast %241 : vector<1x56x56xf32> to vector<56x56xf32>
    %cst_150 = arith.constant dense<0.000000e+00> : vector<56x56xf32>
    %243 = tpu.matmul %240, %242, %cst_150 {dimension_numbers = #tpu.dot_dimension_numbers<[1], [0], [0], [1], [0, 0, 1, 1], [], []>} : vector<56x56xf32>, vector<56x56xf32>, vector<56x56xf32> -> vector<56x56xf32>
    %244 = vector.extract_strided_slice %243 {offsets = [55, 0], sizes = [1, 56], strides = [1, 1]} : vector<56x56xf32> to vector<1x56xf32>
    %245 = vector.extract_strided_slice %243 {offsets = [0, 0], sizes = [55, 56], strides = [1, 1]} : vector<56x56xf32> to vector<55x56xf32>
    %246 = tpu.concatenate %244, %245 in 0 : vector<1x56xf32>, vector<55x56xf32> -> vector<56x56xf32>
    %c1_151 = arith.constant 1 : index
    %c0_152 = arith.constant 0 : index
    %c0_153 = arith.constant 0 : index
    %247 = vector.load %arg23[%c1_151, %c0_152, %c0_153] : memref<3x56x56xf32, #tpu.memory_space<vmem>>, vector<1x56x56xf32>
    %248 = vector.shape_cast %247 : vector<1x56x56xf32> to vector<56x56xf32>
    %cst_154 = arith.constant dense<0.000000e+00> : vector<56x56xf32>
    %249 = tpu.matmul %240, %248, %cst_154 {dimension_numbers = #tpu.dot_dimension_numbers<[1], [0], [0], [1], [0, 0, 1, 1], [], []>} : vector<56x56xf32>, vector<56x56xf32>, vector<56x56xf32> -> vector<56x56xf32>
    %c2_155 = arith.constant 2 : index
    %c0_156 = arith.constant 0 : index
    %c0_157 = arith.constant 0 : index
    %250 = vector.load %arg23[%c2_155, %c0_156, %c0_157] : memref<3x56x56xf32, #tpu.memory_space<vmem>>, vector<1x56x56xf32>
    %251 = vector.shape_cast %250 : vector<1x56x56xf32> to vector<56x56xf32>
    %cst_158 = arith.constant dense<0.000000e+00> : vector<56x56xf32>
    %252 = tpu.matmul %240, %251, %cst_158 {dimension_numbers = #tpu.dot_dimension_numbers<[1], [0], [0], [1], [0, 0, 1, 1], [], []>} : vector<56x56xf32>, vector<56x56xf32>, vector<56x56xf32> -> vector<56x56xf32>
    %253 = vector.extract_strided_slice %252 {offsets = [1, 0], sizes = [55, 56], strides = [1, 1]} : vector<56x56xf32> to vector<55x56xf32>
    %254 = vector.extract_strided_slice %252 {offsets = [0, 0], sizes = [1, 56], strides = [1, 1]} : vector<56x56xf32> to vector<1x56xf32>
    %255 = tpu.concatenate %253, %254 in 0 : vector<55x56xf32>, vector<1x56xf32> -> vector<56x56xf32>
    %256 = tpu.iota {dimensions = array<i32: 0>} : vector<56x56xi32>
    %c7_i32_159 = arith.constant 7 : i32
    %c0_i32_160 = arith.constant 0 : i32
    %257 = arith.cmpi eq, %c7_i32_159, %c0_i32_160 : i32
    %c1_i32_161 = arith.constant 1 : i32
    %258 = arith.select %257, %c1_i32_161, %c7_i32_159 : i32
    %259 = vector.broadcast %258 : i32 to vector<56x56xi32>
    %260 = arith.remsi %256, %259 : vector<56x56xi32>
    %c0_i32_162 = arith.constant 0 : i32
    %261 = vector.broadcast %c0_i32_162 : i32 to vector<56x56xi32>
    %262 = arith.cmpi ne, %260, %261 : vector<56x56xi32>
    %c0_i32_163 = arith.constant 0 : i32
    %263 = vector.broadcast %c0_i32_163 : i32 to vector<56x56xi32>
    %264 = arith.cmpi slt, %260, %263 : vector<56x56xi32>
    %c0_i32_164 = arith.constant 0 : i32
    %265 = arith.cmpi slt, %258, %c0_i32_164 : i32
    %266 = vector.broadcast %265 : i1 to vector<56x56xi1>
    %267 = vector.broadcast %266 : vector<56x56xi1> to vector<56x56xi1>
    %268 = arith.xori %264, %267 : vector<56x56xi1>
    %269 = arith.andi %268, %262 : vector<56x56xi1>
    %270 = vector.broadcast %258 : i32 to vector<56x56xi32>
    %271 = arith.addi %260, %270 : vector<56x56xi32>
    %272 = arith.select %269, %271, %260 : vector<56x56xi1>, vector<56x56xi32>
    %c0_i32_165 = arith.constant 0 : i32
    %273 = vector.broadcast %c0_i32_165 : i32 to vector<56x56xi32>
    %274 = arith.cmpi eq, %272, %273 : vector<56x56xi32>
    %cst_166 = arith.constant 0.000000e+00 : f32
    %275 = vector.broadcast %cst_166 : f32 to vector<56x56xf32>
    %276 = arith.select %274, %275, %246 : vector<56x56xi1>, vector<56x56xf32>
    %c6_i32_167 = arith.constant 6 : i32
    %277 = vector.broadcast %c6_i32_167 : i32 to vector<56x56xi32>
    %278 = arith.cmpi eq, %272, %277 : vector<56x56xi32>
    %cst_168 = arith.constant 0.000000e+00 : f32
    %279 = vector.broadcast %cst_168 : f32 to vector<56x56xf32>
    %280 = arith.select %278, %279, %255 : vector<56x56xi1>, vector<56x56xf32>
    %281 = arith.addf %276, %249 : vector<56x56xf32>
    %282 = arith.addf %281, %280 : vector<56x56xf32>
    %c0_169 = arith.constant 0 : index
    %c0_170 = arith.constant 0 : index
    %283 = vector.load %arg24[%c0_169, %c0_170] : memref<1x56xf32, #tpu.memory_space<vmem>>, vector<1x56xf32>
    %284 = vector.broadcast %283 : vector<1x56xf32> to vector<56x56xf32>
    %285 = arith.addf %282, %284 : vector<56x56xf32>
    %cst_171 = arith.constant 0.000000e+00 : f32
    %286 = vector.broadcast %cst_171 : f32 to vector<56x56xf32>
    %287 = arith.maximumf %285, %286 : vector<56x56xf32>
    %c0_172 = arith.constant 0 : index
    %c0_173 = arith.constant 0 : index
    %c0_174 = arith.constant 0 : index
    %288 = vector.load %arg25[%c0_172, %c0_173, %c0_174] : memref<3x56x40xf32, #tpu.memory_space<vmem>>, vector<1x56x40xf32>
    %289 = vector.shape_cast %288 : vector<1x56x40xf32> to vector<56x40xf32>
    %cst_175 = arith.constant dense<0.000000e+00> : vector<56x40xf32>
    %290 = tpu.matmul %287, %289, %cst_175 {dimension_numbers = #tpu.dot_dimension_numbers<[1], [0], [0], [1], [0, 0, 1, 1], [], []>} : vector<56x56xf32>, vector<56x40xf32>, vector<56x40xf32> -> vector<56x40xf32>
    %c1_176 = arith.constant 1 : index
    %c0_177 = arith.constant 0 : index
    %c0_178 = arith.constant 0 : index
    %291 = vector.load %arg25[%c1_176, %c0_177, %c0_178] : memref<3x56x40xf32, #tpu.memory_space<vmem>>, vector<1x56x40xf32>
    %292 = vector.shape_cast %291 : vector<1x56x40xf32> to vector<56x40xf32>
    %cst_179 = arith.constant dense<0.000000e+00> : vector<56x40xf32>
    %293 = tpu.matmul %287, %292, %cst_179 {dimension_numbers = #tpu.dot_dimension_numbers<[1], [0], [0], [1], [0, 0, 1, 1], [], []>} : vector<56x56xf32>, vector<56x40xf32>, vector<56x40xf32> -> vector<56x40xf32>
    %294 = vector.extract_strided_slice %293 {offsets = [1, 0], sizes = [55, 40], strides = [1, 1]} : vector<56x40xf32> to vector<55x40xf32>
    %295 = vector.extract_strided_slice %293 {offsets = [0, 0], sizes = [1, 40], strides = [1, 1]} : vector<56x40xf32> to vector<1x40xf32>
    %296 = tpu.concatenate %294, %295 in 0 : vector<55x40xf32>, vector<1x40xf32> -> vector<56x40xf32>
    %c2_180 = arith.constant 2 : index
    %c0_181 = arith.constant 0 : index
    %c0_182 = arith.constant 0 : index
    %297 = vector.load %arg25[%c2_180, %c0_181, %c0_182] : memref<3x56x40xf32, #tpu.memory_space<vmem>>, vector<1x56x40xf32>
    %298 = vector.shape_cast %297 : vector<1x56x40xf32> to vector<56x40xf32>
    %cst_183 = arith.constant dense<0.000000e+00> : vector<56x40xf32>
    %299 = tpu.matmul %287, %298, %cst_183 {dimension_numbers = #tpu.dot_dimension_numbers<[1], [0], [0], [1], [0, 0, 1, 1], [], []>} : vector<56x56xf32>, vector<56x40xf32>, vector<56x40xf32> -> vector<56x40xf32>
    %300 = vector.extract_strided_slice %299 {offsets = [2, 0], sizes = [54, 40], strides = [1, 1]} : vector<56x40xf32> to vector<54x40xf32>
    %301 = vector.extract_strided_slice %299 {offsets = [0, 0], sizes = [2, 40], strides = [1, 1]} : vector<56x40xf32> to vector<2x40xf32>
    %302 = tpu.concatenate %300, %301 in 0 : vector<54x40xf32>, vector<2x40xf32> -> vector<56x40xf32>
    %303 = arith.addf %290, %296 : vector<56x40xf32>
    %304 = arith.addf %303, %302 : vector<56x40xf32>
    %c0_184 = arith.constant 0 : index
    %c0_185 = arith.constant 0 : index
    %305 = vector.load %arg26[%c0_184, %c0_185] : memref<1x40xf32, #tpu.memory_space<vmem>>, vector<1x40xf32>
    %306 = vector.broadcast %305 : vector<1x40xf32> to vector<56x40xf32>
    %307 = arith.addf %304, %306 : vector<56x40xf32>
    %cst_186 = arith.constant 0.000000e+00 : f32
    %308 = vector.broadcast %cst_186 : f32 to vector<56x40xf32>
    %309 = arith.maximumf %307, %308 : vector<56x40xf32>
    %310 = vector.extract_strided_slice %309 {offsets = [1, 0], sizes = [55, 40], strides = [1, 1]} : vector<56x40xf32> to vector<55x40xf32>
    %311 = vector.extract_strided_slice %309 {offsets = [0, 0], sizes = [1, 40], strides = [1, 1]} : vector<56x40xf32> to vector<1x40xf32>
    %312 = tpu.concatenate %310, %311 in 0 : vector<55x40xf32>, vector<1x40xf32> -> vector<56x40xf32>
    %313 = arith.maximumf %309, %312 : vector<56x40xf32>
    %c0_187 = arith.constant 0 : index
    %c0_188 = arith.constant 0 : index
    %314 = vector.load %arg27[%c0_187, %c0_188] : memref<16x56xf32, #tpu.memory_space<vmem>>, vector<16x56xf32>
    %cst_189 = arith.constant dense<0.000000e+00> : vector<16x40xf32>
    %315 = tpu.matmul %314, %313, %cst_189 {dimension_numbers = #tpu.dot_dimension_numbers<[1], [0], [0], [1], [0, 0, 1, 1], [], []>} : vector<16x56xf32>, vector<56x40xf32>, vector<16x40xf32> -> vector<16x40xf32>
    %316 = vector.extract_strided_slice %315 {offsets = [0, 8], sizes = [16, 32], strides = [1, 1]} : vector<16x40xf32> to vector<16x32xf32>
    %317 = vector.extract_strided_slice %315 {offsets = [0, 0], sizes = [16, 8], strides = [1, 1]} : vector<16x40xf32> to vector<16x8xf32>
    %318 = tpu.concatenate %316, %317 in 1 : vector<16x32xf32>, vector<16x8xf32> -> vector<16x40xf32>
    %319 = arith.maximumf %315, %318 : vector<16x40xf32>
    %c0_190 = arith.constant 0 : index
    %c0_191 = arith.constant 0 : index
    %c0_192 = arith.constant 0 : index
    %320 = vector.load %arg28[%c0_190, %c0_191, %c0_192] : memref<1x40x16xf32, #tpu.memory_space<vmem>>, vector<1x40x16xf32>
    %321 = vector.shape_cast %320 : vector<1x40x16xf32> to vector<40x16xf32>
    %cst_193 = arith.constant dense<0.000000e+00> : vector<16x16xf32>
    %322 = tpu.matmul %319, %321, %cst_193 {dimension_numbers = #tpu.dot_dimension_numbers<[1], [0], [0], [1], [0, 0, 1, 1], [], []>} : vector<16x40xf32>, vector<40x16xf32>, vector<16x16xf32> -> vector<16x16xf32>
    %c0_194 = arith.constant 0 : index
    %c0_195 = arith.constant 0 : index
    %c0_196 = arith.constant 0 : index
    %323 = vector.load %arg29[%c0_194, %c0_195, %c0_196] : memref<2x16x8xf32, #tpu.memory_space<vmem>>, vector<1x16x8xf32>
    %324 = vector.shape_cast %323 : vector<1x16x8xf32> to vector<16x8xf32>
    %cst_197 = arith.constant dense<0.000000e+00> : vector<16x8xf32>
    %325 = tpu.matmul %322, %324, %cst_197 {dimension_numbers = #tpu.dot_dimension_numbers<[1], [0], [0], [1], [0, 0, 1, 1], [], []>} : vector<16x16xf32>, vector<16x8xf32>, vector<16x8xf32> -> vector<16x8xf32>
    %c1_198 = arith.constant 1 : index
    %c0_199 = arith.constant 0 : index
    %c0_200 = arith.constant 0 : index
    %326 = vector.load %arg29[%c1_198, %c0_199, %c0_200] : memref<2x16x8xf32, #tpu.memory_space<vmem>>, vector<1x16x8xf32>
    %327 = vector.shape_cast %326 : vector<1x16x8xf32> to vector<16x8xf32>
    %cst_201 = arith.constant dense<0.000000e+00> : vector<16x8xf32>
    %328 = tpu.matmul %322, %327, %cst_201 {dimension_numbers = #tpu.dot_dimension_numbers<[1], [0], [0], [1], [0, 0, 1, 1], [], []>} : vector<16x16xf32>, vector<16x8xf32>, vector<16x8xf32> -> vector<16x8xf32>
    %329 = vector.extract_strided_slice %328 {offsets = [1, 0], sizes = [15, 8], strides = [1, 1]} : vector<16x8xf32> to vector<15x8xf32>
    %330 = vector.extract_strided_slice %328 {offsets = [0, 0], sizes = [1, 8], strides = [1, 1]} : vector<16x8xf32> to vector<1x8xf32>
    %331 = tpu.concatenate %329, %330 in 0 : vector<15x8xf32>, vector<1x8xf32> -> vector<16x8xf32>
    %332 = arith.addf %325, %331 : vector<16x8xf32>
    %c0_202 = arith.constant 0 : index
    %c0_203 = arith.constant 0 : index
    %333 = vector.load %arg2[%c0_202, %c0_203] : memref<8x16xf32, #tpu.memory_space<vmem>>, vector<8x16xf32>
    %cst_204 = arith.constant dense<0.000000e+00> : vector<8x8xf32>
    %334 = tpu.matmul %333, %332, %cst_204 {dimension_numbers = #tpu.dot_dimension_numbers<[1], [0], [0], [1], [0, 0, 1, 1], [], []>} : vector<8x16xf32>, vector<16x8xf32>, vector<8x8xf32> -> vector<8x8xf32>
    %c0_205 = arith.constant 0 : index
    %c0_206 = arith.constant 0 : index
    %335 = vector.load %arg30[%c0_205, %c0_206] : memref<1x8xf32, #tpu.memory_space<vmem>>, vector<1x8xf32>
    %336 = vector.broadcast %335 : vector<1x8xf32> to vector<8x8xf32>
    %337 = arith.addf %334, %336 : vector<8x8xf32>
    %cst_207 = arith.constant 0.000000e+00 : f32
    %338 = vector.broadcast %cst_207 : f32 to vector<8x8xf32>
    %339 = arith.maximumf %337, %338 : vector<8x8xf32>
    %c0_208 = arith.constant 0 : index
    %c0_209 = arith.constant 0 : index
    %340 = vector.load %arg32[%c0_208, %c0_209] : memref<1x1xf32, #tpu.memory_space<vmem>>, vector<1x1xf32>
    %c0_210 = arith.constant 0 : index
    %c0_211 = arith.constant 0 : index
    %c0_212 = arith.constant 0 : index
    %341 = vector.load %arg31[%c0_210, %c0_211, %c0_212] : memref<3x1x8xf32, #tpu.memory_space<vmem>>, vector<1x1x8xf32>
    %342 = vector.shape_cast %341 : vector<1x1x8xf32> to vector<1x8xf32>
    %343 = vector.broadcast %342 : vector<1x8xf32> to vector<8x8xf32>
    %344 = arith.mulf %94, %343 : vector<8x8xf32>
    %cst_213 = arith.constant dense<0.000000e+00> : vector<8xf32>
    %345 = vector.multi_reduction <add>, %344, %cst_213 [1] : vector<8x8xf32> to vector<8xf32>
    %346 = vector.shape_cast %345 : vector<8xf32> to vector<8x1xf32>
    %347 = vector.broadcast %340 : vector<1x1xf32> to vector<8x1xf32>
    %348 = arith.addf %347, %346 : vector<8x1xf32>
    %c1_214 = arith.constant 1 : index
    %c0_215 = arith.constant 0 : index
    %c0_216 = arith.constant 0 : index
    %349 = vector.load %arg31[%c1_214, %c0_215, %c0_216] : memref<3x1x8xf32, #tpu.memory_space<vmem>>, vector<1x1x8xf32>
    %350 = vector.shape_cast %349 : vector<1x1x8xf32> to vector<1x8xf32>
    %351 = vector.broadcast %350 : vector<1x8xf32> to vector<8x8xf32>
    %352 = arith.mulf %193, %351 : vector<8x8xf32>
    %cst_217 = arith.constant dense<0.000000e+00> : vector<8xf32>
    %353 = vector.multi_reduction <add>, %352, %cst_217 [1] : vector<8x8xf32> to vector<8xf32>
    %354 = vector.shape_cast %353 : vector<8xf32> to vector<8x1xf32>
    %355 = arith.addf %348, %354 : vector<8x1xf32>
    %c2_218 = arith.constant 2 : index
    %c0_219 = arith.constant 0 : index
    %c0_220 = arith.constant 0 : index
    %356 = vector.load %arg31[%c2_218, %c0_219, %c0_220] : memref<3x1x8xf32, #tpu.memory_space<vmem>>, vector<1x1x8xf32>
    %357 = vector.shape_cast %356 : vector<1x1x8xf32> to vector<1x8xf32>
    %358 = vector.broadcast %357 : vector<1x8xf32> to vector<8x8xf32>
    %359 = arith.mulf %339, %358 : vector<8x8xf32>
    %cst_221 = arith.constant dense<0.000000e+00> : vector<8xf32>
    %360 = vector.multi_reduction <add>, %359, %cst_221 [1] : vector<8x8xf32> to vector<8xf32>
    %361 = vector.shape_cast %360 : vector<8xf32> to vector<8x1xf32>
    %362 = arith.addf %355, %361 : vector<8x1xf32>
    %c0_222 = arith.constant 0 : index
    %c0_223 = arith.constant 0 : index
    %c0_224 = arith.constant 0 : index
    %363 = vector.load %arg33[%c0_222, %c0_223, %c0_224] : memref<1x8x1xf32, #tpu.memory_space<vmem>>, vector<1x8x1xf32>
    %364 = vector.shape_cast %363 : vector<1x8x1xf32> to vector<8x1xf32>
    %365 = vector.shape_cast %362 : vector<8x1xf32> to vector<1x8x1xf32>
    tpu.vector_store %arg33[%c0_222, %c0_223, %c0_224], %365 {strides = array<i32>} : memref<1x8x1xf32, #tpu.memory_space<vmem>>, vector<1x8x1xf32>,
    return
  }
  func.func @transform_0(%arg0: i32) -> (i32, i32, i32) {
    %c0_i32 = arith.constant 0 : i32
    %c0_i32_0 = arith.constant 0 : i32
    %c0_i32_1 = arith.constant 0 : i32
    return %arg0, %c0_i32, %c0_i32_0 : i32, i32, i32
  }
  func.func @transform_1(%arg0: i32) -> (i32, i32) {
    %c0_i32 = arith.constant 0 : i32
    %c0_i32_0 = arith.constant 0 : i32
    %c0_i32_1 = arith.constant 0 : i32
    return %c0_i32, %c0_i32_0 : i32, i32
  }
  func.func @transform_2(%arg0: i32) -> (i32, i32, i32) {
    %c0_i32 = arith.constant 0 : i32
    %c0_i32_0 = arith.constant 0 : i32
    %c0_i32_1 = arith.constant 0 : i32
    %c0_i32_2 = arith.constant 0 : i32
    return %c0_i32, %c0_i32_0, %c0_i32_1 : i32, i32, i32
  }
  func.func @transform_3(%arg0: i32) -> (i32, i32) {
    %c0_i32 = arith.constant 0 : i32
    %c0_i32_0 = arith.constant 0 : i32
    %c0_i32_1 = arith.constant 0 : i32
    return %c0_i32, %c0_i32_0 : i32, i32
  }
  func.func @transform_4(%arg0: i32) -> (i32, i32) {
    %c0_i32 = arith.constant 0 : i32
    %c0_i32_0 = arith.constant 0 : i32
    %c0_i32_1 = arith.constant 0 : i32
    return %c0_i32, %c0_i32_0 : i32, i32
  }
  func.func @transform_5(%arg0: i32) -> (i32, i32, i32) {
    %c0_i32 = arith.constant 0 : i32
    %c0_i32_0 = arith.constant 0 : i32
    %c0_i32_1 = arith.constant 0 : i32
    %c0_i32_2 = arith.constant 0 : i32
    return %c0_i32, %c0_i32_0, %c0_i32_1 : i32, i32, i32
  }
  func.func @transform_6(%arg0: i32) -> (i32, i32, i32) {
    %c0_i32 = arith.constant 0 : i32
    %c0_i32_0 = arith.constant 0 : i32
    %c0_i32_1 = arith.constant 0 : i32
    %c0_i32_2 = arith.constant 0 : i32
    return %c0_i32, %c0_i32_0, %c0_i32_1 : i32, i32, i32
  }
  func.func @transform_7(%arg0: i32) -> (i32, i32) {
    %c0_i32 = arith.constant 0 : i32
    %c0_i32_0 = arith.constant 0 : i32
    %c0_i32_1 = arith.constant 0 : i32
    return %c0_i32, %c0_i32_0 : i32, i32
  }
  func.func @transform_8(%arg0: i32) -> (i32, i32) {
    %c0_i32 = arith.constant 0 : i32
    %c0_i32_0 = arith.constant 0 : i32
    %c0_i32_1 = arith.constant 0 : i32
    return %c0_i32, %c0_i32_0 : i32, i32
  }
  func.func @transform_9(%arg0: i32) -> (i32, i32, i32) {
    %c0_i32 = arith.constant 0 : i32
    %c0_i32_0 = arith.constant 0 : i32
    %c0_i32_1 = arith.constant 0 : i32
    %c0_i32_2 = arith.constant 0 : i32
    return %c0_i32, %c0_i32_0, %c0_i32_1 : i32, i32, i32
  }
  func.func @transform_10(%arg0: i32) -> (i32, i32, i32) {
    %c0_i32 = arith.constant 0 : i32
    %c0_i32_0 = arith.constant 0 : i32
    %c0_i32_1 = arith.constant 0 : i32
    %c0_i32_2 = arith.constant 0 : i32
    return %c0_i32, %c0_i32_0, %c0_i32_1 : i32, i32, i32
  }
  func.func @transform_11(%arg0: i32) -> (i32, i32) {
    %c0_i32 = arith.constant 0 : i32
    %c0_i32_0 = arith.constant 0 : i32
    %c0_i32_1 = arith.constant 0 : i32
    return %c0_i32, %c0_i32_0 : i32, i32
  }
  func.func @transform_12(%arg0: i32) -> (i32, i32, i32) {
    %c0_i32 = arith.constant 0 : i32
    %c0_i32_0 = arith.constant 0 : i32
    %c0_i32_1 = arith.constant 0 : i32
    %c0_i32_2 = arith.constant 0 : i32
    return %c0_i32, %c0_i32_0, %c0_i32_1 : i32, i32, i32
  }
  func.func @transform_13(%arg0: i32) -> (i32, i32) {
    %c0_i32 = arith.constant 0 : i32
    %c0_i32_0 = arith.constant 0 : i32
    %c0_i32_1 = arith.constant 0 : i32
    return %c0_i32, %c0_i32_0 : i32, i32
  }
  func.func @transform_14(%arg0: i32) -> (i32, i32, i32) {
    %c0_i32 = arith.constant 0 : i32
    %c0_i32_0 = arith.constant 0 : i32
    %c0_i32_1 = arith.constant 0 : i32
    %c0_i32_2 = arith.constant 0 : i32
    return %c0_i32, %c0_i32_0, %c0_i32_1 : i32, i32, i32
  }
  func.func @transform_15(%arg0: i32) -> (i32, i32) {
    %c0_i32 = arith.constant 0 : i32
    %c0_i32_0 = arith.constant 0 : i32
    %c0_i32_1 = arith.constant 0 : i32
    return %c0_i32, %c0_i32_0 : i32, i32
  }
  func.func @transform_16(%arg0: i32) -> (i32, i32) {
    %c0_i32 = arith.constant 0 : i32
    %c0_i32_0 = arith.constant 0 : i32
    %c0_i32_1 = arith.constant 0 : i32
    return %c0_i32, %c0_i32_0 : i32, i32
  }
  func.func @transform_17(%arg0: i32) -> (i32, i32, i32) {
    %c0_i32 = arith.constant 0 : i32
    %c0_i32_0 = arith.constant 0 : i32
    %c0_i32_1 = arith.constant 0 : i32
    %c0_i32_2 = arith.constant 0 : i32
    return %c0_i32, %c0_i32_0, %c0_i32_1 : i32, i32, i32
  }
  func.func @transform_18(%arg0: i32) -> (i32, i32, i32) {
    %c0_i32 = arith.constant 0 : i32
    %c0_i32_0 = arith.constant 0 : i32
    %c0_i32_1 = arith.constant 0 : i32
    %c0_i32_2 = arith.constant 0 : i32
    return %c0_i32, %c0_i32_0, %c0_i32_1 : i32, i32, i32
  }
  func.func @transform_19(%arg0: i32) -> (i32, i32) {
    %c0_i32 = arith.constant 0 : i32
    %c0_i32_0 = arith.constant 0 : i32
    %c0_i32_1 = arith.constant 0 : i32
    return %c0_i32, %c0_i32_0 : i32, i32
  }
  func.func @transform_20(%arg0: i32) -> (i32, i32, i32) {
    %c0_i32 = arith.constant 0 : i32
    %c0_i32_0 = arith.constant 0 : i32
    %c0_i32_1 = arith.constant 0 : i32
    %c0_i32_2 = arith.constant 0 : i32
    return %c0_i32, %c0_i32_0, %c0_i32_1 : i32, i32, i32
  }
  func.func @transform_21(%arg0: i32) -> (i32, i32) {
    %c0_i32 = arith.constant 0 : i32
    %c0_i32_0 = arith.constant 0 : i32
    %c0_i32_1 = arith.constant 0 : i32
    return %c0_i32, %c0_i32_0 : i32, i32
  }
  func.func @transform_22(%arg0: i32) -> (i32, i32, i32) {
    %c0_i32 = arith.constant 0 : i32
    %c0_i32_0 = arith.constant 0 : i32
    %c0_i32_1 = arith.constant 0 : i32
    %c0_i32_2 = arith.constant 0 : i32
    return %c0_i32, %c0_i32_0, %c0_i32_1 : i32, i32, i32
  }
  func.func @transform_23(%arg0: i32) -> (i32, i32) {
    %c0_i32 = arith.constant 0 : i32
    %c0_i32_0 = arith.constant 0 : i32
    %c0_i32_1 = arith.constant 0 : i32
    return %c0_i32, %c0_i32_0 : i32, i32
  }
  func.func @transform_24(%arg0: i32) -> (i32, i32, i32) {
    %c0_i32 = arith.constant 0 : i32
    %c0_i32_0 = arith.constant 0 : i32
    %c0_i32_1 = arith.constant 0 : i32
    %c0_i32_2 = arith.constant 0 : i32
    return %c0_i32, %c0_i32_0, %c0_i32_1 : i32, i32, i32
  }
  func.func @transform_25(%arg0: i32) -> (i32, i32) {
    %c0_i32 = arith.constant 0 : i32
    %c0_i32_0 = arith.constant 0 : i32
    %c0_i32_1 = arith.constant 0 : i32
    return %c0_i32, %c0_i32_0 : i32, i32
  }
  func.func @transform_26(%arg0: i32) -> (i32, i32) {
    %c0_i32 = arith.constant 0 : i32
    %c0_i32_0 = arith.constant 0 : i32
    %c0_i32_1 = arith.constant 0 : i32
    return %c0_i32, %c0_i32_0 : i32, i32
  }
  func.func @transform_27(%arg0: i32) -> (i32, i32, i32) {
    %c0_i32 = arith.constant 0 : i32
    %c0_i32_0 = arith.constant 0 : i32
    %c0_i32_1 = arith.constant 0 : i32
    %c0_i32_2 = arith.constant 0 : i32
    return %c0_i32, %c0_i32_0, %c0_i32_1 : i32, i32, i32
  }
  func.func @transform_28(%arg0: i32) -> (i32, i32, i32) {
    %c0_i32 = arith.constant 0 : i32
    %c0_i32_0 = arith.constant 0 : i32
    %c0_i32_1 = arith.constant 0 : i32
    %c0_i32_2 = arith.constant 0 : i32
    return %c0_i32, %c0_i32_0, %c0_i32_1 : i32, i32, i32
  }
  func.func @transform_29(%arg0: i32) -> (i32, i32) {
    %c0_i32 = arith.constant 0 : i32
    %c0_i32_0 = arith.constant 0 : i32
    %c0_i32_1 = arith.constant 0 : i32
    return %c0_i32, %c0_i32_0 : i32, i32
  }
  func.func @transform_30(%arg0: i32) -> (i32, i32, i32) {
    %c0_i32 = arith.constant 0 : i32
    %c0_i32_0 = arith.constant 0 : i32
    %c0_i32_1 = arith.constant 0 : i32
    %c0_i32_2 = arith.constant 0 : i32
    return %c0_i32, %c0_i32_0, %c0_i32_1 : i32, i32, i32
  }
  func.func @transform_31(%arg0: i32) -> (i32, i32) {
    %c0_i32 = arith.constant 0 : i32
    %c0_i32_0 = arith.constant 0 : i32
    %c0_i32_1 = arith.constant 0 : i32
    return %c0_i32, %c0_i32_0 : i32, i32
  }
  func.func @transform_32(%arg0: i32) -> (i32, i32, i32) {
    %c0_i32 = arith.constant 0 : i32
    %c0_i32_0 = arith.constant 0 : i32
    %c0_i32_1 = arith.constant 0 : i32
    return %arg0, %c0_i32, %c0_i32_0 : i32, i32, i32
  }
}

</mosaic_0001>

<llo_original>
// kernel: tile.48
$region0: #{tile.48}
  #allocation0 [shape = 's32[1]{0}', space=sflag, size = 0x4, scoped, tag = 'scoped memory for tile.48']
  %s0 = inlined_call_operand.vmem [shape: f32[8], index: 0, kind: input, shape index: {}]
  %s1 = inlined_call_operand.vmem [shape: f32[14,8], index: 1, kind: output, shape index: {}]
  // Predicated region
  $region2: #{tile.48} parent=0 // pred_check
    _
  $region3: #{tile.48} parent=0 // pred_check_branch
    %3 = sbr.rel (0) target = $region5
  $region4: #{tile.48} parent=0 // pred_region
    _
  $region5: #{tile.48} parent=0 // pred_fallthru
    _
  %v4 = vld [vmem:[%s0] ss:$0 sm:$0xff]
  %5 = vst [vmem:[%s1] sm:$0xff] %v4
  %s6 = scalar_lea.vmem %s1, 8
  %7 = vst [vmem:[%s6] sm:$0xff] %v4

// kernel: tile.49
$region0: #{tile.49}
  %s0 = inlined_call_operand.vmem [shape: f32[14,8], index: 0, kind: input, shape index: {}]
  %s1 = inlined_call_operand.vmem [shape: f32[1,112], index: 1, kind: output, shape index: {}]
  $region1: #{tile.49} parent=0
    #allocation0 [shape = 'u8[4096]{0}', space=vmem, size = 0x1000, scoped, tag = 'scoped mem for output reshape']
    %v2 = vld [vmem:[%s0] sm:$0x1]
    %vm3 = vcmask 64512
    %4 = vst.msk [vmem:[#allocation0] sm:$0x1] %vm3, %v2
    %s5 = scalar_lea.vmem %s0, 13
    %v6 = vld [vmem:[%s5] sm:$0x1]
    %7 = vrot.lane.b32.xlu0 %v6, 104
    %v8 = vpop.permute.xlu0 %7
    %vm9 = vcmask 917312
    %10 = vst.msk [vmem:[#allocation0] sm:$0x1] %vm9, %v8
    %s11 = scalar_lea.vmem %s0, 12
    %v12 = vld [vmem:[%s11] sm:$0x1]
    %13 = vrot.lane.b32.xlu0 %v12, 96
    %v14 = vpop.permute.xlu0 %13
    %vm15 = vcmask 851712
    %16 = vst.msk [vmem:[#allocation0] sm:$0x1] %vm15, %v14
    %s17 = scalar_lea.vmem %s0, 11
    %v18 = vld [vmem:[%s17] sm:$0x1]
    %19 = vrot.lane.b32.xlu0 %v18, 88
    %v20 = vpop.permute.xlu0 %19
    %vm21 = vcmask 786112
    %22 = vst.msk [vmem:[#allocation0] sm:$0x1] %vm21, %v20
    %s23 = scalar_lea.vmem %s0, 10
    %v24 = vld [vmem:[%s23] sm:$0x1]
    %25 = vrot.lane.b32.xlu0 %v24, 80
    %v26 = vpop.permute.xlu0 %25
    %vm27 = vcmask 720512
    %28 = vst.msk [vmem:[#allocation0] sm:$0x1] %vm27, %v26
    %s29 = scalar_lea.vmem %s0, 9
    %v30 = vld [vmem:[%s29] sm:$0x1]
    %31 = vrot.lane.b32.xlu0 %v30, 72
    %v32 = vpop.permute.xlu0 %31
    %vm33 = vcmask 654912
    %34 = vst.msk [vmem:[#allocation0] sm:$0x1] %vm33, %v32
    %s35 = scalar_lea.vmem %s0, 8
    %v36 = vld [vmem:[%s35] sm:$0x1]
    %37 = vrot.lane.b32.xlu0 %v36, 64
    %v38 = vpop.permute.xlu0 %37
    %vm39 = vcmask 589312
    %40 = vst.msk [vmem:[#allocation0] sm:$0x1] %vm39, %v38
    %s41 = scalar_lea.vmem %s0, 7
    %v42 = vld [vmem:[%s41] sm:$0x1]
    %43 = vrot.lane.b32.xlu0 %v42, 56
    %v44 = vpop.permute.xlu0 %43
    %vm45 = vcmask 523712
    %46 = vst.msk [vmem:[#allocation0] sm:$0x1] %vm45, %v44
    %s47 = scalar_lea.vmem %s0, 6
    %v48 = vld [vmem:[%s47] sm:$0x1]
    %49 = vrot.lane.b32.xlu0 %v48, 48
    %v50 = vpop.permute.xlu0 %49
    %vm51 = vcmask 458112
    %52 = vst.msk [vmem:[#allocation0] sm:$0x1] %vm51, %v50
    %s53 = scalar_lea.vmem %s0, 5
    %v54 = vld [vmem:[%s53] sm:$0x1]
    %55 = vrot.lane.b32.xlu0 %v54, 40
    %v56 = vpop.permute.xlu0 %55
    %vm57 = vcmask 392512
    %58 = vst.msk [vmem:[#allocation0] sm:$0x1] %vm57, %v56
    %s59 = scalar_lea.vmem %s0, 4
    %v60 = vld [vmem:[%s59] sm:$0x1]
    %61 = vrot.lane.b32.xlu0 %v60, 32
    %v62 = vpop.permute.xlu0 %61
    %vm63 = vcmask 326912
    %64 = vst.msk [vmem:[#allocation0] sm:$0x1] %vm63, %v62
    %s65 = scalar_lea.vmem %s0, 3
    %v66 = vld [vmem:[%s65] sm:$0x1]
    %67 = vrot.lane.b32.xlu0 %v66, 24
    %v68 = vpop.permute.xlu0 %67
    %vm69 = vcmask 261312
    %70 = vst.msk [vmem:[#allocation0] sm:$0x1] %vm69, %v68
    %s71 = scalar_lea.vmem %s0, 2
    %v72 = vld [vmem:[%s71] sm:$0x1]
    %73 = vrot.lane.b32.xlu0 %v72, 16
    %v74 = vpop.permute.xlu0 %73
    %vm75 = vcmask 195712
    %76 = vst.msk [vmem:[#allocation0] sm:$0x1] %vm75, %v74
    %s77 = scalar_lea.vmem %s0, 1
    %v78 = vld [vmem:[%s77] sm:$0x1]
    %79 = vrot.lane.b32.xlu0 %v78, 8
    %v80 = vpop.permute.xlu0 %79
    %vm81 = vcmask 130112
    %82 = vst.msk [vmem:[#allocation0] sm:$0x1] %vm81, %v80
    %s84 = sshllo.u32 0, 1
    %v86 = vld [vmem:[#allocation0] sm:%s84]
    %s87 = sshllo.u32 0, 1
    %88 = vst [vmem:[%s1] sm:%s87] %v86

// kernel: tile.63
$region0: #{tile.63}
  #allocation0 [shape = 's32[1]{0}', space=sflag, size = 0x4, scoped, tag = 'scoped memory for tile.63']
  %s0 = inlined_call_operand.vmem [shape: f32[8], index: 0, kind: input, shape index: {}]
  %s1 = inlined_call_operand.vmem [shape: f32[5,8], index: 1, kind: output, shape index: {}]
  // Predicated region
  $region2: #{tile.63} parent=0 // pred_check
    _
  $region3: #{tile.63} parent=0 // pred_check_branch
    %3 = sbr.rel (0) target = $region5
  $region4: #{tile.63} parent=0 // pred_region
    _
  $region5: #{tile.63} parent=0 // pred_fallthru
    _
  %v4 = vld [vmem:[%s0] ss:$0 sm:$0xff]
  %5 = vst [vmem:[%s1] sm:$0xff] %v4

// kernel: tile.64
$region0: #{tile.64}
  %s0 = inlined_call_operand.vmem [shape: f32[5,8], index: 0, kind: input, shape index: {}]
  %s1 = inlined_call_operand.vmem [shape: f32[1,40], index: 1, kind: output, shape index: {}]
  $region1: #{tile.64} parent=0
    #allocation0 [shape = 'u8[4096]{0}', space=vmem, size = 0x1000, scoped, tag = 'scoped mem for output reshape']
    %v2 = vld [vmem:[%s0] sm:$0x1]
    %vm3 = vcmask 64512
    %4 = vst.msk [vmem:[#allocation0] sm:$0x1] %vm3, %v2
    %s5 = scalar_lea.vmem %s0, 4
    %v6 = vld [vmem:[%s5] sm:$0x1]
    %7 = vrot.lane.b32.xlu0 %v6, 32
    %v8 = vpop.permute.xlu0 %7
    %vm9 = vcmask 326912
    %10 = vst.msk [vmem:[#allocation0] sm:$0x1] %vm9, %v8
    %s11 = scalar_lea.vmem %s0, 3
    %v12 = vld [vmem:[%s11] sm:$0x1]
    %13 = vrot.lane.b32.xlu0 %v12, 24
    %v14 = vpop.permute.xlu0 %13
    %vm15 = vcmask 261312
    %16 = vst.msk [vmem:[#allocation0] sm:$0x1] %vm15, %v14
    %s17 = scalar_lea.vmem %s0, 2
    %v18 = vld [vmem:[%s17] sm:$0x1]
    %19 = vrot.lane.b32.xlu0 %v18, 16
    %v20 = vpop.permute.xlu0 %19
    %vm21 = vcmask 195712
    %22 = vst.msk [vmem:[#allocation0] sm:$0x1] %vm21, %v20
    %s23 = scalar_lea.vmem %s0, 1
    %v24 = vld [vmem:[%s23] sm:$0x1]
    %25 = vrot.lane.b32.xlu0 %v24, 8
    %v26 = vpop.permute.xlu0 %25
    %vm27 = vcmask 130112
    %28 = vst.msk [vmem:[#allocation0] sm:$0x1] %vm27, %v26
    %s30 = sshllo.u32 0, 1
    %v32 = vld [vmem:[#allocation0] sm:%s30]
    %s33 = sshllo.u32 0, 1
    %34 = vst [vmem:[%s1] sm:%s33] %v32

// kernel: tile.68
$region0: #{tile.68}
  #allocation0 [shape = 's32[1]{0}', space=sflag, size = 0x4, scoped, tag = 'scoped memory for tile.68']
  %s0 = inlined_call_operand.vmem [shape: f32[8], index: 0, kind: input, shape index: {}]
  %s1 = inlined_call_operand.vmem [shape: f32[7,8], index: 1, kind: output, shape index: {}]
  // Predicated region
  $region2: #{tile.68} parent=0 // pred_check
    _
  $region3: #{tile.68} parent=0 // pred_check_branch
    %3 = sbr.rel (0) target = $region5
  $region4: #{tile.68} parent=0 // pred_region
    _
  $region5: #{tile.68} parent=0 // pred_fallthru
    _
  %v4 = vld [vmem:[%s0] ss:$0 sm:$0xff]
  %5 = vst [vmem:[%s1] sm:$0xff] %v4

// kernel: tile.69
$region0: #{tile.69}
  %s0 = inlined_call_operand.vmem [shape: f32[7,8], index: 0, kind: input, shape index: {}]
  %s1 = inlined_call_operand.vmem [shape: f32[1,56], index: 1, kind: output, shape index: {}]
  $region1: #{tile.69} parent=0
    #allocation0 [shape = 'u8[4096]{0}', space=vmem, size = 0x1000, scoped, tag = 'scoped mem for output reshape']
    %v2 = vld [vmem:[%s0] sm:$0x1]
    %vm3 = vcmask 64512
    %4 = vst.msk [vmem:[#allocation0] sm:$0x1] %vm3, %v2
    %s5 = scalar_lea.vmem %s0, 6
    %v6 = vld [vmem:[%s5] sm:$0x1]
    %7 = vrot.lane.b32.xlu0 %v6, 48
    %v8 = vpop.permute.xlu0 %7
    %vm9 = vcmask 458112
    %10 = vst.msk [vmem:[#allocation0] sm:$0x1] %vm9, %v8
    %s11 = scalar_lea.vmem %s0, 5
    %v12 = vld [vmem:[%s11] sm:$0x1]
    %13 = vrot.lane.b32.xlu0 %v12, 40
    %v14 = vpop.permute.xlu0 %13
    %vm15 = vcmask 392512
    %16 = vst.msk [vmem:[#allocation0] sm:$0x1] %vm15, %v14
    %s17 = scalar_lea.vmem %s0, 4
    %v18 = vld [vmem:[%s17] sm:$0x1]
    %19 = vrot.lane.b32.xlu0 %v18, 32
    %v20 = vpop.permute.xlu0 %19
    %vm21 = vcmask 326912
    %22 = vst.msk [vmem:[#allocation0] sm:$0x1] %vm21, %v20
    %s23 = scalar_lea.vmem %s0, 3
    %v24 = vld [vmem:[%s23] sm:$0x1]
    %25 = vrot.lane.b32.xlu0 %v24, 24
    %v26 = vpop.permute.xlu0 %25
    %vm27 = vcmask 261312
    %28 = vst.msk [vmem:[#allocation0] sm:$0x1] %vm27, %v26
    %s29 = scalar_lea.vmem %s0, 2
    %v30 = vld [vmem:[%s29] sm:$0x1]
    %31 = vrot.lane.b32.xlu0 %v30, 16
    %v32 = vpop.permute.xlu0 %31
    %vm33 = vcmask 195712
    %34 = vst.msk [vmem:[#allocation0] sm:$0x1] %vm33, %v32
    %s35 = scalar_lea.vmem %s0, 1
    %v36 = vld [vmem:[%s35] sm:$0x1]
    %37 = vrot.lane.b32.xlu0 %v36, 8
    %v38 = vpop.permute.xlu0 %37
    %vm39 = vcmask 130112
    %40 = vst.msk [vmem:[#allocation0] sm:$0x1] %vm39, %v38
    %s42 = sshllo.u32 0, 1
    %v44 = vld [vmem:[#allocation0] sm:%s42]
    %s45 = sshllo.u32 0, 1
    %46 = vst [vmem:[%s1] sm:%s45] %v44

// kernel: _lambda_.1
$region0: #{_lambda_.1}
  #allocation0 [shape = 'u32[]', space=smem, size = 0x4, offset = 0x4, fixed_abs, tag = 'smem constant byte address 0x4 - core index']
  #allocation1 [shape = 'u32[144,128]{1,0:T(1,128)}', space=vmem, size = 0x12000, scoped, tag = 'internal scratch']
  #allocation2 [shape = 'f32[1,1]{1,0:T(1,128)S(1)}', space=vmem, size = 0x200, scoped, tag = 'scoped memory for _lambda_.1']
  %s0 = inlined_call_operand.smem [shape: u32[33], index: -1, kind: input, shape index: {}]
  %s1 = sld [smem:[%s0]]
  %s2 = scalar_lea.smem %s0, 1
  %s3 = sld [smem:[%s2]]
  %s4 = scalar_lea.smem %s0, 2
  %s5 = sld [smem:[%s4]]
  %s6 = scalar_lea.smem %s0, 3
  %s7 = sld [smem:[%s6]]
  %s8 = scalar_lea.smem %s0, 4
  %s9 = sld [smem:[%s8]]
  %s10 = scalar_lea.smem %s0, 5
  %s11 = sld [smem:[%s10]]
  %s12 = scalar_lea.smem %s0, 6
  %s13 = sld [smem:[%s12]]
  %s14 = scalar_lea.smem %s0, 7
  %s15 = sld [smem:[%s14]]
  %s16 = scalar_lea.smem %s0, 8
  %s17 = sld [smem:[%s16]]
  %s18 = scalar_lea.smem %s0, 9
  %s19 = sld [smem:[%s18]]
  %s20 = scalar_lea.smem %s0, 10
  %s21 = sld [smem:[%s20]]
  %s22 = scalar_lea.smem %s0, 11
  %s23 = sld [smem:[%s22]]
  %s24 = scalar_lea.smem %s0, 12
  %s25 = sld [smem:[%s24]]
  %s26 = scalar_lea.smem %s0, 13
  %s27 = sld [smem:[%s26]]
  %s28 = scalar_lea.smem %s0, 14
  %s29 = sld [smem:[%s28]]
  %s30 = scalar_lea.smem %s0, 15
  %s31 = sld [smem:[%s30]]
  %s32 = scalar_lea.smem %s0, 16
  %s33 = sld [smem:[%s32]]
  %s34 = scalar_lea.smem %s0, 17
  %s35 = sld [smem:[%s34]]
  %s36 = scalar_lea.smem %s0, 18
  %s37 = sld [smem:[%s36]]
  %s38 = scalar_lea.smem %s0, 19
  %s39 = sld [smem:[%s38]]
  %s40 = scalar_lea.smem %s0, 20
  %s41 = sld [smem:[%s40]]
  %s42 = scalar_lea.smem %s0, 21
  %s43 = sld [smem:[%s42]]
  %s44 = scalar_lea.smem %s0, 22
  %s45 = sld [smem:[%s44]]
  %s46 = scalar_lea.smem %s0, 23
  %s47 = sld [smem:[%s46]]
  %s48 = scalar_lea.smem %s0, 24
  %s49 = sld [smem:[%s48]]
  %s50 = scalar_lea.smem %s0, 25
  %s51 = sld [smem:[%s50]]
  %s52 = scalar_lea.smem %s0, 26
  %s53 = sld [smem:[%s52]]
  %s54 = scalar_lea.smem %s0, 27
  %s55 = sld [smem:[%s54]]
  %s56 = scalar_lea.smem %s0, 28
  %s57 = sld [smem:[%s56]]
  %s58 = scalar_lea.smem %s0, 29
  %s59 = sld [smem:[%s58]]
  %s60 = scalar_lea.smem %s0, 30
  %s61 = sld [smem:[%s60]]
  %s62 = scalar_lea.smem %s0, 31
  %s63 = sld [smem:[%s62]]
  %s64 = scalar_lea.smem %s0, 32
  %s65 = sld [smem:[%s64]]
  %s66 = sld [smem:[#allocation0]]
  $region161: #{_lambda_.1} parent=0
    _
  %s68 = ssub.s32 1, %s66
  %s69 = scalar_select 0, %s68, %s66
  %v70 = vstv %s63
  %71 = vst [vmem:[#allocation2] sm:$0x1] %v70
  loop: start=0, step=1, limit=4
  $region2: #{_lambda_.1} parent=0 // loop_pre_header
    _
  $region3: #{_lambda_.1} parent=0 // loop_header
    %s73 = sphi 0, %s77
    %p74 = scmp.ge.s32.totalorder %s73, 4
    %s83 = sphi 0, %s85
    %s86 = sphi 0, %s83
    %s87 = sphi 0, %s86
    %s103 = sphi 0, %s87
    %s107 = sphi 0, %s107
    %s109 = sphi 0, %s107
    %s110 = sphi 0, %s109
    %s124 = sphi 0, %s110
    %s128 = sphi 0, %s128
    %s130 = sphi 0, %s128
    %s131 = sphi 0, %s130
    %s145 = sphi 0, %s131
    %s149 = sphi 0, %s149
    %s151 = sphi 0, %s149
    %s152 = sphi 0, %s151
    %s166 = sphi 0, %s152
    %s170 = sphi 0, %s170
    %s172 = sphi 0, %s170
    %s173 = sphi 0, %s172
    %s187 = sphi 0, %s173
    %s191 = sphi 0, %s191
    %s193 = sphi 0, %s191
    %s194 = sphi 0, %s193
    %s208 = sphi 0, %s194
    %s212 = sphi 0, %s212
    %s214 = sphi 0, %s212
    %s215 = sphi 0, %s214
    %s229 = sphi 0, %s215
    %s233 = sphi 0, %s233
    %s235 = sphi 0, %s233
    %s236 = sphi 0, %s235
    %s250 = sphi 0, %s236
    %s254 = sphi 0, %s254
    %s256 = sphi 0, %s254
    %s257 = sphi 0, %s256
    %s271 = sphi 0, %s257
    %s275 = sphi 0, %s275
    %s277 = sphi 0, %s275
    %s278 = sphi 0, %s277
    %s292 = sphi 0, %s278
    %s296 = sphi 0, %s296
    %s298 = sphi 0, %s296
    %s299 = sphi 0, %s298
    %s313 = sphi 0, %s299
    %s317 = sphi 0, %s317
    %s319 = sphi 0, %s317
    %s320 = sphi 0, %s319
    %s334 = sphi 0, %s320
    %s338 = sphi 0, %s338
    %s340 = sphi 0, %s338
    %s341 = sphi 0, %s340
    %s355 = sphi 0, %s341
    %s359 = sphi 0, %s359
    %s361 = sphi 0, %s359
    %s362 = sphi 0, %s361
    %s376 = sphi 0, %s362
    %s380 = sphi 0, %s380
    %s382 = sphi 0, %s380
    %s383 = sphi 0, %s382
    %s397 = sphi 0, %s383
    %s401 = sphi 0, %s401
    %s403 = sphi 0, %s401
    %s404 = sphi 0, %s403
    %s418 = sphi 0, %s404
    %s422 = sphi 0, %s422
    %s424 = sphi 0, %s422
    %s425 = sphi 0, %s424
    %s439 = sphi 0, %s425
    %s443 = sphi 0, %s443
    %s445 = sphi 0, %s443
    %s446 = sphi 0, %s445
    %s460 = sphi 0, %s446
    %s464 = sphi 0, %s464
    %s466 = sphi 0, %s464
    %s467 = sphi 0, %s466
    %s481 = sphi 0, %s467
    %s485 = sphi 0, %s485
    %s487 = sphi 0, %s485
    %s488 = sphi 0, %s487
    %s502 = sphi 0, %s488
    %s506 = sphi 0, %s506
    %s508 = sphi 0, %s506
    %s509 = sphi 0, %s508
    %s523 = sphi 0, %s509
    %s527 = sphi 0, %s527
    %s529 = sphi 0, %s527
    %s530 = sphi 0, %s529
    %s544 = sphi 0, %s530
    %s548 = sphi 0, %s548
    %s550 = sphi 0, %s548
    %s551 = sphi 0, %s550
    %s565 = sphi 0, %s551
    %s569 = sphi 0, %s569
    %s571 = sphi 0, %s569
    %s572 = sphi 0, %s571
    %s586 = sphi 0, %s572
    %s590 = sphi 0, %s590
    %s592 = sphi 0, %s590
    %s593 = sphi 0, %s592
    %s607 = sphi 0, %s593
    %s611 = sphi 0, %s611
    %s613 = sphi 0, %s611
    %s614 = sphi 0, %s613
    %s628 = sphi 0, %s614
    %s632 = sphi 0, %s632
    %s634 = sphi 0, %s632
    %s635 = sphi 0, %s634
    %s649 = sphi 0, %s635
    %s653 = sphi 0, %s653
    %s655 = sphi 0, %s653
    %s656 = sphi 0, %s655
    %s670 = sphi 0, %s656
    %s674 = sphi 0, %s674
    %s676 = sphi 0, %s674
    %s677 = sphi 0, %s676
    %s691 = sphi 0, %s677
    %s695 = sphi 0, %s695
    %s697 = sphi 0, %s695
    %s698 = sphi 0, %s697
    %s712 = sphi 0, %s698
    %s716 = sphi 0, %s716
    %s718 = sphi 0, %s716
    %s719 = sphi 0, %s718
    %s733 = sphi 0, %s719
    %s737 = sphi 0, %s737
    %s739 = sphi 0, %s737
    %s740 = sphi 0, %s739
    %s754 = sphi 0, %s740
    %s760 = sphi 0, %s762
    %s763 = sphi 0, %s760
    %s764 = sphi 0, %s763
    %s780 = sphi 0, %s764
  $region4: #{_lambda_.1} parent=0 // loop_header_branch
    %76 = sbr.rel (%p74) target = $region8
  $region5: #{_lambda_.1} parent=0 // loop_body
    %s78 = ssub.s32 %s73, 1
    %s79 = ssub.s32 %s73, 2
    %s80 = sadd.s32 %s73, 1
    %s81 = ssub.s32 %s73, %s80
    %p82 = scmp.eq.s32.totalorder %s81, 0
    %s84 = sadd.s32 %s83, 1
    %s85 = scalar_select %p82, %s83, %s84
    %p88 = pneg %p82
    %p89 = scmp.eq.s32.totalorder %s73, 1
    %p90 = por %p88, %p89
    %p91 = scmp.ne.s32.totalorder %s83, %s86
    %p92 = scmp.eq.s32.totalorder %s73, 0
    %p93 = por %p91, %p92
    %p94 = scmp.ne.s32.totalorder %s83, %s86
    %p95 = scmp.eq.s32.totalorder %s78, 1
    %p96 = por %p94, %p95
    %p97 = scmp.ne.s32.totalorder %s86, %s87
    %p98 = scmp.eq.s32.totalorder %s78, 0
    %p99 = por %p97, %p98
    %p100 = scmp.ne.s32.totalorder %s86, %s87
    %p101 = scmp.eq.s32.totalorder %s79, 1
    %p102 = por %p100, %p101
    %p104 = scmp.ne.s32.totalorder %s87, %s103
    %p105 = scmp.eq.s32.totalorder %s79, 0
    %p106 = por %p104, %p105
    %s108 = sadd.s32 %s107, 1
    %p111 = scmp.eq.s32.totalorder %s73, 1
    %p112 = scmp.ne.s32.totalorder %s107, %s109
    %p113 = scmp.eq.s32.totalorder %s73, 0
    %p114 = por %p112, %p113
    %p115 = scmp.ne.s32.totalorder %s107, %s109
    %p116 = scmp.eq.s32.totalorder %s78, 1
    %p117 = por %p115, %p116
    %p118 = scmp.ne.s32.totalorder %s109, %s110
    %p119 = scmp.eq.s32.totalorder %s78, 0
    %p120 = por %p118, %p119
    %p121 = scmp.ne.s32.totalorder %s109, %s110
    %p122 = scmp.eq.s32.totalorder %s79, 1
    %p123 = por %p121, %p122
    %p125 = scmp.ne.s32.totalorder %s110, %s124
    %p126 = scmp.eq.s32.totalorder %s79, 0
    %p127 = por %p125, %p126
    %s129 = sadd.s32 %s128, 1
    %p132 = scmp.eq.s32.totalorder %s73, 1
    %p133 = scmp.ne.s32.totalorder %s128, %s130
    %p134 = scmp.eq.s32.totalorder %s73, 0
    %p135 = por %p133, %p134
    %p136 = scmp.ne.s32.totalorder %s128, %s130
    %p137 = scmp.eq.s32.totalorder %s78, 1
    %p138 = por %p136, %p137
    %p139 = scmp.ne.s32.totalorder %s130, %s131
    %p140 = scmp.eq.s32.totalorder %s78, 0
    %p141 = por %p139, %p140
    %p142 = scmp.ne.s32.totalorder %s130, %s131
    %p143 = scmp.eq.s32.totalorder %s79, 1
    %p144 = por %p142, %p143
    %p146 = scmp.ne.s32.totalorder %s131, %s145
    %p147 = scmp.eq.s32.totalorder %s79, 0
    %p148 = por %p146, %p147
    %s150 = sadd.s32 %s149, 1
    %p153 = scmp.eq.s32.totalorder %s73, 1
    %p154 = scmp.ne.s32.totalorder %s149, %s151
    %p155 = scmp.eq.s32.totalorder %s73, 0
    %p156 = por %p154, %p155
    %p157 = scmp.ne.s32.totalorder %s149, %s151
    %p158 = scmp.eq.s32.totalorder %s78, 1
    %p159 = por %p157, %p158
    %p160 = scmp.ne.s32.totalorder %s151, %s152
    %p161 = scmp.eq.s32.totalorder %s78, 0
    %p162 = por %p160, %p161
    %p163 = scmp.ne.s32.totalorder %s151, %s152
    %p164 = scmp.eq.s32.totalorder %s79, 1
    %p165 = por %p163, %p164
    %p167 = scmp.ne.s32.totalorder %s152, %s166
    %p168 = scmp.eq.s32.totalorder %s79, 0
    %p169 = por %p167, %p168
    %s171 = sadd.s32 %s170, 1
    %p174 = scmp.eq.s32.totalorder %s73, 1
    %p175 = scmp.ne.s32.totalorder %s170, %s172
    %p176 = scmp.eq.s32.totalorder %s73, 0
    %p177 = por %p175, %p176
    %p178 = scmp.ne.s32.totalorder %s170, %s172
    %p179 = scmp.eq.s32.totalorder %s78, 1
    %p180 = por %p178, %p179
    %p181 = scmp.ne.s32.totalorder %s172, %s173
    %p182 = scmp.eq.s32.totalorder %s78, 0
    %p183 = por %p181, %p182
    %p184 = scmp.ne.s32.totalorder %s172, %s173
    %p185 = scmp.eq.s32.totalorder %s79, 1
    %p186 = por %p184, %p185
    %p188 = scmp.ne.s32.totalorder %s173, %s187
    %p189 = scmp.eq.s32.totalorder %s79, 0
    %p190 = por %p188, %p189
    %s192 = sadd.s32 %s191, 1
    %p195 = scmp.eq.s32.totalorder %s73, 1
    %p196 = scmp.ne.s32.totalorder %s191, %s193
    %p197 = scmp.eq.s32.totalorder %s73, 0
    %p198 = por %p196, %p197
    %p199 = scmp.ne.s32.totalorder %s191, %s193
    %p200 = scmp.eq.s32.totalorder %s78, 1
    %p201 = por %p199, %p200
    %p202 = scmp.ne.s32.totalorder %s193, %s194
    %p203 = scmp.eq.s32.totalorder %s78, 0
    %p204 = por %p202, %p203
    %p205 = scmp.ne.s32.totalorder %s193, %s194
    %p206 = scmp.eq.s32.totalorder %s79, 1
    %p207 = por %p205, %p206
    %p209 = scmp.ne.s32.totalorder %s194, %s208
    %p210 = scmp.eq.s32.totalorder %s79, 0
    %p211 = por %p209, %p210
    %s213 = sadd.s32 %s212, 1
    %p216 = scmp.eq.s32.totalorder %s73, 1
    %p217 = scmp.ne.s32.totalorder %s212, %s214
    %p218 = scmp.eq.s32.totalorder %s73, 0
    %p219 = por %p217, %p218
    %p220 = scmp.ne.s32.totalorder %s212, %s214
    %p221 = scmp.eq.s32.totalorder %s78, 1
    %p222 = por %p220, %p221
    %p223 = scmp.ne.s32.totalorder %s214, %s215
    %p224 = scmp.eq.s32.totalorder %s78, 0
    %p225 = por %p223, %p224
    %p226 = scmp.ne.s32.totalorder %s214, %s215
    %p227 = scmp.eq.s32.totalorder %s79, 1
    %p228 = por %p226, %p227
    %p230 = scmp.ne.s32.totalorder %s215, %s229
    %p231 = scmp.eq.s32.totalorder %s79, 0
    %p232 = por %p230, %p231
    %s234 = sadd.s32 %s233, 1
    %p237 = scmp.eq.s32.totalorder %s73, 1
    %p238 = scmp.ne.s32.totalorder %s233, %s235
    %p239 = scmp.eq.s32.totalorder %s73, 0
    %p240 = por %p238, %p239
    %p241 = scmp.ne.s32.totalorder %s233, %s235
    %p242 = scmp.eq.s32.totalorder %s78, 1
    %p243 = por %p241, %p242
    %p244 = scmp.ne.s32.totalorder %s235, %s236
    %p245 = scmp.eq.s32.totalorder %s78, 0
    %p246 = por %p244, %p245
    %p247 = scmp.ne.s32.totalorder %s235, %s236
    %p248 = scmp.eq.s32.totalorder %s79, 1
    %p249 = por %p247, %p248
    %p251 = scmp.ne.s32.totalorder %s236, %s250
    %p252 = scmp.eq.s32.totalorder %s79, 0
    %p253 = por %p251, %p252
    %s255 = sadd.s32 %s254, 1
    %p258 = scmp.eq.s32.totalorder %s73, 1
    %p259 = scmp.ne.s32.totalorder %s254, %s256
    %p260 = scmp.eq.s32.totalorder %s73, 0
    %p261 = por %p259, %p260
    %p262 = scmp.ne.s32.totalorder %s254, %s256
    %p263 = scmp.eq.s32.totalorder %s78, 1
    %p264 = por %p262, %p263
    %p265 = scmp.ne.s32.totalorder %s256, %s257
    %p266 = scmp.eq.s32.totalorder %s78, 0
    %p267 = por %p265, %p266
    %p268 = scmp.ne.s32.totalorder %s256, %s257
    %p269 = scmp.eq.s32.totalorder %s79, 1
    %p270 = por %p268, %p269
    %p272 = scmp.ne.s32.totalorder %s257, %s271
    %p273 = scmp.eq.s32.totalorder %s79, 0
    %p274 = por %p272, %p273
    %s276 = sadd.s32 %s275, 1
    %p279 = scmp.eq.s32.totalorder %s73, 1
    %p280 = scmp.ne.s32.totalorder %s275, %s277
    %p281 = scmp.eq.s32.totalorder %s73, 0
    %p282 = por %p280, %p281
    %p283 = scmp.ne.s32.totalorder %s275, %s277
    %p284 = scmp.eq.s32.totalorder %s78, 1
    %p285 = por %p283, %p284
    %p286 = scmp.ne.s32.totalorder %s277, %s278
    %p287 = scmp.eq.s32.totalorder %s78, 0
    %p288 = por %p286, %p287
    %p289 = scmp.ne.s32.totalorder %s277, %s278
    %p290 = scmp.eq.s32.totalorder %s79, 1
    %p291 = por %p289, %p290
    %p293 = scmp.ne.s32.totalorder %s278, %s292
    %p294 = scmp.eq.s32.totalorder %s79, 0
    %p295 = por %p293, %p294
    %s297 = sadd.s32 %s296, 1
    %p300 = scmp.eq.s32.totalorder %s73, 1
    %p301 = scmp.ne.s32.totalorder %s296, %s298
    %p302 = scmp.eq.s32.totalorder %s73, 0
    %p303 = por %p301, %p302
    %p304 = scmp.ne.s32.totalorder %s296, %s298
    %p305 = scmp.eq.s32.totalorder %s78, 1
    %p306 = por %p304, %p305
    %p307 = scmp.ne.s32.totalorder %s298, %s299
    %p308 = scmp.eq.s32.totalorder %s78, 0
    %p309 = por %p307, %p308
    %p310 = scmp.ne.s32.totalorder %s298, %s299
    %p311 = scmp.eq.s32.totalorder %s79, 1
    %p312 = por %p310, %p311
    %p314 = scmp.ne.s32.totalorder %s299, %s313
    %p315 = scmp.eq.s32.totalorder %s79, 0
    %p316 = por %p314, %p315
    %s318 = sadd.s32 %s317, 1
    %p321 = scmp.eq.s32.totalorder %s73, 1
    %p322 = scmp.ne.s32.totalorder %s317, %s319
    %p323 = scmp.eq.s32.totalorder %s73, 0
    %p324 = por %p322, %p323
    %p325 = scmp.ne.s32.totalorder %s317, %s319
    %p326 = scmp.eq.s32.totalorder %s78, 1
    %p327 = por %p325, %p326
    %p328 = scmp.ne.s32.totalorder %s319, %s320
    %p329 = scmp.eq.s32.totalorder %s78, 0
    %p330 = por %p328, %p329
    %p331 = scmp.ne.s32.totalorder %s319, %s320
    %p332 = scmp.eq.s32.totalorder %s79, 1
    %p333 = por %p331, %p332
    %p335 = scmp.ne.s32.totalorder %s320, %s334
    %p336 = scmp.eq.s32.totalorder %s79, 0
    %p337 = por %p335, %p336
    %s339 = sadd.s32 %s338, 1
    %p342 = scmp.eq.s32.totalorder %s73, 1
    %p343 = scmp.ne.s32.totalorder %s338, %s340
    %p344 = scmp.eq.s32.totalorder %s73, 0
    %p345 = por %p343, %p344
    %p346 = scmp.ne.s32.totalorder %s338, %s340
    %p347 = scmp.eq.s32.totalorder %s78, 1
    %p348 = por %p346, %p347
    %p349 = scmp.ne.s32.totalorder %s340, %s341
    %p350 = scmp.eq.s32.totalorder %s78, 0
    %p351 = por %p349, %p350
    %p352 = scmp.ne.s32.totalorder %s340, %s341
    %p353 = scmp.eq.s32.totalorder %s79, 1
    %p354 = por %p352, %p353
    %p356 = scmp.ne.s32.totalorder %s341, %s355
    %p357 = scmp.eq.s32.totalorder %s79, 0
    %p358 = por %p356, %p357
    %s360 = sadd.s32 %s359, 1
    %p363 = scmp.eq.s32.totalorder %s73, 1
    %p364 = scmp.ne.s32.totalorder %s359, %s361
    %p365 = scmp.eq.s32.totalorder %s73, 0
    %p366 = por %p364, %p365
    %p367 = scmp.ne.s32.totalorder %s359, %s361
    %p368 = scmp.eq.s32.totalorder %s78, 1
    %p369 = por %p367, %p368
    %p370 = scmp.ne.s32.totalorder %s361, %s362
    %p371 = scmp.eq.s32.totalorder %s78, 0
    %p372 = por %p370, %p371
    %p373 = scmp.ne.s32.totalorder %s361, %s362
    %p374 = scmp.eq.s32.totalorder %s79, 1
    %p375 = por %p373, %p374
    %p377 = scmp.ne.s32.totalorder %s362, %s376
    %p378 = scmp.eq.s32.totalorder %s79, 0
    %p379 = por %p377, %p378
    %s381 = sadd.s32 %s380, 1
    %p384 = scmp.eq.s32.totalorder %s73, 1
    %p385 = scmp.ne.s32.totalorder %s380, %s382
    %p386 = scmp.eq.s32.totalorder %s73, 0
    %p387 = por %p385, %p386
    %p388 = scmp.ne.s32.totalorder %s380, %s382
    %p389 = scmp.eq.s32.totalorder %s78, 1
    %p390 = por %p388, %p389
    %p391 = scmp.ne.s32.totalorder %s382, %s383
    %p392 = scmp.eq.s32.totalorder %s78, 0
    %p393 = por %p391, %p392
    %p394 = scmp.ne.s32.totalorder %s382, %s383
    %p395 = scmp.eq.s32.totalorder %s79, 1
    %p396 = por %p394, %p395
    %p398 = scmp.ne.s32.totalorder %s383, %s397
    %p399 = scmp.eq.s32.totalorder %s79, 0
    %p400 = por %p398, %p399
    %s402 = sadd.s32 %s401, 1
    %p405 = scmp.eq.s32.totalorder %s73, 1
    %p406 = scmp.ne.s32.totalorder %s401, %s403
    %p407 = scmp.eq.s32.totalorder %s73, 0
    %p408 = por %p406, %p407
    %p409 = scmp.ne.s32.totalorder %s401, %s403
    %p410 = scmp.eq.s32.totalorder %s78, 1
    %p411 = por %p409, %p410
    %p412 = scmp.ne.s32.totalorder %s403, %s404
    %p413 = scmp.eq.s32.totalorder %s78, 0
    %p414 = por %p412, %p413
    %p415 = scmp.ne.s32.totalorder %s403, %s404
    %p416 = scmp.eq.s32.totalorder %s79, 1
    %p417 = por %p415, %p416
    %p419 = scmp.ne.s32.totalorder %s404, %s418
    %p420 = scmp.eq.s32.totalorder %s79, 0
    %p421 = por %p419, %p420
    %s423 = sadd.s32 %s422, 1
    %p426 = scmp.eq.s32.totalorder %s73, 1
    %p427 = scmp.ne.s32.totalorder %s422, %s424
    %p428 = scmp.eq.s32.totalorder %s73, 0
    %p429 = por %p427, %p428
    %p430 = scmp.ne.s32.totalorder %s422, %s424
    %p431 = scmp.eq.s32.totalorder %s78, 1
    %p432 = por %p430, %p431
    %p433 = scmp.ne.s32.totalorder %s424, %s425
    %p434 = scmp.eq.s32.totalorder %s78, 0
    %p435 = por %p433, %p434
    %p436 = scmp.ne.s32.totalorder %s424, %s425
    %p437 = scmp.eq.s32.totalorder %s79, 1
    %p438 = por %p436, %p437
    %p440 = scmp.ne.s32.totalorder %s425, %s439
    %p441 = scmp.eq.s32.totalorder %s79, 0
    %p442 = por %p440, %p441
    %s444 = sadd.s32 %s443, 1
    %p447 = scmp.eq.s32.totalorder %s73, 1
    %p448 = scmp.ne.s32.totalorder %s443, %s445
    %p449 = scmp.eq.s32.totalorder %s73, 0
    %p450 = por %p448, %p449
    %p451 = scmp.ne.s32.totalorder %s443, %s445
    %p452 = scmp.eq.s32.totalorder %s78, 1
    %p453 = por %p451, %p452
    %p454 = scmp.ne.s32.totalorder %s445, %s446
    %p455 = scmp.eq.s32.totalorder %s78, 0
    %p456 = por %p454, %p455
    %p457 = scmp.ne.s32.totalorder %s445, %s446
    %p458 = scmp.eq.s32.totalorder %s79, 1
    %p459 = por %p457, %p458
    %p461 = scmp.ne.s32.totalorder %s446, %s460
    %p462 = scmp.eq.s32.totalorder %s79, 0
    %p463 = por %p461, %p462
    %s465 = sadd.s32 %s464, 1
    %p468 = scmp.eq.s32.totalorder %s73, 1
    %p469 = scmp.ne.s32.totalorder %s464, %s466
    %p470 = scmp.eq.s32.totalorder %s73, 0
    %p471 = por %p469, %p470
    %p472 = scmp.ne.s32.totalorder %s464, %s466
    %p473 = scmp.eq.s32.totalorder %s78, 1
    %p474 = por %p472, %p473
    %p475 = scmp.ne.s32.totalorder %s466, %s467
    %p476 = scmp.eq.s32.totalorder %s78, 0
    %p477 = por %p475, %p476
    %p478 = scmp.ne.s32.totalorder %s466, %s467
    %p479 = scmp.eq.s32.totalorder %s79, 1
    %p480 = por %p478, %p479
    %p482 = scmp.ne.s32.totalorder %s467, %s481
    %p483 = scmp.eq.s32.totalorder %s79, 0
    %p484 = por %p482, %p483
    %s486 = sadd.s32 %s485, 1
    %p489 = scmp.eq.s32.totalorder %s73, 1
    %p490 = scmp.ne.s32.totalorder %s485, %s487
    %p491 = scmp.eq.s32.totalorder %s73, 0
    %p492 = por %p490, %p491
    %p493 = scmp.ne.s32.totalorder %s485, %s487
    %p494 = scmp.eq.s32.totalorder %s78, 1
    %p495 = por %p493, %p494
    %p496 = scmp.ne.s32.totalorder %s487, %s488
    %p497 = scmp.eq.s32.totalorder %s78, 0
    %p498 = por %p496, %p497
    %p499 = scmp.ne.s32.totalorder %s487, %s488
    %p500 = scmp.eq.s32.totalorder %s79, 1
    %p501 = por %p499, %p500
    %p503 = scmp.ne.s32.totalorder %s488, %s502
    %p504 = scmp.eq.s32.totalorder %s79, 0
    %p505 = por %p503, %p504
    %s507 = sadd.s32 %s506, 1
    %p510 = scmp.eq.s32.totalorder %s73, 1
    %p511 = scmp.ne.s32.totalorder %s506, %s508
    %p512 = scmp.eq.s32.totalorder %s73, 0
    %p513 = por %p511, %p512
    %p514 = scmp.ne.s32.totalorder %s506, %s508
    %p515 = scmp.eq.s32.totalorder %s78, 1
    %p516 = por %p514, %p515
    %p517 = scmp.ne.s32.totalorder %s508, %s509
    %p518 = scmp.eq.s32.totalorder %s78, 0
    %p519 = por %p517, %p518
    %p520 = scmp.ne.s32.totalorder %s508, %s509
    %p521 = scmp.eq.s32.totalorder %s79, 1
    %p522 = por %p520, %p521
    %p524 = scmp.ne.s32.totalorder %s509, %s523
    %p525 = scmp.eq.s32.totalorder %s79, 0
    %p526 = por %p524, %p525
    %s528 = sadd.s32 %s527, 1
    %p531 = scmp.eq.s32.totalorder %s73, 1
    %p532 = scmp.ne.s32.totalorder %s527, %s529
    %p533 = scmp.eq.s32.totalorder %s73, 0
    %p534 = por %p532, %p533
    %p535 = scmp.ne.s32.totalorder %s527, %s529
    %p536 = scmp.eq.s32.totalorder %s78, 1
    %p537 = por %p535, %p536
    %p538 = scmp.ne.s32.totalorder %s529, %s530
    %p539 = scmp.eq.s32.totalorder %s78, 0
    %p540 = por %p538, %p539
    %p541 = scmp.ne.s32.totalorder %s529, %s530
    %p542 = scmp.eq.s32.totalorder %s79, 1
    %p543 = por %p541, %p542
    %p545 = scmp.ne.s32.totalorder %s530, %s544
    %p546 = scmp.eq.s32.totalorder %s79, 0
    %p547 = por %p545, %p546
    %s549 = sadd.s32 %s548, 1
    %p552 = scmp.eq.s32.totalorder %s73, 1
    %p553 = scmp.ne.s32.totalorder %s548, %s550
    %p554 = scmp.eq.s32.totalorder %s73, 0
    %p555 = por %p553, %p554
    %p556 = scmp.ne.s32.totalorder %s548, %s550
    %p557 = scmp.eq.s32.totalorder %s78, 1
    %p558 = por %p556, %p557
    %p559 = scmp.ne.s32.totalorder %s550, %s551
    %p560 = scmp.eq.s32.totalorder %s78, 0
    %p561 = por %p559, %p560
    %p562 = scmp.ne.s32.totalorder %s550, %s551
    %p563 = scmp.eq.s32.totalorder %s79, 1
    %p564 = por %p562, %p563
    %p566 = scmp.ne.s32.totalorder %s551, %s565
    %p567 = scmp.eq.s32.totalorder %s79, 0
    %p568 = por %p566, %p567
    %s570 = sadd.s32 %s569, 1
    %p573 = scmp.eq.s32.totalorder %s73, 1
    %p574 = scmp.ne.s32.totalorder %s569, %s571
    %p575 = scmp.eq.s32.totalorder %s73, 0
    %p576 = por %p574, %p575
    %p577 = scmp.ne.s32.totalorder %s569, %s571
    %p578 = scmp.eq.s32.totalorder %s78, 1
    %p579 = por %p577, %p578
    %p580 = scmp.ne.s32.totalorder %s571, %s572
    %p581 = scmp.eq.s32.totalorder %s78, 0
    %p582 = por %p580, %p581
    %p583 = scmp.ne.s32.totalorder %s571, %s572
    %p584 = scmp.eq.s32.totalorder %s79, 1
    %p585 = por %p583, %p584
    %p587 = scmp.ne.s32.totalorder %s572, %s586
    %p588 = scmp.eq.s32.totalorder %s79, 0
    %p589 = por %p587, %p588
    %s591 = sadd.s32 %s590, 1
    %p594 = scmp.eq.s32.totalorder %s73, 1
    %p595 = scmp.ne.s32.totalorder %s590, %s592
    %p596 = scmp.eq.s32.totalorder %s73, 0
    %p597 = por %p595, %p596
    %p598 = scmp.ne.s32.totalorder %s590, %s592
    %p599 = scmp.eq.s32.totalorder %s78, 1
    %p600 = por %p598, %p599
    %p601 = scmp.ne.s32.totalorder %s592, %s593
    %p602 = scmp.eq.s32.totalorder %s78, 0
    %p603 = por %p601, %p602
    %p604 = scmp.ne.s32.totalorder %s592, %s593
    %p605 = scmp.eq.s32.totalorder %s79, 1
    %p606 = por %p604, %p605
    %p608 = scmp.ne.s32.totalorder %s593, %s607
    %p609 = scmp.eq.s32.totalorder %s79, 0
    %p610 = por %p608, %p609
    %s612 = sadd.s32 %s611, 1
    %p615 = scmp.eq.s32.totalorder %s73, 1
    %p616 = scmp.ne.s32.totalorder %s611, %s613
    %p617 = scmp.eq.s32.totalorder %s73, 0
    %p618 = por %p616, %p617
    %p619 = scmp.ne.s32.totalorder %s611, %s613
    %p620 = scmp.eq.s32.totalorder %s78, 1
    %p621 = por %p619, %p620
    %p622 = scmp.ne.s32.totalorder %s613, %s614
    %p623 = scmp.eq.s32.totalorder %s78, 0
    %p624 = por %p622, %p623
    %p625 = scmp.ne.s32.totalorder %s613, %s614
    %p626 = scmp.eq.s32.totalorder %s79, 1
    %p627 = por %p625, %p626
    %p629 = scmp.ne.s32.totalorder %s614, %s628
    %p630 = scmp.eq.s32.totalorder %s79, 0
    %p631 = por %p629, %p630
    %s633 = sadd.s32 %s632, 1
    %p636 = scmp.eq.s32.totalorder %s73, 1
    %p637 = scmp.ne.s32.totalorder %s632, %s634
    %p638 = scmp.eq.s32.totalorder %s73, 0
    %p639 = por %p637, %p638
    %p640 = scmp.ne.s32.totalorder %s632, %s634
    %p641 = scmp.eq.s32.totalorder %s78, 1
    %p642 = por %p640, %p641
    %p643 = scmp.ne.s32.totalorder %s634, %s635
    %p644 = scmp.eq.s32.totalorder %s78, 0
    %p645 = por %p643, %p644
    %p646 = scmp.ne.s32.totalorder %s634, %s635
    %p647 = scmp.eq.s32.totalorder %s79, 1
    %p648 = por %p646, %p647
    %p650 = scmp.ne.s32.totalorder %s635, %s649
    %p651 = scmp.eq.s32.totalorder %s79, 0
    %p652 = por %p650, %p651
    %s654 = sadd.s32 %s653, 1
    %p657 = scmp.eq.s32.totalorder %s73, 1
    %p658 = scmp.ne.s32.totalorder %s653, %s655
    %p659 = scmp.eq.s32.totalorder %s73, 0
    %p660 = por %p658, %p659
    %p661 = scmp.ne.s32.totalorder %s653, %s655
    %p662 = scmp.eq.s32.totalorder %s78, 1
    %p663 = por %p661, %p662
    %p664 = scmp.ne.s32.totalorder %s655, %s656
    %p665 = scmp.eq.s32.totalorder %s78, 0
    %p666 = por %p664, %p665
    %p667 = scmp.ne.s32.totalorder %s655, %s656
    %p668 = scmp.eq.s32.totalorder %s79, 1
    %p669 = por %p667, %p668
    %p671 = scmp.ne.s32.totalorder %s656, %s670
    %p672 = scmp.eq.s32.totalorder %s79, 0
    %p673 = por %p671, %p672
    %s675 = sadd.s32 %s674, 1
    %p678 = scmp.eq.s32.totalorder %s73, 1
    %p679 = scmp.ne.s32.totalorder %s674, %s676
    %p680 = scmp.eq.s32.totalorder %s73, 0
    %p681 = por %p679, %p680
    %p682 = scmp.ne.s32.totalorder %s674, %s676
    %p683 = scmp.eq.s32.totalorder %s78, 1
    %p684 = por %p682, %p683
    %p685 = scmp.ne.s32.totalorder %s676, %s677
    %p686 = scmp.eq.s32.totalorder %s78, 0
    %p687 = por %p685, %p686
    %p688 = scmp.ne.s32.totalorder %s676, %s677
    %p689 = scmp.eq.s32.totalorder %s79, 1
    %p690 = por %p688, %p689
    %p692 = scmp.ne.s32.totalorder %s677, %s691
    %p693 = scmp.eq.s32.totalorder %s79, 0
    %p694 = por %p692, %p693
    %s696 = sadd.s32 %s695, 1
    %p699 = scmp.eq.s32.totalorder %s73, 1
    %p700 = scmp.ne.s32.totalorder %s695, %s697
    %p701 = scmp.eq.s32.totalorder %s73, 0
    %p702 = por %p700, %p701
    %p703 = scmp.ne.s32.totalorder %s695, %s697
    %p704 = scmp.eq.s32.totalorder %s78, 1
    %p705 = por %p703, %p704
    %p706 = scmp.ne.s32.totalorder %s697, %s698
    %p707 = scmp.eq.s32.totalorder %s78, 0
    %p708 = por %p706, %p707
    %p709 = scmp.ne.s32.totalorder %s697, %s698
    %p710 = scmp.eq.s32.totalorder %s79, 1
    %p711 = por %p709, %p710
    %p713 = scmp.ne.s32.totalorder %s698, %s712
    %p714 = scmp.eq.s32.totalorder %s79, 0
    %p715 = por %p713, %p714
    %s717 = sadd.s32 %s716, 1
    %p720 = scmp.eq.s32.totalorder %s73, 1
    %p721 = scmp.ne.s32.totalorder %s716, %s718
    %p722 = scmp.eq.s32.totalorder %s73, 0
    %p723 = por %p721, %p722
    %p724 = scmp.ne.s32.totalorder %s716, %s718
    %p725 = scmp.eq.s32.totalorder %s78, 1
    %p726 = por %p724, %p725
    %p727 = scmp.ne.s32.totalorder %s718, %s719
    %p728 = scmp.eq.s32.totalorder %s78, 0
    %p729 = por %p727, %p728
    %p730 = scmp.ne.s32.totalorder %s718, %s719
    %p731 = scmp.eq.s32.totalorder %s79, 1
    %p732 = por %p730, %p731
    %p734 = scmp.ne.s32.totalorder %s719, %s733
    %p735 = scmp.eq.s32.totalorder %s79, 0
    %p736 = por %p734, %p735
    %s738 = sadd.s32 %s737, 1
    %p741 = scmp.eq.s32.totalorder %s73, 1
    %p742 = scmp.ne.s32.totalorder %s737, %s739
    %p743 = scmp.eq.s32.totalorder %s73, 0
    %p744 = por %p742, %p743
    %p745 = scmp.ne.s32.totalorder %s737, %s739
    %p746 = scmp.eq.s32.totalorder %s78, 1
    %p747 = por %p745, %p746
    %p748 = scmp.ne.s32.totalorder %s739, %s740
    %p749 = scmp.eq.s32.totalorder %s78, 0
    %p750 = por %p748, %p749
    %p751 = scmp.ne.s32.totalorder %s739, %s740
    %p752 = scmp.eq.s32.totalorder %s79, 1
    %p753 = por %p751, %p752
    %p755 = scmp.ne.s32.totalorder %s740, %s754
    %p756 = scmp.eq.s32.totalorder %s79, 0
    %p757 = por %p755, %p756
    %s758 = ssub.s32 %s73, %s80
    %p759 = scmp.eq.s32.totalorder %s758, 0
    %s761 = sadd.s32 %s760, 1
    %s762 = scalar_select %p759, %s760, %s761
    %p765 = pneg %p759
    %p766 = scmp.eq.s32.totalorder %s73, 1
    %p767 = por %p765, %p766
    %p768 = scmp.ne.s32.totalorder %s760, %s763
    %p769 = scmp.eq.s32.totalorder %s73, 0
    %p770 = por %p768, %p769
    %p771 = scmp.ne.s32.totalorder %s760, %s763
    %p772 = scmp.eq.s32.totalorder %s78, 1
    %p773 = por %p771, %p772
    %p774 = scmp.ne.s32.totalorder %s763, %s764
    %p775 = scmp.eq.s32.totalorder %s78, 0
    %p776 = por %p774, %p775
    %p777 = scmp.ne.s32.totalorder %s763, %s764
    %p778 = scmp.eq.s32.totalorder %s79, 1
    %p779 = por %p777, %p778
    %p781 = scmp.ne.s32.totalorder %s764, %s780
    %p782 = scmp.eq.s32.totalorder %s79, 0
    %p783 = por %p781, %p782
    %p784 = scmp.le.s32.totalorder 1, %s73
    %p785 = scmp.lt.s32.totalorder %s73, 3
    %p786 = pnand %p784, %p785
    %p787 = pneg %p786
    // Predicated region
    $region9: #{_lambda_.1} parent=5 // pred_check
      _
    $region10: #{_lambda_.1} parent=5 // pred_check_branch
      %789 = sbr.rel (%p786) target = $region12
    $region11: #{_lambda_.1} parent=5 // pred_region
      %s790 = ssub.s32 %s73, 1
      // Predicated region
      $region13: #{_lambda_.1} parent=11 // pred_check
        %p791 = pneg %p120
      $region14: #{_lambda_.1} parent=11 // pred_check_branch
        %793 = sbr.rel (%p791) target = $region16
      $region15: #{_lambda_.1} parent=11 // pred_region
        _
      $region16: #{_lambda_.1} parent=11 // pred_fallthru
        _
      // Predicated region
      $region17: #{_lambda_.1} parent=11 // pred_check
        %p794 = pneg %p141
      $region18: #{_lambda_.1} parent=11 // pred_check_branch
        %796 = sbr.rel (%p794) target = $region20
      $region19: #{_lambda_.1} parent=11 // pred_region
        _
      $region20: #{_lambda_.1} parent=11 // pred_fallthru
        _
      // Predicated region
      $region21: #{_lambda_.1} parent=11 // pred_check
        %p797 = pneg %p162
      $region22: #{_lambda_.1} parent=11 // pred_check_branch
        %799 = sbr.rel (%p797) target = $region24
      $region23: #{_lambda_.1} parent=11 // pred_region
        _
      $region24: #{_lambda_.1} parent=11 // pred_fallthru
        _
      // Predicated region
      $region25: #{_lambda_.1} parent=11 // pred_check
        %p800 = pneg %p183
      $region26: #{_lambda_.1} parent=11 // pred_check_branch
        %802 = sbr.rel (%p800) target = $region28
      $region27: #{_lambda_.1} parent=11 // pred_region
        _
      $region28: #{_lambda_.1} parent=11 // pred_fallthru
        _
      // Predicated region
      $region29: #{_lambda_.1} parent=11 // pred_check
        %p803 = pneg %p204
      $region30: #{_lambda_.1} parent=11 // pred_check_branch
        %805 = sbr.rel (%p803) target = $region32
      $region31: #{_lambda_.1} parent=11 // pred_region
        _
      $region32: #{_lambda_.1} parent=11 // pred_fallthru
        _
      // Predicated region
      $region33: #{_lambda_.1} parent=11 // pred_check
        %p806 = pneg %p225
      $region34: #{_lambda_.1} parent=11 // pred_check_branch
        %808 = sbr.rel (%p806) target = $region36
      $region35: #{_lambda_.1} parent=11 // pred_region
        _
      $region36: #{_lambda_.1} parent=11 // pred_fallthru
        _
      // Predicated region
      $region37: #{_lambda_.1} parent=11 // pred_check
        %p809 = pneg %p246
      $region38: #{_lambda_.1} parent=11 // pred_check_branch
        %811 = sbr.rel (%p809) target = $region40
      $region39: #{_lambda_.1} parent=11 // pred_region
        _
      $region40: #{_lambda_.1} parent=11 // pred_fallthru
        _
      // Predicated region
      $region41: #{_lambda_.1} parent=11 // pred_check
        %p812 = pneg %p267
      $region42: #{_lambda_.1} parent=11 // pred_check_branch
        %814 = sbr.rel (%p812) target = $region44
      $region43: #{_lambda_.1} parent=11 // pred_region
        _
      $region44: #{_lambda_.1} parent=11 // pred_fallthru
        _
      // Predicated region
      $region45: #{_lambda_.1} parent=11 // pred_check
        %p815 = pneg %p288
      $region46: #{_lambda_.1} parent=11 // pred_check_branch
        %817 = sbr.rel (%p815) target = $region48
      $region47: #{_lambda_.1} parent=11 // pred_region
        _
      $region48: #{_lambda_.1} parent=11 // pred_fallthru
        _
      // Predicated region
      $region49: #{_lambda_.1} parent=11 // pred_check
        %p818 = pneg %p309
      $region50: #{_lambda_.1} parent=11 // pred_check_branch
        %820 = sbr.rel (%p818) target = $region52
      $region51: #{_lambda_.1} parent=11 // pred_region
        _
      $region52: #{_lambda_.1} parent=11 // pred_fallthru
        _
      // Predicated region
      $region53: #{_lambda_.1} parent=11 // pred_check
        %p821 = pneg %p330
      $region54: #{_lambda_.1} parent=11 // pred_check_branch
        %823 = sbr.rel (%p821) target = $region56
      $region55: #{_lambda_.1} parent=11 // pred_region
        _
      $region56: #{_lambda_.1} parent=11 // pred_fallthru
        _
      // Predicated region
      $region57: #{_lambda_.1} parent=11 // pred_check
        %p824 = pneg %p351
      $region58: #{_lambda_.1} parent=11 // pred_check_branch
        %826 = sbr.rel (%p824) target = $region60
      $region59: #{_lambda_.1} parent=11 // pred_region
        _
      $region60: #{_lambda_.1} parent=11 // pred_fallthru
        _
      // Predicated region
      $region61: #{_lambda_.1} parent=11 // pred_check
        %p827 = pneg %p372
      $region62: #{_lambda_.1} parent=11 // pred_check_branch
        %829 = sbr.rel (%p827) target = $region64
      $region63: #{_lambda_.1} parent=11 // pred_region
        _
      $region64: #{_lambda_.1} parent=11 // pred_fallthru
        _
      // Predicated region
      $region65: #{_lambda_.1} parent=11 // pred_check
        %p830 = pneg %p393
      $region66: #{_lambda_.1} parent=11 // pred_check_branch
        %832 = sbr.rel (%p830) target = $region68
      $region67: #{_lambda_.1} parent=11 // pred_region
        _
      $region68: #{_lambda_.1} parent=11 // pred_fallthru
        _
      // Predicated region
      $region69: #{_lambda_.1} parent=11 // pred_check
        %p833 = pneg %p414
      $region70: #{_lambda_.1} parent=11 // pred_check_branch
        %835 = sbr.rel (%p833) target = $region72
      $region71: #{_lambda_.1} parent=11 // pred_region
        _
      $region72: #{_lambda_.1} parent=11 // pred_fallthru
        _
      // Predicated region
      $region73: #{_lambda_.1} parent=11 // pred_check
        %p836 = pneg %p435
      $region74: #{_lambda_.1} parent=11 // pred_check_branch
        %838 = sbr.rel (%p836) target = $region76
      $region75: #{_lambda_.1} parent=11 // pred_region
        _
      $region76: #{_lambda_.1} parent=11 // pred_fallthru
        _
      // Predicated region
      $region77: #{_lambda_.1} parent=11 // pred_check
        %p839 = pneg %p456
      $region78: #{_lambda_.1} parent=11 // pred_check_branch
        %841 = sbr.rel (%p839) target = $region80
      $region79: #{_lambda_.1} parent=11 // pred_region
        _
      $region80: #{_lambda_.1} parent=11 // pred_fallthru
        _
      // Predicated region
      $region81: #{_lambda_.1} parent=11 // pred_check
        %p842 = pneg %p477
      $region82: #{_lambda_.1} parent=11 // pred_check_branch
        %844 = sbr.rel (%p842) target = $region84
      $region83: #{_lambda_.1} parent=11 // pred_region
        _
      $region84: #{_lambda_.1} parent=11 // pred_fallthru
        _
      // Predicated region
      $region85: #{_lambda_.1} parent=11 // pred_check
        %p845 = pneg %p498
      $region86: #{_lambda_.1} parent=11 // pred_check_branch
        %847 = sbr.rel (%p845) target = $region88
      $region87: #{_lambda_.1} parent=11 // pred_region
        _
      $region88: #{_lambda_.1} parent=11 // pred_fallthru
        _
      // Predicated region
      $region89: #{_lambda_.1} parent=11 // pred_check
        %p848 = pneg %p519
      $region90: #{_lambda_.1} parent=11 // pred_check_branch
        %850 = sbr.rel (%p848) target = $region92
      $region91: #{_lambda_.1} parent=11 // pred_region
        _
      $region92: #{_lambda_.1} parent=11 // pred_fallthru
        _
      // Predicated region
      $region93: #{_lambda_.1} parent=11 // pred_check
        %p851 = pneg %p540
      $region94: #{_lambda_.1} parent=11 // pred_check_branch
        %853 = sbr.rel (%p851) target = $region96
      $region95: #{_lambda_.1} parent=11 // pred_region
        _
      $region96: #{_lambda_.1} parent=11 // pred_fallthru
        _
      // Predicated region
      $region97: #{_lambda_.1} parent=11 // pred_check
        %p854 = pneg %p561
      $region98: #{_lambda_.1} parent=11 // pred_check_branch
        %856 = sbr.rel (%p854) target = $region100
      $region99: #{_lambda_.1} parent=11 // pred_region
        _
      $region100: #{_lambda_.1} parent=11 // pred_fallthru
        _
      // Predicated region
      $region101: #{_lambda_.1} parent=11 // pred_check
        %p857 = pneg %p582
      $region102: #{_lambda_.1} parent=11 // pred_check_branch
        %859 = sbr.rel (%p857) target = $region104
      $region103: #{_lambda_.1} parent=11 // pred_region
        _
      $region104: #{_lambda_.1} parent=11 // pred_fallthru
        _
      // Predicated region
      $region105: #{_lambda_.1} parent=11 // pred_check
        %p860 = pneg %p603
      $region106: #{_lambda_.1} parent=11 // pred_check_branch
        %862 = sbr.rel (%p860) target = $region108
      $region107: #{_lambda_.1} parent=11 // pred_region
        _
      $region108: #{_lambda_.1} parent=11 // pred_fallthru
        _
      // Predicated region
      $region109: #{_lambda_.1} parent=11 // pred_check
        %p863 = pneg %p624
      $region110: #{_lambda_.1} parent=11 // pred_check_branch
        %865 = sbr.rel (%p863) target = $region112
      $region111: #{_lambda_.1} parent=11 // pred_region
        _
      $region112: #{_lambda_.1} parent=11 // pred_fallthru
        _
      // Predicated region
      $region113: #{_lambda_.1} parent=11 // pred_check
        %p866 = pneg %p645
      $region114: #{_lambda_.1} parent=11 // pred_check_branch
        %868 = sbr.rel (%p866) target = $region116
      $region115: #{_lambda_.1} parent=11 // pred_region
        _
      $region116: #{_lambda_.1} parent=11 // pred_fallthru
        _
      // Predicated region
      $region117: #{_lambda_.1} parent=11 // pred_check
        %p869 = pneg %p666
      $region118: #{_lambda_.1} parent=11 // pred_check_branch
        %871 = sbr.rel (%p869) target = $region120
      $region119: #{_lambda_.1} parent=11 // pred_region
        _
      $region120: #{_lambda_.1} parent=11 // pred_fallthru
        _
      // Predicated region
      $region121: #{_lambda_.1} parent=11 // pred_check
        %p872 = pneg %p687
      $region122: #{_lambda_.1} parent=11 // pred_check_branch
        %874 = sbr.rel (%p872) target = $region124
      $region123: #{_lambda_.1} parent=11 // pred_region
        _
      $region124: #{_lambda_.1} parent=11 // pred_fallthru
        _
      // Predicated region
      $region125: #{_lambda_.1} parent=11 // pred_check
        %p875 = pneg %p708
      $region126: #{_lambda_.1} parent=11 // pred_check_branch
        %877 = sbr.rel (%p875) target = $region128
      $region127: #{_lambda_.1} parent=11 // pred_region
        _
      $region128: #{_lambda_.1} parent=11 // pred_fallthru
        _
      // Predicated region
      $region129: #{_lambda_.1} parent=11 // pred_check
        %p878 = pneg %p729
      $region130: #{_lambda_.1} parent=11 // pred_check_branch
        %880 = sbr.rel (%p878) target = $region132
      $region131: #{_lambda_.1} parent=11 // pred_region
        _
      $region132: #{_lambda_.1} parent=11 // pred_fallthru
        _
      // Predicated region
      $region133: #{_lambda_.1} parent=11 // pred_check
        %p881 = pneg %p750
      $region134: #{_lambda_.1} parent=11 // pred_check_branch
        %883 = sbr.rel (%p881) target = $region136
      $region135: #{_lambda_.1} parent=11 // pred_region
        _
      $region136: #{_lambda_.1} parent=11 // pred_fallthru
        _
    $region12: #{_lambda_.1} parent=5 // pred_fallthru
      _
    %p884 = scmp.lt.s32.totalorder %s73, 2
    // Predicated region
    $region137: #{_lambda_.1} parent=5 // pred_check
      %p885 = pneg %p884
    $region138: #{_lambda_.1} parent=5 // pred_check_branch
      %887 = sbr.rel (%p885) target = $region140
    $region139: #{_lambda_.1} parent=5 // pred_region
      // Predicated region
      $region141: #{_lambda_.1} parent=139 // pred_check
        %p888 = pneg %p93
      $region142: #{_lambda_.1} parent=139 // pred_check_branch
        %890 = sbr.rel (%p888) target = $region144
      $region143: #{_lambda_.1} parent=139 // pred_region
        %p891 = scmp.lt.s32.totalorder %s73, 1
        %s892 = scalar_select %p891, %s73, 1
        %s893 = smul.addr %s892, 16
        %s894 = smul.addr %s893, 8
        %s895 = scalar_lea.vmem %s1, %s894
      $region144: #{_lambda_.1} parent=139 // pred_fallthru
        _
    $region140: #{_lambda_.1} parent=5 // pred_fallthru
      _
    %p896 = scmp.le.s32.totalorder 1, %s73
    %p897 = scmp.lt.s32.totalorder %s73, 3
    %p898 = pnand %p896, %p897
    %p899 = pneg %p898
    // Predicated region
    $region145: #{_lambda_.1} parent=5 // pred_check
      _
    $region146: #{_lambda_.1} parent=5 // pred_check_branch
      %901 = sbr.rel (%p898) target = $region148
    $region147: #{_lambda_.1} parent=5 // pred_region
      %s902 = ssub.s32 %s73, 1
      %p903 = scmp.lt.s32.totalorder %s78, 1
      %s904 = scalar_select %p903, %s78, 1
      %s905 = smul.addr %s904, 16
      %s906 = smul.addr %s905, 8
      %s907 = scalar_lea.vmem %s1, %s906
      %p908 = pneg %p99
      %p909 = pneg %p96
      %p910 = pneg %p120
      %p911 = pneg %p117
      %p912 = pneg %p141
      %p913 = pneg %p138
      %p914 = pneg %p162
      %p915 = pneg %p159
      %p916 = pneg %p183
      %p917 = pneg %p180
      %p918 = pneg %p204
      %p919 = pneg %p201
      %p920 = pneg %p225
      %p921 = pneg %p222
      %p922 = pneg %p246
      %p923 = pneg %p243
      %p924 = pneg %p267
      %p925 = pneg %p264
      %p926 = pneg %p288
      %p927 = pneg %p285
      %p928 = pneg %p309
      %p929 = pneg %p306
      %p930 = pneg %p330
      %p931 = pneg %p327
      %p932 = pneg %p351
      %p933 = pneg %p348
      %p934 = pneg %p372
      %p935 = pneg %p369
      %p936 = pneg %p393
      %p937 = pneg %p390
      %p938 = pneg %p414
      %p939 = pneg %p411
      %p940 = pneg %p435
      %p941 = pneg %p432
      %p942 = pneg %p456
      %p943 = pneg %p453
      %p944 = pneg %p477
      %p945 = pneg %p474
      %p946 = pneg %p498
      %p947 = pneg %p495
      %p948 = pneg %p519
      %p949 = pneg %p516
      %p950 = pneg %p540
      %p951 = pneg %p537
      %p952 = pneg %p561
      %p953 = pneg %p558
      %p954 = pneg %p582
      %p955 = pneg %p579
      %p956 = pneg %p603
      %p957 = pneg %p600
      %p958 = pneg %p624
      %p959 = pneg %p621
      %p960 = pneg %p645
      %p961 = pneg %p642
      %p962 = pneg %p666
      %p963 = pneg %p663
      %p964 = pneg %p687
      %p965 = pneg %p684
      %p966 = pneg %p708
      %p967 = pneg %p705
      %p968 = pneg %p729
      %p969 = pneg %p726
      %p970 = pneg %p750
      %p971 = pneg %p747
      %p972 = pneg %p776
      %p973 = pneg %p773
      %p974 = scmp.lt.s32.totalorder %s78, 1
      %s975 = scalar_select %p974, %s78, 1
      %s976 = smul.addr %s975, 8
      %s977 = scalar_lea.vmem %s65, %s976
      %p978 = scmp.lt.s32.totalorder %s78, 1
      %s979 = scalar_select %p978, %s78, 1
      %s980 = smul.addr %s979, 16
      %s981 = smul.addr %s980, 8
      %s982 = scalar_lea.vmem %s1, %s981
      %p983 = scmp.lt.s32.totalorder %s78, 1
      %s984 = scalar_select %p983, %s78, 1
      %s985 = smul.addr %s984, 8
      %s986 = scalar_lea.vmem %s65, %s985
      %v987 = vld [vmem:[%s982] sm:$0xff]
      %v988 = vld [vmem:[%s982 + $0x8] sm:$0xff]
      %v989 = vld [vmem:[%s982 + $0x10] sm:$0xff]
      %v990 = vld [vmem:[%s982 + $0x18] sm:$0xff]
      %v991 = vld [vmem:[%s982 + $0x20] sm:$0xff]
      %v992 = vld [vmem:[%s982 + $0x28] sm:$0xff]
      %v993 = vld [vmem:[%s982 + $0x30] sm:$0xff]
      %v994 = vld [vmem:[%s982 + $0x38] sm:$0xff]
      %v995 = vld [vmem:[%s982 + $0x40] sm:$0xff]
      %v996 = vld [vmem:[%s982 + $0x48] sm:$0xff]
      %v997 = vld [vmem:[%s982 + $0x50] sm:$0xff]
      %v998 = vld [vmem:[%s982 + $0x58] sm:$0xff]
      %v999 = vld [vmem:[%s982 + $0x60] sm:$0xff]
      %v1000 = vld [vmem:[%s982 + $0x68] sm:$0xff]
      %v1001 = vld [vmem:[%s982 + $0x70] sm:$0xff]
      %v1002 = vld [vmem:[%s982 + $0x78] sm:$0xff]
      %v1003 = vld [vmem:[%s5] sm:$0xff]
      %v1004 = vld [vmem:[%s5 + $0x8] sm:$0xff]
      %v1005 = vld [vmem:[%s5 + $0x10] sm:$0xff]
      %v1006 = vld [vmem:[%s5 + $0x18] sm:$0xff]
      %v1007 = vld [vmem:[%s5 + $0x20] sm:$0xff]
      %v1008 = vld [vmem:[%s5 + $0x28] sm:$0xff]
      %v1009 = vld [vmem:[%s5 + $0x30] sm:$0xff]
      %v1010 = vld [vmem:[%s5 + $0x38] sm:$0xff]
      %v1011 = vld [vmem:[%s5 + $0x40] sm:$0xff]
      %v1012 = vld [vmem:[%s5 + $0x48] sm:$0xff]
      %v1013 = vld [vmem:[%s5 + $0x50] sm:$0xff]
      %v1014 = vld [vmem:[%s5 + $0x58] sm:$0xff]
      %v1015 = vld [vmem:[%s5 + $0x60] sm:$0xff]
      %v1016 = vld [vmem:[%s5 + $0x68] sm:$0xff]
      %v1017 = vld [vmem:[%s5 + $0x70] sm:$0xff]
      %v1018 = vld [vmem:[%s5 + $0x78] sm:$0xff]
      %v1019 = vld [vmem:[%s5 + $0x80] sm:$0xff]
      %v1020 = vld [vmem:[%s5 + $0x88] sm:$0xff]
      %v1021 = vld [vmem:[%s5 + $0x90] sm:$0xff]
      %v1022 = vld [vmem:[%s5 + $0x98] sm:$0xff]
      %v1023 = vld [vmem:[%s5 + $0xa0] sm:$0xff]
      %v1024 = vld [vmem:[%s5 + $0xa8] sm:$0xff]
      %v1025 = vld [vmem:[%s5 + $0xb0] sm:$0xff]
      %v1026 = vld [vmem:[%s5 + $0xb8] sm:$0xff]
      %v1027 = vld [vmem:[%s5 + $0xc0] sm:$0xff]
      %v1028 = vld [vmem:[%s5 + $0xc8] sm:$0xff]
      %v1029 = vld [vmem:[%s5 + $0xd0] sm:$0xff]
      %v1030 = vld [vmem:[%s5 + $0xd8] sm:$0xff]
      %v1031 = vld [vmem:[%s5 + $0xe0] sm:$0xff]
      %v1032 = vld [vmem:[%s5 + $0xe8] sm:$0xff]
      %v1033 = vld [vmem:[%s5 + $0xf0] sm:$0xff]
      %v1034 = vld [vmem:[%s5 + $0xf8] sm:$0xff]
      %v1035 = vld [vmem:[%s5 + $0x100] sm:$0xff]
      %v1036 = vld [vmem:[%s5 + $0x108] sm:$0xff]
      %v1037 = vld [vmem:[%s5 + $0x110] sm:$0xff]
      %v1038 = vld [vmem:[%s5 + $0x118] sm:$0xff]
      %v1039 = vld [vmem:[%s5 + $0x120] sm:$0xff]
      %v1040 = vld [vmem:[%s5 + $0x128] sm:$0xff]
      %v1041 = vld [vmem:[%s5 + $0x130] sm:$0xff]
      %v1042 = vld [vmem:[%s5 + $0x138] sm:$0xff]
      %v1043 = vld [vmem:[%s5 + $0x140] sm:$0xff]
      %v1044 = vld [vmem:[%s5 + $0x148] sm:$0xff]
      %v1045 = vld [vmem:[%s5 + $0x150] sm:$0xff]
      %v1046 = vld [vmem:[%s5 + $0x158] sm:$0xff]
      %v1047 = vld [vmem:[%s5 + $0x160] sm:$0xff]
      %v1048 = vld [vmem:[%s5 + $0x168] sm:$0xff]
      %v1049 = vld [vmem:[%s5 + $0x170] sm:$0xff]
      %v1050 = vld [vmem:[%s5 + $0x178] sm:$0xff]
      %s1051 = scalar_lea.vmem %s5, 384
      %v1052 = vld [vmem:[%s1051] sm:$0xff]
      %v1053 = vld [vmem:[%s1051 + $0x8] sm:$0xff]
      %v1054 = vld [vmem:[%s1051 + $0x10] sm:$0xff]
      %v1055 = vld [vmem:[%s1051 + $0x18] sm:$0xff]
      %v1056 = vld [vmem:[%s1051 + $0x20] sm:$0xff]
      %v1057 = vld [vmem:[%s1051 + $0x28] sm:$0xff]
      %v1058 = vld [vmem:[%s1051 + $0x30] sm:$0xff]
      %v1059 = vld [vmem:[%s1051 + $0x38] sm:$0xff]
      %v1060 = vld [vmem:[%s1051 + $0x40] sm:$0xff]
      %v1061 = vld [vmem:[%s1051 + $0x48] sm:$0xff]
      %v1062 = vld [vmem:[%s1051 + $0x50] sm:$0xff]
      %v1063 = vld [vmem:[%s1051 + $0x58] sm:$0xff]
      %v1064 = vld [vmem:[%s1051 + $0x60] sm:$0xff]
      %v1065 = vld [vmem:[%s1051 + $0x68] sm:$0xff]
      %v1066 = vld [vmem:[%s1051 + $0x70] sm:$0xff]
      %v1067 = vld [vmem:[%s1051 + $0x78] sm:$0xff]
      %v1068 = vld [vmem:[%s1051 + $0x80] sm:$0xff]
      %v1069 = vld [vmem:[%s1051 + $0x88] sm:$0xff]
      %v1070 = vld [vmem:[%s1051 + $0x90] sm:$0xff]
      %v1071 = vld [vmem:[%s1051 + $0x98] sm:$0xff]
      %v1072 = vld [vmem:[%s1051 + $0xa0] sm:$0xff]
      %v1073 = vld [vmem:[%s1051 + $0xa8] sm:$0xff]
      %v1074 = vld [vmem:[%s1051 + $0xb0] sm:$0xff]
      %v1075 = vld [vmem:[%s1051 + $0xb8] sm:$0xff]
      %v1076 = vld [vmem:[%s1051 + $0xc0] sm:$0xff]
      %v1077 = vld [vmem:[%s1051 + $0xc8] sm:$0xff]
      %v1078 = vld [vmem:[%s1051 + $0xd0] sm:$0xff]
      %v1079 = vld [vmem:[%s1051 + $0xd8] sm:$0xff]
      %v1080 = vld [vmem:[%s1051 + $0xe0] sm:$0xff]
      %v1081 = vld [vmem:[%s1051 + $0xe8] sm:$0xff]
      %v1082 = vld [vmem:[%s1051 + $0xf0] sm:$0xff]
      %v1083 = vld [vmem:[%s1051 + $0xf8] sm:$0xff]
      %v1084 = vld [vmem:[%s1051 + $0x100] sm:$0xff]
      %v1085 = vld [vmem:[%s1051 + $0x108] sm:$0xff]
      %v1086 = vld [vmem:[%s1051 + $0x110] sm:$0xff]
      %v1087 = vld [vmem:[%s1051 + $0x118] sm:$0xff]
      %v1088 = vld [vmem:[%s1051 + $0x120] sm:$0xff]
      %v1089 = vld [vmem:[%s1051 + $0x128] sm:$0xff]
      %v1090 = vld [vmem:[%s1051 + $0x130] sm:$0xff]
      %v1091 = vld [vmem:[%s1051 + $0x138] sm:$0xff]
      %v1092 = vld [vmem:[%s1051 + $0x140] sm:$0xff]
      %v1093 = vld [vmem:[%s1051 + $0x148] sm:$0xff]
      %v1094 = vld [vmem:[%s1051 + $0x150] sm:$0xff]
      %v1095 = vld [vmem:[%s1051 + $0x158] sm:$0xff]
      %v1096 = vld [vmem:[%s1051 + $0x160] sm:$0xff]
      %v1097 = vld [vmem:[%s1051 + $0x168] sm:$0xff]
      %v1098 = vld [vmem:[%s1051 + $0x170] sm:$0xff]
      %v1099 = vld [vmem:[%s1051 + $0x178] sm:$0xff]
      %1100 = vmatprep.subr.mxu0 %v1053
      %1101 = vmatpush1.msra.mxu0 %v1052
      %1102 = vmatprep.subr.mxu0 %v1056
      %1103 = vmatpush1.msra.mxu0 %v1055
      %1104 = vmatprep.subr.mxu0 %v1059
      %1105 = vmatpush1.msra.mxu0 %v1058
      %1106 = vmatprep.subr.mxu0 %v1062
      %1107 = vmatpush1.msra.mxu0 %v1061
      %1108 = vmatprep.subr.mxu0 %v1065
      %1109 = vmatpush1.msra.mxu0 %v1064
      %1110 = vmatprep.subr.mxu0 %v1068
      %1111 = vmatpush1.msra.mxu0 %v1067
      %1112 = vmatprep.subr.mxu0 %v1071
      %1113 = vmatpush1.msra.mxu0 %v1070
      %1114 = vmatprep.subr.mxu0 %v1074
      %1115 = vmatpush1.msra.mxu0 %v1073
      %1116 = vmatprep.subr.mxu0 %v1077
      %1117 = vmatpush1.msra.mxu0 %v1076
      %1118 = vmatprep.subr.mxu0 %v1080
      %1119 = vmatpush1.msra.mxu0 %v1079
      %1120 = vmatprep.subr.mxu0 %v1083
      %1121 = vmatpush1.msra.mxu0 %v1082
      %1122 = vmatprep.subr.mxu0 %v1086
      %1123 = vmatpush1.msra.mxu0 %v1085
      %1124 = vmatprep.subr.mxu0 %v1089
      %1125 = vmatpush1.msra.mxu0 %v1088
      %1126 = vmatprep.subr.mxu0 %v1092
      %1127 = vmatpush1.msra.mxu0 %v1091
      %1128 = vmatprep.subr.mxu0 %v1095
      %1129 = vmatpush1.msra.mxu0 %v1094
      %1130 = vmatprep.subr.mxu0 %v1098
      %1131 = vmatpush1.msra.mxu0 %v1097
      %1132 = vmatprep.subr.mxu0 0.0
      %1133 = vmatpush1.msra.mxu0 0.0
      %1134 = vmatprep.subr.mxu0 0.0
      %1135 = vmatpush1.msra.mxu0 0.0
      %1136 = vmatprep.subr.mxu0 0.0
      %1137 = vmatpush1.msra.mxu0 0.0
      %1138 = vmatprep.subr.mxu0 0.0
      %1139 = vmatpush1.msra.mxu0 0.0
      %1140 = vmatprep.subr.mxu0 0.0
      %1141 = vmatpush1.msra.mxu0 0.0
      %1142 = vmatprep.subr.mxu0 0.0
      %1143 = vmatpush1.msra.mxu0 0.0
      %1144 = vmatprep.subr.mxu0 0.0
      %1145 = vmatpush1.msra.mxu0 0.0
      %1146 = vmatprep.subr.mxu0 0.0
      %1147 = vmatpush1.msra.mxu0 0.0
      %1148 = vmatprep.subr.mxu0 0.0
      %1149 = vmatpush1.msra.mxu0 0.0
      %1150 = vmatprep.subr.mxu0 0.0
      %1151 = vmatpush1.msra.mxu0 0.0
      %1152 = vmatprep.subr.mxu0 0.0
      %1153 = vmatpush1.msra.mxu0 0.0
      %1154 = vmatprep.subr.mxu0 0.0
      %1155 = vmatpush1.msra.mxu0 0.0
      %1156 = vmatprep.subr.mxu0 0.0
      %1157 = vmatpush1.msra.mxu0 0.0
      %1158 = vmatprep.subr.mxu0 0.0
      %1159 = vmatpush1.msra.mxu0 0.0
      %1160 = vmatprep.subr.mxu0 0.0
      %1161 = vmatpush1.msra.mxu0 0.0
      %1162 = vmatprep.subr.mxu0 0.0
      %1163 = vmatpush1.msra.mxu0 0.0
      %1164 = vmatprep.mubr.f32.mxu0 0.0
      %1165 = vmatmul.mubr.f32.gmra.mrb[0].mxu0 %v987
      %v1166 = vpop.f32.mrb[0].mxu0
      %v1167 = vadd.f32 0.0, %v1166
      %v1168 = vpop.f32.mrb[0].mxu0
      %v1169 = vadd.f32 0.0, %v1168
      %1170 = vmatprep.mubr.f32.mxu0 0.0
      %1171 = vmatmul.mubr.f32.gmra.mrb[0].mxu0 %v988
      %v1172 = vpop.f32.mrb[0].mxu0
      %v1173 = vadd.f32 0.0, %v1172
      %v1174 = vpop.f32.mrb[0].mxu0
      %v1175 = vadd.f32 0.0, %v1174
      %1176 = vmatprep.mubr.f32.mxu0 0.0
      %1177 = vmatmul.mubr.f32.gmra.mrb[0].mxu0 %v989
      %v1178 = vpop.f32.mrb[0].mxu0
      %v1179 = vadd.f32 0.0, %v1178
      %v1180 = vpop.f32.mrb[0].mxu0
      %v1181 = vadd.f32 0.0, %v1180
      %1182 = vmatprep.mubr.f32.mxu0 0.0
      %1183 = vmatmul.mubr.f32.gmra.mrb[0].mxu0 %v990
      %v1184 = vpop.f32.mrb[0].mxu0
      %v1185 = vadd.f32 0.0, %v1184
      %v1186 = vpop.f32.mrb[0].mxu0
      %v1187 = vadd.f32 0.0, %v1186
      %1188 = vmatprep.mubr.f32.mxu0 0.0
      %1189 = vmatmul.mubr.f32.gmra.mrb[0].mxu0 %v991
      %v1190 = vpop.f32.mrb[0].mxu0
      %v1191 = vadd.f32 0.0, %v1190
      %v1192 = vpop.f32.mrb[0].mxu0
      %v1193 = vadd.f32 0.0, %v1192
      %1194 = vmatprep.mubr.f32.mxu0 0.0
      %1195 = vmatmul.mubr.f32.gmra.mrb[0].mxu0 %v992
      %v1196 = vpop.f32.mrb[0].mxu0
      %v1197 = vadd.f32 0.0, %v1196
      %v1198 = vpop.f32.mrb[0].mxu0
      %v1199 = vadd.f32 0.0, %v1198
      %1200 = vmatprep.mubr.f32.mxu0 0.0
      %1201 = vmatmul.mubr.f32.gmra.mrb[0].mxu0 %v993
      %v1202 = vpop.f32.mrb[0].mxu0
      %v1203 = vadd.f32 0.0, %v1202
      %v1204 = vpop.f32.mrb[0].mxu0
      %v1205 = vadd.f32 0.0, %v1204
      %1206 = vmatprep.mubr.f32.mxu0 0.0
      %1207 = vmatmul.mubr.f32.gmra.mrb[0].mxu0 %v994
      %v1208 = vpop.f32.mrb[0].mxu0
      %v1209 = vadd.f32 0.0, %v1208
      %v1210 = vpop.f32.mrb[0].mxu0
      %v1211 = vadd.f32 0.0, %v1210
      %1212 = vmatprep.mubr.f32.mxu0 0.0
      %1213 = vmatmul.mubr.f32.gmra.mrb[0].mxu0 %v995
      %v1214 = vpop.f32.mrb[0].mxu0
      %v1215 = vadd.f32 0.0, %v1214
      %v1216 = vpop.f32.mrb[0].mxu0
      %v1217 = vadd.f32 0.0, %v1216
      %1218 = vmatprep.mubr.f32.mxu0 0.0
      %1219 = vmatmul.mubr.f32.gmra.mrb[0].mxu0 %v996
      %v1220 = vpop.f32.mrb[0].mxu0
      %v1221 = vadd.f32 0.0, %v1220
      %v1222 = vpop.f32.mrb[0].mxu0
      %v1223 = vadd.f32 0.0, %v1222
      %1224 = vmatprep.mubr.f32.mxu0 0.0
      %1225 = vmatmul.mubr.f32.gmra.mrb[0].mxu0 %v997
      %v1226 = vpop.f32.mrb[0].mxu0
      %v1227 = vadd.f32 0.0, %v1226
      %v1228 = vpop.f32.mrb[0].mxu0
      %v1229 = vadd.f32 0.0, %v1228
      %1230 = vmatprep.mubr.f32.mxu0 0.0
      %1231 = vmatmul.mubr.f32.gmra.mrb[0].mxu0 %v998
      %v1232 = vpop.f32.mrb[0].mxu0
      %v1233 = vadd.f32 0.0, %v1232
      %v1234 = vpop.f32.mrb[0].mxu0
      %v1235 = vadd.f32 0.0, %v1234
      %1236 = vmatprep.mubr.f32.mxu0 0.0
      %1237 = vmatmul.mubr.f32.gmra.mrb[0].mxu0 %v999
      %v1238 = vpop.f32.mrb[0].mxu0
      %v1239 = vadd.f32 0.0, %v1238
      %v1240 = vpop.f32.mrb[0].mxu0
      %v1241 = vadd.f32 0.0, %v1240
      %1242 = vmatprep.mubr.f32.mxu0 0.0
      %1243 = vmatmul.mubr.f32.gmra.mrb[0].mxu0 %v1000
      %v1244 = vpop.f32.mrb[0].mxu0
      %v1245 = vadd.f32 0.0, %v1244
      %v1246 = vpop.f32.mrb[0].mxu0
      %v1247 = vadd.f32 0.0, %v1246
      %1248 = vmatprep.mubr.f32.mxu0 0.0
      %1249 = vmatmul.mubr.f32.gmra.mrb[0].mxu0 %v1001
      %v1250 = vpop.f32.mrb[0].mxu0
      %v1251 = vadd.f32 0.0, %v1250
      %v1252 = vpop.f32.mrb[0].mxu0
      %v1253 = vadd.f32 0.0, %v1252
      %1254 = vmatprep.mubr.f32.mxu0 0.0
      %1255 = vmatmul.mubr.f32.gmra.mrb[0].mxu0 %v1002
      %v1256 = vpop.f32.mrb[0].mxu0
      %v1257 = vadd.f32 0.0, %v1256
      %v1258 = vpop.f32.mrb[0].mxu0
      %v1259 = vadd.f32 0.0, %v1258
      %1260 = vdwg.mxu0
      %1261 = vmatprep.subr.mxu0 0.0
      %1262 = vmatpush1.msra.mxu0 %v1054
      %1263 = vmatprep.subr.mxu0 0.0
      %1264 = vmatpush1.msra.mxu0 %v1057
      %1265 = vmatprep.subr.mxu0 0.0
      %1266 = vmatpush1.msra.mxu0 %v1060
      %1267 = vmatprep.subr.mxu0 0.0
      %1268 = vmatpush1.msra.mxu0 %v1063
      %1269 = vmatprep.subr.mxu0 0.0
      %1270 = vmatpush1.msra.mxu0 %v1066
      %1271 = vmatprep.subr.mxu0 0.0
      %1272 = vmatpush1.msra.mxu0 %v1069
      %1273 = vmatprep.subr.mxu0 0.0
      %1274 = vmatpush1.msra.mxu0 %v1072
      %1275 = vmatprep.subr.mxu0 0.0
      %1276 = vmatpush1.msra.mxu0 %v1075
      %1277 = vmatprep.subr.mxu0 0.0
      %1278 = vmatpush1.msra.mxu0 %v1078
      %1279 = vmatprep.subr.mxu0 0.0
      %1280 = vmatpush1.msra.mxu0 %v1081
      %1281 = vmatprep.subr.mxu0 0.0
      %1282 = vmatpush1.msra.mxu0 %v1084
      %1283 = vmatprep.subr.mxu0 0.0
      %1284 = vmatpush1.msra.mxu0 %v1087
      %1285 = vmatprep.subr.mxu0 0.0
      %1286 = vmatpush1.msra.mxu0 %v1090
      %1287 = vmatprep.subr.mxu0 0.0
      %1288 = vmatpush1.msra.mxu0 %v1093
      %1289 = vmatprep.subr.mxu0 0.0
      %1290 = vmatpush1.msra.mxu0 %v1096
      %1291 = vmatprep.subr.mxu0 0.0
      %1292 = vmatpush1.msra.mxu0 %v1099
      %1293 = vmatprep.subr.mxu0 0.0
      %1294 = vmatpush1.msra.mxu0 0.0
      %1295 = vmatprep.subr.mxu0 0.0
      %1296 = vmatpush1.msra.mxu0 0.0
      %1297 = vmatprep.subr.mxu0 0.0
      %1298 = vmatpush1.msra.mxu0 0.0
      %1299 = vmatprep.subr.mxu0 0.0
      %1300 = vmatpush1.msra.mxu0 0.0
      %1301 = vmatprep.subr.mxu0 0.0
      %1302 = vmatpush1.msra.mxu0 0.0
      %1303 = vmatprep.subr.mxu0 0.0
      %1304 = vmatpush1.msra.mxu0 0.0
      %1305 = vmatprep.subr.mxu0 0.0
      %1306 = vmatpush1.msra.mxu0 0.0
      %1307 = vmatprep.subr.mxu0 0.0
      %1308 = vmatpush1.msra.mxu0 0.0
      %1309 = vmatprep.subr.mxu0 0.0
      %1310 = vmatpush1.msra.mxu0 0.0
      %1311 = vmatprep.subr.mxu0 0.0
      %1312 = vmatpush1.msra.mxu0 0.0
      %1313 = vmatprep.subr.mxu0 0.0
      %1314 = vmatpush1.msra.mxu0 0.0
      %1315 = vmatprep.subr.mxu0 0.0
      %1316 = vmatpush1.msra.mxu0 0.0
      %1317 = vmatprep.subr.mxu0 0.0
      %1318 = vmatpush1.msra.mxu0 0.0
      %1319 = vmatprep.subr.mxu0 0.0
      %1320 = vmatpush1.msra.mxu0 0.0
      %1321 = vmatprep.subr.mxu0 0.0
      %1322 = vmatpush1.msra.mxu0 0.0
      %1323 = vmatprep.subr.mxu0 0.0
      %1324 = vmatpush1.msra.mxu0 0.0
      %1325 = vmatprep.mubr.f32.mxu0 0.0
      %1326 = vmatmul.mubr.f32.gmra.mrb[0].mxu0 %v987
      %v1327 = vpop.f32.mrb[0].mxu0
      %v1328 = vadd.f32 0.0, %v1327
      %v1329 = vpop.f32.mrb[0].mxu0
      %1330 = vmatprep.mubr.f32.mxu0 0.0
      %1331 = vmatmul.mubr.f32.gmra.mrb[0].mxu0 %v988
      %v1332 = vpop.f32.mrb[0].mxu0
      %v1333 = vadd.f32 0.0, %v1332
      %v1334 = vpop.f32.mrb[0].mxu0
      %1335 = vmatprep.mubr.f32.mxu0 0.0
      %1336 = vmatmul.mubr.f32.gmra.mrb[0].mxu0 %v989
      %v1337 = vpop.f32.mrb[0].mxu0
      %v1338 = vadd.f32 0.0, %v1337
      %v1339 = vpop.f32.mrb[0].mxu0
      %1340 = vmatprep.mubr.f32.mxu0 0.0
      %1341 = vmatmul.mubr.f32.gmra.mrb[0].mxu0 %v990
      %v1342 = vpop.f32.mrb[0].mxu0
      %v1343 = vadd.f32 0.0, %v1342
      %v1344 = vpop.f32.mrb[0].mxu0
      %1345 = vmatprep.mubr.f32.mxu0 0.0
      %1346 = vmatmul.mubr.f32.gmra.mrb[0].mxu0 %v991
      %v1347 = vpop.f32.mrb[0].mxu0
      %v1348 = vadd.f32 0.0, %v1347
      %v1349 = vpop.f32.mrb[0].mxu0
      %1350 = vmatprep.mubr.f32.mxu0 0.0
      %1351 = vmatmul.mubr.f32.gmra.mrb[0].mxu0 %v992
      %v1352 = vpop.f32.mrb[0].mxu0
      %v1353 = vadd.f32 0.0, %v1352
      %v1354 = vpop.f32.mrb[0].mxu0
      %1355 = vmatprep.mubr.f32.mxu0 0.0
      %1356 = vmatmul.mubr.f32.gmra.mrb[0].mxu0 %v993
      %v1357 = vpop.f32.mrb[0].mxu0
      %v1358 = vadd.f32 0.0, %v1357
      %v1359 = vpop.f32.mrb[0].mxu0
      %1360 = vmatprep.mubr.f32.mxu0 0.0
      %1361 = vmatmul.mubr.f32.gmra.mrb[0].mxu0 %v994
      %v1362 = vpop.f32.mrb[0].mxu0
      %v1363 = vadd.f32 0.0, %v1362
      %v1364 = vpop.f32.mrb[0].mxu0
      %1365 = vmatprep.mubr.f32.mxu0 0.0
      %1366 = vmatmul.mubr.f32.gmra.mrb[0].mxu0 %v995
      %v1367 = vpop.f32.mrb[0].mxu0
      %v1368 = vadd.f32 0.0, %v1367
      %v1369 = vpop.f32.mrb[0].mxu0
      %1370 = vmatprep.mubr.f32.mxu0 0.0
      %1371 = vmatmul.mubr.f32.gmra.mrb[0].mxu0 %v996
      %v1372 = vpop.f32.mrb[0].mxu0
      %v1373 = vadd.f32 0.0, %v1372
      %v1374 = vpop.f32.mrb[0].mxu0
      %1375 = vmatprep.mubr.f32.mxu0 0.0
      %1376 = vmatmul.mubr.f32.gmra.mrb[0].mxu0 %v997
      %v1377 = vpop.f32.mrb[0].mxu0
      %v1378 = vadd.f32 0.0, %v1377
      %v1379 = vpop.f32.mrb[0].mxu0
      %1380 = vmatprep.mubr.f32.mxu0 0.0
      %1381 = vmatmul.mubr.f32.gmra.mrb[0].mxu0 %v998
      %v1382 = vpop.f32.mrb[0].mxu0
      %v1383 = vadd.f32 0.0, %v1382
      %v1384 = vpop.f32.mrb[0].mxu0
      %1385 = vmatprep.mubr.f32.mxu0 0.0
      %1386 = vmatmul.mubr.f32.gmra.mrb[0].mxu0 %v999
      %v1387 = vpop.f32.mrb[0].mxu0
      %v1388 = vadd.f32 0.0, %v1387
      %v1389 = vpop.f32.mrb[0].mxu0
      %1390 = vmatprep.mubr.f32.mxu0 0.0
      %1391 = vmatmul.mubr.f32.gmra.mrb[0].mxu0 %v1000
      %v1392 = vpop.f32.mrb[0].mxu0
      %v1393 = vadd.f32 0.0, %v1392
      %v1394 = vpop.f32.mrb[0].mxu0
      %1395 = vmatprep.mubr.f32.mxu0 0.0
      %1396 = vmatmul.mubr.f32.gmra.mrb[0].mxu0 %v1001
      %v1397 = vpop.f32.mrb[0].mxu0
      %v1398 = vadd.f32 0.0, %v1397
      %v1399 = vpop.f32.mrb[0].mxu0
      %1400 = vmatprep.mubr.f32.mxu0 0.0
      %1401 = vmatmul.mubr.f32.gmra.mrb[0].mxu0 %v1002
      %v1402 = vpop.f32.mrb[0].mxu0
      %v1403 = vadd.f32 0.0, %v1402
      %v1404 = vpop.f32.mrb[0].mxu0
      %1405 = vdwg.mxu0
      %vm1454 = vcmask 1046528
      %v1455 = vrot.slane %v1167, 1
      %v1456 = vrot.slane %v1173, 1
      %v1457 = vsel %vm1454, %v1455, %v1456
      %v1458 = vrot.slane %v1169, 1
      %v1459 = vrot.slane %v1175, 1
      %v1460 = vsel %vm1454, %v1458, %v1459
      %v1461 = vrot.slane %v1328, 1
      %v1462 = vrot.slane %v1333, 1
      %v1463 = vsel %vm1454, %v1461, %v1462
      %v1464 = vrot.slane %v1179, 1
      %v1465 = vsel %vm1454, %v1456, %v1464
      %v1466 = vrot.slane %v1181, 1
      %v1467 = vsel %vm1454, %v1459, %v1466
      %v1468 = vrot.slane %v1338, 1
      %v1469 = vsel %vm1454, %v1462, %v1468
      %v1470 = vrot.slane %v1185, 1
      %v1471 = vsel %vm1454, %v1464, %v1470
      %v1472 = vrot.slane %v1187, 1
      %v1473 = vsel %vm1454, %v1466, %v1472
      %v1474 = vrot.slane %v1343, 1
      %v1475 = vsel %vm1454, %v1468, %v1474
      %v1476 = vrot.slane %v1191, 1
      %v1477 = vsel %vm1454, %v1470, %v1476
      %v1478 = vrot.slane %v1193, 1
      %v1479 = vsel %vm1454, %v1472, %v1478
      %v1480 = vrot.slane %v1348, 1
      %v1481 = vsel %vm1454, %v1474, %v1480
      %v1482 = vrot.slane %v1197, 1
      %v1483 = vsel %vm1454, %v1476, %v1482
      %v1484 = vrot.slane %v1199, 1
      %v1485 = vsel %vm1454, %v1478, %v1484
      %v1486 = vrot.slane %v1353, 1
      %v1487 = vsel %vm1454, %v1480, %v1486
      %v1488 = vrot.slane %v1203, 1
      %v1489 = vsel %vm1454, %v1482, %v1488
      %v1490 = vrot.slane %v1205, 1
      %v1491 = vsel %vm1454, %v1484, %v1490
      %v1492 = vrot.slane %v1358, 1
      %v1493 = vsel %vm1454, %v1486, %v1492
      %v1494 = vrot.slane %v1209, 1
      %v1495 = vsel %vm1454, %v1488, %v1494
      %v1496 = vrot.slane %v1211, 1
      %v1497 = vsel %vm1454, %v1490, %v1496
      %v1498 = vrot.slane %v1363, 1
      %v1499 = vsel %vm1454, %v1492, %v1498
      %v1500 = vrot.slane %v1215, 1
      %v1501 = vsel %vm1454, %v1494, %v1500
      %v1502 = vrot.slane %v1217, 1
      %v1503 = vsel %vm1454, %v1496, %v1502
      %v1504 = vrot.slane %v1368, 1
      %v1505 = vsel %vm1454, %v1498, %v1504
      %v1506 = vrot.slane %v1221, 1
      %v1507 = vsel %vm1454, %v1500, %v1506
      %v1508 = vrot.slane %v1223, 1
      %v1509 = vsel %vm1454, %v1502, %v1508
      %v1510 = vrot.slane %v1373, 1
      %v1511 = vsel %vm1454, %v1504, %v1510
      %v1512 = vrot.slane %v1227, 1
      %v1513 = vsel %vm1454, %v1506, %v1512
      %v1514 = vrot.slane %v1229, 1
      %v1515 = vsel %vm1454, %v1508, %v1514
      %v1516 = vrot.slane %v1378, 1
      %v1517 = vsel %vm1454, %v1510, %v1516
      %v1518 = vrot.slane %v1233, 1
      %v1519 = vsel %vm1454, %v1512, %v1518
      %v1520 = vrot.slane %v1235, 1
      %v1521 = vsel %vm1454, %v1514, %v1520
      %v1522 = vrot.slane %v1383, 1
      %v1523 = vsel %vm1454, %v1516, %v1522
      %v1524 = vrot.slane %v1239, 1
      %v1525 = vsel %vm1454, %v1518, %v1524
      %v1526 = vrot.slane %v1241, 1
      %v1527 = vsel %vm1454, %v1520, %v1526
      %v1528 = vrot.slane %v1388, 1
      %v1529 = vsel %vm1454, %v1522, %v1528
      %v1530 = vrot.slane %v1245, 1
      %v1531 = vsel %vm1454, %v1524, %v1530
      %v1532 = vrot.slane %v1247, 1
      %v1533 = vsel %vm1454, %v1526, %v1532
      %v1534 = vrot.slane %v1393, 1
      %v1535 = vsel %vm1454, %v1528, %v1534
      %v1536 = vrot.slane %v1251, 1
      %v1537 = vsel %vm1454, %v1530, %v1536
      %v1538 = vrot.slane %v1253, 1
      %v1539 = vsel %vm1454, %v1532, %v1538
      %v1540 = vrot.slane %v1398, 1
      %v1541 = vsel %vm1454, %v1534, %v1540
      %v1542 = vrot.slane %v1257, 1
      %v1543 = vsel %vm1454, %v1536, %v1542
      %v1544 = vrot.slane %v1259, 1
      %v1545 = vsel %vm1454, %v1538, %v1544
      %v1546 = vrot.slane %v1403, 1
      %v1547 = vsel %vm1454, %v1540, %v1546
      %v1599 = vsel %vm1454, %v1542, %v1455
      %v1600 = vsel %vm1454, %v1544, %v1458
      %v1601 = vsel %vm1454, %v1546, %v1461
      %s1602 = scalar_lea.vmem %s5, 768
      %v1603 = vld [vmem:[%s1602] sm:$0xff]
      %v1604 = vld [vmem:[%s1602 + $0x8] sm:$0xff]
      %v1605 = vld [vmem:[%s1602 + $0x10] sm:$0xff]
      %v1606 = vld [vmem:[%s1602 + $0x18] sm:$0xff]
      %v1607 = vld [vmem:[%s1602 + $0x20] sm:$0xff]
      %v1608 = vld [vmem:[%s1602 + $0x28] sm:$0xff]
      %v1609 = vld [vmem:[%s1602 + $0x30] sm:$0xff]
      %v1610 = vld [vmem:[%s1602 + $0x38] sm:$0xff]
      %v1611 = vld [vmem:[%s1602 + $0x40] sm:$0xff]
      %v1612 = vld [vmem:[%s1602 + $0x48] sm:$0xff]
      %v1613 = vld [vmem:[%s1602 + $0x50] sm:$0xff]
      %v1614 = vld [vmem:[%s1602 + $0x58] sm:$0xff]
      %v1615 = vld [vmem:[%s1602 + $0x60] sm:$0xff]
      %v1616 = vld [vmem:[%s1602 + $0x68] sm:$0xff]
      %v1617 = vld [vmem:[%s1602 + $0x70] sm:$0xff]
      %v1618 = vld [vmem:[%s1602 + $0x78] sm:$0xff]
      %v1619 = vld [vmem:[%s1602 + $0x80] sm:$0xff]
      %v1620 = vld [vmem:[%s1602 + $0x88] sm:$0xff]
      %v1621 = vld [vmem:[%s1602 + $0x90] sm:$0xff]
      %v1622 = vld [vmem:[%s1602 + $0x98] sm:$0xff]
      %v1623 = vld [vmem:[%s1602 + $0xa0] sm:$0xff]
      %v1624 = vld [vmem:[%s1602 + $0xa8] sm:$0xff]
      %v1625 = vld [vmem:[%s1602 + $0xb0] sm:$0xff]
      %v1626 = vld [vmem:[%s1602 + $0xb8] sm:$0xff]
      %v1627 = vld [vmem:[%s1602 + $0xc0] sm:$0xff]
      %v1628 = vld [vmem:[%s1602 + $0xc8] sm:$0xff]
      %v1629 = vld [vmem:[%s1602 + $0xd0] sm:$0xff]
      %v1630 = vld [vmem:[%s1602 + $0xd8] sm:$0xff]
      %v1631 = vld [vmem:[%s1602 + $0xe0] sm:$0xff]
      %v1632 = vld [vmem:[%s1602 + $0xe8] sm:$0xff]
      %v1633 = vld [vmem:[%s1602 + $0xf0] sm:$0xff]
      %v1634 = vld [vmem:[%s1602 + $0xf8] sm:$0xff]
      %v1635 = vld [vmem:[%s1602 + $0x100] sm:$0xff]
      %v1636 = vld [vmem:[%s1602 + $0x108] sm:$0xff]
      %v1637 = vld [vmem:[%s1602 + $0x110] sm:$0xff]
      %v1638 = vld [vmem:[%s1602 + $0x118] sm:$0xff]
      %v1639 = vld [vmem:[%s1602 + $0x120] sm:$0xff]
      %v1640 = vld [vmem:[%s1602 + $0x128] sm:$0xff]
      %v1641 = vld [vmem:[%s1602 + $0x130] sm:$0xff]
      %v1642 = vld [vmem:[%s1602 + $0x138] sm:$0xff]
      %v1643 = vld [vmem:[%s1602 + $0x140] sm:$0xff]
      %v1644 = vld [vmem:[%s1602 + $0x148] sm:$0xff]
      %v1645 = vld [vmem:[%s1602 + $0x150] sm:$0xff]
      %v1646 = vld [vmem:[%s1602 + $0x158] sm:$0xff]
      %v1647 = vld [vmem:[%s1602 + $0x160] sm:$0xff]
      %v1648 = vld [vmem:[%s1602 + $0x168] sm:$0xff]
      %v1649 = vld [vmem:[%s1602 + $0x170] sm:$0xff]
      %v1650 = vld [vmem:[%s1602 + $0x178] sm:$0xff]
      %1651 = vmatprep.subr.mxu0 %v1604
      %1652 = vmatpush1.msra.mxu0 %v1603
      %1653 = vmatprep.subr.mxu0 %v1607
      %1654 = vmatpush1.msra.mxu0 %v1606
      %1655 = vmatprep.subr.mxu0 %v1610
      %1656 = vmatpush1.msra.mxu0 %v1609
      %1657 = vmatprep.subr.mxu0 %v1613
      %1658 = vmatpush1.msra.mxu0 %v1612
      %1659 = vmatprep.subr.mxu0 %v1616
      %1660 = vmatpush1.msra.mxu0 %v1615
      %1661 = vmatprep.subr.mxu0 %v1619
      %1662 = vmatpush1.msra.mxu0 %v1618
      %1663 = vmatprep.subr.mxu0 %v1622
      %1664 = vmatpush1.msra.mxu0 %v1621
      %1665 = vmatprep.subr.mxu0 %v1625
      %1666 = vmatpush1.msra.mxu0 %v1624
      %1667 = vmatprep.subr.mxu0 %v1628
      %1668 = vmatpush1.msra.mxu0 %v1627
      %1669 = vmatprep.subr.mxu0 %v1631
      %1670 = vmatpush1.msra.mxu0 %v1630
      %1671 = vmatprep.subr.mxu0 %v1634
      %1672 = vmatpush1.msra.mxu0 %v1633
      %1673 = vmatprep.subr.mxu0 %v1637
      %1674 = vmatpush1.msra.mxu0 %v1636
      %1675 = vmatprep.subr.mxu0 %v1640
      %1676 = vmatpush1.msra.mxu0 %v1639
      %1677 = vmatprep.subr.mxu0 %v1643
      %1678 = vmatpush1.msra.mxu0 %v1642
      %1679 = vmatprep.subr.mxu0 %v1646
      %1680 = vmatpush1.msra.mxu0 %v1645
      %1681 = vmatprep.subr.mxu0 %v1649
      %1682 = vmatpush1.msra.mxu0 %v1648
      %1683 = vmatprep.subr.mxu0 0.0
      %1684 = vmatpush1.msra.mxu0 0.0
      %1685 = vmatprep.subr.mxu0 0.0
      %1686 = vmatpush1.msra.mxu0 0.0
      %1687 = vmatprep.subr.mxu0 0.0
      %1688 = vmatpush1.msra.mxu0 0.0
      %1689 = vmatprep.subr.mxu0 0.0
      %1690 = vmatpush1.msra.mxu0 0.0
      %1691 = vmatprep.subr.mxu0 0.0
      %1692 = vmatpush1.msra.mxu0 0.0
      %1693 = vmatprep.subr.mxu0 0.0
      %1694 = vmatpush1.msra.mxu0 0.0
      %1695 = vmatprep.subr.mxu0 0.0
      %1696 = vmatpush1.msra.mxu0 0.0
      %1697 = vmatprep.subr.mxu0 0.0
      %1698 = vmatpush1.msra.mxu0 0.0
      %1699 = vmatprep.subr.mxu0 0.0
      %1700 = vmatpush1.msra.mxu0 0.0
      %1701 = vmatprep.subr.mxu0 0.0
      %1702 = vmatpush1.msra.mxu0 0.0
      %1703 = vmatprep.subr.mxu0 0.0
      %1704 = vmatpush1.msra.mxu0 0.0
      %1705 = vmatprep.subr.mxu0 0.0
      %1706 = vmatpush1.msra.mxu0 0.0
      %1707 = vmatprep.subr.mxu0 0.0
      %1708 = vmatpush1.msra.mxu0 0.0
      %1709 = vmatprep.subr.mxu0 0.0
      %1710 = vmatpush1.msra.mxu0 0.0
      %1711 = vmatprep.subr.mxu0 0.0
      %1712 = vmatpush1.msra.mxu0 0.0
      %1713 = vmatprep.subr.mxu0 0.0
      %1714 = vmatpush1.msra.mxu0 0.0
      %1715 = vmatprep.mubr.f32.mxu0 0.0
      %1716 = vmatmul.mubr.f32.gmra.mrb[0].mxu0 %v987
      %v1717 = vpop.f32.mrb[0].mxu0
      %v1718 = vadd.f32 0.0, %v1717
      %v1719 = vpop.f32.mrb[0].mxu0
      %v1720 = vadd.f32 0.0, %v1719
      %1721 = vmatprep.mubr.f32.mxu0 0.0
      %1722 = vmatmul.mubr.f32.gmra.mrb[0].mxu0 %v988
      %v1723 = vpop.f32.mrb[0].mxu0
      %v1724 = vadd.f32 0.0, %v1723
      %v1725 = vpop.f32.mrb[0].mxu0
      %v1726 = vadd.f32 0.0, %v1725
      %1727 = vmatprep.mubr.f32.mxu0 0.0
      %1728 = vmatmul.mubr.f32.gmra.mrb[0].mxu0 %v989
      %v1729 = vpop.f32.mrb[0].mxu0
      %v1730 = vadd.f32 0.0, %v1729
      %v1731 = vpop.f32.mrb[0].mxu0
      %v1732 = vadd.f32 0.0, %v1731
      %1733 = vmatprep.mubr.f32.mxu0 0.0
      %1734 = vmatmul.mubr.f32.gmra.mrb[0].mxu0 %v990
      %v1735 = vpop.f32.mrb[0].mxu0
      %v1736 = vadd.f32 0.0, %v1735
      %v1737 = vpop.f32.mrb[0].mxu0
      %v1738 = vadd.f32 0.0, %v1737
      %1739 = vmatprep.mubr.f32.mxu0 0.0
      %1740 = vmatmul.mubr.f32.gmra.mrb[0].mxu0 %v991
      %v1741 = vpop.f32.mrb[0].mxu0
      %v1742 = vadd.f32 0.0, %v1741
      %v1743 = vpop.f32.mrb[0].mxu0
      %v1744 = vadd.f32 0.0, %v1743
      %1745 = vmatprep.mubr.f32.mxu0 0.0
      %1746 = vmatmul.mubr.f32.gmra.mrb[0].mxu0 %v992
      %v1747 = vpop.f32.mrb[0].mxu0
      %v1748 = vadd.f32 0.0, %v1747
      %v1749 = vpop.f32.mrb[0].mxu0
      %v1750 = vadd.f32 0.0, %v1749
      %1751 = vmatprep.mubr.f32.mxu0 0.0
      %1752 = vmatmul.mubr.f32.gmra.mrb[0].mxu0 %v993
      %v1753 = vpop.f32.mrb[0].mxu0
      %v1754 = vadd.f32 0.0, %v1753
      %v1755 = vpop.f32.mrb[0].mxu0
      %v1756 = vadd.f32 0.0, %v1755
      %1757 = vmatprep.mubr.f32.mxu0 0.0
      %1758 = vmatmul.mubr.f32.gmra.mrb[0].mxu0 %v994
      %v1759 = vpop.f32.mrb[0].mxu0
      %v1760 = vadd.f32 0.0, %v1759
      %v1761 = vpop.f32.mrb[0].mxu0
      %v1762 = vadd.f32 0.0, %v1761
      %1763 = vmatprep.mubr.f32.mxu0 0.0
      %1764 = vmatmul.mubr.f32.gmra.mrb[0].mxu0 %v995
      %v1765 = vpop.f32.mrb[0].mxu0
      %v1766 = vadd.f32 0.0, %v1765
      %v1767 = vpop.f32.mrb[0].mxu0
      %v1768 = vadd.f32 0.0, %v1767
      %1769 = vmatprep.mubr.f32.mxu0 0.0
      %1770 = vmatmul.mubr.f32.gmra.mrb[0].mxu0 %v996
      %v1771 = vpop.f32.mrb[0].mxu0
      %v1772 = vadd.f32 0.0, %v1771
      %v1773 = vpop.f32.mrb[0].mxu0
      %v1774 = vadd.f32 0.0, %v1773
      %1775 = vmatprep.mubr.f32.mxu0 0.0
      %1776 = vmatmul.mubr.f32.gmra.mrb[0].mxu0 %v997
      %v1777 = vpop.f32.mrb[0].mxu0
      %v1778 = vadd.f32 0.0, %v1777
      %v1779 = vpop.f32.mrb[0].mxu0
      %v1780 = vadd.f32 0.0, %v1779
      %1781 = vmatprep.mubr.f32.mxu0 0.0
      %1782 = vmatmul.mubr.f32.gmra.mrb[0].mxu0 %v998
      %v1783 = vpop.f32.mrb[0].mxu0
      %v1784 = vadd.f32 0.0, %v1783
      %v1785 = vpop.f32.mrb[0].mxu0
      %v1786 = vadd.f32 0.0, %v1785
      %1787 = vmatprep.mubr.f32.mxu0 0.0
      %1788 = vmatmul.mubr.f32.gmra.mrb[0].mxu0 %v999
      %v1789 = vpop.f32.mrb[0].mxu0
      %v1790 = vadd.f32 0.0, %v1789
      %v1791 = vpop.f32.mrb[0].mxu0
      %v1792 = vadd.f32 0.0, %v1791
      %1793 = vmatprep.mubr.f32.mxu0 0.0
      %1794 = vmatmul.mubr.f32.gmra.mrb[0].mxu0 %v1000
      %v1795 = vpop.f32.mrb[0].mxu0
      %v1796 = vadd.f32 0.0, %v1795
      %v1797 = vpop.f32.mrb[0].mxu0
      %v1798 = vadd.f32 0.0, %v1797
      %1799 = vmatprep.mubr.f32.mxu0 0.0
      %1800 = vmatmul.mubr.f32.gmra.mrb[0].mxu0 %v1001
      %v1801 = vpop.f32.mrb[0].mxu0
      %v1802 = vadd.f32 0.0, %v1801
      %v1803 = vpop.f32.mrb[0].mxu0
      %v1804 = vadd.f32 0.0, %v1803
      %1805 = vmatprep.mubr.f32.mxu0 0.0
      %1806 = vmatmul.mubr.f32.gmra.mrb[0].mxu0 %v1002
      %v1807 = vpop.f32.mrb[0].mxu0
      %v1808 = vadd.f32 0.0, %v1807
      %v1809 = vpop.f32.mrb[0].mxu0
      %v1810 = vadd.f32 0.0, %v1809
      %1811 = vdwg.mxu0
      %1812 = vmatprep.subr.mxu0 0.0
      %1813 = vmatpush1.msra.mxu0 %v1605
      %1814 = vmatprep.subr.mxu0 0.0
      %1815 = vmatpush1.msra.mxu0 %v1608
      %1816 = vmatprep.subr.mxu0 0.0
      %1817 = vmatpush1.msra.mxu0 %v1611
      %1818 = vmatprep.subr.mxu0 0.0
      %1819 = vmatpush1.msra.mxu0 %v1614
      %1820 = vmatprep.subr.mxu0 0.0
      %1821 = vmatpush1.msra.mxu0 %v1617
      %1822 = vmatprep.subr.mxu0 0.0
      %1823 = vmatpush1.msra.mxu0 %v1620
      %1824 = vmatprep.subr.mxu0 0.0
      %1825 = vmatpush1.msra.mxu0 %v1623
      %1826 = vmatprep.subr.mxu0 0.0
      %1827 = vmatpush1.msra.mxu0 %v1626
      %1828 = vmatprep.subr.mxu0 0.0
      %1829 = vmatpush1.msra.mxu0 %v1629
      %1830 = vmatprep.subr.mxu0 0.0
      %1831 = vmatpush1.msra.mxu0 %v1632
      %1832 = vmatprep.subr.mxu0 0.0
      %1833 = vmatpush1.msra.mxu0 %v1635
      %1834 = vmatprep.subr.mxu0 0.0
      %1835 = vmatpush1.msra.mxu0 %v1638
      %1836 = vmatprep.subr.mxu0 0.0
      %1837 = vmatpush1.msra.mxu0 %v1641
      %1838 = vmatprep.subr.mxu0 0.0
      %1839 = vmatpush1.msra.mxu0 %v1644
      %1840 = vmatprep.subr.mxu0 0.0
      %1841 = vmatpush1.msra.mxu0 %v1647
      %1842 = vmatprep.subr.mxu0 0.0
      %1843 = vmatpush1.msra.mxu0 %v1650
      %1844 = vmatprep.subr.mxu0 0.0
      %1845 = vmatpush1.msra.mxu0 0.0
      %1846 = vmatprep.subr.mxu0 0.0
      %1847 = vmatpush1.msra.mxu0 0.0
      %1848 = vmatprep.subr.mxu0 0.0
      %1849 = vmatpush1.msra.mxu0 0.0
      %1850 = vmatprep.subr.mxu0 0.0
      %1851 = vmatpush1.msra.mxu0 0.0
      %1852 = vmatprep.subr.mxu0 0.0
      %1853 = vmatpush1.msra.mxu0 0.0
      %1854 = vmatprep.subr.mxu0 0.0
      %1855 = vmatpush1.msra.mxu0 0.0
      %1856 = vmatprep.subr.mxu0 0.0
      %1857 = vmatpush1.msra.mxu0 0.0
      %1858 = vmatprep.subr.mxu0 0.0
      %1859 = vmatpush1.msra.mxu0 0.0
      %1860 = vmatprep.subr.mxu0 0.0
      %1861 = vmatpush1.msra.mxu0 0.0
      %1862 = vmatprep.subr.mxu0 0.0
      %1863 = vmatpush1.msra.mxu0 0.0
      %1864 = vmatprep.subr.mxu0 0.0
      %1865 = vmatpush1.msra.mxu0 0.0
      %1866 = vmatprep.subr.mxu0 0.0
      %1867 = vmatpush1.msra.mxu0 0.0
      %1868 = vmatprep.subr.mxu0 0.0
      %1869 = vmatpush1.msra.mxu0 0.0
      %1870 = vmatprep.subr.mxu0 0.0
      %1871 = vmatpush1.msra.mxu0 0.0
      %1872 = vmatprep.subr.mxu0 0.0
      %1873 = vmatpush1.msra.mxu0 0.0
      %1874 = vmatprep.subr.mxu0 0.0
      %1875 = vmatpush1.msra.mxu0 0.0
      %1876 = vmatprep.mubr.f32.mxu0 0.0
      %1877 = vmatmul.mubr.f32.gmra.mrb[0].mxu0 %v987
      %v1878 = vpop.f32.mrb[0].mxu0
      %v1879 = vadd.f32 0.0, %v1878
      %v1880 = vpop.f32.mrb[0].mxu0
      %1881 = vmatprep.mubr.f32.mxu0 0.0
      %1882 = vmatmul.mubr.f32.gmra.mrb[0].mxu0 %v988
      %v1883 = vpop.f32.mrb[0].mxu0
      %v1884 = vadd.f32 0.0, %v1883
      %v1885 = vpop.f32.mrb[0].mxu0
      %1886 = vmatprep.mubr.f32.mxu0 0.0
      %1887 = vmatmul.mubr.f32.gmra.mrb[0].mxu0 %v989
      %v1888 = vpop.f32.mrb[0].mxu0
      %v1889 = vadd.f32 0.0, %v1888
      %v1890 = vpop.f32.mrb[0].mxu0
      %1891 = vmatprep.mubr.f32.mxu0 0.0
      %1892 = vmatmul.mubr.f32.gmra.mrb[0].mxu0 %v990
      %v1893 = vpop.f32.mrb[0].mxu0
      %v1894 = vadd.f32 0.0, %v1893
      %v1895 = vpop.f32.mrb[0].mxu0
      %1896 = vmatprep.mubr.f32.mxu0 0.0
      %1897 = vmatmul.mubr.f32.gmra.mrb[0].mxu0 %v991
      %v1898 = vpop.f32.mrb[0].mxu0
      %v1899 = vadd.f32 0.0, %v1898
      %v1900 = vpop.f32.mrb[0].mxu0
      %1901 = vmatprep.mubr.f32.mxu0 0.0
      %1902 = vmatmul.mubr.f32.gmra.mrb[0].mxu0 %v992
      %v1903 = vpop.f32.mrb[0].mxu0
      %v1904 = vadd.f32 0.0, %v1903
      %v1905 = vpop.f32.mrb[0].mxu0
      %1906 = vmatprep.mubr.f32.mxu0 0.0
      %1907 = vmatmul.mubr.f32.gmra.mrb[0].mxu0 %v993
      %v1908 = vpop.f32.mrb[0].mxu0
      %v1909 = vadd.f32 0.0, %v1908
      %v1910 = vpop.f32.mrb[0].mxu0
      %1911 = vmatprep.mubr.f32.mxu0 0.0
      %1912 = vmatmul.mubr.f32.gmra.mrb[0].mxu0 %v994
      %v1913 = vpop.f32.mrb[0].mxu0
      %v1914 = vadd.f32 0.0, %v1913
      %v1915 = vpop.f32.mrb[0].mxu0
      %1916 = vmatprep.mubr.f32.mxu0 0.0
      %1917 = vmatmul.mubr.f32.gmra.mrb[0].mxu0 %v995
      %v1918 = vpop.f32.mrb[0].mxu0
      %v1919 = vadd.f32 0.0, %v1918
      %v1920 = vpop.f32.mrb[0].mxu0
      %1921 = vmatprep.mubr.f32.mxu0 0.0
      %1922 = vmatmul.mubr.f32.gmra.mrb[0].mxu0 %v996
      %v1923 = vpop.f32.mrb[0].mxu0
      %v1924 = vadd.f32 0.0, %v1923
      %v1925 = vpop.f32.mrb[0].mxu0
      %1926 = vmatprep.mubr.f32.mxu0 0.0
      %1927 = vmatmul.mubr.f32.gmra.mrb[0].mxu0 %v997
      %v1928 = vpop.f32.mrb[0].mxu0
      %v1929 = vadd.f32 0.0, %v1928
      %v1930 = vpop.f32.mrb[0].mxu0
      %1931 = vmatprep.mubr.f32.mxu0 0.0
      %1932 = vmatmul.mubr.f32.gmra.mrb[0].mxu0 %v998
      %v1933 = vpop.f32.mrb[0].mxu0
      %v1934 = vadd.f32 0.0, %v1933
      %v1935 = vpop.f32.mrb[0].mxu0
      %1936 = vmatprep.mubr.f32.mxu0 0.0
      %1937 = vmatmul.mubr.f32.gmra.mrb[0].mxu0 %v999
      %v1938 = vpop.f32.mrb[0].mxu0
      %v1939 = vadd.f32 0.0, %v1938
      %v1940 = vpop.f32.mrb[0].mxu0
      %1941 = vmatprep.mubr.f32.mxu0 0.0
      %1942 = vmatmul.mubr.f32.gmra.mrb[0].mxu0 %v1000
      %v1943 = vpop.f32.mrb[0].mxu0
      %v1944 = vadd.f32 0.0, %v1943
      %v1945 = vpop.f32.mrb[0].mxu0
      %1946 = vmatprep.mubr.f32.mxu0 0.0
      %1947 = vmatmul.mubr.f32.gmra.mrb[0].mxu0 %v1001
      %v1948 = vpop.f32.mrb[0].mxu0
      %v1949 = vadd.f32 0.0, %v1948
      %v1950 = vpop.f32.mrb[0].mxu0
      %1951 = vmatprep.mubr.f32.mxu0 0.0
      %1952 = vmatmul.mubr.f32.gmra.mrb[0].mxu0 %v1002
      %v1953 = vpop.f32.mrb[0].mxu0
      %v1954 = vadd.f32 0.0, %v1953
      %v1955 = vpop.f32.mrb[0].mxu0
      %1956 = vdwg.mxu0
      %vm2005 = vcmask 1045504
      %v2006 = vrot.slane %v1718, 2
      %v2007 = vrot.slane %v1724, 2
      %v2008 = vsel %vm2005, %v2006, %v2007
      %v2009 = vrot.slane %v1720, 2
      %v2010 = vrot.slane %v1726, 2
      %v2011 = vsel %vm2005, %v2009, %v2010
      %v2012 = vrot.slane %v1879, 2
      %v2013 = vrot.slane %v1884, 2
      %v2014 = vsel %vm2005, %v2012, %v2013
      %v2015 = vrot.slane %v1730, 2
      %v2016 = vsel %vm2005, %v2007, %v2015
      %v2017 = vrot.slane %v1732, 2
      %v2018 = vsel %vm2005, %v2010, %v2017
      %v2019 = vrot.slane %v1889, 2
      %v2020 = vsel %vm2005, %v2013, %v2019
      %v2021 = vrot.slane %v1736, 2
      %v2022 = vsel %vm2005, %v2015, %v2021
      %v2023 = vrot.slane %v1738, 2
      %v2024 = vsel %vm2005, %v2017, %v2023
      %v2025 = vrot.slane %v1894, 2
      %v2026 = vsel %vm2005, %v2019, %v2025
      %v2027 = vrot.slane %v1742, 2
      %v2028 = vsel %vm2005, %v2021, %v2027
      %v2029 = vrot.slane %v1744, 2
      %v2030 = vsel %vm2005, %v2023, %v2029
      %v2031 = vrot.slane %v1899, 2
      %v2032 = vsel %vm2005, %v2025, %v2031
      %v2033 = vrot.slane %v1748, 2
      %v2034 = vsel %vm2005, %v2027, %v2033
      %v2035 = vrot.slane %v1750, 2
      %v2036 = vsel %vm2005, %v2029, %v2035
      %v2037 = vrot.slane %v1904, 2
      %v2038 = vsel %vm2005, %v2031, %v2037
      %v2039 = vrot.slane %v1754, 2
      %v2040 = vsel %vm2005, %v2033, %v2039
      %v2041 = vrot.slane %v1756, 2
      %v2042 = vsel %vm2005, %v2035, %v2041
      %v2043 = vrot.slane %v1909, 2
      %v2044 = vsel %vm2005, %v2037, %v2043
      %v2045 = vrot.slane %v1760, 2
      %v2046 = vsel %vm2005, %v2039, %v2045
      %v2047 = vrot.slane %v1762, 2
      %v2048 = vsel %vm2005, %v2041, %v2047
      %v2049 = vrot.slane %v1914, 2
      %v2050 = vsel %vm2005, %v2043, %v2049
      %v2051 = vrot.slane %v1766, 2
      %v2052 = vsel %vm2005, %v2045, %v2051
      %v2053 = vrot.slane %v1768, 2
      %v2054 = vsel %vm2005, %v2047, %v2053
      %v2055 = vrot.slane %v1919, 2
      %v2056 = vsel %vm2005, %v2049, %v2055
      %v2057 = vrot.slane %v1772, 2
      %v2058 = vsel %vm2005, %v2051, %v2057
      %v2059 = vrot.slane %v1774, 2
      %v2060 = vsel %vm2005, %v2053, %v2059
      %v2061 = vrot.slane %v1924, 2
      %v2062 = vsel %vm2005, %v2055, %v2061
      %v2063 = vrot.slane %v1778, 2
      %v2064 = vsel %vm2005, %v2057, %v2063
      %v2065 = vrot.slane %v1780, 2
      %v2066 = vsel %vm2005, %v2059, %v2065
      %v2067 = vrot.slane %v1929, 2
      %v2068 = vsel %vm2005, %v2061, %v2067
      %v2069 = vrot.slane %v1784, 2
      %v2070 = vsel %vm2005, %v2063, %v2069
      %v2071 = vrot.slane %v1786, 2
      %v2072 = vsel %vm2005, %v2065, %v2071
      %v2073 = vrot.slane %v1934, 2
      %v2074 = vsel %vm2005, %v2067, %v2073
      %v2075 = vrot.slane %v1790, 2
      %v2076 = vsel %vm2005, %v2069, %v2075
      %v2077 = vrot.slane %v1792, 2
      %v2078 = vsel %vm2005, %v2071, %v2077
      %v2079 = vrot.slane %v1939, 2
      %v2080 = vsel %vm2005, %v2073, %v2079
      %v2081 = vrot.slane %v1796, 2
      %v2082 = vsel %vm2005, %v2075, %v2081
      %v2083 = vrot.slane %v1798, 2
      %v2084 = vsel %vm2005, %v2077, %v2083
      %v2085 = vrot.slane %v1944, 2
      %v2086 = vsel %vm2005, %v2079, %v2085
      %v2087 = vrot.slane %v1802, 2
      %v2088 = vsel %vm2005, %v2081, %v2087
      %v2089 = vrot.slane %v1804, 2
      %v2090 = vsel %vm2005, %v2083, %v2089
      %v2091 = vrot.slane %v1949, 2
      %v2092 = vsel %vm2005, %v2085, %v2091
      %v2093 = vrot.slane %v1808, 2
      %v2094 = vsel %vm2005, %v2087, %v2093
      %v2095 = vrot.slane %v1810, 2
      %v2096 = vsel %vm2005, %v2089, %v2095
      %v2097 = vrot.slane %v1954, 2
      %v2098 = vsel %vm2005, %v2091, %v2097
      %v2150 = vsel %vm2005, %v2093, %v2006
      %v2151 = vsel %vm2005, %v2095, %v2009
      %v2152 = vsel %vm2005, %v2097, %v2012
      %2153 = vmatprep.subr.mxu0 %v1004
      %2154 = vmatpush1.msra.mxu0 %v1003
      %2155 = vmatprep.subr.mxu0 %v1007
      %2156 = vmatpush1.msra.mxu0 %v1006
      %2157 = vmatprep.subr.mxu0 %v1010
      %2158 = vmatpush1.msra.mxu0 %v1009
      %2159 = vmatprep.subr.mxu0 %v1013
      %2160 = vmatpush1.msra.mxu0 %v1012
      %2161 = vmatprep.subr.mxu0 %v1016
      %2162 = vmatpush1.msra.mxu0 %v1015
      %2163 = vmatprep.subr.mxu0 %v1019
      %2164 = vmatpush1.msra.mxu0 %v1018
      %2165 = vmatprep.subr.mxu0 %v1022
      %2166 = vmatpush1.msra.mxu0 %v1021
      %2167 = vmatprep.subr.mxu0 %v1025
      %2168 = vmatpush1.msra.mxu0 %v1024
      %2169 = vmatprep.subr.mxu0 %v1028
      %2170 = vmatpush1.msra.mxu0 %v1027
      %2171 = vmatprep.subr.mxu0 %v1031
      %2172 = vmatpush1.msra.mxu0 %v1030
      %2173 = vmatprep.subr.mxu0 %v1034
      %2174 = vmatpush1.msra.mxu0 %v1033
      %2175 = vmatprep.subr.mxu0 %v1037
      %2176 = vmatpush1.msra.mxu0 %v1036
      %2177 = vmatprep.subr.mxu0 %v1040
      %2178 = vmatpush1.msra.mxu0 %v1039
      %2179 = vmatprep.subr.mxu0 %v1043
      %2180 = vmatpush1.msra.mxu0 %v1042
      %2181 = vmatprep.subr.mxu0 %v1046
      %2182 = vmatpush1.msra.mxu0 %v1045
      %2183 = vmatprep.subr.mxu0 %v1049
      %2184 = vmatpush1.msra.mxu0 %v1048
      %2185 = vmatprep.subr.mxu0 0.0
      %2186 = vmatpush1.msra.mxu0 0.0
      %2187 = vmatprep.subr.mxu0 0.0
      %2188 = vmatpush1.msra.mxu0 0.0
      %2189 = vmatprep.subr.mxu0 0.0
      %2190 = vmatpush1.msra.mxu0 0.0
      %2191 = vmatprep.subr.mxu0 0.0
      %2192 = vmatpush1.msra.mxu0 0.0
      %2193 = vmatprep.subr.mxu0 0.0
      %2194 = vmatpush1.msra.mxu0 0.0
      %2195 = vmatprep.subr.mxu0 0.0
      %2196 = vmatpush1.msra.mxu0 0.0
      %2197 = vmatprep.subr.mxu0 0.0
      %2198 = vmatpush1.msra.mxu0 0.0
      %2199 = vmatprep.subr.mxu0 0.0
      %2200 = vmatpush1.msra.mxu0 0.0
      %2201 = vmatprep.subr.mxu0 0.0
      %2202 = vmatpush1.msra.mxu0 0.0
      %2203 = vmatprep.subr.mxu0 0.0
      %2204 = vmatpush1.msra.mxu0 0.0
      %2205 = vmatprep.subr.mxu0 0.0
      %2206 = vmatpush1.msra.mxu0 0.0
      %2207 = vmatprep.subr.mxu0 0.0
      %2208 = vmatpush1.msra.mxu0 0.0
      %2209 = vmatprep.subr.mxu0 0.0
      %2210 = vmatpush1.msra.mxu0 0.0
      %2211 = vmatprep.subr.mxu0 0.0
      %2212 = vmatpush1.msra.mxu0 0.0
      %2213 = vmatprep.subr.mxu0 0.0
      %2214 = vmatpush1.msra.mxu0 0.0
      %2215 = vmatprep.subr.mxu0 0.0
      %2216 = vmatpush1.msra.mxu0 0.0
      %2217 = vmatprep.mubr.f32.mxu0 0.0
      %2218 = vmatmul.mubr.f32.gmra.mrb[0].mxu0 %v987
      %v2219 = vpop.f32.mrb[0].mxu0
      %v2220 = vadd.f32 %v1457, %v2219
      %v2221 = vpop.f32.mrb[0].mxu0
      %v2222 = vadd.f32 %v1460, %v2221
      %2223 = vmatprep.mubr.f32.mxu0 0.0
      %2224 = vmatmul.mubr.f32.gmra.mrb[0].mxu0 %v988
      %v2225 = vpop.f32.mrb[0].mxu0
      %v2226 = vadd.f32 %v1465, %v2225
      %v2227 = vpop.f32.mrb[0].mxu0
      %v2228 = vadd.f32 %v1467, %v2227
      %2229 = vmatprep.mubr.f32.mxu0 0.0
      %2230 = vmatmul.mubr.f32.gmra.mrb[0].mxu0 %v989
      %v2231 = vpop.f32.mrb[0].mxu0
      %v2232 = vadd.f32 %v1471, %v2231
      %v2233 = vpop.f32.mrb[0].mxu0
      %v2234 = vadd.f32 %v1473, %v2233
      %2235 = vmatprep.mubr.f32.mxu0 0.0
      %2236 = vmatmul.mubr.f32.gmra.mrb[0].mxu0 %v990
      %v2237 = vpop.f32.mrb[0].mxu0
      %v2238 = vadd.f32 %v1477, %v2237
      %v2239 = vpop.f32.mrb[0].mxu0
      %v2240 = vadd.f32 %v1479, %v2239
      %2241 = vmatprep.mubr.f32.mxu0 0.0
      %2242 = vmatmul.mubr.f32.gmra.mrb[0].mxu0 %v991
      %v2243 = vpop.f32.mrb[0].mxu0
      %v2244 = vadd.f32 %v1483, %v2243
      %v2245 = vpop.f32.mrb[0].mxu0
      %v2246 = vadd.f32 %v1485, %v2245
      %2247 = vmatprep.mubr.f32.mxu0 0.0
      %2248 = vmatmul.mubr.f32.gmra.mrb[0].mxu0 %v992
      %v2249 = vpop.f32.mrb[0].mxu0
      %v2250 = vadd.f32 %v1489, %v2249
      %v2251 = vpop.f32.mrb[0].mxu0
      %v2252 = vadd.f32 %v1491, %v2251
      %2253 = vmatprep.mubr.f32.mxu0 0.0
      %2254 = vmatmul.mubr.f32.gmra.mrb[0].mxu0 %v993
      %v2255 = vpop.f32.mrb[0].mxu0
      %v2256 = vadd.f32 %v1495, %v2255
      %v2257 = vpop.f32.mrb[0].mxu0
      %v2258 = vadd.f32 %v1497, %v2257
      %2259 = vmatprep.mubr.f32.mxu0 0.0
      %2260 = vmatmul.mubr.f32.gmra.mrb[0].mxu0 %v994
      %v2261 = vpop.f32.mrb[0].mxu0
      %v2262 = vadd.f32 %v1501, %v2261
      %v2263 = vpop.f32.mrb[0].mxu0
      %v2264 = vadd.f32 %v1503, %v2263
      %2265 = vmatprep.mubr.f32.mxu0 0.0
      %2266 = vmatmul.mubr.f32.gmra.mrb[0].mxu0 %v995
      %v2267 = vpop.f32.mrb[0].mxu0
      %v2268 = vadd.f32 %v1507, %v2267
      %v2269 = vpop.f32.mrb[0].mxu0
      %v2270 = vadd.f32 %v1509, %v2269
      %2271 = vmatprep.mubr.f32.mxu0 0.0
      %2272 = vmatmul.mubr.f32.gmra.mrb[0].mxu0 %v996
      %v2273 = vpop.f32.mrb[0].mxu0
      %v2274 = vadd.f32 %v1513, %v2273
      %v2275 = vpop.f32.mrb[0].mxu0
      %v2276 = vadd.f32 %v1515, %v2275
      %2277 = vmatprep.mubr.f32.mxu0 0.0
      %2278 = vmatmul.mubr.f32.gmra.mrb[0].mxu0 %v997
      %v2279 = vpop.f32.mrb[0].mxu0
      %v2280 = vadd.f32 %v1519, %v2279
      %v2281 = vpop.f32.mrb[0].mxu0
      %v2282 = vadd.f32 %v1521, %v2281
      %2283 = vmatprep.mubr.f32.mxu0 0.0
      %2284 = vmatmul.mubr.f32.gmra.mrb[0].mxu0 %v998
      %v2285 = vpop.f32.mrb[0].mxu0
      %v2286 = vadd.f32 %v1525, %v2285
      %v2287 = vpop.f32.mrb[0].mxu0
      %v2288 = vadd.f32 %v1527, %v2287
      %2289 = vmatprep.mubr.f32.mxu0 0.0
      %2290 = vmatmul.mubr.f32.gmra.mrb[0].mxu0 %v999
      %v2291 = vpop.f32.mrb[0].mxu0
      %v2292 = vadd.f32 %v1531, %v2291
      %v2293 = vpop.f32.mrb[0].mxu0
      %v2294 = vadd.f32 %v1533, %v2293
      %2295 = vmatprep.mubr.f32.mxu0 0.0
      %2296 = vmatmul.mubr.f32.gmra.mrb[0].mxu0 %v1000
      %v2297 = vpop.f32.mrb[0].mxu0
      %v2298 = vadd.f32 %v1537, %v2297
      %v2299 = vpop.f32.mrb[0].mxu0
      %v2300 = vadd.f32 %v1539, %v2299
      %2301 = vmatprep.mubr.f32.mxu0 0.0
      %2302 = vmatmul.mubr.f32.gmra.mrb[0].mxu0 %v1001
      %v2303 = vpop.f32.mrb[0].mxu0
      %v2304 = vadd.f32 %v1543, %v2303
      %v2305 = vpop.f32.mrb[0].mxu0
      %v2306 = vadd.f32 %v1545, %v2305
      %2307 = vmatprep.mubr.f32.mxu0 0.0
      %2308 = vmatmul.mubr.f32.gmra.mrb[0].mxu0 %v1002
      %v2309 = vpop.f32.mrb[0].mxu0
      %v2310 = vadd.f32 %v1599, %v2309
      %v2311 = vpop.f32.mrb[0].mxu0
      %v2312 = vadd.f32 %v1600, %v2311
      %2313 = vdwg.mxu0
      %2314 = vmatprep.subr.mxu0 0.0
      %2315 = vmatpush1.msra.mxu0 %v1005
      %2316 = vmatprep.subr.mxu0 0.0
      %2317 = vmatpush1.msra.mxu0 %v1008
      %2318 = vmatprep.subr.mxu0 0.0
      %2319 = vmatpush1.msra.mxu0 %v1011
      %2320 = vmatprep.subr.mxu0 0.0
      %2321 = vmatpush1.msra.mxu0 %v1014
      %2322 = vmatprep.subr.mxu0 0.0
      %2323 = vmatpush1.msra.mxu0 %v1017
      %2324 = vmatprep.subr.mxu0 0.0
      %2325 = vmatpush1.msra.mxu0 %v1020
      %2326 = vmatprep.subr.mxu0 0.0
      %2327 = vmatpush1.msra.mxu0 %v1023
      %2328 = vmatprep.subr.mxu0 0.0
      %2329 = vmatpush1.msra.mxu0 %v1026
      %2330 = vmatprep.subr.mxu0 0.0
      %2331 = vmatpush1.msra.mxu0 %v1029
      %2332 = vmatprep.subr.mxu0 0.0
      %2333 = vmatpush1.msra.mxu0 %v1032
      %2334 = vmatprep.subr.mxu0 0.0
      %2335 = vmatpush1.msra.mxu0 %v1035
      %2336 = vmatprep.subr.mxu0 0.0
      %2337 = vmatpush1.msra.mxu0 %v1038
      %2338 = vmatprep.subr.mxu0 0.0
      %2339 = vmatpush1.msra.mxu0 %v1041
      %2340 = vmatprep.subr.mxu0 0.0
      %2341 = vmatpush1.msra.mxu0 %v1044
      %2342 = vmatprep.subr.mxu0 0.0
      %2343 = vmatpush1.msra.mxu0 %v1047
      %2344 = vmatprep.subr.mxu0 0.0
      %2345 = vmatpush1.msra.mxu0 %v1050
      %2346 = vmatprep.subr.mxu0 0.0
      %2347 = vmatpush1.msra.mxu0 0.0
      %2348 = vmatprep.subr.mxu0 0.0
      %2349 = vmatpush1.msra.mxu0 0.0
      %2350 = vmatprep.subr.mxu0 0.0
      %2351 = vmatpush1.msra.mxu0 0.0
      %2352 = vmatprep.subr.mxu0 0.0
      %2353 = vmatpush1.msra.mxu0 0.0
      %2354 = vmatprep.subr.mxu0 0.0
      %2355 = vmatpush1.msra.mxu0 0.0
      %2356 = vmatprep.subr.mxu0 0.0
      %2357 = vmatpush1.msra.mxu0 0.0
      %2358 = vmatprep.subr.mxu0 0.0
      %2359 = vmatpush1.msra.mxu0 0.0
      %2360 = vmatprep.subr.mxu0 0.0
      %2361 = vmatpush1.msra.mxu0 0.0
      %2362 = vmatprep.subr.mxu0 0.0
      %2363 = vmatpush1.msra.mxu0 0.0
      %2364 = vmatprep.subr.mxu0 0.0
      %2365 = vmatpush1.msra.mxu0 0.0
      %2366 = vmatprep.subr.mxu0 0.0
      %2367 = vmatpush1.msra.mxu0 0.0
      %2368 = vmatprep.subr.mxu0 0.0
      %2369 = vmatpush1.msra.mxu0 0.0
      %2370 = vmatprep.subr.mxu0 0.0
      %2371 = vmatpush1.msra.mxu0 0.0
      %2372 = vmatprep.subr.mxu0 0.0
      %2373 = vmatpush1.msra.mxu0 0.0
      %2374 = vmatprep.subr.mxu0 0.0
      %2375 = vmatpush1.msra.mxu0 0.0
      %2376 = vmatprep.subr.mxu0 0.0
      %2377 = vmatpush1.msra.mxu0 0.0
      %2378 = vmatprep.mubr.f32.mxu0 0.0
      %2379 = vmatmul.mubr.f32.gmra.mrb[0].mxu0 %v987
      %v2380 = vpop.f32.mrb[0].mxu0
      %v2381 = vadd.f32 %v1463, %v2380
      %v2382 = vpop.f32.mrb[0].mxu0
      %2383 = vmatprep.mubr.f32.mxu0 0.0
      %2384 = vmatmul.mubr.f32.gmra.mrb[0].mxu0 %v988
      %v2385 = vpop.f32.mrb[0].mxu0
      %v2386 = vadd.f32 %v1469, %v2385
      %v2387 = vpop.f32.mrb[0].mxu0
      %2388 = vmatprep.mubr.f32.mxu0 0.0
      %2389 = vmatmul.mubr.f32.gmra.mrb[0].mxu0 %v989
      %v2390 = vpop.f32.mrb[0].mxu0
      %v2391 = vadd.f32 %v1475, %v2390
      %v2392 = vpop.f32.mrb[0].mxu0
      %2393 = vmatprep.mubr.f32.mxu0 0.0
      %2394 = vmatmul.mubr.f32.gmra.mrb[0].mxu0 %v990
      %v2395 = vpop.f32.mrb[0].mxu0
      %v2396 = vadd.f32 %v1481, %v2395
      %v2397 = vpop.f32.mrb[0].mxu0
      %2398 = vmatprep.mubr.f32.mxu0 0.0
      %2399 = vmatmul.mubr.f32.gmra.mrb[0].mxu0 %v991
      %v2400 = vpop.f32.mrb[0].mxu0
      %v2401 = vadd.f32 %v1487, %v2400
      %v2402 = vpop.f32.mrb[0].mxu0
      %2403 = vmatprep.mubr.f32.mxu0 0.0
      %2404 = vmatmul.mubr.f32.gmra.mrb[0].mxu0 %v992
      %v2405 = vpop.f32.mrb[0].mxu0
      %v2406 = vadd.f32 %v1493, %v2405
      %v2407 = vpop.f32.mrb[0].mxu0
      %2408 = vmatprep.mubr.f32.mxu0 0.0
      %2409 = vmatmul.mubr.f32.gmra.mrb[0].mxu0 %v993
      %v2410 = vpop.f32.mrb[0].mxu0
      %v2411 = vadd.f32 %v1499, %v2410
      %v2412 = vpop.f32.mrb[0].mxu0
      %2413 = vmatprep.mubr.f32.mxu0 0.0
      %2414 = vmatmul.mubr.f32.gmra.mrb[0].mxu0 %v994
      %v2415 = vpop.f32.mrb[0].mxu0
      %v2416 = vadd.f32 %v1505, %v2415
      %v2417 = vpop.f32.mrb[0].mxu0
      %2418 = vmatprep.mubr.f32.mxu0 0.0
      %2419 = vmatmul.mubr.f32.gmra.mrb[0].mxu0 %v995
      %v2420 = vpop.f32.mrb[0].mxu0
      %v2421 = vadd.f32 %v1511, %v2420
      %v2422 = vpop.f32.mrb[0].mxu0
      %2423 = vmatprep.mubr.f32.mxu0 0.0
      %2424 = vmatmul.mubr.f32.gmra.mrb[0].mxu0 %v996
      %v2425 = vpop.f32.mrb[0].mxu0
      %v2426 = vadd.f32 %v1517, %v2425
      %v2427 = vpop.f32.mrb[0].mxu0
      %2428 = vmatprep.mubr.f32.mxu0 0.0
      %2429 = vmatmul.mubr.f32.gmra.mrb[0].mxu0 %v997
      %v2430 = vpop.f32.mrb[0].mxu0
      %v2431 = vadd.f32 %v1523, %v2430
      %v2432 = vpop.f32.mrb[0].mxu0
      %2433 = vmatprep.mubr.f32.mxu0 0.0
      %2434 = vmatmul.mubr.f32.gmra.mrb[0].mxu0 %v998
      %v2435 = vpop.f32.mrb[0].mxu0
      %v2436 = vadd.f32 %v1529, %v2435
      %v2437 = vpop.f32.mrb[0].mxu0
      %2438 = vmatprep.mubr.f32.mxu0 0.0
      %2439 = vmatmul.mubr.f32.gmra.mrb[0].mxu0 %v999
      %v2440 = vpop.f32.mrb[0].mxu0
      %v2441 = vadd.f32 %v1535, %v2440
      %v2442 = vpop.f32.mrb[0].mxu0
      %2443 = vmatprep.mubr.f32.mxu0 0.0
      %2444 = vmatmul.mubr.f32.gmra.mrb[0].mxu0 %v1000
      %v2445 = vpop.f32.mrb[0].mxu0
      %v2446 = vadd.f32 %v1541, %v2445
      %v2447 = vpop.f32.mrb[0].mxu0
      %2448 = vmatprep.mubr.f32.mxu0 0.0
      %2449 = vmatmul.mubr.f32.gmra.mrb[0].mxu0 %v1001
      %v2450 = vpop.f32.mrb[0].mxu0
      %v2451 = vadd.f32 %v1547, %v2450
      %v2452 = vpop.f32.mrb[0].mxu0
      %2453 = vmatprep.mubr.f32.mxu0 0.0
      %2454 = vmatmul.mubr.f32.gmra.mrb[0].mxu0 %v1002
      %v2455 = vpop.f32.mrb[0].mxu0
      %v2456 = vadd.f32 %v1601, %v2455
      %v2457 = vpop.f32.mrb[0].mxu0
      %2458 = vdwg.mxu0
      %v2459 = vadd.f32 %v2220, %v2008
      %v2460 = vadd.f32 %v2222, %v2011
      %v2461 = vadd.f32 %v2381, %v2014
      %v2462 = vadd.f32 %v2226, %v2016
      %v2463 = vadd.f32 %v2228, %v2018
      %v2464 = vadd.f32 %v2386, %v2020
      %v2465 = vadd.f32 %v2232, %v2022
      %v2466 = vadd.f32 %v2234, %v2024
      %v2467 = vadd.f32 %v2391, %v2026
      %v2468 = vadd.f32 %v2238, %v2028
      %v2469 = vadd.f32 %v2240, %v2030
      %v2470 = vadd.f32 %v2396, %v2032
      %v2471 = vadd.f32 %v2244, %v2034
      %v2472 = vadd.f32 %v2246, %v2036
      %v2473 = vadd.f32 %v2401, %v2038
      %v2474 = vadd.f32 %v2250, %v2040
      %v2475 = vadd.f32 %v2252, %v2042
      %v2476 = vadd.f32 %v2406, %v2044
      %v2477 = vadd.f32 %v2256, %v2046
      %v2478 = vadd.f32 %v2258, %v2048
      %v2479 = vadd.f32 %v2411, %v2050
      %v2480 = vadd.f32 %v2262, %v2052
      %v2481 = vadd.f32 %v2264, %v2054
      %v2482 = vadd.f32 %v2416, %v2056
      %v2483 = vadd.f32 %v2268, %v2058
      %v2484 = vadd.f32 %v2270, %v2060
      %v2485 = vadd.f32 %v2421, %v2062
      %v2486 = vadd.f32 %v2274, %v2064
      %v2487 = vadd.f32 %v2276, %v2066
      %v2488 = vadd.f32 %v2426, %v2068
      %v2489 = vadd.f32 %v2280, %v2070
      %v2490 = vadd.f32 %v2282, %v2072
      %v2491 = vadd.f32 %v2431, %v2074
      %v2492 = vadd.f32 %v2286, %v2076
      %v2493 = vadd.f32 %v2288, %v2078
      %v2494 = vadd.f32 %v2436, %v2080
      %v2495 = vadd.f32 %v2292, %v2082
      %v2496 = vadd.f32 %v2294, %v2084
      %v2497 = vadd.f32 %v2441, %v2086
      %v2498 = vadd.f32 %v2298, %v2088
      %v2499 = vadd.f32 %v2300, %v2090
      %v2500 = vadd.f32 %v2446, %v2092
      %v2501 = vadd.f32 %v2304, %v2094
      %v2502 = vadd.f32 %v2306, %v2096
      %v2503 = vadd.f32 %v2451, %v2098
      %v2504 = vadd.f32 %v2310, %v2150
      %v2505 = vadd.f32 %v2312, %v2151
      %v2506 = vadd.f32 %v2456, %v2152
      %v2507 = vld [vmem:[%s7] sm:$0x7]
      %v2509 = vlaneseq
      %v2510 = vshrl.u32 %v2509, 7
      %v2511 = vsub.s32 0, %v2510
      %v2512 = vrot.slane %v2507, %v2511
      %v2513 = vlaneseq
      %v2514 = vshrl.u32 %v2513, 7
      %v2515 = vsub.s32 1, %v2514
      %v2516 = vrot.slane %v2507, %v2515
      %v2517 = vlaneseq
      %v2518 = vshrl.u32 %v2517, 7
      %v2519 = vsub.s32 2, %v2518
      %v2520 = vrot.slane %v2507, %v2519
      %v2524 = vadd.f32 %v2459, %v2512
      %v2525 = vadd.f32 %v2460, %v2516
      %v2526 = vadd.f32 %v2461, %v2520
      %v2527 = vadd.f32 %v2462, %v2512
      %v2528 = vadd.f32 %v2463, %v2516
      %v2529 = vadd.f32 %v2464, %v2520
      %v2530 = vadd.f32 %v2465, %v2512
      %v2531 = vadd.f32 %v2466, %v2516
      %v2532 = vadd.f32 %v2467, %v2520
      %v2533 = vadd.f32 %v2468, %v2512
      %v2534 = vadd.f32 %v2469, %v2516
      %v2535 = vadd.f32 %v2470, %v2520
      %v2536 = vadd.f32 %v2471, %v2512
      %v2537 = vadd.f32 %v2472, %v2516
      %v2538 = vadd.f32 %v2473, %v2520
      %v2539 = vadd.f32 %v2474, %v2512
      %v2540 = vadd.f32 %v2475, %v2516
      %v2541 = vadd.f32 %v2476, %v2520
      %v2542 = vadd.f32 %v2477, %v2512
      %v2543 = vadd.f32 %v2478, %v2516
      %v2544 = vadd.f32 %v2479, %v2520
      %v2545 = vadd.f32 %v2480, %v2512
      %v2546 = vadd.f32 %v2481, %v2516
      %v2547 = vadd.f32 %v2482, %v2520
      %v2548 = vadd.f32 %v2483, %v2512
      %v2549 = vadd.f32 %v2484, %v2516
      %v2550 = vadd.f32 %v2485, %v2520
      %v2551 = vadd.f32 %v2486, %v2512
      %v2552 = vadd.f32 %v2487, %v2516
      %v2553 = vadd.f32 %v2488, %v2520
      %v2554 = vadd.f32 %v2489, %v2512
      %v2555 = vadd.f32 %v2490, %v2516
      %v2556 = vadd.f32 %v2491, %v2520
      %v2557 = vadd.f32 %v2492, %v2512
      %v2558 = vadd.f32 %v2493, %v2516
      %v2559 = vadd.f32 %v2494, %v2520
      %v2560 = vadd.f32 %v2495, %v2512
      %v2561 = vadd.f32 %v2496, %v2516
      %v2562 = vadd.f32 %v2497, %v2520
      %v2563 = vadd.f32 %v2498, %v2512
      %v2564 = vadd.f32 %v2499, %v2516
      %v2565 = vadd.f32 %v2500, %v2520
      %v2566 = vadd.f32 %v2501, %v2512
      %v2567 = vadd.f32 %v2502, %v2516
      %v2568 = vadd.f32 %v2503, %v2520
      %v2569 = vadd.f32 %v2504, %v2512
      %v2570 = vadd.f32 %v2505, %v2516
      %v2571 = vadd.f32 %v2506, %v2520
      %v2572 = vmax.f32 %v2524, 0.0
      %v2573 = vmax.f32 %v2525, 0.0
      %v2574 = vmax.f32 %v2526, 0.0
      %v2575 = vmax.f32 %v2527, 0.0
      %v2576 = vmax.f32 %v2528, 0.0
      %v2577 = vmax.f32 %v2529, 0.0
      %v2578 = vmax.f32 %v2530, 0.0
      %v2579 = vmax.f32 %v2531, 0.0
      %v2580 = vmax.f32 %v2532, 0.0
      %v2581 = vmax.f32 %v2533, 0.0
      %v2582 = vmax.f32 %v2534, 0.0
      %v2583 = vmax.f32 %v2535, 0.0
      %v2584 = vmax.f32 %v2536, 0.0
      %v2585 = vmax.f32 %v2537, 0.0
      %v2586 = vmax.f32 %v2538, 0.0
      %v2587 = vmax.f32 %v2539, 0.0
      %v2588 = vmax.f32 %v2540, 0.0
      %v2589 = vmax.f32 %v2541, 0.0
      %v2590 = vmax.f32 %v2542, 0.0
      %v2591 = vmax.f32 %v2543, 0.0
      %v2592 = vmax.f32 %v2544, 0.0
      %v2593 = vmax.f32 %v2545, 0.0
      %v2594 = vmax.f32 %v2546, 0.0
      %v2595 = vmax.f32 %v2547, 0.0
      %v2596 = vmax.f32 %v2548, 0.0
      %v2597 = vmax.f32 %v2549, 0.0
      %v2598 = vmax.f32 %v2550, 0.0
      %v2599 = vmax.f32 %v2551, 0.0
      %v2600 = vmax.f32 %v2552, 0.0
      %v2601 = vmax.f32 %v2553, 0.0
      %v2602 = vmax.f32 %v2554, 0.0
      %v2603 = vmax.f32 %v2555, 0.0
      %v2604 = vmax.f32 %v2556, 0.0
      %v2605 = vmax.f32 %v2557, 0.0
      %v2606 = vmax.f32 %v2558, 0.0
      %v2607 = vmax.f32 %v2559, 0.0
      %v2608 = vmax.f32 %v2560, 0.0
      %v2609 = vmax.f32 %v2561, 0.0
      %v2610 = vmax.f32 %v2562, 0.0
      %v2611 = vmax.f32 %v2563, 0.0
      %v2612 = vmax.f32 %v2564, 0.0
      %v2613 = vmax.f32 %v2565, 0.0
      %v2614 = vmax.f32 %v2566, 0.0
      %v2615 = vmax.f32 %v2567, 0.0
      %v2616 = vmax.f32 %v2568, 0.0
      %v2617 = vmax.f32 %v2569, 0.0
      %v2618 = vmax.f32 %v2570, 0.0
      %v2619 = vmax.f32 %v2571, 0.0
      %v2668 = vrot.slane %v2572, 1
      %v2669 = vrot.slane %v2575, 1
      %v2670 = vsel %vm1454, %v2668, %v2669
      %v2671 = vrot.slane %v2573, 1
      %v2672 = vrot.slane %v2576, 1
      %v2673 = vsel %vm1454, %v2671, %v2672
      %v2674 = vrot.slane %v2574, 1
      %v2675 = vrot.slane %v2577, 1
      %v2676 = vsel %vm1454, %v2674, %v2675
      %v2677 = vrot.slane %v2578, 1
      %v2678 = vsel %vm1454, %v2669, %v2677
      %v2679 = vrot.slane %v2579, 1
      %v2680 = vsel %vm1454, %v2672, %v2679
      %v2681 = vrot.slane %v2580, 1
      %v2682 = vsel %vm1454, %v2675, %v2681
      %v2683 = vrot.slane %v2581, 1
      %v2684 = vsel %vm1454, %v2677, %v2683
      %v2685 = vrot.slane %v2582, 1
      %v2686 = vsel %vm1454, %v2679, %v2685
      %v2687 = vrot.slane %v2583, 1
      %v2688 = vsel %vm1454, %v2681, %v2687
      %v2689 = vrot.slane %v2584, 1
      %v2690 = vsel %vm1454, %v2683, %v2689
      %v2691 = vrot.slane %v2585, 1
      %v2692 = vsel %vm1454, %v2685, %v2691
      %v2693 = vrot.slane %v2586, 1
      %v2694 = vsel %vm1454, %v2687, %v2693
      %v2695 = vrot.slane %v2587, 1
      %v2696 = vsel %vm1454, %v2689, %v2695
      %v2697 = vrot.slane %v2588, 1
      %v2698 = vsel %vm1454, %v2691, %v2697
      %v2699 = vrot.slane %v2589, 1
      %v2700 = vsel %vm1454, %v2693, %v2699
      %v2701 = vrot.slane %v2590, 1
      %v2702 = vsel %vm1454, %v2695, %v2701
      %v2703 = vrot.slane %v2591, 1
      %v2704 = vsel %vm1454, %v2697, %v2703
      %v2705 = vrot.slane %v2592, 1
      %v2706 = vsel %vm1454, %v2699, %v2705
      %v2707 = vrot.slane %v2593, 1
      %v2708 = vsel %vm1454, %v2701, %v2707
      %v2709 = vrot.slane %v2594, 1
      %v2710 = vsel %vm1454, %v2703, %v2709
      %v2711 = vrot.slane %v2595, 1
      %v2712 = vsel %vm1454, %v2705, %v2711
      %v2713 = vrot.slane %v2596, 1
      %v2714 = vsel %vm1454, %v2707, %v2713
      %v2715 = vrot.slane %v2597, 1
      %v2716 = vsel %vm1454, %v2709, %v2715
      %v2717 = vrot.slane %v2598, 1
      %v2718 = vsel %vm1454, %v2711, %v2717
      %v2719 = vrot.slane %v2599, 1
      %v2720 = vsel %vm1454, %v2713, %v2719
      %v2721 = vrot.slane %v2600, 1
      %v2722 = vsel %vm1454, %v2715, %v2721
      %v2723 = vrot.slane %v2601, 1
      %v2724 = vsel %vm1454, %v2717, %v2723
      %v2725 = vrot.slane %v2602, 1
      %v2726 = vsel %vm1454, %v2719, %v2725
      %v2727 = vrot.slane %v2603, 1
      %v2728 = vsel %vm1454, %v2721, %v2727
      %v2729 = vrot.slane %v2604, 1
      %v2730 = vsel %vm1454, %v2723, %v2729
      %v2731 = vrot.slane %v2605, 1
      %v2732 = vsel %vm1454, %v2725, %v2731
      %v2733 = vrot.slane %v2606, 1
      %v2734 = vsel %vm1454, %v2727, %v2733
      %v2735 = vrot.slane %v2607, 1
      %v2736 = vsel %vm1454, %v2729, %v2735
      %v2737 = vrot.slane %v2608, 1
      %v2738 = vsel %vm1454, %v2731, %v2737
      %v2739 = vrot.slane %v2609, 1
      %v2740 = vsel %vm1454, %v2733, %v2739
      %v2741 = vrot.slane %v2610, 1
      %v2742 = vsel %vm1454, %v2735, %v2741
      %v2743 = vrot.slane %v2611, 1
      %v2744 = vsel %vm1454, %v2737, %v2743
      %v2745 = vrot.slane %v2612, 1
      %v2746 = vsel %vm1454, %v2739, %v2745
      %v2747 = vrot.slane %v2613, 1
      %v2748 = vsel %vm1454, %v2741, %v2747
      %v2749 = vrot.slane %v2614, 1
      %v2750 = vsel %vm1454, %v2743, %v2749
      %v2751 = vrot.slane %v2615, 1
      %v2752 = vsel %vm1454, %v2745, %v2751
      %v2753 = vrot.slane %v2616, 1
      %v2754 = vsel %vm1454, %v2747, %v2753
      %v2755 = vrot.slane %v2617, 1
      %v2756 = vsel %vm1454, %v2749, %v2755
      %v2757 = vrot.slane %v2618, 1
      %v2758 = vsel %vm1454, %v2751, %v2757
      %v2759 = vrot.slane %v2619, 1
      %v2760 = vsel %vm1454, %v2753, %v2759
      %v2812 = vsel %vm1454, %v2755, %v2668
      %v2813 = vsel %vm1454, %v2757, %v2671
      %v2814 = vsel %vm1454, %v2759, %v2674
      %v2815 = vmax.f32 %v2572, %v2670
      %v2816 = vmax.f32 %v2573, %v2673
      %v2817 = vmax.f32 %v2574, %v2676
      %v2818 = vmax.f32 %v2575, %v2678
      %v2819 = vmax.f32 %v2576, %v2680
      %v2820 = vmax.f32 %v2577, %v2682
      %v2821 = vmax.f32 %v2578, %v2684
      %v2822 = vmax.f32 %v2579, %v2686
      %v2823 = vmax.f32 %v2580, %v2688
      %v2824 = vmax.f32 %v2581, %v2690
      %v2825 = vmax.f32 %v2582, %v2692
      %v2826 = vmax.f32 %v2583, %v2694
      %v2827 = vmax.f32 %v2584, %v2696
      %v2828 = vmax.f32 %v2585, %v2698
      %v2829 = vmax.f32 %v2586, %v2700
      %v2830 = vmax.f32 %v2587, %v2702
      %v2831 = vmax.f32 %v2588, %v2704
      %v2832 = vmax.f32 %v2589, %v2706
      %v2833 = vmax.f32 %v2590, %v2708
      %v2834 = vmax.f32 %v2591, %v2710
      %v2835 = vmax.f32 %v2592, %v2712
      %v2836 = vmax.f32 %v2593, %v2714
      %v2837 = vmax.f32 %v2594, %v2716
      %v2838 = vmax.f32 %v2595, %v2718
      %v2839 = vmax.f32 %v2596, %v2720
      %v2840 = vmax.f32 %v2597, %v2722
      %v2841 = vmax.f32 %v2598, %v2724
      %v2842 = vmax.f32 %v2599, %v2726
      %v2843 = vmax.f32 %v2600, %v2728
      %v2844 = vmax.f32 %v2601, %v2730
      %v2845 = vmax.f32 %v2602, %v2732
      %v2846 = vmax.f32 %v2603, %v2734
      %v2847 = vmax.f32 %v2604, %v2736
      %v2848 = vmax.f32 %v2605, %v2738
      %v2849 = vmax.f32 %v2606, %v2740
      %v2850 = vmax.f32 %v2607, %v2742
      %v2851 = vmax.f32 %v2608, %v2744
      %v2852 = vmax.f32 %v2609, %v2746
      %v2853 = vmax.f32 %v2610, %v2748
      %v2854 = vmax.f32 %v2611, %v2750
      %v2855 = vmax.f32 %v2612, %v2752
      %v2856 = vmax.f32 %v2613, %v2754
      %v2857 = vmax.f32 %v2614, %v2756
      %v2858 = vmax.f32 %v2615, %v2758
      %v2859 = vmax.f32 %v2616, %v2760
      %v2860 = vmax.f32 %v2617, %v2812
      %v2861 = vmax.f32 %v2618, %v2813
      %v2862 = vmax.f32 %v2619, %v2814
      %v2863 = vld [vmem:[%s9] sm:$0xff]
      %v2864 = vld [vmem:[%s9 + $0x8] sm:$0xff]
      %v2865 = vld [vmem:[%s9 + $0x10] sm:$0xff]
      %v2866 = vld [vmem:[%s9 + $0x18] sm:$0xff]
      %v2867 = vld [vmem:[%s9 + $0x20] sm:$0xff]
      %v2868 = vld [vmem:[%s9 + $0x28] sm:$0xff]
      %v2869 = vld [vmem:[%s9 + $0x30] sm:$0xff]
      %2870 = vmatprep.subr.mxu0 %v2816
      %2871 = vmatpush1.msra.mxu0 %v2815
      %2872 = vmatprep.subr.mxu0 %v2819
      %2873 = vmatpush1.msra.mxu0 %v2818
      %2874 = vmatprep.subr.mxu0 %v2822
      %2875 = vmatpush1.msra.mxu0 %v2821
      %2876 = vmatprep.subr.mxu0 %v2825
      %2877 = vmatpush1.msra.mxu0 %v2824
      %2878 = vmatprep.subr.mxu0 %v2828
      %2879 = vmatpush1.msra.mxu0 %v2827
      %2880 = vmatprep.subr.mxu0 %v2831
      %2881 = vmatpush1.msra.mxu0 %v2830
      %2882 = vmatprep.subr.mxu0 %v2834
      %2883 = vmatpush1.msra.mxu0 %v2833
      %2884 = vmatprep.subr.mxu0 %v2837
      %2885 = vmatpush1.msra.mxu0 %v2836
      %2886 = vmatprep.subr.mxu0 %v2840
      %2887 = vmatpush1.msra.mxu0 %v2839
      %2888 = vmatprep.subr.mxu0 %v2843
      %2889 = vmatpush1.msra.mxu0 %v2842
      %2890 = vmatprep.subr.mxu0 %v2846
      %2891 = vmatpush1.msra.mxu0 %v2845
      %2892 = vmatprep.subr.mxu0 %v2849
      %2893 = vmatpush1.msra.mxu0 %v2848
      %2894 = vmatprep.subr.mxu0 %v2852
      %2895 = vmatpush1.msra.mxu0 %v2851
      %2896 = vmatprep.subr.mxu0 %v2855
      %2897 = vmatpush1.msra.mxu0 %v2854
      %2898 = vmatprep.subr.mxu0 %v2858
      %2899 = vmatpush1.msra.mxu0 %v2857
      %2900 = vmatprep.subr.mxu0 %v2861
      %2901 = vmatpush1.msra.mxu0 %v2860
      %2902 = vmatprep.subr.mxu0 0.0
      %2903 = vmatpush1.msra.mxu0 0.0
      %2904 = vmatprep.subr.mxu0 0.0
      %2905 = vmatpush1.msra.mxu0 0.0
      %2906 = vmatprep.subr.mxu0 0.0
      %2907 = vmatpush1.msra.mxu0 0.0
      %2908 = vmatprep.subr.mxu0 0.0
      %2909 = vmatpush1.msra.mxu0 0.0
      %2910 = vmatprep.subr.mxu0 0.0
      %2911 = vmatpush1.msra.mxu0 0.0
      %2912 = vmatprep.subr.mxu0 0.0
      %2913 = vmatpush1.msra.mxu0 0.0
      %2914 = vmatprep.subr.mxu0 0.0
      %2915 = vmatpush1.msra.mxu0 0.0
      %2916 = vmatprep.subr.mxu0 0.0
      %2917 = vmatpush1.msra.mxu0 0.0
      %2918 = vmatprep.subr.mxu0 0.0
      %2919 = vmatpush1.msra.mxu0 0.0
      %2920 = vmatprep.subr.mxu0 0.0
      %2921 = vmatpush1.msra.mxu0 0.0
      %2922 = vmatprep.subr.mxu0 0.0
      %2923 = vmatpush1.msra.mxu0 0.0
      %2924 = vmatprep.subr.mxu0 0.0
      %2925 = vmatpush1.msra.mxu0 0.0
      %2926 = vmatprep.subr.mxu0 0.0
      %2927 = vmatpush1.msra.mxu0 0.0
      %2928 = vmatprep.subr.mxu0 0.0
      %2929 = vmatpush1.msra.mxu0 0.0
      %2930 = vmatprep.subr.mxu0 0.0
      %2931 = vmatpush1.msra.mxu0 0.0
      %2932 = vmatprep.subr.mxu0 0.0
      %2933 = vmatpush1.msra.mxu0 0.0
      %2934 = vmatprep.mubr.f32.mxu0 0.0
      %2935 = vmatmul.mubr.f32.gmra.mrb[0].mxu0 %v2863
      %v2936 = vpop.f32.mrb[0].mxu0
      %v2937 = vadd.f32 0.0, %v2936
      %v2938 = vpop.f32.mrb[0].mxu0
      %v2939 = vadd.f32 0.0, %v2938
      %2940 = vmatprep.mubr.f32.mxu0 0.0
      %2941 = vmatmul.mubr.f32.gmra.mrb[0].mxu0 %v2864
      %v2942 = vpop.f32.mrb[0].mxu0
      %v2943 = vadd.f32 0.0, %v2942
      %v2944 = vpop.f32.mrb[0].mxu0
      %v2945 = vadd.f32 0.0, %v2944
      %2946 = vmatprep.mubr.f32.mxu0 0.0
      %2947 = vmatmul.mubr.f32.gmra.mrb[0].mxu0 %v2865
      %v2948 = vpop.f32.mrb[0].mxu0
      %v2949 = vadd.f32 0.0, %v2948
      %v2950 = vpop.f32.mrb[0].mxu0
      %v2951 = vadd.f32 0.0, %v2950
      %2952 = vmatprep.mubr.f32.mxu0 0.0
      %2953 = vmatmul.mubr.f32.gmra.mrb[0].mxu0 %v2866
      %v2954 = vpop.f32.mrb[0].mxu0
      %v2955 = vadd.f32 0.0, %v2954
      %v2956 = vpop.f32.mrb[0].mxu0
      %v2957 = vadd.f32 0.0, %v2956
      %2958 = vmatprep.mubr.f32.mxu0 0.0
      %2959 = vmatmul.mubr.f32.gmra.mrb[0].mxu0 %v2867
      %v2960 = vpop.f32.mrb[0].mxu0
      %v2961 = vadd.f32 0.0, %v2960
      %v2962 = vpop.f32.mrb[0].mxu0
      %v2963 = vadd.f32 0.0, %v2962
      %2964 = vmatprep.mubr.f32.mxu0 0.0
      %2965 = vmatmul.mubr.f32.gmra.mrb[0].mxu0 %v2868
      %v2966 = vpop.f32.mrb[0].mxu0
      %v2967 = vadd.f32 0.0, %v2966
      %v2968 = vpop.f32.mrb[0].mxu0
      %v2969 = vadd.f32 0.0, %v2968
      %2970 = vmatprep.mubr.f32.mxu0 0.0
      %2971 = vmatmul.mubr.f32.gmra.mrb[0].mxu0 %v2869
      %v2972 = vpop.f32.mrb[0].mxu0
      %v2973 = vadd.f32 0.0, %v2972
      %v2974 = vpop.f32.mrb[0].mxu0
      %v2975 = vadd.f32 0.0, %v2974
      %2976 = vdwg.mxu0
      %2977 = vmatprep.subr.mxu0 0.0
      %2978 = vmatpush1.msra.mxu0 %v2817
      %2979 = vmatprep.subr.mxu0 0.0
      %2980 = vmatpush1.msra.mxu0 %v2820
      %2981 = vmatprep.subr.mxu0 0.0
      %2982 = vmatpush1.msra.mxu0 %v2823
      %2983 = vmatprep.subr.mxu0 0.0
      %2984 = vmatpush1.msra.mxu0 %v2826
      %2985 = vmatprep.subr.mxu0 0.0
      %2986 = vmatpush1.msra.mxu0 %v2829
      %2987 = vmatprep.subr.mxu0 0.0
      %2988 = vmatpush1.msra.mxu0 %v2832
      %2989 = vmatprep.subr.mxu0 0.0
      %2990 = vmatpush1.msra.mxu0 %v2835
      %2991 = vmatprep.subr.mxu0 0.0
      %2992 = vmatpush1.msra.mxu0 %v2838
      %2993 = vmatprep.subr.mxu0 0.0
      %2994 = vmatpush1.msra.mxu0 %v2841
      %2995 = vmatprep.subr.mxu0 0.0
      %2996 = vmatpush1.msra.mxu0 %v2844
      %2997 = vmatprep.subr.mxu0 0.0
      %2998 = vmatpush1.msra.mxu0 %v2847
      %2999 = vmatprep.subr.mxu0 0.0
      %3000 = vmatpush1.msra.mxu0 %v2850
      %3001 = vmatprep.subr.mxu0 0.0
      %3002 = vmatpush1.msra.mxu0 %v2853
      %3003 = vmatprep.subr.mxu0 0.0
      %3004 = vmatpush1.msra.mxu0 %v2856
      %3005 = vmatprep.subr.mxu0 0.0
      %3006 = vmatpush1.msra.mxu0 %v2859
      %3007 = vmatprep.subr.mxu0 0.0
      %3008 = vmatpush1.msra.mxu0 %v2862
      %3009 = vmatprep.subr.mxu0 0.0
      %3010 = vmatpush1.msra.mxu0 0.0
      %3011 = vmatprep.subr.mxu0 0.0
      %3012 = vmatpush1.msra.mxu0 0.0
      %3013 = vmatprep.subr.mxu0 0.0
      %3014 = vmatpush1.msra.mxu0 0.0
      %3015 = vmatprep.subr.mxu0 0.0
      %3016 = vmatpush1.msra.mxu0 0.0
      %3017 = vmatprep.subr.mxu0 0.0
      %3018 = vmatpush1.msra.mxu0 0.0
      %3019 = vmatprep.subr.mxu0 0.0
      %3020 = vmatpush1.msra.mxu0 0.0
      %3021 = vmatprep.subr.mxu0 0.0
      %3022 = vmatpush1.msra.mxu0 0.0
      %3023 = vmatprep.subr.mxu0 0.0
      %3024 = vmatpush1.msra.mxu0 0.0
      %3025 = vmatprep.subr.mxu0 0.0
      %3026 = vmatpush1.msra.mxu0 0.0
      %3027 = vmatprep.subr.mxu0 0.0
      %3028 = vmatpush1.msra.mxu0 0.0
      %3029 = vmatprep.subr.mxu0 0.0
      %3030 = vmatpush1.msra.mxu0 0.0
      %3031 = vmatprep.subr.mxu0 0.0
      %3032 = vmatpush1.msra.mxu0 0.0
      %3033 = vmatprep.subr.mxu0 0.0
      %3034 = vmatpush1.msra.mxu0 0.0
      %3035 = vmatprep.subr.mxu0 0.0
      %3036 = vmatpush1.msra.mxu0 0.0
      %3037 = vmatprep.subr.mxu0 0.0
      %3038 = vmatpush1.msra.mxu0 0.0
      %3039 = vmatprep.subr.mxu0 0.0
      %3040 = vmatpush1.msra.mxu0 0.0
      %3041 = vmatprep.mubr.f32.mxu0 0.0
      %3042 = vmatmul.mubr.f32.gmra.mrb[0].mxu0 %v2863
      %v3043 = vpop.f32.mrb[0].mxu0
      %v3044 = vadd.f32 0.0, %v3043
      %v3045 = vpop.f32.mrb[0].mxu0
      %3046 = vmatprep.mubr.f32.mxu0 0.0
      %3047 = vmatmul.mubr.f32.gmra.mrb[0].mxu0 %v2864
      %v3048 = vpop.f32.mrb[0].mxu0
      %v3049 = vadd.f32 0.0, %v3048
      %v3050 = vpop.f32.mrb[0].mxu0
      %3051 = vmatprep.mubr.f32.mxu0 0.0
      %3052 = vmatmul.mubr.f32.gmra.mrb[0].mxu0 %v2865
      %v3053 = vpop.f32.mrb[0].mxu0
      %v3054 = vadd.f32 0.0, %v3053
      %v3055 = vpop.f32.mrb[0].mxu0
      %3056 = vmatprep.mubr.f32.mxu0 0.0
      %3057 = vmatmul.mubr.f32.gmra.mrb[0].mxu0 %v2866
      %v3058 = vpop.f32.mrb[0].mxu0
      %v3059 = vadd.f32 0.0, %v3058
      %v3060 = vpop.f32.mrb[0].mxu0
      %3061 = vmatprep.mubr.f32.mxu0 0.0
      %3062 = vmatmul.mubr.f32.gmra.mrb[0].mxu0 %v2867
      %v3063 = vpop.f32.mrb[0].mxu0
      %v3064 = vadd.f32 0.0, %v3063
      %v3065 = vpop.f32.mrb[0].mxu0
      %3066 = vmatprep.mubr.f32.mxu0 0.0
      %3067 = vmatmul.mubr.f32.gmra.mrb[0].mxu0 %v2868
      %v3068 = vpop.f32.mrb[0].mxu0
      %v3069 = vadd.f32 0.0, %v3068
      %v3070 = vpop.f32.mrb[0].mxu0
      %3071 = vmatprep.mubr.f32.mxu0 0.0
      %3072 = vmatmul.mubr.f32.gmra.mrb[0].mxu0 %v2869
      %v3073 = vpop.f32.mrb[0].mxu0
      %v3074 = vadd.f32 0.0, %v3073
      %v3075 = vpop.f32.mrb[0].mxu0
      %3076 = vdwg.mxu0
      %3098 = vrot.lane.b32.xlu0 %v2937, 120
      %v3099 = vpop.permute.xlu0 %3098
      %3100 = vrot.lane.b32.xlu0 %v2939, 120
      %v3101 = vpop.permute.xlu0 %3100
      %3102 = vrot.lane.b32.xlu0 %v3044, 120
      %v3103 = vpop.permute.xlu0 %3102
      %3104 = vrot.lane.b32.xlu0 %v2943, 120
      %v3105 = vpop.permute.xlu0 %3104
      %3106 = vrot.lane.b32.xlu0 %v2945, 120
      %v3107 = vpop.permute.xlu0 %3106
      %3108 = vrot.lane.b32.xlu0 %v3049, 120
      %v3109 = vpop.permute.xlu0 %3108
      %3110 = vrot.lane.b32.xlu0 %v2949, 120
      %v3111 = vpop.permute.xlu0 %3110
      %3112 = vrot.lane.b32.xlu0 %v2951, 120
      %v3113 = vpop.permute.xlu0 %3112
      %3114 = vrot.lane.b32.xlu0 %v3054, 120
      %v3115 = vpop.permute.xlu0 %3114
      %3116 = vrot.lane.b32.xlu0 %v2955, 120
      %v3117 = vpop.permute.xlu0 %3116
      %3118 = vrot.lane.b32.xlu0 %v2957, 120
      %v3119 = vpop.permute.xlu0 %3118
      %3120 = vrot.lane.b32.xlu0 %v3059, 120
      %v3121 = vpop.permute.xlu0 %3120
      %3122 = vrot.lane.b32.xlu0 %v2961, 120
      %v3123 = vpop.permute.xlu0 %3122
      %3124 = vrot.lane.b32.xlu0 %v2963, 120
      %v3125 = vpop.permute.xlu0 %3124
      %3126 = vrot.lane.b32.xlu0 %v3064, 120
      %v3127 = vpop.permute.xlu0 %3126
      %3128 = vrot.lane.b32.xlu0 %v2967, 120
      %v3129 = vpop.permute.xlu0 %3128
      %3130 = vrot.lane.b32.xlu0 %v2969, 120
      %v3131 = vpop.permute.xlu0 %3130
      %3132 = vrot.lane.b32.xlu0 %v3069, 120
      %v3133 = vpop.permute.xlu0 %3132
      %3134 = vrot.lane.b32.xlu0 %v2973, 120
      %v3135 = vpop.permute.xlu0 %3134
      %3136 = vrot.lane.b32.xlu0 %v2975, 120
      %v3137 = vpop.permute.xlu0 %3136
      %3138 = vrot.lane.b32.xlu0 %v3074, 120
      %v3139 = vpop.permute.xlu0 %3138
      %vm3140 = vcmask 982016
      %v3141 = vsel %vm3140, %v3099, %v3101
      %v3142 = vsel %vm3140, %v3101, %v3103
      %v3143 = vsel %vm3140, %v3105, %v3107
      %v3144 = vsel %vm3140, %v3107, %v3109
      %v3145 = vsel %vm3140, %v3111, %v3113
      %v3146 = vsel %vm3140, %v3113, %v3115
      %v3147 = vsel %vm3140, %v3117, %v3119
      %v3148 = vsel %vm3140, %v3119, %v3121
      %v3149 = vsel %vm3140, %v3123, %v3125
      %v3150 = vsel %vm3140, %v3125, %v3127
      %v3151 = vsel %vm3140, %v3129, %v3131
      %v3152 = vsel %vm3140, %v3131, %v3133
      %v3153 = vsel %vm3140, %v3135, %v3137
      %v3154 = vsel %vm3140, %v3137, %v3139
      %3176 = vrot.lane.b32.xlu0 %v2937, 72
      %v3177 = vpop.permute.xlu0 %3176
      %3178 = vrot.lane.b32.xlu0 %v2943, 72
      %v3179 = vpop.permute.xlu0 %3178
      %3180 = vrot.lane.b32.xlu0 %v2949, 72
      %v3181 = vpop.permute.xlu0 %3180
      %3182 = vrot.lane.b32.xlu0 %v2955, 72
      %v3183 = vpop.permute.xlu0 %3182
      %3184 = vrot.lane.b32.xlu0 %v2961, 72
      %v3185 = vpop.permute.xlu0 %3184
      %3186 = vrot.lane.b32.xlu0 %v2967, 72
      %v3187 = vpop.permute.xlu0 %3186
      %3188 = vrot.lane.b32.xlu0 %v2973, 72
      %v3189 = vpop.permute.xlu0 %3188
      %vm3197 = vcmask 588800
      %v3198 = vsel %vm3197, %v3103, %v3177
      %v3199 = vsel %vm3197, %v3109, %v3179
      %v3200 = vsel %vm3197, %v3115, %v3181
      %v3201 = vsel %vm3197, %v3121, %v3183
      %v3202 = vsel %vm3197, %v3127, %v3185
      %v3203 = vsel %vm3197, %v3133, %v3187
      %v3204 = vsel %vm3197, %v3139, %v3189
      %v3205 = vmax.f32 %v2937, %v3141
      %v3206 = vmax.f32 %v2939, %v3142
      %v3207 = vmax.f32 %v3044, %v3198
      %v3208 = vmax.f32 %v2943, %v3143
      %v3209 = vmax.f32 %v2945, %v3144
      %v3210 = vmax.f32 %v3049, %v3199
      %v3211 = vmax.f32 %v2949, %v3145
      %v3212 = vmax.f32 %v2951, %v3146
      %v3213 = vmax.f32 %v3054, %v3200
      %v3214 = vmax.f32 %v2955, %v3147
      %v3215 = vmax.f32 %v2957, %v3148
      %v3216 = vmax.f32 %v3059, %v3201
      %v3217 = vmax.f32 %v2961, %v3149
      %v3218 = vmax.f32 %v2963, %v3150
      %v3219 = vmax.f32 %v3064, %v3202
      %v3220 = vmax.f32 %v2967, %v3151
      %v3221 = vmax.f32 %v2969, %v3152
      %v3222 = vmax.f32 %v3069, %v3203
      %v3223 = vmax.f32 %v2973, %v3153
      %v3224 = vmax.f32 %v2975, %v3154
      %v3225 = vmax.f32 %v3074, %v3204
      %v3226 = vld [vmem:[%s11] sm:$0xff]
      %v3227 = vld [vmem:[%s11 + $0x8] sm:$0xff]
      %v3228 = vld [vmem:[%s11 + $0x10] sm:$0xff]
      %v3229 = vld [vmem:[%s11 + $0x18] sm:$0xff]
      %v3230 = vld [vmem:[%s11 + $0x20] sm:$0xff]
      %v3231 = vld [vmem:[%s11 + $0x28] sm:$0xff]
      %v3232 = vld [vmem:[%s11 + $0x30] sm:$0xff]
      %v3233 = vld [vmem:[%s11 + $0x38] sm:$0xff]
      %v3234 = vld [vmem:[%s11 + $0x40] sm:$0xff]
      %v3235 = vld [vmem:[%s11 + $0x48] sm:$0xff]
      %v3236 = vld [vmem:[%s11 + $0x50] sm:$0xff]
      %v3237 = vld [vmem:[%s11 + $0x58] sm:$0xff]
      %v3238 = vld [vmem:[%s11 + $0x60] sm:$0xff]
      %v3239 = vld [vmem:[%s11 + $0x68] sm:$0xff]
      %v3240 = vld [vmem:[%s11 + $0x70] sm:$0xff]
      %v3241 = vld [vmem:[%s11 + $0x78] sm:$0xff]
      %v3242 = vld [vmem:[%s11 + $0x80] sm:$0xff]
      %v3243 = vld [vmem:[%s11 + $0x88] sm:$0xff]
      %v3244 = vld [vmem:[%s11 + $0x90] sm:$0xff]
      %v3245 = vld [vmem:[%s11 + $0x98] sm:$0xff]
      %v3246 = vld [vmem:[%s11 + $0xa0] sm:$0xff]
      %v3247 = vld [vmem:[%s11 + $0xa8] sm:$0xff]
      %v3248 = vld [vmem:[%s11 + $0xb0] sm:$0xff]
      %v3249 = vld [vmem:[%s11 + $0xb8] sm:$0xff]
      %v3250 = vld [vmem:[%s11 + $0xc0] sm:$0xff]
      %v3251 = vld [vmem:[%s11 + $0xc8] sm:$0xff]
      %v3252 = vld [vmem:[%s11 + $0xd0] sm:$0xff]
      %v3253 = vld [vmem:[%s11 + $0xd8] sm:$0xff]
      %v3254 = vld [vmem:[%s11 + $0xe0] sm:$0xff]
      %v3255 = vld [vmem:[%s11 + $0xe8] sm:$0xff]
      %v3256 = vld [vmem:[%s11 + $0xf0] sm:$0xff]
      %v3257 = vld [vmem:[%s11 + $0xf8] sm:$0xff]
      %v3258 = vld [vmem:[%s11 + $0x100] sm:$0xff]
      %v3259 = vld [vmem:[%s11 + $0x108] sm:$0xff]
      %v3260 = vld [vmem:[%s11 + $0x110] sm:$0xff]
      %v3261 = vld [vmem:[%s11 + $0x118] sm:$0xff]
      %v3262 = vld [vmem:[%s11 + $0x120] sm:$0xff]
      %v3263 = vld [vmem:[%s11 + $0x128] sm:$0xff]
      %v3264 = vld [vmem:[%s11 + $0x130] sm:$0xff]
      %v3265 = vld [vmem:[%s11 + $0x138] sm:$0xff]
      %v3266 = vld [vmem:[%s11 + $0x140] sm:$0xff]
      %v3267 = vld [vmem:[%s11 + $0x148] sm:$0xff]
      %vm3268 = vcmask 654336
      %v3270 = vsel %vm3268, %v3207, 0
      %v3273 = vsel %vm3268, %v3210, 0
      %v3276 = vsel %vm3268, %v3213, 0
      %v3279 = vsel %vm3268, %v3216, 0
      %v3282 = vsel %vm3268, %v3219, 0
      %v3285 = vsel %vm3268, %v3222, 0
      %v3288 = vsel %vm3268, %v3225, 0
      %3290 = vmatprep.subr.mxu0 0.0
      %3291 = vmatpush1.msra.mxu0 %v3226
      %3292 = vmatprep.subr.mxu0 0.0
      %3293 = vmatpush1.msra.mxu0 %v3227
      %3294 = vmatprep.subr.mxu0 0.0
      %3295 = vmatpush1.msra.mxu0 %v3228
      %3296 = vmatprep.subr.mxu0 0.0
      %3297 = vmatpush1.msra.mxu0 %v3229
      %3298 = vmatprep.subr.mxu0 0.0
      %3299 = vmatpush1.msra.mxu0 %v3230
      %3300 = vmatprep.subr.mxu0 0.0
      %3301 = vmatpush1.msra.mxu0 %v3231
      %3302 = vmatprep.subr.mxu0 0.0
      %3303 = vmatpush1.msra.mxu0 %v3232
      %3304 = vmatprep.subr.mxu0 0.0
      %3305 = vmatpush1.msra.mxu0 %v3233
      %3306 = vmatprep.subr.mxu0 0.0
      %3307 = vmatpush1.msra.mxu0 %v3234
      %3308 = vmatprep.subr.mxu0 0.0
      %3309 = vmatpush1.msra.mxu0 %v3235
      %3310 = vmatprep.subr.mxu0 0.0
      %3311 = vmatpush1.msra.mxu0 %v3236
      %3312 = vmatprep.subr.mxu0 0.0
      %3313 = vmatpush1.msra.mxu0 %v3237
      %3314 = vmatprep.subr.mxu0 0.0
      %3315 = vmatpush1.msra.mxu0 %v3238
      %3316 = vmatprep.subr.mxu0 0.0
      %3317 = vmatpush1.msra.mxu0 %v3239
      %3318 = vmatprep.subr.mxu0 0.0
      %3319 = vmatpush1.msra.mxu0 %v3240
      %3320 = vmatprep.subr.mxu0 0.0
      %3321 = vmatpush1.msra.mxu0 %v3241
      %3322 = vmatprep.subr.mxu0 0.0
      %3323 = vmatpush1.msra.mxu0 %v3242
      %3324 = vmatprep.subr.mxu0 0.0
      %3325 = vmatpush1.msra.mxu0 %v3243
      %3326 = vmatprep.subr.mxu0 0.0
      %3327 = vmatpush1.msra.mxu0 %v3244
      %3328 = vmatprep.subr.mxu0 0.0
      %3329 = vmatpush1.msra.mxu0 %v3245
      %3330 = vmatprep.subr.mxu0 0.0
      %3331 = vmatpush1.msra.mxu0 %v3246
      %3332 = vmatprep.subr.mxu0 0.0
      %3333 = vmatpush1.msra.mxu0 %v3247
      %3334 = vmatprep.subr.mxu0 0.0
      %3335 = vmatpush1.msra.mxu0 %v3248
      %3336 = vmatprep.subr.mxu0 0.0
      %3337 = vmatpush1.msra.mxu0 %v3249
      %3338 = vmatprep.subr.mxu0 0.0
      %3339 = vmatpush1.msra.mxu0 %v3250
      %3340 = vmatprep.subr.mxu0 0.0
      %3341 = vmatpush1.msra.mxu0 %v3251
      %3342 = vmatprep.subr.mxu0 0.0
      %3343 = vmatpush1.msra.mxu0 %v3252
      %3344 = vmatprep.subr.mxu0 0.0
      %3345 = vmatpush1.msra.mxu0 %v3253
      %3346 = vmatprep.subr.mxu0 0.0
      %3347 = vmatpush1.msra.mxu0 %v3254
      %3348 = vmatprep.subr.mxu0 0.0
      %3349 = vmatpush1.msra.mxu0 %v3255
      %3350 = vmatprep.subr.mxu0 0.0
      %3351 = vmatpush1.msra.mxu0 %v3256
      %3352 = vmatprep.subr.mxu0 0.0
      %3353 = vmatpush1.msra.mxu0 %v3257
      %3354 = vmatprep.mubr.f32.mxu0 %v3206
      %3355 = vmatmul.mubr.f32.gmra.mrb[0].mxu0 %v3205
      %v3356 = vpop.f32.mrb[0].mxu0
      %v3357 = vadd.f32 0.0, %v3356
      %v3358 = vpop.f32.mrb[0].mxu0
      %3359 = vmatprep.mubr.f32.mxu0 %v3209
      %3360 = vmatmul.mubr.f32.gmra.mrb[0].mxu0 %v3208
      %v3361 = vpop.f32.mrb[0].mxu0
      %v3362 = vadd.f32 0.0, %v3361
      %v3363 = vpop.f32.mrb[0].mxu0
      %3364 = vmatprep.mubr.f32.mxu0 %v3212
      %3365 = vmatmul.mubr.f32.gmra.mrb[0].mxu0 %v3211
      %v3366 = vpop.f32.mrb[0].mxu0
      %v3367 = vadd.f32 0.0, %v3366
      %v3368 = vpop.f32.mrb[0].mxu0
      %3369 = vmatprep.mubr.f32.mxu0 %v3215
      %3370 = vmatmul.mubr.f32.gmra.mrb[0].mxu0 %v3214
      %v3371 = vpop.f32.mrb[0].mxu0
      %v3372 = vadd.f32 0.0, %v3371
      %v3373 = vpop.f32.mrb[0].mxu0
      %3374 = vmatprep.mubr.f32.mxu0 %v3218
      %3375 = vmatmul.mubr.f32.gmra.mrb[0].mxu0 %v3217
      %v3376 = vpop.f32.mrb[0].mxu0
      %v3377 = vadd.f32 0.0, %v3376
      %v3378 = vpop.f32.mrb[0].mxu0
      %3379 = vmatprep.mubr.f32.mxu0 %v3221
      %3380 = vmatmul.mubr.f32.gmra.mrb[0].mxu0 %v3220
      %v3381 = vpop.f32.mrb[0].mxu0
      %v3382 = vadd.f32 0.0, %v3381
      %v3383 = vpop.f32.mrb[0].mxu0
      %3384 = vmatprep.mubr.f32.mxu0 %v3224
      %3385 = vmatmul.mubr.f32.gmra.mrb[0].mxu0 %v3223
      %v3386 = vpop.f32.mrb[0].mxu0
      %v3387 = vadd.f32 0.0, %v3386
      %v3388 = vpop.f32.mrb[0].mxu0
      %3389 = vdwg.mxu0
      %3390 = vmatprep.subr.mxu0 0.0
      %3391 = vmatpush1.msra.mxu0 %v3258
      %3392 = vmatprep.subr.mxu0 0.0
      %3393 = vmatpush1.msra.mxu0 %v3259
      %3394 = vmatprep.subr.mxu0 0.0
      %3395 = vmatpush1.msra.mxu0 %v3260
      %3396 = vmatprep.subr.mxu0 0.0
      %3397 = vmatpush1.msra.mxu0 %v3261
      %3398 = vmatprep.subr.mxu0 0.0
      %3399 = vmatpush1.msra.mxu0 %v3262
      %3400 = vmatprep.subr.mxu0 0.0
      %3401 = vmatpush1.msra.mxu0 %v3263
      %3402 = vmatprep.subr.mxu0 0.0
      %3403 = vmatpush1.msra.mxu0 %v3264
      %3404 = vmatprep.subr.mxu0 0.0
      %3405 = vmatpush1.msra.mxu0 %v3265
      %3406 = vmatprep.subr.mxu0 0.0
      %3407 = vmatpush1.msra.mxu0 %v3266
      %3408 = vmatprep.subr.mxu0 0.0
      %3409 = vmatpush1.msra.mxu0 %v3267
      %3410 = vmatprep.subr.mxu0 0.0
      %3411 = vmatpush1.msra.mxu0 0.0
      %3412 = vmatprep.subr.mxu0 0.0
      %3413 = vmatpush1.msra.mxu0 0.0
      %3414 = vmatprep.subr.mxu0 0.0
      %3415 = vmatpush1.msra.mxu0 0.0
      %3416 = vmatprep.subr.mxu0 0.0
      %3417 = vmatpush1.msra.mxu0 0.0
      %3418 = vmatprep.subr.mxu0 0.0
      %3419 = vmatpush1.msra.mxu0 0.0
      %3420 = vmatprep.subr.mxu0 0.0
      %3421 = vmatpush1.msra.mxu0 0.0
      %3422 = vmatprep.subr.mxu0 0.0
      %3423 = vmatpush1.msra.mxu0 0.0
      %3424 = vmatprep.subr.mxu0 0.0
      %3425 = vmatpush1.msra.mxu0 0.0
      %3426 = vmatprep.subr.mxu0 0.0
      %3427 = vmatpush1.msra.mxu0 0.0
      %3428 = vmatprep.subr.mxu0 0.0
      %3429 = vmatpush1.msra.mxu0 0.0
      %3430 = vmatprep.subr.mxu0 0.0
      %3431 = vmatpush1.msra.mxu0 0.0
      %3432 = vmatprep.subr.mxu0 0.0
      %3433 = vmatpush1.msra.mxu0 0.0
      %3434 = vmatprep.subr.mxu0 0.0
      %3435 = vmatpush1.msra.mxu0 0.0
      %3436 = vmatprep.subr.mxu0 0.0
      %3437 = vmatpush1.msra.mxu0 0.0
      %3438 = vmatprep.subr.mxu0 0.0
      %3439 = vmatpush1.msra.mxu0 0.0
      %3440 = vmatprep.subr.mxu0 0.0
      %3441 = vmatpush1.msra.mxu0 0.0
      %3442 = vmatprep.subr.mxu0 0.0
      %3443 = vmatpush1.msra.mxu0 0.0
      %3444 = vmatprep.subr.mxu0 0.0
      %3445 = vmatpush1.msra.mxu0 0.0
      %3446 = vmatprep.subr.mxu0 0.0
      %3447 = vmatpush1.msra.mxu0 0.0
      %3448 = vmatprep.subr.mxu0 0.0
      %3449 = vmatpush1.msra.mxu0 0.0
      %3450 = vmatprep.subr.mxu0 0.0
      %3451 = vmatpush1.msra.mxu0 0.0
      %3452 = vmatprep.subr.mxu0 0.0
      %3453 = vmatpush1.msra.mxu0 0.0
      %3454 = vmatprep.mubr.f32.mxu0 0.0
      %3455 = vmatmul.mubr.f32.gmra.mrb[0].mxu0 %v3270
      %v3456 = vpop.f32.mrb[0].mxu0
      %v3457 = vadd.f32 %v3357, %v3456
      %v3458 = vpop.f32.mrb[0].mxu0
      %3459 = vmatprep.mubr.f32.mxu0 0.0
      %3460 = vmatmul.mubr.f32.gmra.mrb[0].mxu0 %v3273
      %v3461 = vpop.f32.mrb[0].mxu0
      %v3462 = vadd.f32 %v3362, %v3461
      %v3463 = vpop.f32.mrb[0].mxu0
      %3464 = vmatprep.mubr.f32.mxu0 0.0
      %3465 = vmatmul.mubr.f32.gmra.mrb[0].mxu0 %v3276
      %v3466 = vpop.f32.mrb[0].mxu0
      %v3467 = vadd.f32 %v3367, %v3466
      %v3468 = vpop.f32.mrb[0].mxu0
      %3469 = vmatprep.mubr.f32.mxu0 0.0
      %3470 = vmatmul.mubr.f32.gmra.mrb[0].mxu0 %v3279
      %v3471 = vpop.f32.mrb[0].mxu0
      %v3472 = vadd.f32 %v3372, %v3471
      %v3473 = vpop.f32.mrb[0].mxu0
      %3474 = vmatprep.mubr.f32.mxu0 0.0
      %3475 = vmatmul.mubr.f32.gmra.mrb[0].mxu0 %v3282
      %v3476 = vpop.f32.mrb[0].mxu0
      %v3477 = vadd.f32 %v3377, %v3476
      %v3478 = vpop.f32.mrb[0].mxu0
      %3479 = vmatprep.mubr.f32.mxu0 0.0
      %3480 = vmatmul.mubr.f32.gmra.mrb[0].mxu0 %v3285
      %v3481 = vpop.f32.mrb[0].mxu0
      %v3482 = vadd.f32 %v3382, %v3481
      %v3483 = vpop.f32.mrb[0].mxu0
      %3484 = vmatprep.mubr.f32.mxu0 0.0
      %3485 = vmatmul.mubr.f32.gmra.mrb[0].mxu0 %v3288
      %v3486 = vpop.f32.mrb[0].mxu0
      %v3487 = vadd.f32 %v3387, %v3486
      %v3488 = vpop.f32.mrb[0].mxu0
      %3489 = vdwg.mxu0
      %s3490 = scalar_lea.vmem %s11, 336
      %v3491 = vld [vmem:[%s3490] sm:$0xff]
      %v3492 = vld [vmem:[%s3490 + $0x8] sm:$0xff]
      %v3493 = vld [vmem:[%s3490 + $0x10] sm:$0xff]
      %v3494 = vld [vmem:[%s3490 + $0x18] sm:$0xff]
      %v3495 = vld [vmem:[%s3490 + $0x20] sm:$0xff]
      %v3496 = vld [vmem:[%s3490 + $0x28] sm:$0xff]
      %v3497 = vld [vmem:[%s3490 + $0x30] sm:$0xff]
      %v3498 = vld [vmem:[%s3490 + $0x38] sm:$0xff]
      %v3499 = vld [vmem:[%s3490 + $0x40] sm:$0xff]
      %v3500 = vld [vmem:[%s3490 + $0x48] sm:$0xff]
      %v3501 = vld [vmem:[%s3490 + $0x50] sm:$0xff]
      %v3502 = vld [vmem:[%s3490 + $0x58] sm:$0xff]
      %v3503 = vld [vmem:[%s3490 + $0x60] sm:$0xff]
      %v3504 = vld [vmem:[%s3490 + $0x68] sm:$0xff]
      %v3505 = vld [vmem:[%s3490 + $0x70] sm:$0xff]
      %v3506 = vld [vmem:[%s3490 + $0x78] sm:$0xff]
      %v3507 = vld [vmem:[%s3490 + $0x80] sm:$0xff]
      %v3508 = vld [vmem:[%s3490 + $0x88] sm:$0xff]
      %v3509 = vld [vmem:[%s3490 + $0x90] sm:$0xff]
      %v3510 = vld [vmem:[%s3490 + $0x98] sm:$0xff]
      %v3511 = vld [vmem:[%s3490 + $0xa0] sm:$0xff]
      %v3512 = vld [vmem:[%s3490 + $0xa8] sm:$0xff]
      %v3513 = vld [vmem:[%s3490 + $0xb0] sm:$0xff]
      %v3514 = vld [vmem:[%s3490 + $0xb8] sm:$0xff]
      %v3515 = vld [vmem:[%s3490 + $0xc0] sm:$0xff]
      %v3516 = vld [vmem:[%s3490 + $0xc8] sm:$0xff]
      %v3517 = vld [vmem:[%s3490 + $0xd0] sm:$0xff]
      %v3518 = vld [vmem:[%s3490 + $0xd8] sm:$0xff]
      %v3519 = vld [vmem:[%s3490 + $0xe0] sm:$0xff]
      %v3520 = vld [vmem:[%s3490 + $0xe8] sm:$0xff]
      %v3521 = vld [vmem:[%s3490 + $0xf0] sm:$0xff]
      %v3522 = vld [vmem:[%s3490 + $0xf8] sm:$0xff]
      %v3523 = vld [vmem:[%s3490 + $0x100] sm:$0xff]
      %v3524 = vld [vmem:[%s3490 + $0x108] sm:$0xff]
      %v3525 = vld [vmem:[%s3490 + $0x110] sm:$0xff]
      %v3526 = vld [vmem:[%s3490 + $0x118] sm:$0xff]
      %v3527 = vld [vmem:[%s3490 + $0x120] sm:$0xff]
      %v3528 = vld [vmem:[%s3490 + $0x128] sm:$0xff]
      %v3529 = vld [vmem:[%s3490 + $0x130] sm:$0xff]
      %v3530 = vld [vmem:[%s3490 + $0x138] sm:$0xff]
      %v3531 = vld [vmem:[%s3490 + $0x140] sm:$0xff]
      %v3532 = vld [vmem:[%s3490 + $0x148] sm:$0xff]
      %3533 = vmatprep.subr.mxu0 0.0
      %3534 = vmatpush1.msra.mxu0 %v3491
      %3535 = vmatprep.subr.mxu0 0.0
      %3536 = vmatpush1.msra.mxu0 %v3492
      %3537 = vmatprep.subr.mxu0 0.0
      %3538 = vmatpush1.msra.mxu0 %v3493
      %3539 = vmatprep.subr.mxu0 0.0
      %3540 = vmatpush1.msra.mxu0 %v3494
      %3541 = vmatprep.subr.mxu0 0.0
      %3542 = vmatpush1.msra.mxu0 %v3495
      %3543 = vmatprep.subr.mxu0 0.0
      %3544 = vmatpush1.msra.mxu0 %v3496
      %3545 = vmatprep.subr.mxu0 0.0
      %3546 = vmatpush1.msra.mxu0 %v3497
      %3547 = vmatprep.subr.mxu0 0.0
      %3548 = vmatpush1.msra.mxu0 %v3498
      %3549 = vmatprep.subr.mxu0 0.0
      %3550 = vmatpush1.msra.mxu0 %v3499
      %3551 = vmatprep.subr.mxu0 0.0
      %3552 = vmatpush1.msra.mxu0 %v3500
      %3553 = vmatprep.subr.mxu0 0.0
      %3554 = vmatpush1.msra.mxu0 %v3501
      %3555 = vmatprep.subr.mxu0 0.0
      %3556 = vmatpush1.msra.mxu0 %v3502
      %3557 = vmatprep.subr.mxu0 0.0
      %3558 = vmatpush1.msra.mxu0 %v3503
      %3559 = vmatprep.subr.mxu0 0.0
      %3560 = vmatpush1.msra.mxu0 %v3504
      %3561 = vmatprep.subr.mxu0 0.0
      %3562 = vmatpush1.msra.mxu0 %v3505
      %3563 = vmatprep.subr.mxu0 0.0
      %3564 = vmatpush1.msra.mxu0 %v3506
      %3565 = vmatprep.subr.mxu0 0.0
      %3566 = vmatpush1.msra.mxu0 %v3507
      %3567 = vmatprep.subr.mxu0 0.0
      %3568 = vmatpush1.msra.mxu0 %v3508
      %3569 = vmatprep.subr.mxu0 0.0
      %3570 = vmatpush1.msra.mxu0 %v3509
      %3571 = vmatprep.subr.mxu0 0.0
      %3572 = vmatpush1.msra.mxu0 %v3510
      %3573 = vmatprep.subr.mxu0 0.0
      %3574 = vmatpush1.msra.mxu0 %v3511
      %3575 = vmatprep.subr.mxu0 0.0
      %3576 = vmatpush1.msra.mxu0 %v3512
      %3577 = vmatprep.subr.mxu0 0.0
      %3578 = vmatpush1.msra.mxu0 %v3513
      %3579 = vmatprep.subr.mxu0 0.0
      %3580 = vmatpush1.msra.mxu0 %v3514
      %3581 = vmatprep.subr.mxu0 0.0
      %3582 = vmatpush1.msra.mxu0 %v3515
      %3583 = vmatprep.subr.mxu0 0.0
      %3584 = vmatpush1.msra.mxu0 %v3516
      %3585 = vmatprep.subr.mxu0 0.0
      %3586 = vmatpush1.msra.mxu0 %v3517
      %3587 = vmatprep.subr.mxu0 0.0
      %3588 = vmatpush1.msra.mxu0 %v3518
      %3589 = vmatprep.subr.mxu0 0.0
      %3590 = vmatpush1.msra.mxu0 %v3519
      %3591 = vmatprep.subr.mxu0 0.0
      %3592 = vmatpush1.msra.mxu0 %v3520
      %3593 = vmatprep.subr.mxu0 0.0
      %3594 = vmatpush1.msra.mxu0 %v3521
      %3595 = vmatprep.subr.mxu0 0.0
      %3596 = vmatpush1.msra.mxu0 %v3522
      %3597 = vmatprep.mubr.f32.mxu0 %v3206
      %3598 = vmatmul.mubr.f32.gmra.mrb[0].mxu0 %v3205
      %v3599 = vpop.f32.mrb[0].mxu0
      %v3600 = vadd.f32 0.0, %v3599
      %v3601 = vpop.f32.mrb[0].mxu0
      %3602 = vmatprep.mubr.f32.mxu0 %v3209
      %3603 = vmatmul.mubr.f32.gmra.mrb[0].mxu0 %v3208
      %v3604 = vpop.f32.mrb[0].mxu0
      %v3605 = vadd.f32 0.0, %v3604
      %v3606 = vpop.f32.mrb[0].mxu0
      %3607 = vmatprep.mubr.f32.mxu0 %v3212
      %3608 = vmatmul.mubr.f32.gmra.mrb[0].mxu0 %v3211
      %v3609 = vpop.f32.mrb[0].mxu0
      %v3610 = vadd.f32 0.0, %v3609
      %v3611 = vpop.f32.mrb[0].mxu0
      %3612 = vmatprep.mubr.f32.mxu0 %v3215
      %3613 = vmatmul.mubr.f32.gmra.mrb[0].mxu0 %v3214
      %v3614 = vpop.f32.mrb[0].mxu0
      %v3615 = vadd.f32 0.0, %v3614
      %v3616 = vpop.f32.mrb[0].mxu0
      %3617 = vmatprep.mubr.f32.mxu0 %v3218
      %3618 = vmatmul.mubr.f32.gmra.mrb[0].mxu0 %v3217
      %v3619 = vpop.f32.mrb[0].mxu0
      %v3620 = vadd.f32 0.0, %v3619
      %v3621 = vpop.f32.mrb[0].mxu0
      %3622 = vmatprep.mubr.f32.mxu0 %v3221
      %3623 = vmatmul.mubr.f32.gmra.mrb[0].mxu0 %v3220
      %v3624 = vpop.f32.mrb[0].mxu0
      %v3625 = vadd.f32 0.0, %v3624
      %v3626 = vpop.f32.mrb[0].mxu0
      %3627 = vmatprep.mubr.f32.mxu0 %v3224
      %3628 = vmatmul.mubr.f32.gmra.mrb[0].mxu0 %v3223
      %v3629 = vpop.f32.mrb[0].mxu0
      %v3630 = vadd.f32 0.0, %v3629
      %v3631 = vpop.f32.mrb[0].mxu0
      %3632 = vdwg.mxu0
      %3633 = vmatprep.subr.mxu0 0.0
      %3634 = vmatpush1.msra.mxu0 %v3523
      %3635 = vmatprep.subr.mxu0 0.0
      %3636 = vmatpush1.msra.mxu0 %v3524
      %3637 = vmatprep.subr.mxu0 0.0
      %3638 = vmatpush1.msra.mxu0 %v3525
      %3639 = vmatprep.subr.mxu0 0.0
      %3640 = vmatpush1.msra.mxu0 %v3526
      %3641 = vmatprep.subr.mxu0 0.0
      %3642 = vmatpush1.msra.mxu0 %v3527
      %3643 = vmatprep.subr.mxu0 0.0
      %3644 = vmatpush1.msra.mxu0 %v3528
      %3645 = vmatprep.subr.mxu0 0.0
      %3646 = vmatpush1.msra.mxu0 %v3529
      %3647 = vmatprep.subr.mxu0 0.0
      %3648 = vmatpush1.msra.mxu0 %v3530
      %3649 = vmatprep.subr.mxu0 0.0
      %3650 = vmatpush1.msra.mxu0 %v3531
      %3651 = vmatprep.subr.mxu0 0.0
      %3652 = vmatpush1.msra.mxu0 %v3532
      %3653 = vmatprep.subr.mxu0 0.0
      %3654 = vmatpush1.msra.mxu0 0.0
      %3655 = vmatprep.subr.mxu0 0.0
      %3656 = vmatpush1.msra.mxu0 0.0
      %3657 = vmatprep.subr.mxu0 0.0
      %3658 = vmatpush1.msra.mxu0 0.0
      %3659 = vmatprep.subr.mxu0 0.0
      %3660 = vmatpush1.msra.mxu0 0.0
      %3661 = vmatprep.subr.mxu0 0.0
      %3662 = vmatpush1.msra.mxu0 0.0
      %3663 = vmatprep.subr.mxu0 0.0
      %3664 = vmatpush1.msra.mxu0 0.0
      %3665 = vmatprep.subr.mxu0 0.0
      %3666 = vmatpush1.msra.mxu0 0.0
      %3667 = vmatprep.subr.mxu0 0.0
      %3668 = vmatpush1.msra.mxu0 0.0
      %3669 = vmatprep.subr.mxu0 0.0
      %3670 = vmatpush1.msra.mxu0 0.0
      %3671 = vmatprep.subr.mxu0 0.0
      %3672 = vmatpush1.msra.mxu0 0.0
      %3673 = vmatprep.subr.mxu0 0.0
      %3674 = vmatpush1.msra.mxu0 0.0
      %3675 = vmatprep.subr.mxu0 0.0
      %3676 = vmatpush1.msra.mxu0 0.0
      %3677 = vmatprep.subr.mxu0 0.0
      %3678 = vmatpush1.msra.mxu0 0.0
      %3679 = vmatprep.subr.mxu0 0.0
      %3680 = vmatpush1.msra.mxu0 0.0
      %3681 = vmatprep.subr.mxu0 0.0
      %3682 = vmatpush1.msra.mxu0 0.0
      %3683 = vmatprep.subr.mxu0 0.0
      %3684 = vmatpush1.msra.mxu0 0.0
      %3685 = vmatprep.subr.mxu0 0.0
      %3686 = vmatpush1.msra.mxu0 0.0
      %3687 = vmatprep.subr.mxu0 0.0
      %3688 = vmatpush1.msra.mxu0 0.0
      %3689 = vmatprep.subr.mxu0 0.0
      %3690 = vmatpush1.msra.mxu0 0.0
      %3691 = vmatprep.subr.mxu0 0.0
      %3692 = vmatpush1.msra.mxu0 0.0
      %3693 = vmatprep.subr.mxu0 0.0
      %3694 = vmatpush1.msra.mxu0 0.0
      %3695 = vmatprep.subr.mxu0 0.0
      %3696 = vmatpush1.msra.mxu0 0.0
      %3697 = vmatprep.mubr.f32.mxu0 0.0
      %3698 = vmatmul.mubr.f32.gmra.mrb[0].mxu0 %v3270
      %v3699 = vpop.f32.mrb[0].mxu0
      %v3700 = vadd.f32 %v3600, %v3699
      %v3701 = vpop.f32.mrb[0].mxu0
      %3702 = vmatprep.mubr.f32.mxu0 0.0
      %3703 = vmatmul.mubr.f32.gmra.mrb[0].mxu0 %v3273
      %v3704 = vpop.f32.mrb[0].mxu0
      %v3705 = vadd.f32 %v3605, %v3704
      %v3706 = vpop.f32.mrb[0].mxu0
      %3707 = vmatprep.mubr.f32.mxu0 0.0
      %3708 = vmatmul.mubr.f32.gmra.mrb[0].mxu0 %v3276
      %v3709 = vpop.f32.mrb[0].mxu0
      %v3710 = vadd.f32 %v3610, %v3709
      %v3711 = vpop.f32.mrb[0].mxu0
      %3712 = vmatprep.mubr.f32.mxu0 0.0
      %3713 = vmatmul.mubr.f32.gmra.mrb[0].mxu0 %v3279
      %v3714 = vpop.f32.mrb[0].mxu0
      %v3715 = vadd.f32 %v3615, %v3714
      %v3716 = vpop.f32.mrb[0].mxu0
      %3717 = vmatprep.mubr.f32.mxu0 0.0
      %3718 = vmatmul.mubr.f32.gmra.mrb[0].mxu0 %v3282
      %v3719 = vpop.f32.mrb[0].mxu0
      %v3720 = vadd.f32 %v3620, %v3719
      %v3721 = vpop.f32.mrb[0].mxu0
      %3722 = vmatprep.mubr.f32.mxu0 0.0
      %3723 = vmatmul.mubr.f32.gmra.mrb[0].mxu0 %v3285
      %v3724 = vpop.f32.mrb[0].mxu0
      %v3725 = vadd.f32 %v3625, %v3724
      %v3726 = vpop.f32.mrb[0].mxu0
      %3727 = vmatprep.mubr.f32.mxu0 0.0
      %3728 = vmatmul.mubr.f32.gmra.mrb[0].mxu0 %v3288
      %v3729 = vpop.f32.mrb[0].mxu0
      %v3730 = vadd.f32 %v3630, %v3729
      %v3731 = vpop.f32.mrb[0].mxu0
      %3732 = vdwg.mxu0
      %s3733 = scalar_lea.vmem %s11, 672
      %v3734 = vld [vmem:[%s3733] sm:$0xff]
      %v3735 = vld [vmem:[%s3733 + $0x8] sm:$0xff]
      %v3736 = vld [vmem:[%s3733 + $0x10] sm:$0xff]
      %v3737 = vld [vmem:[%s3733 + $0x18] sm:$0xff]
      %v3738 = vld [vmem:[%s3733 + $0x20] sm:$0xff]
      %v3739 = vld [vmem:[%s3733 + $0x28] sm:$0xff]
      %v3740 = vld [vmem:[%s3733 + $0x30] sm:$0xff]
      %v3741 = vld [vmem:[%s3733 + $0x38] sm:$0xff]
      %v3742 = vld [vmem:[%s3733 + $0x40] sm:$0xff]
      %v3743 = vld [vmem:[%s3733 + $0x48] sm:$0xff]
      %v3744 = vld [vmem:[%s3733 + $0x50] sm:$0xff]
      %v3745 = vld [vmem:[%s3733 + $0x58] sm:$0xff]
      %v3746 = vld [vmem:[%s3733 + $0x60] sm:$0xff]
      %v3747 = vld [vmem:[%s3733 + $0x68] sm:$0xff]
      %v3748 = vld [vmem:[%s3733 + $0x70] sm:$0xff]
      %v3749 = vld [vmem:[%s3733 + $0x78] sm:$0xff]
      %v3750 = vld [vmem:[%s3733 + $0x80] sm:$0xff]
      %v3751 = vld [vmem:[%s3733 + $0x88] sm:$0xff]
      %v3752 = vld [vmem:[%s3733 + $0x90] sm:$0xff]
      %v3753 = vld [vmem:[%s3733 + $0x98] sm:$0xff]
      %v3754 = vld [vmem:[%s3733 + $0xa0] sm:$0xff]
      %v3755 = vld [vmem:[%s3733 + $0xa8] sm:$0xff]
      %v3756 = vld [vmem:[%s3733 + $0xb0] sm:$0xff]
      %v3757 = vld [vmem:[%s3733 + $0xb8] sm:$0xff]
      %v3758 = vld [vmem:[%s3733 + $0xc0] sm:$0xff]
      %v3759 = vld [vmem:[%s3733 + $0xc8] sm:$0xff]
      %v3760 = vld [vmem:[%s3733 + $0xd0] sm:$0xff]
      %v3761 = vld [vmem:[%s3733 + $0xd8] sm:$0xff]
      %v3762 = vld [vmem:[%s3733 + $0xe0] sm:$0xff]
      %v3763 = vld [vmem:[%s3733 + $0xe8] sm:$0xff]
      %v3764 = vld [vmem:[%s3733 + $0xf0] sm:$0xff]
      %v3765 = vld [vmem:[%s3733 + $0xf8] sm:$0xff]
      %v3766 = vld [vmem:[%s3733 + $0x100] sm:$0xff]
      %v3767 = vld [vmem:[%s3733 + $0x108] sm:$0xff]
      %v3768 = vld [vmem:[%s3733 + $0x110] sm:$0xff]
      %v3769 = vld [vmem:[%s3733 + $0x118] sm:$0xff]
      %v3770 = vld [vmem:[%s3733 + $0x120] sm:$0xff]
      %v3771 = vld [vmem:[%s3733 + $0x128] sm:$0xff]
      %v3772 = vld [vmem:[%s3733 + $0x130] sm:$0xff]
      %v3773 = vld [vmem:[%s3733 + $0x138] sm:$0xff]
      %v3774 = vld [vmem:[%s3733 + $0x140] sm:$0xff]
      %v3775 = vld [vmem:[%s3733 + $0x148] sm:$0xff]
      %3776 = vmatprep.subr.mxu0 0.0
      %3777 = vmatpush1.msra.mxu0 %v3734
      %3778 = vmatprep.subr.mxu0 0.0
      %3779 = vmatpush1.msra.mxu0 %v3735
      %3780 = vmatprep.subr.mxu0 0.0
      %3781 = vmatpush1.msra.mxu0 %v3736
      %3782 = vmatprep.subr.mxu0 0.0
      %3783 = vmatpush1.msra.mxu0 %v3737
      %3784 = vmatprep.subr.mxu0 0.0
      %3785 = vmatpush1.msra.mxu0 %v3738
      %3786 = vmatprep.subr.mxu0 0.0
      %3787 = vmatpush1.msra.mxu0 %v3739
      %3788 = vmatprep.subr.mxu0 0.0
      %3789 = vmatpush1.msra.mxu0 %v3740
      %3790 = vmatprep.subr.mxu0 0.0
      %3791 = vmatpush1.msra.mxu0 %v3741
      %3792 = vmatprep.subr.mxu0 0.0
      %3793 = vmatpush1.msra.mxu0 %v3742
      %3794 = vmatprep.subr.mxu0 0.0
      %3795 = vmatpush1.msra.mxu0 %v3743
      %3796 = vmatprep.subr.mxu0 0.0
      %3797 = vmatpush1.msra.mxu0 %v3744
      %3798 = vmatprep.subr.mxu0 0.0
      %3799 = vmatpush1.msra.mxu0 %v3745
      %3800 = vmatprep.subr.mxu0 0.0
      %3801 = vmatpush1.msra.mxu0 %v3746
      %3802 = vmatprep.subr.mxu0 0.0
      %3803 = vmatpush1.msra.mxu0 %v3747
      %3804 = vmatprep.subr.mxu0 0.0
      %3805 = vmatpush1.msra.mxu0 %v3748
      %3806 = vmatprep.subr.mxu0 0.0
      %3807 = vmatpush1.msra.mxu0 %v3749
      %3808 = vmatprep.subr.mxu0 0.0
      %3809 = vmatpush1.msra.mxu0 %v3750
      %3810 = vmatprep.subr.mxu0 0.0
      %3811 = vmatpush1.msra.mxu0 %v3751
      %3812 = vmatprep.subr.mxu0 0.0
      %3813 = vmatpush1.msra.mxu0 %v3752
      %3814 = vmatprep.subr.mxu0 0.0
      %3815 = vmatpush1.msra.mxu0 %v3753
      %3816 = vmatprep.subr.mxu0 0.0
      %3817 = vmatpush1.msra.mxu0 %v3754
      %3818 = vmatprep.subr.mxu0 0.0
      %3819 = vmatpush1.msra.mxu0 %v3755
      %3820 = vmatprep.subr.mxu0 0.0
      %3821 = vmatpush1.msra.mxu0 %v3756
      %3822 = vmatprep.subr.mxu0 0.0
      %3823 = vmatpush1.msra.mxu0 %v3757
      %3824 = vmatprep.subr.mxu0 0.0
      %3825 = vmatpush1.msra.mxu0 %v3758
      %3826 = vmatprep.subr.mxu0 0.0
      %3827 = vmatpush1.msra.mxu0 %v3759
      %3828 = vmatprep.subr.mxu0 0.0
      %3829 = vmatpush1.msra.mxu0 %v3760
      %3830 = vmatprep.subr.mxu0 0.0
      %3831 = vmatpush1.msra.mxu0 %v3761
      %3832 = vmatprep.subr.mxu0 0.0
      %3833 = vmatpush1.msra.mxu0 %v3762
      %3834 = vmatprep.subr.mxu0 0.0
      %3835 = vmatpush1.msra.mxu0 %v3763
      %3836 = vmatprep.subr.mxu0 0.0
      %3837 = vmatpush1.msra.mxu0 %v3764
      %3838 = vmatprep.subr.mxu0 0.0
      %3839 = vmatpush1.msra.mxu0 %v3765
      %3840 = vmatprep.mubr.f32.mxu0 %v3206
      %3841 = vmatmul.mubr.f32.gmra.mrb[0].mxu0 %v3205
      %v3842 = vpop.f32.mrb[0].mxu0
      %v3843 = vadd.f32 0.0, %v3842
      %v3844 = vpop.f32.mrb[0].mxu0
      %3845 = vmatprep.mubr.f32.mxu0 %v3209
      %3846 = vmatmul.mubr.f32.gmra.mrb[0].mxu0 %v3208
      %v3847 = vpop.f32.mrb[0].mxu0
      %v3848 = vadd.f32 0.0, %v3847
      %v3849 = vpop.f32.mrb[0].mxu0
      %3850 = vmatprep.mubr.f32.mxu0 %v3212
      %3851 = vmatmul.mubr.f32.gmra.mrb[0].mxu0 %v3211
      %v3852 = vpop.f32.mrb[0].mxu0
      %v3853 = vadd.f32 0.0, %v3852
      %v3854 = vpop.f32.mrb[0].mxu0
      %3855 = vmatprep.mubr.f32.mxu0 %v3215
      %3856 = vmatmul.mubr.f32.gmra.mrb[0].mxu0 %v3214
      %v3857 = vpop.f32.mrb[0].mxu0
      %v3858 = vadd.f32 0.0, %v3857
      %v3859 = vpop.f32.mrb[0].mxu0
      %3860 = vmatprep.mubr.f32.mxu0 %v3218
      %3861 = vmatmul.mubr.f32.gmra.mrb[0].mxu0 %v3217
      %v3862 = vpop.f32.mrb[0].mxu0
      %v3863 = vadd.f32 0.0, %v3862
      %v3864 = vpop.f32.mrb[0].mxu0
      %3865 = vmatprep.mubr.f32.mxu0 %v3221
      %3866 = vmatmul.mubr.f32.gmra.mrb[0].mxu0 %v3220
      %v3867 = vpop.f32.mrb[0].mxu0
      %v3868 = vadd.f32 0.0, %v3867
      %v3869 = vpop.f32.mrb[0].mxu0
      %3870 = vmatprep.mubr.f32.mxu0 %v3224
      %3871 = vmatmul.mubr.f32.gmra.mrb[0].mxu0 %v3223
      %v3872 = vpop.f32.mrb[0].mxu0
      %v3873 = vadd.f32 0.0, %v3872
      %v3874 = vpop.f32.mrb[0].mxu0
      %3875 = vdwg.mxu0
      %3876 = vmatprep.subr.mxu0 0.0
      %3877 = vmatpush1.msra.mxu0 %v3766
      %3878 = vmatprep.subr.mxu0 0.0
      %3879 = vmatpush1.msra.mxu0 %v3767
      %3880 = vmatprep.subr.mxu0 0.0
      %3881 = vmatpush1.msra.mxu0 %v3768
      %3882 = vmatprep.subr.mxu0 0.0
      %3883 = vmatpush1.msra.mxu0 %v3769
      %3884 = vmatprep.subr.mxu0 0.0
      %3885 = vmatpush1.msra.mxu0 %v3770
      %3886 = vmatprep.subr.mxu0 0.0
      %3887 = vmatpush1.msra.mxu0 %v3771
      %3888 = vmatprep.subr.mxu0 0.0
      %3889 = vmatpush1.msra.mxu0 %v3772
      %3890 = vmatprep.subr.mxu0 0.0
      %3891 = vmatpush1.msra.mxu0 %v3773
      %3892 = vmatprep.subr.mxu0 0.0
      %3893 = vmatpush1.msra.mxu0 %v3774
      %3894 = vmatprep.subr.mxu0 0.0
      %3895 = vmatpush1.msra.mxu0 %v3775
      %3896 = vmatprep.subr.mxu0 0.0
      %3897 = vmatpush1.msra.mxu0 0.0
      %3898 = vmatprep.subr.mxu0 0.0
      %3899 = vmatpush1.msra.mxu0 0.0
      %3900 = vmatprep.subr.mxu0 0.0
      %3901 = vmatpush1.msra.mxu0 0.0
      %3902 = vmatprep.subr.mxu0 0.0
      %3903 = vmatpush1.msra.mxu0 0.0
      %3904 = vmatprep.subr.mxu0 0.0
      %3905 = vmatpush1.msra.mxu0 0.0
      %3906 = vmatprep.subr.mxu0 0.0
      %3907 = vmatpush1.msra.mxu0 0.0
      %3908 = vmatprep.subr.mxu0 0.0
      %3909 = vmatpush1.msra.mxu0 0.0
      %3910 = vmatprep.subr.mxu0 0.0
      %3911 = vmatpush1.msra.mxu0 0.0
      %3912 = vmatprep.subr.mxu0 0.0
      %3913 = vmatpush1.msra.mxu0 0.0
      %3914 = vmatprep.subr.mxu0 0.0
      %3915 = vmatpush1.msra.mxu0 0.0
      %3916 = vmatprep.subr.mxu0 0.0
      %3917 = vmatpush1.msra.mxu0 0.0
      %3918 = vmatprep.subr.mxu0 0.0
      %3919 = vmatpush1.msra.mxu0 0.0
      %3920 = vmatprep.subr.mxu0 0.0
      %3921 = vmatpush1.msra.mxu0 0.0
      %3922 = vmatprep.subr.mxu0 0.0
      %3923 = vmatpush1.msra.mxu0 0.0
      %3924 = vmatprep.subr.mxu0 0.0
      %3925 = vmatpush1.msra.mxu0 0.0
      %3926 = vmatprep.subr.mxu0 0.0
      %3927 = vmatpush1.msra.mxu0 0.0
      %3928 = vmatprep.subr.mxu0 0.0
      %3929 = vmatpush1.msra.mxu0 0.0
      %3930 = vmatprep.subr.mxu0 0.0
      %3931 = vmatpush1.msra.mxu0 0.0
      %3932 = vmatprep.subr.mxu0 0.0
      %3933 = vmatpush1.msra.mxu0 0.0
      %3934 = vmatprep.subr.mxu0 0.0
      %3935 = vmatpush1.msra.mxu0 0.0
      %3936 = vmatprep.subr.mxu0 0.0
      %3937 = vmatpush1.msra.mxu0 0.0
      %3938 = vmatprep.subr.mxu0 0.0
      %3939 = vmatpush1.msra.mxu0 0.0
      %3940 = vmatprep.mubr.f32.mxu0 0.0
      %3941 = vmatmul.mubr.f32.gmra.mrb[0].mxu0 %v3270
      %v3942 = vpop.f32.mrb[0].mxu0
      %v3943 = vadd.f32 %v3843, %v3942
      %v3944 = vpop.f32.mrb[0].mxu0
      %3945 = vmatprep.mubr.f32.mxu0 0.0
      %3946 = vmatmul.mubr.f32.gmra.mrb[0].mxu0 %v3273
      %v3947 = vpop.f32.mrb[0].mxu0
      %v3948 = vadd.f32 %v3848, %v3947
      %v3949 = vpop.f32.mrb[0].mxu0
      %3950 = vmatprep.mubr.f32.mxu0 0.0
      %3951 = vmatmul.mubr.f32.gmra.mrb[0].mxu0 %v3276
      %v3952 = vpop.f32.mrb[0].mxu0
      %v3953 = vadd.f32 %v3853, %v3952
      %v3954 = vpop.f32.mrb[0].mxu0
      %3955 = vmatprep.mubr.f32.mxu0 0.0
      %3956 = vmatmul.mubr.f32.gmra.mrb[0].mxu0 %v3279
      %v3957 = vpop.f32.mrb[0].mxu0
      %v3958 = vadd.f32 %v3858, %v3957
      %v3959 = vpop.f32.mrb[0].mxu0
      %3960 = vmatprep.mubr.f32.mxu0 0.0
      %3961 = vmatmul.mubr.f32.gmra.mrb[0].mxu0 %v3282
      %v3962 = vpop.f32.mrb[0].mxu0
      %v3963 = vadd.f32 %v3863, %v3962
      %v3964 = vpop.f32.mrb[0].mxu0
      %3965 = vmatprep.mubr.f32.mxu0 0.0
      %3966 = vmatmul.mubr.f32.gmra.mrb[0].mxu0 %v3285
      %v3967 = vpop.f32.mrb[0].mxu0
      %v3968 = vadd.f32 %v3868, %v3967
      %v3969 = vpop.f32.mrb[0].mxu0
      %3970 = vmatprep.mubr.f32.mxu0 0.0
      %3971 = vmatmul.mubr.f32.gmra.mrb[0].mxu0 %v3288
      %v3972 = vpop.f32.mrb[0].mxu0
      %v3973 = vadd.f32 %v3873, %v3972
      %v3974 = vpop.f32.mrb[0].mxu0
      %3975 = vdwg.mxu0
      %v3976 = vld [vmem:[%s13] sm:$0xff]
      %v3977 = vld [vmem:[%s13 + $0x8] sm:$0xff]
      %v3978 = vld [vmem:[%s13 + $0x10] sm:$0xff]
      %v3979 = vld [vmem:[%s13 + $0x18] sm:$0xff]
      %v3980 = vld [vmem:[%s13 + $0x20] sm:$0xff]
      %v3981 = vld [vmem:[%s13 + $0x28] sm:$0xff]
      %v3982 = vld [vmem:[%s13 + $0x30] sm:$0xff]
      %s3983 = scalar_lea.vmem %s13, 56
      %v3984 = vld [vmem:[%s3983] sm:$0xff]
      %v3985 = vld [vmem:[%s3983 + $0x8] sm:$0xff]
      %v3986 = vld [vmem:[%s3983 + $0x10] sm:$0xff]
      %v3987 = vld [vmem:[%s3983 + $0x18] sm:$0xff]
      %v3988 = vld [vmem:[%s3983 + $0x20] sm:$0xff]
      %v3989 = vld [vmem:[%s3983 + $0x28] sm:$0xff]
      %v3990 = vld [vmem:[%s3983 + $0x30] sm:$0xff]
      %vm3991 = vcmask 457728
      %v3993 = vsel %vm3991, %v3457, 0
      %v3996 = vsel %vm3991, %v3462, 0
      %v3999 = vsel %vm3991, %v3467, 0
      %v4002 = vsel %vm3991, %v3472, 0
      %v4005 = vsel %vm3991, %v3477, 0
      %v4008 = vsel %vm3991, %v3482, 0
      %v4011 = vsel %vm3991, %v3487, 0
      %4013 = vmatprep.subr.mxu0 0.0
      %4014 = vmatpush1.msra.mxu0 %v3984
      %4015 = vmatprep.subr.mxu0 0.0
      %4016 = vmatpush1.msra.mxu0 %v3985
      %4017 = vmatprep.subr.mxu0 0.0
      %4018 = vmatpush1.msra.mxu0 %v3986
      %4019 = vmatprep.subr.mxu0 0.0
      %4020 = vmatpush1.msra.mxu0 %v3987
      %4021 = vmatprep.subr.mxu0 0.0
      %4022 = vmatpush1.msra.mxu0 %v3988
      %4023 = vmatprep.subr.mxu0 0.0
      %4024 = vmatpush1.msra.mxu0 %v3989
      %4025 = vmatprep.subr.mxu0 0.0
      %4026 = vmatpush1.msra.mxu0 %v3990
      %4027 = vmatprep.subr.mxu0 0.0
      %4028 = vmatpush1.msra.mxu0 0.0
      %4029 = vmatprep.subr.mxu0 0.0
      %4030 = vmatpush1.msra.mxu0 0.0
      %4031 = vmatprep.subr.mxu0 0.0
      %4032 = vmatpush1.msra.mxu0 0.0
      %4033 = vmatprep.subr.mxu0 0.0
      %4034 = vmatpush1.msra.mxu0 0.0
      %4035 = vmatprep.subr.mxu0 0.0
      %4036 = vmatpush1.msra.mxu0 0.0
      %4037 = vmatprep.subr.mxu0 0.0
      %4038 = vmatpush1.msra.mxu0 0.0
      %4039 = vmatprep.subr.mxu0 0.0
      %4040 = vmatpush1.msra.mxu0 0.0
      %4041 = vmatprep.subr.mxu0 0.0
      %4042 = vmatpush1.msra.mxu0 0.0
      %4043 = vmatprep.subr.mxu0 0.0
      %4044 = vmatpush1.msra.mxu0 0.0
      %4045 = vmatprep.subr.mxu0 0.0
      %4046 = vmatpush1.msra.mxu0 0.0
      %4047 = vmatprep.subr.mxu0 0.0
      %4048 = vmatpush1.msra.mxu0 0.0
      %4049 = vmatprep.subr.mxu0 0.0
      %4050 = vmatpush1.msra.mxu0 0.0
      %4051 = vmatprep.subr.mxu0 0.0
      %4052 = vmatpush1.msra.mxu0 0.0
      %4053 = vmatprep.subr.mxu0 0.0
      %4054 = vmatpush1.msra.mxu0 0.0
      %4055 = vmatprep.subr.mxu0 0.0
      %4056 = vmatpush1.msra.mxu0 0.0
      %4057 = vmatprep.subr.mxu0 0.0
      %4058 = vmatpush1.msra.mxu0 0.0
      %4059 = vmatprep.subr.mxu0 0.0
      %4060 = vmatpush1.msra.mxu0 0.0
      %4061 = vmatprep.subr.mxu0 0.0
      %4062 = vmatpush1.msra.mxu0 0.0
      %4063 = vmatprep.subr.mxu0 0.0
      %4064 = vmatpush1.msra.mxu0 0.0
      %4065 = vmatprep.subr.mxu0 0.0
      %4066 = vmatpush1.msra.mxu0 0.0
      %4067 = vmatprep.subr.mxu0 0.0
      %4068 = vmatpush1.msra.mxu0 0.0
      %4069 = vmatprep.subr.mxu0 0.0
      %4070 = vmatpush1.msra.mxu0 0.0
      %4071 = vmatprep.subr.mxu0 0.0
      %4072 = vmatpush1.msra.mxu0 0.0
      %4073 = vmatprep.subr.mxu0 0.0
      %4074 = vmatpush1.msra.mxu0 0.0
      %4075 = vmatprep.subr.mxu0 0.0
      %4076 = vmatpush1.msra.mxu0 0.0
      %4077 = vmatprep.mubr.f32.mxu0 0.0
      %4078 = vmatmul.mubr.f32.gmra.mrb[0].mxu0 %v3993
      %v4079 = vpop.f32.mrb[0].mxu0
      %v4080 = vadd.f32 0.0, %v4079
      %v4081 = vpop.f32.mrb[0].mxu0
      %4082 = vmatprep.mubr.f32.mxu0 0.0
      %4083 = vmatmul.mubr.f32.gmra.mrb[0].mxu0 %v3996
      %v4084 = vpop.f32.mrb[0].mxu0
      %v4085 = vadd.f32 0.0, %v4084
      %v4086 = vpop.f32.mrb[0].mxu0
      %4087 = vmatprep.mubr.f32.mxu0 0.0
      %4088 = vmatmul.mubr.f32.gmra.mrb[0].mxu0 %v3999
      %v4089 = vpop.f32.mrb[0].mxu0
      %v4090 = vadd.f32 0.0, %v4089
      %v4091 = vpop.f32.mrb[0].mxu0
      %4092 = vmatprep.mubr.f32.mxu0 0.0
      %4093 = vmatmul.mubr.f32.gmra.mrb[0].mxu0 %v4002
      %v4094 = vpop.f32.mrb[0].mxu0
      %v4095 = vadd.f32 0.0, %v4094
      %v4096 = vpop.f32.mrb[0].mxu0
      %4097 = vmatprep.mubr.f32.mxu0 0.0
      %4098 = vmatmul.mubr.f32.gmra.mrb[0].mxu0 %v4005
      %v4099 = vpop.f32.mrb[0].mxu0
      %v4100 = vadd.f32 0.0, %v4099
      %v4101 = vpop.f32.mrb[0].mxu0
      %4102 = vmatprep.mubr.f32.mxu0 0.0
      %4103 = vmatmul.mubr.f32.gmra.mrb[0].mxu0 %v4008
      %v4104 = vpop.f32.mrb[0].mxu0
      %v4105 = vadd.f32 0.0, %v4104
      %v4106 = vpop.f32.mrb[0].mxu0
      %4107 = vmatprep.mubr.f32.mxu0 0.0
      %4108 = vmatmul.mubr.f32.gmra.mrb[0].mxu0 %v4011
      %v4109 = vpop.f32.mrb[0].mxu0
      %v4110 = vadd.f32 0.0, %v4109
      %v4111 = vpop.f32.mrb[0].mxu0
      %4112 = vdwg.mxu0
      %v4120 = vrot.slane %v4080, 1
      %v4121 = vrot.slane %v4085, 1
      %v4122 = vsel %vm1454, %v4120, %v4121
      %v4123 = vrot.slane %v4090, 1
      %v4124 = vsel %vm1454, %v4121, %v4123
      %v4125 = vrot.slane %v4095, 1
      %v4126 = vsel %vm1454, %v4123, %v4125
      %v4127 = vrot.slane %v4100, 1
      %v4128 = vsel %vm1454, %v4125, %v4127
      %v4129 = vrot.slane %v4105, 1
      %v4130 = vsel %vm1454, %v4127, %v4129
      %v4131 = vrot.slane %v4110, 1
      %v4132 = vsel %vm1454, %v4129, %v4131
      %v4141 = vsel %vm1454, %v4131, %v4120
      %s4142 = scalar_lea.vmem %s13, 112
      %v4143 = vld [vmem:[%s4142] sm:$0xff]
      %v4144 = vld [vmem:[%s4142 + $0x8] sm:$0xff]
      %v4145 = vld [vmem:[%s4142 + $0x10] sm:$0xff]
      %v4146 = vld [vmem:[%s4142 + $0x18] sm:$0xff]
      %v4147 = vld [vmem:[%s4142 + $0x20] sm:$0xff]
      %v4148 = vld [vmem:[%s4142 + $0x28] sm:$0xff]
      %v4149 = vld [vmem:[%s4142 + $0x30] sm:$0xff]
      %4150 = vmatprep.subr.mxu0 0.0
      %4151 = vmatpush1.msra.mxu0 %v4143
      %4152 = vmatprep.subr.mxu0 0.0
      %4153 = vmatpush1.msra.mxu0 %v4144
      %4154 = vmatprep.subr.mxu0 0.0
      %4155 = vmatpush1.msra.mxu0 %v4145
      %4156 = vmatprep.subr.mxu0 0.0
      %4157 = vmatpush1.msra.mxu0 %v4146
      %4158 = vmatprep.subr.mxu0 0.0
      %4159 = vmatpush1.msra.mxu0 %v4147
      %4160 = vmatprep.subr.mxu0 0.0
      %4161 = vmatpush1.msra.mxu0 %v4148
      %4162 = vmatprep.subr.mxu0 0.0
      %4163 = vmatpush1.msra.mxu0 %v4149
      %4164 = vmatprep.subr.mxu0 0.0
      %4165 = vmatpush1.msra.mxu0 0.0
      %4166 = vmatprep.subr.mxu0 0.0
      %4167 = vmatpush1.msra.mxu0 0.0
      %4168 = vmatprep.subr.mxu0 0.0
      %4169 = vmatpush1.msra.mxu0 0.0
      %4170 = vmatprep.subr.mxu0 0.0
      %4171 = vmatpush1.msra.mxu0 0.0
      %4172 = vmatprep.subr.mxu0 0.0
      %4173 = vmatpush1.msra.mxu0 0.0
      %4174 = vmatprep.subr.mxu0 0.0
      %4175 = vmatpush1.msra.mxu0 0.0
      %4176 = vmatprep.subr.mxu0 0.0
      %4177 = vmatpush1.msra.mxu0 0.0
      %4178 = vmatprep.subr.mxu0 0.0
      %4179 = vmatpush1.msra.mxu0 0.0
      %4180 = vmatprep.subr.mxu0 0.0
      %4181 = vmatpush1.msra.mxu0 0.0
      %4182 = vmatprep.subr.mxu0 0.0
      %4183 = vmatpush1.msra.mxu0 0.0
      %4184 = vmatprep.subr.mxu0 0.0
      %4185 = vmatpush1.msra.mxu0 0.0
      %4186 = vmatprep.subr.mxu0 0.0
      %4187 = vmatpush1.msra.mxu0 0.0
      %4188 = vmatprep.subr.mxu0 0.0
      %4189 = vmatpush1.msra.mxu0 0.0
      %4190 = vmatprep.subr.mxu0 0.0
      %4191 = vmatpush1.msra.mxu0 0.0
      %4192 = vmatprep.subr.mxu0 0.0
      %4193 = vmatpush1.msra.mxu0 0.0
      %4194 = vmatprep.subr.mxu0 0.0
      %4195 = vmatpush1.msra.mxu0 0.0
      %4196 = vmatprep.subr.mxu0 0.0
      %4197 = vmatpush1.msra.mxu0 0.0
      %4198 = vmatprep.subr.mxu0 0.0
      %4199 = vmatpush1.msra.mxu0 0.0
      %4200 = vmatprep.subr.mxu0 0.0
      %4201 = vmatpush1.msra.mxu0 0.0
      %4202 = vmatprep.subr.mxu0 0.0
      %4203 = vmatpush1.msra.mxu0 0.0
      %4204 = vmatprep.subr.mxu0 0.0
      %4205 = vmatpush1.msra.mxu0 0.0
      %4206 = vmatprep.subr.mxu0 0.0
      %4207 = vmatpush1.msra.mxu0 0.0
      %4208 = vmatprep.subr.mxu0 0.0
      %4209 = vmatpush1.msra.mxu0 0.0
      %4210 = vmatprep.subr.mxu0 0.0
      %4211 = vmatpush1.msra.mxu0 0.0
      %4212 = vmatprep.subr.mxu0 0.0
      %4213 = vmatpush1.msra.mxu0 0.0
      %4214 = vmatprep.mubr.f32.mxu0 0.0
      %4215 = vmatmul.mubr.f32.gmra.mrb[0].mxu0 %v3993
      %v4216 = vpop.f32.mrb[0].mxu0
      %v4217 = vadd.f32 0.0, %v4216
      %v4218 = vpop.f32.mrb[0].mxu0
      %4219 = vmatprep.mubr.f32.mxu0 0.0
      %4220 = vmatmul.mubr.f32.gmra.mrb[0].mxu0 %v3996
      %v4221 = vpop.f32.mrb[0].mxu0
      %v4222 = vadd.f32 0.0, %v4221
      %v4223 = vpop.f32.mrb[0].mxu0
      %4224 = vmatprep.mubr.f32.mxu0 0.0
      %4225 = vmatmul.mubr.f32.gmra.mrb[0].mxu0 %v3999
      %v4226 = vpop.f32.mrb[0].mxu0
      %v4227 = vadd.f32 0.0, %v4226
      %v4228 = vpop.f32.mrb[0].mxu0
      %4229 = vmatprep.mubr.f32.mxu0 0.0
      %4230 = vmatmul.mubr.f32.gmra.mrb[0].mxu0 %v4002
      %v4231 = vpop.f32.mrb[0].mxu0
      %v4232 = vadd.f32 0.0, %v4231
      %v4233 = vpop.f32.mrb[0].mxu0
      %4234 = vmatprep.mubr.f32.mxu0 0.0
      %4235 = vmatmul.mubr.f32.gmra.mrb[0].mxu0 %v4005
      %v4236 = vpop.f32.mrb[0].mxu0
      %v4237 = vadd.f32 0.0, %v4236
      %v4238 = vpop.f32.mrb[0].mxu0
      %4239 = vmatprep.mubr.f32.mxu0 0.0
      %4240 = vmatmul.mubr.f32.gmra.mrb[0].mxu0 %v4008
      %v4241 = vpop.f32.mrb[0].mxu0
      %v4242 = vadd.f32 0.0, %v4241
      %v4243 = vpop.f32.mrb[0].mxu0
      %4244 = vmatprep.mubr.f32.mxu0 0.0
      %4245 = vmatmul.mubr.f32.gmra.mrb[0].mxu0 %v4011
      %v4246 = vpop.f32.mrb[0].mxu0
      %v4247 = vadd.f32 0.0, %v4246
      %v4248 = vpop.f32.mrb[0].mxu0
      %4249 = vdwg.mxu0
      %v4257 = vrot.slane %v4217, 2
      %v4258 = vrot.slane %v4222, 2
      %v4259 = vsel %vm2005, %v4257, %v4258
      %v4260 = vrot.slane %v4227, 2
      %v4261 = vsel %vm2005, %v4258, %v4260
      %v4262 = vrot.slane %v4232, 2
      %v4263 = vsel %vm2005, %v4260, %v4262
      %v4264 = vrot.slane %v4237, 2
      %v4265 = vsel %vm2005, %v4262, %v4264
      %v4266 = vrot.slane %v4242, 2
      %v4267 = vsel %vm2005, %v4264, %v4266
      %v4268 = vrot.slane %v4247, 2
      %v4269 = vsel %vm2005, %v4266, %v4268
      %v4278 = vsel %vm2005, %v4268, %v4257
      %4279 = vmatprep.subr.mxu0 0.0
      %4280 = vmatpush1.msra.mxu0 %v3976
      %4281 = vmatprep.subr.mxu0 0.0
      %4282 = vmatpush1.msra.mxu0 %v3977
      %4283 = vmatprep.subr.mxu0 0.0
      %4284 = vmatpush1.msra.mxu0 %v3978
      %4285 = vmatprep.subr.mxu0 0.0
      %4286 = vmatpush1.msra.mxu0 %v3979
      %4287 = vmatprep.subr.mxu0 0.0
      %4288 = vmatpush1.msra.mxu0 %v3980
      %4289 = vmatprep.subr.mxu0 0.0
      %4290 = vmatpush1.msra.mxu0 %v3981
      %4291 = vmatprep.subr.mxu0 0.0
      %4292 = vmatpush1.msra.mxu0 %v3982
      %4293 = vmatprep.subr.mxu0 0.0
      %4294 = vmatpush1.msra.mxu0 0.0
      %4295 = vmatprep.subr.mxu0 0.0
      %4296 = vmatpush1.msra.mxu0 0.0
      %4297 = vmatprep.subr.mxu0 0.0
      %4298 = vmatpush1.msra.mxu0 0.0
      %4299 = vmatprep.subr.mxu0 0.0
      %4300 = vmatpush1.msra.mxu0 0.0
      %4301 = vmatprep.subr.mxu0 0.0
      %4302 = vmatpush1.msra.mxu0 0.0
      %4303 = vmatprep.subr.mxu0 0.0
      %4304 = vmatpush1.msra.mxu0 0.0
      %4305 = vmatprep.subr.mxu0 0.0
      %4306 = vmatpush1.msra.mxu0 0.0
      %4307 = vmatprep.subr.mxu0 0.0
      %4308 = vmatpush1.msra.mxu0 0.0
      %4309 = vmatprep.subr.mxu0 0.0
      %4310 = vmatpush1.msra.mxu0 0.0
      %4311 = vmatprep.subr.mxu0 0.0
      %4312 = vmatpush1.msra.mxu0 0.0
      %4313 = vmatprep.subr.mxu0 0.0
      %4314 = vmatpush1.msra.mxu0 0.0
      %4315 = vmatprep.subr.mxu0 0.0
      %4316 = vmatpush1.msra.mxu0 0.0
      %4317 = vmatprep.subr.mxu0 0.0
      %4318 = vmatpush1.msra.mxu0 0.0
      %4319 = vmatprep.subr.mxu0 0.0
      %4320 = vmatpush1.msra.mxu0 0.0
      %4321 = vmatprep.subr.mxu0 0.0
      %4322 = vmatpush1.msra.mxu0 0.0
      %4323 = vmatprep.subr.mxu0 0.0
      %4324 = vmatpush1.msra.mxu0 0.0
      %4325 = vmatprep.subr.mxu0 0.0
      %4326 = vmatpush1.msra.mxu0 0.0
      %4327 = vmatprep.subr.mxu0 0.0
      %4328 = vmatpush1.msra.mxu0 0.0
      %4329 = vmatprep.subr.mxu0 0.0
      %4330 = vmatpush1.msra.mxu0 0.0
      %4331 = vmatprep.subr.mxu0 0.0
      %4332 = vmatpush1.msra.mxu0 0.0
      %4333 = vmatprep.subr.mxu0 0.0
      %4334 = vmatpush1.msra.mxu0 0.0
      %4335 = vmatprep.subr.mxu0 0.0
      %4336 = vmatpush1.msra.mxu0 0.0
      %4337 = vmatprep.subr.mxu0 0.0
      %4338 = vmatpush1.msra.mxu0 0.0
      %4339 = vmatprep.subr.mxu0 0.0
      %4340 = vmatpush1.msra.mxu0 0.0
      %4341 = vmatprep.subr.mxu0 0.0
      %4342 = vmatpush1.msra.mxu0 0.0
      %4343 = vmatprep.mubr.f32.mxu0 0.0
      %4344 = vmatmul.mubr.f32.gmra.mrb[0].mxu0 %v3993
      %v4345 = vpop.f32.mrb[0].mxu0
      %v4346 = vadd.f32 %v4122, %v4345
      %v4347 = vpop.f32.mrb[0].mxu0
      %4348 = vmatprep.mubr.f32.mxu0 0.0
      %4349 = vmatmul.mubr.f32.gmra.mrb[0].mxu0 %v3996
      %v4350 = vpop.f32.mrb[0].mxu0
      %v4351 = vadd.f32 %v4124, %v4350
      %v4352 = vpop.f32.mrb[0].mxu0
      %4353 = vmatprep.mubr.f32.mxu0 0.0
      %4354 = vmatmul.mubr.f32.gmra.mrb[0].mxu0 %v3999
      %v4355 = vpop.f32.mrb[0].mxu0
      %v4356 = vadd.f32 %v4126, %v4355
      %v4357 = vpop.f32.mrb[0].mxu0
      %4358 = vmatprep.mubr.f32.mxu0 0.0
      %4359 = vmatmul.mubr.f32.gmra.mrb[0].mxu0 %v4002
      %v4360 = vpop.f32.mrb[0].mxu0
      %v4361 = vadd.f32 %v4128, %v4360
      %v4362 = vpop.f32.mrb[0].mxu0
      %4363 = vmatprep.mubr.f32.mxu0 0.0
      %4364 = vmatmul.mubr.f32.gmra.mrb[0].mxu0 %v4005
      %v4365 = vpop.f32.mrb[0].mxu0
      %v4366 = vadd.f32 %v4130, %v4365
      %v4367 = vpop.f32.mrb[0].mxu0
      %4368 = vmatprep.mubr.f32.mxu0 0.0
      %4369 = vmatmul.mubr.f32.gmra.mrb[0].mxu0 %v4008
      %v4370 = vpop.f32.mrb[0].mxu0
      %v4371 = vadd.f32 %v4132, %v4370
      %v4372 = vpop.f32.mrb[0].mxu0
      %4373 = vmatprep.mubr.f32.mxu0 0.0
      %4374 = vmatmul.mubr.f32.gmra.mrb[0].mxu0 %v4011
      %v4375 = vpop.f32.mrb[0].mxu0
      %v4376 = vadd.f32 %v4141, %v4375
      %v4377 = vpop.f32.mrb[0].mxu0
      %4378 = vdwg.mxu0
      %v4379 = vadd.f32 %v4346, %v4259
      %v4380 = vadd.f32 %v4351, %v4261
      %v4381 = vadd.f32 %v4356, %v4263
      %v4382 = vadd.f32 %v4361, %v4265
      %v4383 = vadd.f32 %v4366, %v4267
      %v4384 = vadd.f32 %v4371, %v4269
      %v4385 = vadd.f32 %v4376, %v4278
      %v4386 = vld [vmem:[%s15] sm:$0x1]
      %v4388 = vlaneseq
      %v4389 = vshrl.u32 %v4388, 7
      %v4390 = vsub.s32 0, %v4389
      %v4391 = vrot.slane %v4386, %v4390
      %v4393 = vadd.f32 %v4379, %v4391
      %v4394 = vadd.f32 %v4380, %v4391
      %v4395 = vadd.f32 %v4381, %v4391
      %v4396 = vadd.f32 %v4382, %v4391
      %v4397 = vadd.f32 %v4383, %v4391
      %v4398 = vadd.f32 %v4384, %v4391
      %v4399 = vadd.f32 %v4385, %v4391
      %v4400 = vmax.f32 %v4393, 0.0
      %v4401 = vmax.f32 %v4394, 0.0
      %v4402 = vmax.f32 %v4395, 0.0
      %v4403 = vmax.f32 %v4396, 0.0
      %v4404 = vmax.f32 %v4397, 0.0
      %v4405 = vmax.f32 %v4398, 0.0
      %v4406 = vmax.f32 %v4399, 0.0
      %v4414 = vrot.slane %v4400, 1
      %v4415 = vrot.slane %v4401, 1
      %v4416 = vsel %vm1454, %v4414, %v4415
      %v4417 = vrot.slane %v4402, 1
      %v4418 = vsel %vm1454, %v4415, %v4417
      %v4419 = vrot.slane %v4403, 1
      %v4420 = vsel %vm1454, %v4417, %v4419
      %v4421 = vrot.slane %v4404, 1
      %v4422 = vsel %vm1454, %v4419, %v4421
      %v4423 = vrot.slane %v4405, 1
      %v4424 = vsel %vm1454, %v4421, %v4423
      %v4425 = vrot.slane %v4406, 1
      %v4426 = vsel %vm1454, %v4423, %v4425
      %v4435 = vsel %vm1454, %v4425, %v4414
      %v4436 = vmax.f32 %v4400, %v4416
      %v4437 = vmax.f32 %v4401, %v4418
      %v4438 = vmax.f32 %v4402, %v4420
      %v4439 = vmax.f32 %v4403, %v4422
      %v4440 = vmax.f32 %v4404, %v4424
      %v4441 = vmax.f32 %v4405, %v4426
      %v4442 = vmax.f32 %v4406, %v4435
      %v4443 = vld [vmem:[%s17] sm:$0xff]
      %v4444 = vld [vmem:[%s17 + $0x8] sm:$0xff]
      %v4446 = vsel %vm3991, %v4443, 0
      %v4449 = vsel %vm3991, %v4444, 0
      %4451 = vmatprep.subr.mxu0 0.0
      %4452 = vmatpush1.msra.mxu0 %v4436
      %4453 = vmatprep.subr.mxu0 0.0
      %4454 = vmatpush1.msra.mxu0 %v4437
      %4455 = vmatprep.subr.mxu0 0.0
      %4456 = vmatpush1.msra.mxu0 %v4438
      %4457 = vmatprep.subr.mxu0 0.0
      %4458 = vmatpush1.msra.mxu0 %v4439
      %4459 = vmatprep.subr.mxu0 0.0
      %4460 = vmatpush1.msra.mxu0 %v4440
      %4461 = vmatprep.subr.mxu0 0.0
      %4462 = vmatpush1.msra.mxu0 %v4441
      %4463 = vmatprep.subr.mxu0 0.0
      %4464 = vmatpush1.msra.mxu0 %v4442
      %4465 = vmatprep.subr.mxu0 0.0
      %4466 = vmatpush1.msra.mxu0 0.0
      %4467 = vmatprep.subr.mxu0 0.0
      %4468 = vmatpush1.msra.mxu0 0.0
      %4469 = vmatprep.subr.mxu0 0.0
      %4470 = vmatpush1.msra.mxu0 0.0
      %4471 = vmatprep.subr.mxu0 0.0
      %4472 = vmatpush1.msra.mxu0 0.0
      %4473 = vmatprep.subr.mxu0 0.0
      %4474 = vmatpush1.msra.mxu0 0.0
      %4475 = vmatprep.subr.mxu0 0.0
      %4476 = vmatpush1.msra.mxu0 0.0
      %4477 = vmatprep.subr.mxu0 0.0
      %4478 = vmatpush1.msra.mxu0 0.0
      %4479 = vmatprep.subr.mxu0 0.0
      %4480 = vmatpush1.msra.mxu0 0.0
      %4481 = vmatprep.subr.mxu0 0.0
      %4482 = vmatpush1.msra.mxu0 0.0
      %4483 = vmatprep.subr.mxu0 0.0
      %4484 = vmatpush1.msra.mxu0 0.0
      %4485 = vmatprep.subr.mxu0 0.0
      %4486 = vmatpush1.msra.mxu0 0.0
      %4487 = vmatprep.subr.mxu0 0.0
      %4488 = vmatpush1.msra.mxu0 0.0
      %4489 = vmatprep.subr.mxu0 0.0
      %4490 = vmatpush1.msra.mxu0 0.0
      %4491 = vmatprep.subr.mxu0 0.0
      %4492 = vmatpush1.msra.mxu0 0.0
      %4493 = vmatprep.subr.mxu0 0.0
      %4494 = vmatpush1.msra.mxu0 0.0
      %4495 = vmatprep.subr.mxu0 0.0
      %4496 = vmatpush1.msra.mxu0 0.0
      %4497 = vmatprep.subr.mxu0 0.0
      %4498 = vmatpush1.msra.mxu0 0.0
      %4499 = vmatprep.subr.mxu0 0.0
      %4500 = vmatpush1.msra.mxu0 0.0
      %4501 = vmatprep.subr.mxu0 0.0
      %4502 = vmatpush1.msra.mxu0 0.0
      %4503 = vmatprep.subr.mxu0 0.0
      %4504 = vmatpush1.msra.mxu0 0.0
      %4505 = vmatprep.subr.mxu0 0.0
      %4506 = vmatpush1.msra.mxu0 0.0
      %4507 = vmatprep.subr.mxu0 0.0
      %4508 = vmatpush1.msra.mxu0 0.0
      %4509 = vmatprep.subr.mxu0 0.0
      %4510 = vmatpush1.msra.mxu0 0.0
      %4511 = vmatprep.subr.mxu0 0.0
      %4512 = vmatpush1.msra.mxu0 0.0
      %4513 = vmatprep.subr.mxu0 0.0
      %4514 = vmatpush1.msra.mxu0 0.0
      %4515 = vmatprep.mubr.f32.mxu0 0.0
      %4516 = vmatmul.mubr.f32.gmra.mrb[0].mxu0 %v4446
      %v4517 = vpop.f32.mrb[0].mxu0
      %v4518 = vadd.f32 0.0, %v4517
      %v4519 = vpop.f32.mrb[0].mxu0
      %4520 = vmatprep.mubr.f32.mxu0 0.0
      %4521 = vmatmul.mubr.f32.gmra.mrb[0].mxu0 %v4449
      %v4522 = vpop.f32.mrb[0].mxu0
      %v4523 = vadd.f32 0.0, %v4522
      %v4524 = vpop.f32.mrb[0].mxu0
      %4525 = vdwg.mxu0
      %4528 = vrot.lane.b32.xlu0 %v4518, 120
      %v4529 = vpop.permute.xlu0 %4528
      %4530 = vrot.lane.b32.xlu0 %v4523, 120
      %v4531 = vpop.permute.xlu0 %4530
      %4534 = vrot.lane.b32.xlu0 %v4518, 32
      %v4535 = vpop.permute.xlu0 %4534
      %4536 = vrot.lane.b32.xlu0 %v4523, 32
      %v4537 = vpop.permute.xlu0 %4536
      %vm4540 = vcmask 261120
      %v4541 = vsel %vm4540, %v4529, %v4535
      %v4542 = vsel %vm4540, %v4531, %v4537
      %v4543 = vmax.f32 %v4518, %v4541
      %v4544 = vmax.f32 %v4523, %v4542
      %v4545 = vld [vmem:[%s19] sm:$0xff]
      %v4546 = vld [vmem:[%s19 + $0x8] sm:$0xff]
      %v4547 = vld [vmem:[%s19 + $0x10] sm:$0xff]
      %v4548 = vld [vmem:[%s19 + $0x18] sm:$0xff]
      %v4549 = vld [vmem:[%s19 + $0x20] sm:$0xff]
      %vm4550 = vcmask 326656
      %v4552 = vsel %vm4550, %v4543, 0
      %v4555 = vsel %vm4550, %v4544, 0
      %4557 = vmatprep.subr.mxu0 0.0
      %4558 = vmatpush1.msra.mxu0 %v4545
      %4559 = vmatprep.subr.mxu0 0.0
      %4560 = vmatpush1.msra.mxu0 %v4546
      %4561 = vmatprep.subr.mxu0 0.0
      %4562 = vmatpush1.msra.mxu0 %v4547
      %4563 = vmatprep.subr.mxu0 0.0
      %4564 = vmatpush1.msra.mxu0 %v4548
      %4565 = vmatprep.subr.mxu0 0.0
      %4566 = vmatpush1.msra.mxu0 %v4549
      %4567 = vmatprep.subr.mxu0 0.0
      %4568 = vmatpush1.msra.mxu0 0.0
      %4569 = vmatprep.subr.mxu0 0.0
      %4570 = vmatpush1.msra.mxu0 0.0
      %4571 = vmatprep.subr.mxu0 0.0
      %4572 = vmatpush1.msra.mxu0 0.0
      %4573 = vmatprep.subr.mxu0 0.0
      %4574 = vmatpush1.msra.mxu0 0.0
      %4575 = vmatprep.subr.mxu0 0.0
      %4576 = vmatpush1.msra.mxu0 0.0
      %4577 = vmatprep.subr.mxu0 0.0
      %4578 = vmatpush1.msra.mxu0 0.0
      %4579 = vmatprep.subr.mxu0 0.0
      %4580 = vmatpush1.msra.mxu0 0.0
      %4581 = vmatprep.subr.mxu0 0.0
      %4582 = vmatpush1.msra.mxu0 0.0
      %4583 = vmatprep.subr.mxu0 0.0
      %4584 = vmatpush1.msra.mxu0 0.0
      %4585 = vmatprep.subr.mxu0 0.0
      %4586 = vmatpush1.msra.mxu0 0.0
      %4587 = vmatprep.subr.mxu0 0.0
      %4588 = vmatpush1.msra.mxu0 0.0
      %4589 = vmatprep.subr.mxu0 0.0
      %4590 = vmatpush1.msra.mxu0 0.0
      %4591 = vmatprep.subr.mxu0 0.0
      %4592 = vmatpush1.msra.mxu0 0.0
      %4593 = vmatprep.subr.mxu0 0.0
      %4594 = vmatpush1.msra.mxu0 0.0
      %4595 = vmatprep.subr.mxu0 0.0
      %4596 = vmatpush1.msra.mxu0 0.0
      %4597 = vmatprep.subr.mxu0 0.0
      %4598 = vmatpush1.msra.mxu0 0.0
      %4599 = vmatprep.subr.mxu0 0.0
      %4600 = vmatpush1.msra.mxu0 0.0
      %4601 = vmatprep.subr.mxu0 0.0
      %4602 = vmatpush1.msra.mxu0 0.0
      %4603 = vmatprep.subr.mxu0 0.0
      %4604 = vmatpush1.msra.mxu0 0.0
      %4605 = vmatprep.subr.mxu0 0.0
      %4606 = vmatpush1.msra.mxu0 0.0
      %4607 = vmatprep.subr.mxu0 0.0
      %4608 = vmatpush1.msra.mxu0 0.0
      %4609 = vmatprep.subr.mxu0 0.0
      %4610 = vmatpush1.msra.mxu0 0.0
      %4611 = vmatprep.subr.mxu0 0.0
      %4612 = vmatpush1.msra.mxu0 0.0
      %4613 = vmatprep.subr.mxu0 0.0
      %4614 = vmatpush1.msra.mxu0 0.0
      %4615 = vmatprep.subr.mxu0 0.0
      %4616 = vmatpush1.msra.mxu0 0.0
      %4617 = vmatprep.subr.mxu0 0.0
      %4618 = vmatpush1.msra.mxu0 0.0
      %4619 = vmatprep.subr.mxu0 0.0
      %4620 = vmatpush1.msra.mxu0 0.0
      %4621 = vmatprep.mubr.f32.mxu0 0.0
      %4622 = vmatmul.mubr.f32.gmra.mrb[0].mxu0 %v4552
      %v4623 = vpop.f32.mrb[0].mxu0
      %v4624 = vadd.f32 0.0, %v4623
      %v4625 = vpop.f32.mrb[0].mxu0
      %4626 = vmatprep.mubr.f32.mxu0 0.0
      %4627 = vmatmul.mubr.f32.gmra.mrb[0].mxu0 %v4555
      %v4628 = vpop.f32.mrb[0].mxu0
      %v4629 = vadd.f32 0.0, %v4628
      %v4630 = vpop.f32.mrb[0].mxu0
      %4631 = vdwg.mxu0
      %v4632 = vld [vmem:[%s21] sm:$0xff]
      %v4633 = vld [vmem:[%s21 + $0x8] sm:$0xff]
      %s4634 = scalar_lea.vmem %s21, 16
      %v4635 = vld [vmem:[%s4634] sm:$0xff]
      %v4636 = vld [vmem:[%s4634 + $0x8] sm:$0xff]
      %vm4637 = vcmask 130048
      %v4639 = vsel %vm4637, %v4624, 0
      %v4642 = vsel %vm4637, %v4629, 0
      %4644 = vmatprep.subr.mxu0 0.0
      %4645 = vmatpush1.msra.mxu0 %v4635
      %4646 = vmatprep.subr.mxu0 0.0
      %4647 = vmatpush1.msra.mxu0 %v4636
      %4648 = vmatprep.subr.mxu0 0.0
      %4649 = vmatpush1.msra.mxu0 0.0
      %4650 = vmatprep.subr.mxu0 0.0
      %4651 = vmatpush1.msra.mxu0 0.0
      %4652 = vmatprep.subr.mxu0 0.0
      %4653 = vmatpush1.msra.mxu0 0.0
      %4654 = vmatprep.subr.mxu0 0.0
      %4655 = vmatpush1.msra.mxu0 0.0
      %4656 = vmatprep.subr.mxu0 0.0
      %4657 = vmatpush1.msra.mxu0 0.0
      %4658 = vmatprep.subr.mxu0 0.0
      %4659 = vmatpush1.msra.mxu0 0.0
      %4660 = vmatprep.subr.mxu0 0.0
      %4661 = vmatpush1.msra.mxu0 0.0
      %4662 = vmatprep.subr.mxu0 0.0
      %4663 = vmatpush1.msra.mxu0 0.0
      %4664 = vmatprep.subr.mxu0 0.0
      %4665 = vmatpush1.msra.mxu0 0.0
      %4666 = vmatprep.subr.mxu0 0.0
      %4667 = vmatpush1.msra.mxu0 0.0
      %4668 = vmatprep.subr.mxu0 0.0
      %4669 = vmatpush1.msra.mxu0 0.0
      %4670 = vmatprep.subr.mxu0 0.0
      %4671 = vmatpush1.msra.mxu0 0.0
      %4672 = vmatprep.subr.mxu0 0.0
      %4673 = vmatpush1.msra.mxu0 0.0
      %4674 = vmatprep.subr.mxu0 0.0
      %4675 = vmatpush1.msra.mxu0 0.0
      %4676 = vmatprep.subr.mxu0 0.0
      %4677 = vmatpush1.msra.mxu0 0.0
      %4678 = vmatprep.subr.mxu0 0.0
      %4679 = vmatpush1.msra.mxu0 0.0
      %4680 = vmatprep.subr.mxu0 0.0
      %4681 = vmatpush1.msra.mxu0 0.0
      %4682 = vmatprep.subr.mxu0 0.0
      %4683 = vmatpush1.msra.mxu0 0.0
      %4684 = vmatprep.subr.mxu0 0.0
      %4685 = vmatpush1.msra.mxu0 0.0
      %4686 = vmatprep.subr.mxu0 0.0
      %4687 = vmatpush1.msra.mxu0 0.0
      %4688 = vmatprep.subr.mxu0 0.0
      %4689 = vmatpush1.msra.mxu0 0.0
      %4690 = vmatprep.subr.mxu0 0.0
      %4691 = vmatpush1.msra.mxu0 0.0
      %4692 = vmatprep.subr.mxu0 0.0
      %4693 = vmatpush1.msra.mxu0 0.0
      %4694 = vmatprep.subr.mxu0 0.0
      %4695 = vmatpush1.msra.mxu0 0.0
      %4696 = vmatprep.subr.mxu0 0.0
      %4697 = vmatpush1.msra.mxu0 0.0
      %4698 = vmatprep.subr.mxu0 0.0
      %4699 = vmatpush1.msra.mxu0 0.0
      %4700 = vmatprep.subr.mxu0 0.0
      %4701 = vmatpush1.msra.mxu0 0.0
      %4702 = vmatprep.subr.mxu0 0.0
      %4703 = vmatpush1.msra.mxu0 0.0
      %4704 = vmatprep.subr.mxu0 0.0
      %4705 = vmatpush1.msra.mxu0 0.0
      %4706 = vmatprep.subr.mxu0 0.0
      %4707 = vmatpush1.msra.mxu0 0.0
      %4708 = vmatprep.mubr.f32.mxu0 0.0
      %4709 = vmatmul.mubr.f32.gmra.mrb[0].mxu0 %v4639
      %v4710 = vpop.f32.mrb[0].mxu0
      %v4711 = vadd.f32 0.0, %v4710
      %v4712 = vpop.f32.mrb[0].mxu0
      %4713 = vmatprep.mubr.f32.mxu0 0.0
      %4714 = vmatmul.mubr.f32.gmra.mrb[0].mxu0 %v4642
      %v4715 = vpop.f32.mrb[0].mxu0
      %v4716 = vadd.f32 0.0, %v4715
      %v4717 = vpop.f32.mrb[0].mxu0
      %4718 = vdwg.mxu0
      %v4721 = vrot.slane %v4711, 1
      %v4722 = vrot.slane %v4716, 1
      %v4723 = vsel %vm1454, %v4721, %v4722
      %v4727 = vsel %vm1454, %v4722, %v4721
      %4728 = vmatprep.subr.mxu0 0.0
      %4729 = vmatpush1.msra.mxu0 %v4632
      %4730 = vmatprep.subr.mxu0 0.0
      %4731 = vmatpush1.msra.mxu0 %v4633
      %4732 = vmatprep.subr.mxu0 0.0
      %4733 = vmatpush1.msra.mxu0 0.0
      %4734 = vmatprep.subr.mxu0 0.0
      %4735 = vmatpush1.msra.mxu0 0.0
      %4736 = vmatprep.subr.mxu0 0.0
      %4737 = vmatpush1.msra.mxu0 0.0
      %4738 = vmatprep.subr.mxu0 0.0
      %4739 = vmatpush1.msra.mxu0 0.0
      %4740 = vmatprep.subr.mxu0 0.0
      %4741 = vmatpush1.msra.mxu0 0.0
      %4742 = vmatprep.subr.mxu0 0.0
      %4743 = vmatpush1.msra.mxu0 0.0
      %4744 = vmatprep.subr.mxu0 0.0
      %4745 = vmatpush1.msra.mxu0 0.0
      %4746 = vmatprep.subr.mxu0 0.0
      %4747 = vmatpush1.msra.mxu0 0.0
      %4748 = vmatprep.subr.mxu0 0.0
      %4749 = vmatpush1.msra.mxu0 0.0
      %4750 = vmatprep.subr.mxu0 0.0
      %4751 = vmatpush1.msra.mxu0 0.0
      %4752 = vmatprep.subr.mxu0 0.0
      %4753 = vmatpush1.msra.mxu0 0.0
      %4754 = vmatprep.subr.mxu0 0.0
      %4755 = vmatpush1.msra.mxu0 0.0
      %4756 = vmatprep.subr.mxu0 0.0
      %4757 = vmatpush1.msra.mxu0 0.0
      %4758 = vmatprep.subr.mxu0 0.0
      %4759 = vmatpush1.msra.mxu0 0.0
      %4760 = vmatprep.subr.mxu0 0.0
      %4761 = vmatpush1.msra.mxu0 0.0
      %4762 = vmatprep.subr.mxu0 0.0
      %4763 = vmatpush1.msra.mxu0 0.0
      %4764 = vmatprep.subr.mxu0 0.0
      %4765 = vmatpush1.msra.mxu0 0.0
      %4766 = vmatprep.subr.mxu0 0.0
      %4767 = vmatpush1.msra.mxu0 0.0
      %4768 = vmatprep.subr.mxu0 0.0
      %4769 = vmatpush1.msra.mxu0 0.0
      %4770 = vmatprep.subr.mxu0 0.0
      %4771 = vmatpush1.msra.mxu0 0.0
      %4772 = vmatprep.subr.mxu0 0.0
      %4773 = vmatpush1.msra.mxu0 0.0
      %4774 = vmatprep.subr.mxu0 0.0
      %4775 = vmatpush1.msra.mxu0 0.0
      %4776 = vmatprep.subr.mxu0 0.0
      %4777 = vmatpush1.msra.mxu0 0.0
      %4778 = vmatprep.subr.mxu0 0.0
      %4779 = vmatpush1.msra.mxu0 0.0
      %4780 = vmatprep.subr.mxu0 0.0
      %4781 = vmatpush1.msra.mxu0 0.0
      %4782 = vmatprep.subr.mxu0 0.0
      %4783 = vmatpush1.msra.mxu0 0.0
      %4784 = vmatprep.subr.mxu0 0.0
      %4785 = vmatpush1.msra.mxu0 0.0
      %4786 = vmatprep.subr.mxu0 0.0
      %4787 = vmatpush1.msra.mxu0 0.0
      %4788 = vmatprep.subr.mxu0 0.0
      %4789 = vmatpush1.msra.mxu0 0.0
      %4790 = vmatprep.subr.mxu0 0.0
      %4791 = vmatpush1.msra.mxu0 0.0
      %4792 = vmatprep.mubr.f32.mxu0 0.0
      %4793 = vmatmul.mubr.f32.gmra.mrb[0].mxu0 %v4639
      %v4794 = vpop.f32.mrb[0].mxu0
      %v4795 = vadd.f32 %v4723, %v4794
      %v4796 = vpop.f32.mrb[0].mxu0
      %4797 = vmatprep.mubr.f32.mxu0 0.0
      %4798 = vmatmul.mubr.f32.gmra.mrb[0].mxu0 %v4642
      %v4799 = vpop.f32.mrb[0].mxu0
      %v4800 = vadd.f32 %v4727, %v4799
      %v4801 = vpop.f32.mrb[0].mxu0
      %4802 = vdwg.mxu0
      %v4803 = vld [vmem:[%s3] sm:$0xff]
      %v4804 = vld [vmem:[%s23] sm:$0x1]
      %v4806 = vlaneseq
      %v4807 = vshrl.u32 %v4806, 7
      %v4808 = vsub.s32 0, %v4807
      %v4809 = vrot.slane %v4804, %v4808
      %v4812 = vsel %vm4637, %v4803, 0
      %4814 = vmatprep.subr.mxu0 0.0
      %4815 = vmatpush1.msra.mxu0 %v4795
      %4816 = vmatprep.subr.mxu0 0.0
      %4817 = vmatpush1.msra.mxu0 %v4800
      %4818 = vmatprep.subr.mxu0 0.0
      %4819 = vmatpush1.msra.mxu0 0.0
      %4820 = vmatprep.subr.mxu0 0.0
      %4821 = vmatpush1.msra.mxu0 0.0
      %4822 = vmatprep.subr.mxu0 0.0
      %4823 = vmatpush1.msra.mxu0 0.0
      %4824 = vmatprep.subr.mxu0 0.0
      %4825 = vmatpush1.msra.mxu0 0.0
      %4826 = vmatprep.subr.mxu0 0.0
      %4827 = vmatpush1.msra.mxu0 0.0
      %4828 = vmatprep.subr.mxu0 0.0
      %4829 = vmatpush1.msra.mxu0 0.0
      %4830 = vmatprep.subr.mxu0 0.0
      %4831 = vmatpush1.msra.mxu0 0.0
      %4832 = vmatprep.subr.mxu0 0.0
      %4833 = vmatpush1.msra.mxu0 0.0
      %4834 = vmatprep.subr.mxu0 0.0
      %4835 = vmatpush1.msra.mxu0 0.0
      %4836 = vmatprep.subr.mxu0 0.0
      %4837 = vmatpush1.msra.mxu0 0.0
      %4838 = vmatprep.subr.mxu0 0.0
      %4839 = vmatpush1.msra.mxu0 0.0
      %4840 = vmatprep.subr.mxu0 0.0
      %4841 = vmatpush1.msra.mxu0 0.0
      %4842 = vmatprep.subr.mxu0 0.0
      %4843 = vmatpush1.msra.mxu0 0.0
      %4844 = vmatprep.subr.mxu0 0.0
      %4845 = vmatpush1.msra.mxu0 0.0
      %4846 = vmatprep.subr.mxu0 0.0
      %4847 = vmatpush1.msra.mxu0 0.0
      %4848 = vmatprep.subr.mxu0 0.0
      %4849 = vmatpush1.msra.mxu0 0.0
      %4850 = vmatprep.subr.mxu0 0.0
      %4851 = vmatpush1.msra.mxu0 0.0
      %4852 = vmatprep.subr.mxu0 0.0
      %4853 = vmatpush1.msra.mxu0 0.0
      %4854 = vmatprep.subr.mxu0 0.0
      %4855 = vmatpush1.msra.mxu0 0.0
      %4856 = vmatprep.subr.mxu0 0.0
      %4857 = vmatpush1.msra.mxu0 0.0
      %4858 = vmatprep.subr.mxu0 0.0
      %4859 = vmatpush1.msra.mxu0 0.0
      %4860 = vmatprep.subr.mxu0 0.0
      %4861 = vmatpush1.msra.mxu0 0.0
      %4862 = vmatprep.subr.mxu0 0.0
      %4863 = vmatpush1.msra.mxu0 0.0
      %4864 = vmatprep.subr.mxu0 0.0
      %4865 = vmatpush1.msra.mxu0 0.0
      %4866 = vmatprep.subr.mxu0 0.0
      %4867 = vmatpush1.msra.mxu0 0.0
      %4868 = vmatprep.subr.mxu0 0.0
      %4869 = vmatpush1.msra.mxu0 0.0
      %4870 = vmatprep.subr.mxu0 0.0
      %4871 = vmatpush1.msra.mxu0 0.0
      %4872 = vmatprep.subr.mxu0 0.0
      %4873 = vmatpush1.msra.mxu0 0.0
      %4874 = vmatprep.subr.mxu0 0.0
      %4875 = vmatpush1.msra.mxu0 0.0
      %4876 = vmatprep.subr.mxu0 0.0
      %4877 = vmatpush1.msra.mxu0 0.0
      %4878 = vmatprep.mubr.f32.mxu0 0.0
      %4879 = vmatmul.mubr.f32.gmra.mrb[0].mxu0 %v4812
      %v4880 = vpop.f32.mrb[0].mxu0
      %v4881 = vadd.f32 %v4809, %v4880
      %v4882 = vpop.f32.mrb[0].mxu0
      %4883 = vdwg.mxu0
      %v4884 = vmax.f32 %v4881, 0.0
      %v4885 = vld [vmem:[%s25] sm:$0xff]
      %v4886 = vld [vmem:[%s25 + $0x8] sm:$0xff]
      %v4887 = vld [vmem:[%s25 + $0x10] sm:$0xff]
      %v4888 = vld [vmem:[%s25 + $0x18] sm:$0xff]
      %v4889 = vld [vmem:[%s25 + $0x20] sm:$0xff]
      %v4890 = vld [vmem:[%s25 + $0x28] sm:$0xff]
      %v4891 = vld [vmem:[%s25 + $0x30] sm:$0xff]
      %v4893 = vsel %vm3991, %v3700, 0
      %v4896 = vsel %vm3991, %v3705, 0
      %v4899 = vsel %vm3991, %v3710, 0
      %v4902 = vsel %vm3991, %v3715, 0
      %v4905 = vsel %vm3991, %v3720, 0
      %v4908 = vsel %vm3991, %v3725, 0
      %v4911 = vsel %vm3991, %v3730, 0
      %4913 = vmatprep.subr.mxu0 0.0
      %4914 = vmatpush1.msra.mxu0 %v4885
      %4915 = vmatprep.subr.mxu0 0.0
      %4916 = vmatpush1.msra.mxu0 %v4886
      %4917 = vmatprep.subr.mxu0 0.0
      %4918 = vmatpush1.msra.mxu0 %v4887
      %4919 = vmatprep.subr.mxu0 0.0
      %4920 = vmatpush1.msra.mxu0 %v4888
      %4921 = vmatprep.subr.mxu0 0.0
      %4922 = vmatpush1.msra.mxu0 %v4889
      %4923 = vmatprep.subr.mxu0 0.0
      %4924 = vmatpush1.msra.mxu0 %v4890
      %4925 = vmatprep.subr.mxu0 0.0
      %4926 = vmatpush1.msra.mxu0 %v4891
      %4927 = vmatprep.subr.mxu0 0.0
      %4928 = vmatpush1.msra.mxu0 0.0
      %4929 = vmatprep.subr.mxu0 0.0
      %4930 = vmatpush1.msra.mxu0 0.0
      %4931 = vmatprep.subr.mxu0 0.0
      %4932 = vmatpush1.msra.mxu0 0.0
      %4933 = vmatprep.subr.mxu0 0.0
      %4934 = vmatpush1.msra.mxu0 0.0
      %4935 = vmatprep.subr.mxu0 0.0
      %4936 = vmatpush1.msra.mxu0 0.0
      %4937 = vmatprep.subr.mxu0 0.0
      %4938 = vmatpush1.msra.mxu0 0.0
      %4939 = vmatprep.subr.mxu0 0.0
      %4940 = vmatpush1.msra.mxu0 0.0
      %4941 = vmatprep.subr.mxu0 0.0
      %4942 = vmatpush1.msra.mxu0 0.0
      %4943 = vmatprep.subr.mxu0 0.0
      %4944 = vmatpush1.msra.mxu0 0.0
      %4945 = vmatprep.subr.mxu0 0.0
      %4946 = vmatpush1.msra.mxu0 0.0
      %4947 = vmatprep.subr.mxu0 0.0
      %4948 = vmatpush1.msra.mxu0 0.0
      %4949 = vmatprep.subr.mxu0 0.0
      %4950 = vmatpush1.msra.mxu0 0.0
      %4951 = vmatprep.subr.mxu0 0.0
      %4952 = vmatpush1.msra.mxu0 0.0
      %4953 = vmatprep.subr.mxu0 0.0
      %4954 = vmatpush1.msra.mxu0 0.0
      %4955 = vmatprep.subr.mxu0 0.0
      %4956 = vmatpush1.msra.mxu0 0.0
      %4957 = vmatprep.subr.mxu0 0.0
      %4958 = vmatpush1.msra.mxu0 0.0
      %4959 = vmatprep.subr.mxu0 0.0
      %4960 = vmatpush1.msra.mxu0 0.0
      %4961 = vmatprep.subr.mxu0 0.0
      %4962 = vmatpush1.msra.mxu0 0.0
      %4963 = vmatprep.subr.mxu0 0.0
      %4964 = vmatpush1.msra.mxu0 0.0
      %4965 = vmatprep.subr.mxu0 0.0
      %4966 = vmatpush1.msra.mxu0 0.0
      %4967 = vmatprep.subr.mxu0 0.0
      %4968 = vmatpush1.msra.mxu0 0.0
      %4969 = vmatprep.subr.mxu0 0.0
      %4970 = vmatpush1.msra.mxu0 0.0
      %4971 = vmatprep.subr.mxu0 0.0
      %4972 = vmatpush1.msra.mxu0 0.0
      %4973 = vmatprep.subr.mxu0 0.0
      %4974 = vmatpush1.msra.mxu0 0.0
      %4975 = vmatprep.subr.mxu0 0.0
      %4976 = vmatpush1.msra.mxu0 0.0
      %4977 = vmatprep.mubr.f32.mxu0 0.0
      %4978 = vmatmul.mubr.f32.gmra.mrb[0].mxu0 %v4893
      %v4979 = vpop.f32.mrb[0].mxu0
      %v4980 = vadd.f32 0.0, %v4979
      %v4981 = vpop.f32.mrb[0].mxu0
      %4982 = vmatprep.mubr.f32.mxu0 0.0
      %4983 = vmatmul.mubr.f32.gmra.mrb[0].mxu0 %v4896
      %v4984 = vpop.f32.mrb[0].mxu0
      %v4985 = vadd.f32 0.0, %v4984
      %v4986 = vpop.f32.mrb[0].mxu0
      %4987 = vmatprep.mubr.f32.mxu0 0.0
      %4988 = vmatmul.mubr.f32.gmra.mrb[0].mxu0 %v4899
      %v4989 = vpop.f32.mrb[0].mxu0
      %v4990 = vadd.f32 0.0, %v4989
      %v4991 = vpop.f32.mrb[0].mxu0
      %4992 = vmatprep.mubr.f32.mxu0 0.0
      %4993 = vmatmul.mubr.f32.gmra.mrb[0].mxu0 %v4902
      %v4994 = vpop.f32.mrb[0].mxu0
      %v4995 = vadd.f32 0.0, %v4994
      %v4996 = vpop.f32.mrb[0].mxu0
      %4997 = vmatprep.mubr.f32.mxu0 0.0
      %4998 = vmatmul.mubr.f32.gmra.mrb[0].mxu0 %v4905
      %v4999 = vpop.f32.mrb[0].mxu0
      %v5000 = vadd.f32 0.0, %v4999
      %v5001 = vpop.f32.mrb[0].mxu0
      %5002 = vmatprep.mubr.f32.mxu0 0.0
      %5003 = vmatmul.mubr.f32.gmra.mrb[0].mxu0 %v4908
      %v5004 = vpop.f32.mrb[0].mxu0
      %v5005 = vadd.f32 0.0, %v5004
      %v5006 = vpop.f32.mrb[0].mxu0
      %5007 = vmatprep.mubr.f32.mxu0 0.0
      %5008 = vmatmul.mubr.f32.gmra.mrb[0].mxu0 %v4911
      %v5009 = vpop.f32.mrb[0].mxu0
      %v5010 = vadd.f32 0.0, %v5009
      %v5011 = vpop.f32.mrb[0].mxu0
      %5012 = vdwg.mxu0
      %v5014 = vrot.slane %v5010, 7
      %vm5022 = vcmask 1040384
      %v5023 = vrot.slane %v4980, 7
      %v5024 = vrot.slane %v4985, 7
      %v5025 = vsel %vm5022, %v5023, %v5024
      %v5026 = vrot.slane %v4990, 7
      %v5027 = vsel %vm5022, %v5024, %v5026
      %v5028 = vrot.slane %v4995, 7
      %v5029 = vsel %vm5022, %v5026, %v5028
      %v5030 = vrot.slane %v5000, 7
      %v5031 = vsel %vm5022, %v5028, %v5030
      %v5032 = vrot.slane %v5005, 7
      %v5033 = vsel %vm5022, %v5030, %v5032
      %v5034 = vsel %vm5022, %v5032, %v5014
      %v5042 = vsel %vm5022, %v5014, %v5023
      %s5043 = scalar_lea.vmem %s25, 56
      %v5044 = vld [vmem:[%s5043] sm:$0xff]
      %v5045 = vld [vmem:[%s5043 + $0x8] sm:$0xff]
      %v5046 = vld [vmem:[%s5043 + $0x10] sm:$0xff]
      %v5047 = vld [vmem:[%s5043 + $0x18] sm:$0xff]
      %v5048 = vld [vmem:[%s5043 + $0x20] sm:$0xff]
      %v5049 = vld [vmem:[%s5043 + $0x28] sm:$0xff]
      %v5050 = vld [vmem:[%s5043 + $0x30] sm:$0xff]
      %5051 = vmatprep.subr.mxu0 0.0
      %5052 = vmatpush1.msra.mxu0 %v5044
      %5053 = vmatprep.subr.mxu0 0.0
      %5054 = vmatpush1.msra.mxu0 %v5045
      %5055 = vmatprep.subr.mxu0 0.0
      %5056 = vmatpush1.msra.mxu0 %v5046
      %5057 = vmatprep.subr.mxu0 0.0
      %5058 = vmatpush1.msra.mxu0 %v5047
      %5059 = vmatprep.subr.mxu0 0.0
      %5060 = vmatpush1.msra.mxu0 %v5048
      %5061 = vmatprep.subr.mxu0 0.0
      %5062 = vmatpush1.msra.mxu0 %v5049
      %5063 = vmatprep.subr.mxu0 0.0
      %5064 = vmatpush1.msra.mxu0 %v5050
      %5065 = vmatprep.subr.mxu0 0.0
      %5066 = vmatpush1.msra.mxu0 0.0
      %5067 = vmatprep.subr.mxu0 0.0
      %5068 = vmatpush1.msra.mxu0 0.0
      %5069 = vmatprep.subr.mxu0 0.0
      %5070 = vmatpush1.msra.mxu0 0.0
      %5071 = vmatprep.subr.mxu0 0.0
      %5072 = vmatpush1.msra.mxu0 0.0
      %5073 = vmatprep.subr.mxu0 0.0
      %5074 = vmatpush1.msra.mxu0 0.0
      %5075 = vmatprep.subr.mxu0 0.0
      %5076 = vmatpush1.msra.mxu0 0.0
      %5077 = vmatprep.subr.mxu0 0.0
      %5078 = vmatpush1.msra.mxu0 0.0
      %5079 = vmatprep.subr.mxu0 0.0
      %5080 = vmatpush1.msra.mxu0 0.0
      %5081 = vmatprep.subr.mxu0 0.0
      %5082 = vmatpush1.msra.mxu0 0.0
      %5083 = vmatprep.subr.mxu0 0.0
      %5084 = vmatpush1.msra.mxu0 0.0
      %5085 = vmatprep.subr.mxu0 0.0
      %5086 = vmatpush1.msra.mxu0 0.0
      %5087 = vmatprep.subr.mxu0 0.0
      %5088 = vmatpush1.msra.mxu0 0.0
      %5089 = vmatprep.subr.mxu0 0.0
      %5090 = vmatpush1.msra.mxu0 0.0
      %5091 = vmatprep.subr.mxu0 0.0
      %5092 = vmatpush1.msra.mxu0 0.0
      %5093 = vmatprep.subr.mxu0 0.0
      %5094 = vmatpush1.msra.mxu0 0.0
      %5095 = vmatprep.subr.mxu0 0.0
      %5096 = vmatpush1.msra.mxu0 0.0
      %5097 = vmatprep.subr.mxu0 0.0
      %5098 = vmatpush1.msra.mxu0 0.0
      %5099 = vmatprep.subr.mxu0 0.0
      %5100 = vmatpush1.msra.mxu0 0.0
      %5101 = vmatprep.subr.mxu0 0.0
      %5102 = vmatpush1.msra.mxu0 0.0
      %5103 = vmatprep.subr.mxu0 0.0
      %5104 = vmatpush1.msra.mxu0 0.0
      %5105 = vmatprep.subr.mxu0 0.0
      %5106 = vmatpush1.msra.mxu0 0.0
      %5107 = vmatprep.subr.mxu0 0.0
      %5108 = vmatpush1.msra.mxu0 0.0
      %5109 = vmatprep.subr.mxu0 0.0
      %5110 = vmatpush1.msra.mxu0 0.0
      %5111 = vmatprep.subr.mxu0 0.0
      %5112 = vmatpush1.msra.mxu0 0.0
      %5113 = vmatprep.subr.mxu0 0.0
      %5114 = vmatpush1.msra.mxu0 0.0
      %5115 = vmatprep.mubr.f32.mxu0 0.0
      %5116 = vmatmul.mubr.f32.gmra.mrb[0].mxu0 %v4893
      %v5117 = vpop.f32.mrb[0].mxu0
      %v5118 = vadd.f32 0.0, %v5117
      %v5119 = vpop.f32.mrb[0].mxu0
      %5120 = vmatprep.mubr.f32.mxu0 0.0
      %5121 = vmatmul.mubr.f32.gmra.mrb[0].mxu0 %v4896
      %v5122 = vpop.f32.mrb[0].mxu0
      %v5123 = vadd.f32 0.0, %v5122
      %v5124 = vpop.f32.mrb[0].mxu0
      %5125 = vmatprep.mubr.f32.mxu0 0.0
      %5126 = vmatmul.mubr.f32.gmra.mrb[0].mxu0 %v4899
      %v5127 = vpop.f32.mrb[0].mxu0
      %v5128 = vadd.f32 0.0, %v5127
      %v5129 = vpop.f32.mrb[0].mxu0
      %5130 = vmatprep.mubr.f32.mxu0 0.0
      %5131 = vmatmul.mubr.f32.gmra.mrb[0].mxu0 %v4902
      %v5132 = vpop.f32.mrb[0].mxu0
      %v5133 = vadd.f32 0.0, %v5132
      %v5134 = vpop.f32.mrb[0].mxu0
      %5135 = vmatprep.mubr.f32.mxu0 0.0
      %5136 = vmatmul.mubr.f32.gmra.mrb[0].mxu0 %v4905
      %v5137 = vpop.f32.mrb[0].mxu0
      %v5138 = vadd.f32 0.0, %v5137
      %v5139 = vpop.f32.mrb[0].mxu0
      %5140 = vmatprep.mubr.f32.mxu0 0.0
      %5141 = vmatmul.mubr.f32.gmra.mrb[0].mxu0 %v4908
      %v5142 = vpop.f32.mrb[0].mxu0
      %v5143 = vadd.f32 0.0, %v5142
      %v5144 = vpop.f32.mrb[0].mxu0
      %5145 = vmatprep.mubr.f32.mxu0 0.0
      %5146 = vmatmul.mubr.f32.gmra.mrb[0].mxu0 %v4911
      %v5147 = vpop.f32.mrb[0].mxu0
      %v5148 = vadd.f32 0.0, %v5147
      %v5149 = vpop.f32.mrb[0].mxu0
      %5150 = vdwg.mxu0
      %s5151 = scalar_lea.vmem %s25, 112
      %v5152 = vld [vmem:[%s5151] sm:$0xff]
      %v5153 = vld [vmem:[%s5151 + $0x8] sm:$0xff]
      %v5154 = vld [vmem:[%s5151 + $0x10] sm:$0xff]
      %v5155 = vld [vmem:[%s5151 + $0x18] sm:$0xff]
      %v5156 = vld [vmem:[%s5151 + $0x20] sm:$0xff]
      %v5157 = vld [vmem:[%s5151 + $0x28] sm:$0xff]
      %v5158 = vld [vmem:[%s5151 + $0x30] sm:$0xff]
      %5159 = vmatprep.subr.mxu0 0.0
      %5160 = vmatpush1.msra.mxu0 %v5152
      %5161 = vmatprep.subr.mxu0 0.0
      %5162 = vmatpush1.msra.mxu0 %v5153
      %5163 = vmatprep.subr.mxu0 0.0
      %5164 = vmatpush1.msra.mxu0 %v5154
      %5165 = vmatprep.subr.mxu0 0.0
      %5166 = vmatpush1.msra.mxu0 %v5155
      %5167 = vmatprep.subr.mxu0 0.0
      %5168 = vmatpush1.msra.mxu0 %v5156
      %5169 = vmatprep.subr.mxu0 0.0
      %5170 = vmatpush1.msra.mxu0 %v5157
      %5171 = vmatprep.subr.mxu0 0.0
      %5172 = vmatpush1.msra.mxu0 %v5158
      %5173 = vmatprep.subr.mxu0 0.0
      %5174 = vmatpush1.msra.mxu0 0.0
      %5175 = vmatprep.subr.mxu0 0.0
      %5176 = vmatpush1.msra.mxu0 0.0
      %5177 = vmatprep.subr.mxu0 0.0
      %5178 = vmatpush1.msra.mxu0 0.0
      %5179 = vmatprep.subr.mxu0 0.0
      %5180 = vmatpush1.msra.mxu0 0.0
      %5181 = vmatprep.subr.mxu0 0.0
      %5182 = vmatpush1.msra.mxu0 0.0
      %5183 = vmatprep.subr.mxu0 0.0
      %5184 = vmatpush1.msra.mxu0 0.0
      %5185 = vmatprep.subr.mxu0 0.0
      %5186 = vmatpush1.msra.mxu0 0.0
      %5187 = vmatprep.subr.mxu0 0.0
      %5188 = vmatpush1.msra.mxu0 0.0
      %5189 = vmatprep.subr.mxu0 0.0
      %5190 = vmatpush1.msra.mxu0 0.0
      %5191 = vmatprep.subr.mxu0 0.0
      %5192 = vmatpush1.msra.mxu0 0.0
      %5193 = vmatprep.subr.mxu0 0.0
      %5194 = vmatpush1.msra.mxu0 0.0
      %5195 = vmatprep.subr.mxu0 0.0
      %5196 = vmatpush1.msra.mxu0 0.0
      %5197 = vmatprep.subr.mxu0 0.0
      %5198 = vmatpush1.msra.mxu0 0.0
      %5199 = vmatprep.subr.mxu0 0.0
      %5200 = vmatpush1.msra.mxu0 0.0
      %5201 = vmatprep.subr.mxu0 0.0
      %5202 = vmatpush1.msra.mxu0 0.0
      %5203 = vmatprep.subr.mxu0 0.0
      %5204 = vmatpush1.msra.mxu0 0.0
      %5205 = vmatprep.subr.mxu0 0.0
      %5206 = vmatpush1.msra.mxu0 0.0
      %5207 = vmatprep.subr.mxu0 0.0
      %5208 = vmatpush1.msra.mxu0 0.0
      %5209 = vmatprep.subr.mxu0 0.0
      %5210 = vmatpush1.msra.mxu0 0.0
      %5211 = vmatprep.subr.mxu0 0.0
      %5212 = vmatpush1.msra.mxu0 0.0
      %5213 = vmatprep.subr.mxu0 0.0
      %5214 = vmatpush1.msra.mxu0 0.0
      %5215 = vmatprep.subr.mxu0 0.0
      %5216 = vmatpush1.msra.mxu0 0.0
      %5217 = vmatprep.subr.mxu0 0.0
      %5218 = vmatpush1.msra.mxu0 0.0
      %5219 = vmatprep.subr.mxu0 0.0
      %5220 = vmatpush1.msra.mxu0 0.0
      %5221 = vmatprep.subr.mxu0 0.0
      %5222 = vmatpush1.msra.mxu0 0.0
      %5223 = vmatprep.mubr.f32.mxu0 0.0
      %5224 = vmatmul.mubr.f32.gmra.mrb[0].mxu0 %v4893
      %v5225 = vpop.f32.mrb[0].mxu0
      %v5226 = vadd.f32 0.0, %v5225
      %v5227 = vpop.f32.mrb[0].mxu0
      %5228 = vmatprep.mubr.f32.mxu0 0.0
      %5229 = vmatmul.mubr.f32.gmra.mrb[0].mxu0 %v4896
      %v5230 = vpop.f32.mrb[0].mxu0
      %v5231 = vadd.f32 0.0, %v5230
      %v5232 = vpop.f32.mrb[0].mxu0
      %5233 = vmatprep.mubr.f32.mxu0 0.0
      %5234 = vmatmul.mubr.f32.gmra.mrb[0].mxu0 %v4899
      %v5235 = vpop.f32.mrb[0].mxu0
      %v5236 = vadd.f32 0.0, %v5235
      %v5237 = vpop.f32.mrb[0].mxu0
      %5238 = vmatprep.mubr.f32.mxu0 0.0
      %5239 = vmatmul.mubr.f32.gmra.mrb[0].mxu0 %v4902
      %v5240 = vpop.f32.mrb[0].mxu0
      %v5241 = vadd.f32 0.0, %v5240
      %v5242 = vpop.f32.mrb[0].mxu0
      %5243 = vmatprep.mubr.f32.mxu0 0.0
      %5244 = vmatmul.mubr.f32.gmra.mrb[0].mxu0 %v4905
      %v5245 = vpop.f32.mrb[0].mxu0
      %v5246 = vadd.f32 0.0, %v5245
      %v5247 = vpop.f32.mrb[0].mxu0
      %5248 = vmatprep.mubr.f32.mxu0 0.0
      %5249 = vmatmul.mubr.f32.gmra.mrb[0].mxu0 %v4908
      %v5250 = vpop.f32.mrb[0].mxu0
      %v5251 = vadd.f32 0.0, %v5250
      %v5252 = vpop.f32.mrb[0].mxu0
      %5253 = vmatprep.mubr.f32.mxu0 0.0
      %5254 = vmatmul.mubr.f32.gmra.mrb[0].mxu0 %v4911
      %v5255 = vpop.f32.mrb[0].mxu0
      %v5256 = vadd.f32 0.0, %v5255
      %v5257 = vpop.f32.mrb[0].mxu0
      %5258 = vdwg.mxu0
      %v5266 = vrot.slane %v5226, 1
      %v5267 = vrot.slane %v5231, 1
      %v5268 = vsel %vm1454, %v5266, %v5267
      %v5269 = vrot.slane %v5236, 1
      %v5270 = vsel %vm1454, %v5267, %v5269
      %v5271 = vrot.slane %v5241, 1
      %v5272 = vsel %vm1454, %v5269, %v5271
      %v5273 = vrot.slane %v5246, 1
      %v5274 = vsel %vm1454, %v5271, %v5273
      %v5275 = vrot.slane %v5251, 1
      %v5276 = vsel %vm1454, %v5273, %v5275
      %v5277 = vrot.slane %v5256, 1
      %v5278 = vsel %vm1454, %v5275, %v5277
      %v5287 = vsel %vm1454, %v5277, %v5266
      %v5288 = vlaneseq
      %v5289 = vshrl.u32 %v5288, 7
      %v5290 = vadd.s32 %v5289, 8
      %v5291 = vadd.s32 %v5289, 16
      %v5292 = vadd.s32 %v5289, 24
      %v5293 = vadd.s32 %v5289, 32
      %v5294 = vadd.s32 %v5289, 40
      %v5295 = vadd.s32 %v5289, 48
      %vm5296 = vcmp.lt.s32.totalorder %v5289, 0
      %v5297 = vsub.s32 0, %v5289
      %v5298 = vsel %vm5296, %v5297, %v5289
      %v5299 = vmul.u32.u64.compose %v5298, 2454267026
      %v5300 = vextract.low.u32 %v5299
      %v5301 = vextract.high.u32 %v5299
      %vm5302 = vc.u32 %v5300, 2454267026
      %v5303 = vsel %vm5302, 1, 0
      %v5304 = vadd.s32 %v5301, %v5303
      %v5305 = vshrl.u32 %v5304, 2
      %v5306 = vmul.u32 %v5305, 7
      %v5307 = vsub.s32 %v5298, %v5306
      %v5308 = vsub.s32 0, %v5307
      %v5309 = vsel %vm5296, %v5308, %v5307
      %vm5310 = vcmp.lt.s32.totalorder %v5290, 0
      %v5311 = vsub.s32 0, %v5290
      %v5312 = vsel %vm5310, %v5311, %v5290
      %v5313 = vmul.u32.u64.compose %v5312, 2454267026
      %v5314 = vextract.low.u32 %v5313
      %v5315 = vextract.high.u32 %v5313
      %vm5316 = vc.u32 %v5314, 2454267026
      %v5317 = vsel %vm5316, 1, 0
      %v5318 = vadd.s32 %v5315, %v5317
      %v5319 = vshrl.u32 %v5318, 2
      %v5320 = vmul.u32 %v5319, 7
      %v5321 = vsub.s32 %v5312, %v5320
      %v5322 = vsub.s32 0, %v5321
      %v5323 = vsel %vm5310, %v5322, %v5321
      %vm5324 = vcmp.lt.s32.totalorder %v5291, 0
      %v5325 = vsub.s32 0, %v5291
      %v5326 = vsel %vm5324, %v5325, %v5291
      %v5327 = vmul.u32.u64.compose %v5326, 2454267026
      %v5328 = vextract.low.u32 %v5327
      %v5329 = vextract.high.u32 %v5327
      %vm5330 = vc.u32 %v5328, 2454267026
      %v5331 = vsel %vm5330, 1, 0
      %v5332 = vadd.s32 %v5329, %v5331
      %v5333 = vshrl.u32 %v5332, 2
      %v5334 = vmul.u32 %v5333, 7
      %v5335 = vsub.s32 %v5326, %v5334
      %v5336 = vsub.s32 0, %v5335
      %v5337 = vsel %vm5324, %v5336, %v5335
      %vm5338 = vcmp.lt.s32.totalorder %v5292, 0
      %v5339 = vsub.s32 0, %v5292
      %v5340 = vsel %vm5338, %v5339, %v5292
      %v5341 = vmul.u32.u64.compose %v5340, 2454267026
      %v5342 = vextract.low.u32 %v5341
      %v5343 = vextract.high.u32 %v5341
      %vm5344 = vc.u32 %v5342, 2454267026
      %v5345 = vsel %vm5344, 1, 0
      %v5346 = vadd.s32 %v5343, %v5345
      %v5347 = vshrl.u32 %v5346, 2
      %v5348 = vmul.u32 %v5347, 7
      %v5349 = vsub.s32 %v5340, %v5348
      %v5350 = vsub.s32 0, %v5349
      %v5351 = vsel %vm5338, %v5350, %v5349
      %vm5352 = vcmp.lt.s32.totalorder %v5293, 0
      %v5353 = vsub.s32 0, %v5293
      %v5354 = vsel %vm5352, %v5353, %v5293
      %v5355 = vmul.u32.u64.compose %v5354, 2454267026
      %v5356 = vextract.low.u32 %v5355
      %v5357 = vextract.high.u32 %v5355
      %vm5358 = vc.u32 %v5356, 2454267026
      %v5359 = vsel %vm5358, 1, 0
      %v5360 = vadd.s32 %v5357, %v5359
      %v5361 = vshrl.u32 %v5360, 2
      %v5362 = vmul.u32 %v5361, 7
      %v5363 = vsub.s32 %v5354, %v5362
      %v5364 = vsub.s32 0, %v5363
      %v5365 = vsel %vm5352, %v5364, %v5363
      %vm5366 = vcmp.lt.s32.totalorder %v5294, 0
      %v5367 = vsub.s32 0, %v5294
      %v5368 = vsel %vm5366, %v5367, %v5294
      %v5369 = vmul.u32.u64.compose %v5368, 2454267026
      %v5370 = vextract.low.u32 %v5369
      %v5371 = vextract.high.u32 %v5369
      %vm5372 = vc.u32 %v5370, 2454267026
      %v5373 = vsel %vm5372, 1, 0
      %v5374 = vadd.s32 %v5371, %v5373
      %v5375 = vshrl.u32 %v5374, 2
      %v5376 = vmul.u32 %v5375, 7
      %v5377 = vsub.s32 %v5368, %v5376
      %v5378 = vsub.s32 0, %v5377
      %v5379 = vsel %vm5366, %v5378, %v5377
      %vm5380 = vcmp.lt.s32.totalorder %v5295, 0
      %v5381 = vsub.s32 0, %v5295
      %v5382 = vsel %vm5380, %v5381, %v5295
      %v5383 = vmul.u32.u64.compose %v5382, 2454267026
      %v5384 = vextract.low.u32 %v5383
      %v5385 = vextract.high.u32 %v5383
      %vm5386 = vc.u32 %v5384, 2454267026
      %v5387 = vsel %vm5386, 1, 0
      %v5388 = vadd.s32 %v5385, %v5387
      %v5389 = vshrl.u32 %v5388, 2
      %v5390 = vmul.u32 %v5389, 7
      %v5391 = vsub.s32 %v5382, %v5390
      %v5392 = vsub.s32 0, %v5391
      %v5393 = vsel %vm5380, %v5392, %v5391
      %vm5394 = vcmp.ne.s32.totalorder %v5309, 0
      %vm5395 = vcmp.ne.s32.totalorder %v5323, 0
      %vm5396 = vcmp.ne.s32.totalorder %v5337, 0
      %vm5397 = vcmp.ne.s32.totalorder %v5351, 0
      %vm5398 = vcmp.ne.s32.totalorder %v5365, 0
      %vm5399 = vcmp.ne.s32.totalorder %v5379, 0
      %vm5400 = vcmp.ne.s32.totalorder %v5393, 0
      %vm5401 = vcmp.lt.s32.totalorder %v5309, 0
      %vm5402 = vcmp.lt.s32.totalorder %v5323, 0
      %vm5403 = vcmp.lt.s32.totalorder %v5337, 0
      %vm5404 = vcmp.lt.s32.totalorder %v5351, 0
      %vm5405 = vcmp.lt.s32.totalorder %v5365, 0
      %vm5406 = vcmp.lt.s32.totalorder %v5379, 0
      %vm5407 = vcmp.lt.s32.totalorder %v5393, 0
      %vm5408 = vmand %vm5401, %vm5394
      %vm5409 = vmand %vm5402, %vm5395
      %vm5410 = vmand %vm5403, %vm5396
      %vm5411 = vmand %vm5404, %vm5397
      %vm5412 = vmand %vm5405, %vm5398
      %vm5413 = vmand %vm5406, %vm5399
      %vm5414 = vmand %vm5407, %vm5400
      %v5415 = vadd.s32 %v5309, 7
      %v5416 = vadd.s32 %v5323, 7
      %v5417 = vadd.s32 %v5337, 7
      %v5418 = vadd.s32 %v5351, 7
      %v5419 = vadd.s32 %v5365, 7
      %v5420 = vadd.s32 %v5379, 7
      %v5421 = vadd.s32 %v5393, 7
      %v5422 = vsel %vm5408, %v5415, %v5309
      %v5423 = vsel %vm5409, %v5416, %v5323
      %v5424 = vsel %vm5410, %v5417, %v5337
      %v5425 = vsel %vm5411, %v5418, %v5351
      %v5426 = vsel %vm5412, %v5419, %v5365
      %v5427 = vsel %vm5413, %v5420, %v5379
      %v5428 = vsel %vm5414, %v5421, %v5393
      %vm5429 = vcmp.eq.s32.totalorder %v5422, 0
      %vm5430 = vcmp.eq.s32.totalorder %v5423, 0
      %vm5431 = vcmp.eq.s32.totalorder %v5424, 0
      %vm5432 = vcmp.eq.s32.totalorder %v5425, 0
      %vm5433 = vcmp.eq.s32.totalorder %v5426, 0
      %vm5434 = vcmp.eq.s32.totalorder %v5427, 0
      %vm5435 = vcmp.eq.s32.totalorder %v5428, 0
      %v5436 = vsel %vm5429, 0.0, %v5042
      %v5437 = vsel %vm5430, 0.0, %v5025
      %v5438 = vsel %vm5431, 0.0, %v5027
      %v5439 = vsel %vm5432, 0.0, %v5029
      %v5440 = vsel %vm5433, 0.0, %v5031
      %v5441 = vsel %vm5434, 0.0, %v5033
      %v5442 = vsel %vm5435, 0.0, %v5034
      %vm5443 = vcmp.eq.s32.totalorder %v5422, 6
      %vm5444 = vcmp.eq.s32.totalorder %v5423, 6
      %vm5445 = vcmp.eq.s32.totalorder %v5424, 6
      %vm5446 = vcmp.eq.s32.totalorder %v5425, 6
      %vm5447 = vcmp.eq.s32.totalorder %v5426, 6
      %vm5448 = vcmp.eq.s32.totalorder %v5427, 6
      %vm5449 = vcmp.eq.s32.totalorder %v5428, 6
      %v5450 = vsel %vm5443, 0.0, %v5268
      %v5451 = vsel %vm5444, 0.0, %v5270
      %v5452 = vsel %vm5445, 0.0, %v5272
      %v5453 = vsel %vm5446, 0.0, %v5274
      %v5454 = vsel %vm5447, 0.0, %v5276
      %v5455 = vsel %vm5448, 0.0, %v5278
      %v5456 = vsel %vm5449, 0.0, %v5287
      %v5457 = vadd.f32 %v5436, %v5118
      %v5458 = vadd.f32 %v5437, %v5123
      %v5459 = vadd.f32 %v5438, %v5128
      %v5460 = vadd.f32 %v5439, %v5133
      %v5461 = vadd.f32 %v5440, %v5138
      %v5462 = vadd.f32 %v5441, %v5143
      %v5463 = vadd.f32 %v5442, %v5148
      %v5464 = vadd.f32 %v5457, %v5450
      %v5465 = vadd.f32 %v5458, %v5451
      %v5466 = vadd.f32 %v5459, %v5452
      %v5467 = vadd.f32 %v5460, %v5453
      %v5468 = vadd.f32 %v5461, %v5454
      %v5469 = vadd.f32 %v5462, %v5455
      %v5470 = vadd.f32 %v5463, %v5456
      %v5471 = vld [vmem:[%s27] sm:$0x1]
      %v5473 = vlaneseq
      %v5474 = vshrl.u32 %v5473, 7
      %v5475 = vsub.s32 0, %v5474
      %v5476 = vrot.slane %v5471, %v5475
      %v5478 = vadd.f32 %v5464, %v5476
      %v5479 = vadd.f32 %v5465, %v5476
      %v5480 = vadd.f32 %v5466, %v5476
      %v5481 = vadd.f32 %v5467, %v5476
      %v5482 = vadd.f32 %v5468, %v5476
      %v5483 = vadd.f32 %v5469, %v5476
      %v5484 = vadd.f32 %v5470, %v5476
      %v5485 = vmax.f32 %v5478, 0.0
      %v5486 = vmax.f32 %v5479, 0.0
      %v5487 = vmax.f32 %v5480, 0.0
      %v5488 = vmax.f32 %v5481, 0.0
      %v5489 = vmax.f32 %v5482, 0.0
      %v5490 = vmax.f32 %v5483, 0.0
      %v5491 = vmax.f32 %v5484, 0.0
      %v5492 = vld [vmem:[%s29] sm:$0xff]
      %v5493 = vld [vmem:[%s29 + $0x8] sm:$0xff]
      %v5494 = vld [vmem:[%s29 + $0x10] sm:$0xff]
      %v5495 = vld [vmem:[%s29 + $0x18] sm:$0xff]
      %v5496 = vld [vmem:[%s29 + $0x20] sm:$0xff]
      %v5497 = vld [vmem:[%s29 + $0x28] sm:$0xff]
      %v5498 = vld [vmem:[%s29 + $0x30] sm:$0xff]
      %s5499 = scalar_lea.vmem %s29, 56
      %v5500 = vld [vmem:[%s5499] sm:$0xff]
      %v5501 = vld [vmem:[%s5499 + $0x8] sm:$0xff]
      %v5502 = vld [vmem:[%s5499 + $0x10] sm:$0xff]
      %v5503 = vld [vmem:[%s5499 + $0x18] sm:$0xff]
      %v5504 = vld [vmem:[%s5499 + $0x20] sm:$0xff]
      %v5505 = vld [vmem:[%s5499 + $0x28] sm:$0xff]
      %v5506 = vld [vmem:[%s5499 + $0x30] sm:$0xff]
      %v5508 = vsel %vm3991, %v5485, 0
      %v5511 = vsel %vm3991, %v5486, 0
      %v5514 = vsel %vm3991, %v5487, 0
      %v5517 = vsel %vm3991, %v5488, 0
      %v5520 = vsel %vm3991, %v5489, 0
      %v5523 = vsel %vm3991, %v5490, 0
      %v5526 = vsel %vm3991, %v5491, 0
      %5528 = vmatprep.subr.mxu0 0.0
      %5529 = vmatpush1.msra.mxu0 %v5500
      %5530 = vmatprep.subr.mxu0 0.0
      %5531 = vmatpush1.msra.mxu0 %v5501
      %5532 = vmatprep.subr.mxu0 0.0
      %5533 = vmatpush1.msra.mxu0 %v5502
      %5534 = vmatprep.subr.mxu0 0.0
      %5535 = vmatpush1.msra.mxu0 %v5503
      %5536 = vmatprep.subr.mxu0 0.0
      %5537 = vmatpush1.msra.mxu0 %v5504
      %5538 = vmatprep.subr.mxu0 0.0
      %5539 = vmatpush1.msra.mxu0 %v5505
      %5540 = vmatprep.subr.mxu0 0.0
      %5541 = vmatpush1.msra.mxu0 %v5506
      %5542 = vmatprep.subr.mxu0 0.0
      %5543 = vmatpush1.msra.mxu0 0.0
      %5544 = vmatprep.subr.mxu0 0.0
      %5545 = vmatpush1.msra.mxu0 0.0
      %5546 = vmatprep.subr.mxu0 0.0
      %5547 = vmatpush1.msra.mxu0 0.0
      %5548 = vmatprep.subr.mxu0 0.0
      %5549 = vmatpush1.msra.mxu0 0.0
      %5550 = vmatprep.subr.mxu0 0.0
      %5551 = vmatpush1.msra.mxu0 0.0
      %5552 = vmatprep.subr.mxu0 0.0
      %5553 = vmatpush1.msra.mxu0 0.0
      %5554 = vmatprep.subr.mxu0 0.0
      %5555 = vmatpush1.msra.mxu0 0.0
      %5556 = vmatprep.subr.mxu0 0.0
      %5557 = vmatpush1.msra.mxu0 0.0
      %5558 = vmatprep.subr.mxu0 0.0
      %5559 = vmatpush1.msra.mxu0 0.0
      %5560 = vmatprep.subr.mxu0 0.0
      %5561 = vmatpush1.msra.mxu0 0.0
      %5562 = vmatprep.subr.mxu0 0.0
      %5563 = vmatpush1.msra.mxu0 0.0
      %5564 = vmatprep.subr.mxu0 0.0
      %5565 = vmatpush1.msra.mxu0 0.0
      %5566 = vmatprep.subr.mxu0 0.0
      %5567 = vmatpush1.msra.mxu0 0.0
      %5568 = vmatprep.subr.mxu0 0.0
      %5569 = vmatpush1.msra.mxu0 0.0
      %5570 = vmatprep.subr.mxu0 0.0
      %5571 = vmatpush1.msra.mxu0 0.0
      %5572 = vmatprep.subr.mxu0 0.0
      %5573 = vmatpush1.msra.mxu0 0.0
      %5574 = vmatprep.subr.mxu0 0.0
      %5575 = vmatpush1.msra.mxu0 0.0
      %5576 = vmatprep.subr.mxu0 0.0
      %5577 = vmatpush1.msra.mxu0 0.0
      %5578 = vmatprep.subr.mxu0 0.0
      %5579 = vmatpush1.msra.mxu0 0.0
      %5580 = vmatprep.subr.mxu0 0.0
      %5581 = vmatpush1.msra.mxu0 0.0
      %5582 = vmatprep.subr.mxu0 0.0
      %5583 = vmatpush1.msra.mxu0 0.0
      %5584 = vmatprep.subr.mxu0 0.0
      %5585 = vmatpush1.msra.mxu0 0.0
      %5586 = vmatprep.subr.mxu0 0.0
      %5587 = vmatpush1.msra.mxu0 0.0
      %5588 = vmatprep.subr.mxu0 0.0
      %5589 = vmatpush1.msra.mxu0 0.0
      %5590 = vmatprep.subr.mxu0 0.0
      %5591 = vmatpush1.msra.mxu0 0.0
      %5592 = vmatprep.mubr.f32.mxu0 0.0
      %5593 = vmatmul.mubr.f32.gmra.mrb[0].mxu0 %v5508
      %v5594 = vpop.f32.mrb[0].mxu0
      %v5595 = vadd.f32 0.0, %v5594
      %v5596 = vpop.f32.mrb[0].mxu0
      %5597 = vmatprep.mubr.f32.mxu0 0.0
      %5598 = vmatmul.mubr.f32.gmra.mrb[0].mxu0 %v5511
      %v5599 = vpop.f32.mrb[0].mxu0
      %v5600 = vadd.f32 0.0, %v5599
      %v5601 = vpop.f32.mrb[0].mxu0
      %5602 = vmatprep.mubr.f32.mxu0 0.0
      %5603 = vmatmul.mubr.f32.gmra.mrb[0].mxu0 %v5514
      %v5604 = vpop.f32.mrb[0].mxu0
      %v5605 = vadd.f32 0.0, %v5604
      %v5606 = vpop.f32.mrb[0].mxu0
      %5607 = vmatprep.mubr.f32.mxu0 0.0
      %5608 = vmatmul.mubr.f32.gmra.mrb[0].mxu0 %v5517
      %v5609 = vpop.f32.mrb[0].mxu0
      %v5610 = vadd.f32 0.0, %v5609
      %v5611 = vpop.f32.mrb[0].mxu0
      %5612 = vmatprep.mubr.f32.mxu0 0.0
      %5613 = vmatmul.mubr.f32.gmra.mrb[0].mxu0 %v5520
      %v5614 = vpop.f32.mrb[0].mxu0
      %v5615 = vadd.f32 0.0, %v5614
      %v5616 = vpop.f32.mrb[0].mxu0
      %5617 = vmatprep.mubr.f32.mxu0 0.0
      %5618 = vmatmul.mubr.f32.gmra.mrb[0].mxu0 %v5523
      %v5619 = vpop.f32.mrb[0].mxu0
      %v5620 = vadd.f32 0.0, %v5619
      %v5621 = vpop.f32.mrb[0].mxu0
      %5622 = vmatprep.mubr.f32.mxu0 0.0
      %5623 = vmatmul.mubr.f32.gmra.mrb[0].mxu0 %v5526
      %v5624 = vpop.f32.mrb[0].mxu0
      %v5625 = vadd.f32 0.0, %v5624
      %v5626 = vpop.f32.mrb[0].mxu0
      %5627 = vdwg.mxu0
      %v5635 = vrot.slane %v5595, 1
      %v5636 = vrot.slane %v5600, 1
      %v5637 = vsel %vm1454, %v5635, %v5636
      %v5638 = vrot.slane %v5605, 1
      %v5639 = vsel %vm1454, %v5636, %v5638
      %v5640 = vrot.slane %v5610, 1
      %v5641 = vsel %vm1454, %v5638, %v5640
      %v5642 = vrot.slane %v5615, 1
      %v5643 = vsel %vm1454, %v5640, %v5642
      %v5644 = vrot.slane %v5620, 1
      %v5645 = vsel %vm1454, %v5642, %v5644
      %v5646 = vrot.slane %v5625, 1
      %v5647 = vsel %vm1454, %v5644, %v5646
      %v5656 = vsel %vm1454, %v5646, %v5635
      %s5657 = scalar_lea.vmem %s29, 112
      %v5658 = vld [vmem:[%s5657] sm:$0xff]
      %v5659 = vld [vmem:[%s5657 + $0x8] sm:$0xff]
      %v5660 = vld [vmem:[%s5657 + $0x10] sm:$0xff]
      %v5661 = vld [vmem:[%s5657 + $0x18] sm:$0xff]
      %v5662 = vld [vmem:[%s5657 + $0x20] sm:$0xff]
      %v5663 = vld [vmem:[%s5657 + $0x28] sm:$0xff]
      %v5664 = vld [vmem:[%s5657 + $0x30] sm:$0xff]
      %5665 = vmatprep.subr.mxu0 0.0
      %5666 = vmatpush1.msra.mxu0 %v5658
      %5667 = vmatprep.subr.mxu0 0.0
      %5668 = vmatpush1.msra.mxu0 %v5659
      %5669 = vmatprep.subr.mxu0 0.0
      %5670 = vmatpush1.msra.mxu0 %v5660
      %5671 = vmatprep.subr.mxu0 0.0
      %5672 = vmatpush1.msra.mxu0 %v5661
      %5673 = vmatprep.subr.mxu0 0.0
      %5674 = vmatpush1.msra.mxu0 %v5662
      %5675 = vmatprep.subr.mxu0 0.0
      %5676 = vmatpush1.msra.mxu0 %v5663
      %5677 = vmatprep.subr.mxu0 0.0
      %5678 = vmatpush1.msra.mxu0 %v5664
      %5679 = vmatprep.subr.mxu0 0.0
      %5680 = vmatpush1.msra.mxu0 0.0
      %5681 = vmatprep.subr.mxu0 0.0
      %5682 = vmatpush1.msra.mxu0 0.0
      %5683 = vmatprep.subr.mxu0 0.0
      %5684 = vmatpush1.msra.mxu0 0.0
      %5685 = vmatprep.subr.mxu0 0.0
      %5686 = vmatpush1.msra.mxu0 0.0
      %5687 = vmatprep.subr.mxu0 0.0
      %5688 = vmatpush1.msra.mxu0 0.0
      %5689 = vmatprep.subr.mxu0 0.0
      %5690 = vmatpush1.msra.mxu0 0.0
      %5691 = vmatprep.subr.mxu0 0.0
      %5692 = vmatpush1.msra.mxu0 0.0
      %5693 = vmatprep.subr.mxu0 0.0
      %5694 = vmatpush1.msra.mxu0 0.0
      %5695 = vmatprep.subr.mxu0 0.0
      %5696 = vmatpush1.msra.mxu0 0.0
      %5697 = vmatprep.subr.mxu0 0.0
      %5698 = vmatpush1.msra.mxu0 0.0
      %5699 = vmatprep.subr.mxu0 0.0
      %5700 = vmatpush1.msra.mxu0 0.0
      %5701 = vmatprep.subr.mxu0 0.0
      %5702 = vmatpush1.msra.mxu0 0.0
      %5703 = vmatprep.subr.mxu0 0.0
      %5704 = vmatpush1.msra.mxu0 0.0
      %5705 = vmatprep.subr.mxu0 0.0
      %5706 = vmatpush1.msra.mxu0 0.0
      %5707 = vmatprep.subr.mxu0 0.0
      %5708 = vmatpush1.msra.mxu0 0.0
      %5709 = vmatprep.subr.mxu0 0.0
      %5710 = vmatpush1.msra.mxu0 0.0
      %5711 = vmatprep.subr.mxu0 0.0
      %5712 = vmatpush1.msra.mxu0 0.0
      %5713 = vmatprep.subr.mxu0 0.0
      %5714 = vmatpush1.msra.mxu0 0.0
      %5715 = vmatprep.subr.mxu0 0.0
      %5716 = vmatpush1.msra.mxu0 0.0
      %5717 = vmatprep.subr.mxu0 0.0
      %5718 = vmatpush1.msra.mxu0 0.0
      %5719 = vmatprep.subr.mxu0 0.0
      %5720 = vmatpush1.msra.mxu0 0.0
      %5721 = vmatprep.subr.mxu0 0.0
      %5722 = vmatpush1.msra.mxu0 0.0
      %5723 = vmatprep.subr.mxu0 0.0
      %5724 = vmatpush1.msra.mxu0 0.0
      %5725 = vmatprep.subr.mxu0 0.0
      %5726 = vmatpush1.msra.mxu0 0.0
      %5727 = vmatprep.subr.mxu0 0.0
      %5728 = vmatpush1.msra.mxu0 0.0
      %5729 = vmatprep.mubr.f32.mxu0 0.0
      %5730 = vmatmul.mubr.f32.gmra.mrb[0].mxu0 %v5508
      %v5731 = vpop.f32.mrb[0].mxu0
      %v5732 = vadd.f32 0.0, %v5731
      %v5733 = vpop.f32.mrb[0].mxu0
      %5734 = vmatprep.mubr.f32.mxu0 0.0
      %5735 = vmatmul.mubr.f32.gmra.mrb[0].mxu0 %v5511
      %v5736 = vpop.f32.mrb[0].mxu0
      %v5737 = vadd.f32 0.0, %v5736
      %v5738 = vpop.f32.mrb[0].mxu0
      %5739 = vmatprep.mubr.f32.mxu0 0.0
      %5740 = vmatmul.mubr.f32.gmra.mrb[0].mxu0 %v5514
      %v5741 = vpop.f32.mrb[0].mxu0
      %v5742 = vadd.f32 0.0, %v5741
      %v5743 = vpop.f32.mrb[0].mxu0
      %5744 = vmatprep.mubr.f32.mxu0 0.0
      %5745 = vmatmul.mubr.f32.gmra.mrb[0].mxu0 %v5517
      %v5746 = vpop.f32.mrb[0].mxu0
      %v5747 = vadd.f32 0.0, %v5746
      %v5748 = vpop.f32.mrb[0].mxu0
      %5749 = vmatprep.mubr.f32.mxu0 0.0
      %5750 = vmatmul.mubr.f32.gmra.mrb[0].mxu0 %v5520
      %v5751 = vpop.f32.mrb[0].mxu0
      %v5752 = vadd.f32 0.0, %v5751
      %v5753 = vpop.f32.mrb[0].mxu0
      %5754 = vmatprep.mubr.f32.mxu0 0.0
      %5755 = vmatmul.mubr.f32.gmra.mrb[0].mxu0 %v5523
      %v5756 = vpop.f32.mrb[0].mxu0
      %v5757 = vadd.f32 0.0, %v5756
      %v5758 = vpop.f32.mrb[0].mxu0
      %5759 = vmatprep.mubr.f32.mxu0 0.0
      %5760 = vmatmul.mubr.f32.gmra.mrb[0].mxu0 %v5526
      %v5761 = vpop.f32.mrb[0].mxu0
      %v5762 = vadd.f32 0.0, %v5761
      %v5763 = vpop.f32.mrb[0].mxu0
      %5764 = vdwg.mxu0
      %v5772 = vrot.slane %v5732, 2
      %v5773 = vrot.slane %v5737, 2
      %v5774 = vsel %vm2005, %v5772, %v5773
      %v5775 = vrot.slane %v5742, 2
      %v5776 = vsel %vm2005, %v5773, %v5775
      %v5777 = vrot.slane %v5747, 2
      %v5778 = vsel %vm2005, %v5775, %v5777
      %v5779 = vrot.slane %v5752, 2
      %v5780 = vsel %vm2005, %v5777, %v5779
      %v5781 = vrot.slane %v5757, 2
      %v5782 = vsel %vm2005, %v5779, %v5781
      %v5783 = vrot.slane %v5762, 2
      %v5784 = vsel %vm2005, %v5781, %v5783
      %v5793 = vsel %vm2005, %v5783, %v5772
      %5794 = vmatprep.subr.mxu0 0.0
      %5795 = vmatpush1.msra.mxu0 %v5492
      %5796 = vmatprep.subr.mxu0 0.0
      %5797 = vmatpush1.msra.mxu0 %v5493
      %5798 = vmatprep.subr.mxu0 0.0
      %5799 = vmatpush1.msra.mxu0 %v5494
      %5800 = vmatprep.subr.mxu0 0.0
      %5801 = vmatpush1.msra.mxu0 %v5495
      %5802 = vmatprep.subr.mxu0 0.0
      %5803 = vmatpush1.msra.mxu0 %v5496
      %5804 = vmatprep.subr.mxu0 0.0
      %5805 = vmatpush1.msra.mxu0 %v5497
      %5806 = vmatprep.subr.mxu0 0.0
      %5807 = vmatpush1.msra.mxu0 %v5498
      %5808 = vmatprep.subr.mxu0 0.0
      %5809 = vmatpush1.msra.mxu0 0.0
      %5810 = vmatprep.subr.mxu0 0.0
      %5811 = vmatpush1.msra.mxu0 0.0
      %5812 = vmatprep.subr.mxu0 0.0
      %5813 = vmatpush1.msra.mxu0 0.0
      %5814 = vmatprep.subr.mxu0 0.0
      %5815 = vmatpush1.msra.mxu0 0.0
      %5816 = vmatprep.subr.mxu0 0.0
      %5817 = vmatpush1.msra.mxu0 0.0
      %5818 = vmatprep.subr.mxu0 0.0
      %5819 = vmatpush1.msra.mxu0 0.0
      %5820 = vmatprep.subr.mxu0 0.0
      %5821 = vmatpush1.msra.mxu0 0.0
      %5822 = vmatprep.subr.mxu0 0.0
      %5823 = vmatpush1.msra.mxu0 0.0
      %5824 = vmatprep.subr.mxu0 0.0
      %5825 = vmatpush1.msra.mxu0 0.0
      %5826 = vmatprep.subr.mxu0 0.0
      %5827 = vmatpush1.msra.mxu0 0.0
      %5828 = vmatprep.subr.mxu0 0.0
      %5829 = vmatpush1.msra.mxu0 0.0
      %5830 = vmatprep.subr.mxu0 0.0
      %5831 = vmatpush1.msra.mxu0 0.0
      %5832 = vmatprep.subr.mxu0 0.0
      %5833 = vmatpush1.msra.mxu0 0.0
      %5834 = vmatprep.subr.mxu0 0.0
      %5835 = vmatpush1.msra.mxu0 0.0
      %5836 = vmatprep.subr.mxu0 0.0
      %5837 = vmatpush1.msra.mxu0 0.0
      %5838 = vmatprep.subr.mxu0 0.0
      %5839 = vmatpush1.msra.mxu0 0.0
      %5840 = vmatprep.subr.mxu0 0.0
      %5841 = vmatpush1.msra.mxu0 0.0
      %5842 = vmatprep.subr.mxu0 0.0
      %5843 = vmatpush1.msra.mxu0 0.0
      %5844 = vmatprep.subr.mxu0 0.0
      %5845 = vmatpush1.msra.mxu0 0.0
      %5846 = vmatprep.subr.mxu0 0.0
      %5847 = vmatpush1.msra.mxu0 0.0
      %5848 = vmatprep.subr.mxu0 0.0
      %5849 = vmatpush1.msra.mxu0 0.0
      %5850 = vmatprep.subr.mxu0 0.0
      %5851 = vmatpush1.msra.mxu0 0.0
      %5852 = vmatprep.subr.mxu0 0.0
      %5853 = vmatpush1.msra.mxu0 0.0
      %5854 = vmatprep.subr.mxu0 0.0
      %5855 = vmatpush1.msra.mxu0 0.0
      %5856 = vmatprep.subr.mxu0 0.0
      %5857 = vmatpush1.msra.mxu0 0.0
      %5858 = vmatprep.mubr.f32.mxu0 0.0
      %5859 = vmatmul.mubr.f32.gmra.mrb[0].mxu0 %v5508
      %v5860 = vpop.f32.mrb[0].mxu0
      %v5861 = vadd.f32 %v5637, %v5860
      %v5862 = vpop.f32.mrb[0].mxu0
      %5863 = vmatprep.mubr.f32.mxu0 0.0
      %5864 = vmatmul.mubr.f32.gmra.mrb[0].mxu0 %v5511
      %v5865 = vpop.f32.mrb[0].mxu0
      %v5866 = vadd.f32 %v5639, %v5865
      %v5867 = vpop.f32.mrb[0].mxu0
      %5868 = vmatprep.mubr.f32.mxu0 0.0
      %5869 = vmatmul.mubr.f32.gmra.mrb[0].mxu0 %v5514
      %v5870 = vpop.f32.mrb[0].mxu0
      %v5871 = vadd.f32 %v5641, %v5870
      %v5872 = vpop.f32.mrb[0].mxu0
      %5873 = vmatprep.mubr.f32.mxu0 0.0
      %5874 = vmatmul.mubr.f32.gmra.mrb[0].mxu0 %v5517
      %v5875 = vpop.f32.mrb[0].mxu0
      %v5876 = vadd.f32 %v5643, %v5875
      %v5877 = vpop.f32.mrb[0].mxu0
      %5878 = vmatprep.mubr.f32.mxu0 0.0
      %5879 = vmatmul.mubr.f32.gmra.mrb[0].mxu0 %v5520
      %v5880 = vpop.f32.mrb[0].mxu0
      %v5881 = vadd.f32 %v5645, %v5880
      %v5882 = vpop.f32.mrb[0].mxu0
      %5883 = vmatprep.mubr.f32.mxu0 0.0
      %5884 = vmatmul.mubr.f32.gmra.mrb[0].mxu0 %v5523
      %v5885 = vpop.f32.mrb[0].mxu0
      %v5886 = vadd.f32 %v5647, %v5885
      %v5887 = vpop.f32.mrb[0].mxu0
      %5888 = vmatprep.mubr.f32.mxu0 0.0
      %5889 = vmatmul.mubr.f32.gmra.mrb[0].mxu0 %v5526
      %v5890 = vpop.f32.mrb[0].mxu0
      %v5891 = vadd.f32 %v5656, %v5890
      %v5892 = vpop.f32.mrb[0].mxu0
      %5893 = vdwg.mxu0
      %v5894 = vadd.f32 %v5861, %v5774
      %v5895 = vadd.f32 %v5866, %v5776
      %v5896 = vadd.f32 %v5871, %v5778
      %v5897 = vadd.f32 %v5876, %v5780
      %v5898 = vadd.f32 %v5881, %v5782
      %v5899 = vadd.f32 %v5886, %v5784
      %v5900 = vadd.f32 %v5891, %v5793
      %v5901 = vld [vmem:[%s31] sm:$0x1]
      %v5903 = vlaneseq
      %v5904 = vshrl.u32 %v5903, 7
      %v5905 = vsub.s32 0, %v5904
      %v5906 = vrot.slane %v5901, %v5905
      %v5908 = vadd.f32 %v5894, %v5906
      %v5909 = vadd.f32 %v5895, %v5906
      %v5910 = vadd.f32 %v5896, %v5906
      %v5911 = vadd.f32 %v5897, %v5906
      %v5912 = vadd.f32 %v5898, %v5906
      %v5913 = vadd.f32 %v5899, %v5906
      %v5914 = vadd.f32 %v5900, %v5906
      %v5915 = vmax.f32 %v5908, 0.0
      %v5916 = vmax.f32 %v5909, 0.0
      %v5917 = vmax.f32 %v5910, 0.0
      %v5918 = vmax.f32 %v5911, 0.0
      %v5919 = vmax.f32 %v5912, 0.0
      %v5920 = vmax.f32 %v5913, 0.0
      %v5921 = vmax.f32 %v5914, 0.0
      %v5929 = vrot.slane %v5915, 1
      %v5930 = vrot.slane %v5916, 1
      %v5931 = vsel %vm1454, %v5929, %v5930
      %v5932 = vrot.slane %v5917, 1
      %v5933 = vsel %vm1454, %v5930, %v5932
      %v5934 = vrot.slane %v5918, 1
      %v5935 = vsel %vm1454, %v5932, %v5934
      %v5936 = vrot.slane %v5919, 1
      %v5937 = vsel %vm1454, %v5934, %v5936
      %v5938 = vrot.slane %v5920, 1
      %v5939 = vsel %vm1454, %v5936, %v5938
      %v5940 = vrot.slane %v5921, 1
      %v5941 = vsel %vm1454, %v5938, %v5940
      %v5950 = vsel %vm1454, %v5940, %v5929
      %v5951 = vmax.f32 %v5915, %v5931
      %v5952 = vmax.f32 %v5916, %v5933
      %v5953 = vmax.f32 %v5917, %v5935
      %v5954 = vmax.f32 %v5918, %v5937
      %v5955 = vmax.f32 %v5919, %v5939
      %v5956 = vmax.f32 %v5920, %v5941
      %v5957 = vmax.f32 %v5921, %v5950
      %v5958 = vld [vmem:[%s33] sm:$0xff]
      %v5959 = vld [vmem:[%s33 + $0x8] sm:$0xff]
      %v5961 = vsel %vm3991, %v5958, 0
      %v5964 = vsel %vm3991, %v5959, 0
      %5966 = vmatprep.subr.mxu0 0.0
      %5967 = vmatpush1.msra.mxu0 %v5951
      %5968 = vmatprep.subr.mxu0 0.0
      %5969 = vmatpush1.msra.mxu0 %v5952
      %5970 = vmatprep.subr.mxu0 0.0
      %5971 = vmatpush1.msra.mxu0 %v5953
      %5972 = vmatprep.subr.mxu0 0.0
      %5973 = vmatpush1.msra.mxu0 %v5954
      %5974 = vmatprep.subr.mxu0 0.0
      %5975 = vmatpush1.msra.mxu0 %v5955
      %5976 = vmatprep.subr.mxu0 0.0
      %5977 = vmatpush1.msra.mxu0 %v5956
      %5978 = vmatprep.subr.mxu0 0.0
      %5979 = vmatpush1.msra.mxu0 %v5957
      %5980 = vmatprep.subr.mxu0 0.0
      %5981 = vmatpush1.msra.mxu0 0.0
      %5982 = vmatprep.subr.mxu0 0.0
      %5983 = vmatpush1.msra.mxu0 0.0
      %5984 = vmatprep.subr.mxu0 0.0
      %5985 = vmatpush1.msra.mxu0 0.0
      %5986 = vmatprep.subr.mxu0 0.0
      %5987 = vmatpush1.msra.mxu0 0.0
      %5988 = vmatprep.subr.mxu0 0.0
      %5989 = vmatpush1.msra.mxu0 0.0
      %5990 = vmatprep.subr.mxu0 0.0
      %5991 = vmatpush1.msra.mxu0 0.0
      %5992 = vmatprep.subr.mxu0 0.0
      %5993 = vmatpush1.msra.mxu0 0.0
      %5994 = vmatprep.subr.mxu0 0.0
      %5995 = vmatpush1.msra.mxu0 0.0
      %5996 = vmatprep.subr.mxu0 0.0
      %5997 = vmatpush1.msra.mxu0 0.0
      %5998 = vmatprep.subr.mxu0 0.0
      %5999 = vmatpush1.msra.mxu0 0.0
      %6000 = vmatprep.subr.mxu0 0.0
      %6001 = vmatpush1.msra.mxu0 0.0
      %6002 = vmatprep.subr.mxu0 0.0
      %6003 = vmatpush1.msra.mxu0 0.0
      %6004 = vmatprep.subr.mxu0 0.0
      %6005 = vmatpush1.msra.mxu0 0.0
      %6006 = vmatprep.subr.mxu0 0.0
      %6007 = vmatpush1.msra.mxu0 0.0
      %6008 = vmatprep.subr.mxu0 0.0
      %6009 = vmatpush1.msra.mxu0 0.0
      %6010 = vmatprep.subr.mxu0 0.0
      %6011 = vmatpush1.msra.mxu0 0.0
      %6012 = vmatprep.subr.mxu0 0.0
      %6013 = vmatpush1.msra.mxu0 0.0
      %6014 = vmatprep.subr.mxu0 0.0
      %6015 = vmatpush1.msra.mxu0 0.0
      %6016 = vmatprep.subr.mxu0 0.0
      %6017 = vmatpush1.msra.mxu0 0.0
      %6018 = vmatprep.subr.mxu0 0.0
      %6019 = vmatpush1.msra.mxu0 0.0
      %6020 = vmatprep.subr.mxu0 0.0
      %6021 = vmatpush1.msra.mxu0 0.0
      %6022 = vmatprep.subr.mxu0 0.0
      %6023 = vmatpush1.msra.mxu0 0.0
      %6024 = vmatprep.subr.mxu0 0.0
      %6025 = vmatpush1.msra.mxu0 0.0
      %6026 = vmatprep.subr.mxu0 0.0
      %6027 = vmatpush1.msra.mxu0 0.0
      %6028 = vmatprep.subr.mxu0 0.0
      %6029 = vmatpush1.msra.mxu0 0.0
      %6030 = vmatprep.mubr.f32.mxu0 0.0
      %6031 = vmatmul.mubr.f32.gmra.mrb[0].mxu0 %v5961
      %v6032 = vpop.f32.mrb[0].mxu0
      %v6033 = vadd.f32 0.0, %v6032
      %v6034 = vpop.f32.mrb[0].mxu0
      %6035 = vmatprep.mubr.f32.mxu0 0.0
      %6036 = vmatmul.mubr.f32.gmra.mrb[0].mxu0 %v5964
      %v6037 = vpop.f32.mrb[0].mxu0
      %v6038 = vadd.f32 0.0, %v6037
      %v6039 = vpop.f32.mrb[0].mxu0
      %6040 = vdwg.mxu0
      %6043 = vrot.lane.b32.xlu0 %v6033, 120
      %v6044 = vpop.permute.xlu0 %6043
      %6045 = vrot.lane.b32.xlu0 %v6038, 120
      %v6046 = vpop.permute.xlu0 %6045
      %6049 = vrot.lane.b32.xlu0 %v6033, 32
      %v6050 = vpop.permute.xlu0 %6049
      %6051 = vrot.lane.b32.xlu0 %v6038, 32
      %v6052 = vpop.permute.xlu0 %6051
      %v6055 = vsel %vm4540, %v6044, %v6050
      %v6056 = vsel %vm4540, %v6046, %v6052
      %v6057 = vmax.f32 %v6033, %v6055
      %v6058 = vmax.f32 %v6038, %v6056
      %v6059 = vld [vmem:[%s35] sm:$0xff]
      %v6060 = vld [vmem:[%s35 + $0x8] sm:$0xff]
      %v6061 = vld [vmem:[%s35 + $0x10] sm:$0xff]
      %v6062 = vld [vmem:[%s35 + $0x18] sm:$0xff]
      %v6063 = vld [vmem:[%s35 + $0x20] sm:$0xff]
      %v6065 = vsel %vm4550, %v6057, 0
      %v6068 = vsel %vm4550, %v6058, 0
      %6070 = vmatprep.subr.mxu0 0.0
      %6071 = vmatpush1.msra.mxu0 %v6059
      %6072 = vmatprep.subr.mxu0 0.0
      %6073 = vmatpush1.msra.mxu0 %v6060
      %6074 = vmatprep.subr.mxu0 0.0
      %6075 = vmatpush1.msra.mxu0 %v6061
      %6076 = vmatprep.subr.mxu0 0.0
      %6077 = vmatpush1.msra.mxu0 %v6062
      %6078 = vmatprep.subr.mxu0 0.0
      %6079 = vmatpush1.msra.mxu0 %v6063
      %6080 = vmatprep.subr.mxu0 0.0
      %6081 = vmatpush1.msra.mxu0 0.0
      %6082 = vmatprep.subr.mxu0 0.0
      %6083 = vmatpush1.msra.mxu0 0.0
      %6084 = vmatprep.subr.mxu0 0.0
      %6085 = vmatpush1.msra.mxu0 0.0
      %6086 = vmatprep.subr.mxu0 0.0
      %6087 = vmatpush1.msra.mxu0 0.0
      %6088 = vmatprep.subr.mxu0 0.0
      %6089 = vmatpush1.msra.mxu0 0.0
      %6090 = vmatprep.subr.mxu0 0.0
      %6091 = vmatpush1.msra.mxu0 0.0
      %6092 = vmatprep.subr.mxu0 0.0
      %6093 = vmatpush1.msra.mxu0 0.0
      %6094 = vmatprep.subr.mxu0 0.0
      %6095 = vmatpush1.msra.mxu0 0.0
      %6096 = vmatprep.subr.mxu0 0.0
      %6097 = vmatpush1.msra.mxu0 0.0
      %6098 = vmatprep.subr.mxu0 0.0
      %6099 = vmatpush1.msra.mxu0 0.0
      %6100 = vmatprep.subr.mxu0 0.0
      %6101 = vmatpush1.msra.mxu0 0.0
      %6102 = vmatprep.subr.mxu0 0.0
      %6103 = vmatpush1.msra.mxu0 0.0
      %6104 = vmatprep.subr.mxu0 0.0
      %6105 = vmatpush1.msra.mxu0 0.0
      %6106 = vmatprep.subr.mxu0 0.0
      %6107 = vmatpush1.msra.mxu0 0.0
      %6108 = vmatprep.subr.mxu0 0.0
      %6109 = vmatpush1.msra.mxu0 0.0
      %6110 = vmatprep.subr.mxu0 0.0
      %6111 = vmatpush1.msra.mxu0 0.0
      %6112 = vmatprep.subr.mxu0 0.0
      %6113 = vmatpush1.msra.mxu0 0.0
      %6114 = vmatprep.subr.mxu0 0.0
      %6115 = vmatpush1.msra.mxu0 0.0
      %6116 = vmatprep.subr.mxu0 0.0
      %6117 = vmatpush1.msra.mxu0 0.0
      %6118 = vmatprep.subr.mxu0 0.0
      %6119 = vmatpush1.msra.mxu0 0.0
      %6120 = vmatprep.subr.mxu0 0.0
      %6121 = vmatpush1.msra.mxu0 0.0
      %6122 = vmatprep.subr.mxu0 0.0
      %6123 = vmatpush1.msra.mxu0 0.0
      %6124 = vmatprep.subr.mxu0 0.0
      %6125 = vmatpush1.msra.mxu0 0.0
      %6126 = vmatprep.subr.mxu0 0.0
      %6127 = vmatpush1.msra.mxu0 0.0
      %6128 = vmatprep.subr.mxu0 0.0
      %6129 = vmatpush1.msra.mxu0 0.0
      %6130 = vmatprep.subr.mxu0 0.0
      %6131 = vmatpush1.msra.mxu0 0.0
      %6132 = vmatprep.subr.mxu0 0.0
      %6133 = vmatpush1.msra.mxu0 0.0
      %6134 = vmatprep.mubr.f32.mxu0 0.0
      %6135 = vmatmul.mubr.f32.gmra.mrb[0].mxu0 %v6065
      %v6136 = vpop.f32.mrb[0].mxu0
      %v6137 = vadd.f32 0.0, %v6136
      %v6138 = vpop.f32.mrb[0].mxu0
      %6139 = vmatprep.mubr.f32.mxu0 0.0
      %6140 = vmatmul.mubr.f32.gmra.mrb[0].mxu0 %v6068
      %v6141 = vpop.f32.mrb[0].mxu0
      %v6142 = vadd.f32 0.0, %v6141
      %v6143 = vpop.f32.mrb[0].mxu0
      %6144 = vdwg.mxu0
      %v6145 = vld [vmem:[%s37] sm:$0xff]
      %v6146 = vld [vmem:[%s37 + $0x8] sm:$0xff]
      %s6147 = scalar_lea.vmem %s37, 16
      %v6148 = vld [vmem:[%s6147] sm:$0xff]
      %v6149 = vld [vmem:[%s6147 + $0x8] sm:$0xff]
      %v6151 = vsel %vm4637, %v6137, 0
      %v6154 = vsel %vm4637, %v6142, 0
      %6156 = vmatprep.subr.mxu0 0.0
      %6157 = vmatpush1.msra.mxu0 %v6148
      %6158 = vmatprep.subr.mxu0 0.0
      %6159 = vmatpush1.msra.mxu0 %v6149
      %6160 = vmatprep.subr.mxu0 0.0
      %6161 = vmatpush1.msra.mxu0 0.0
      %6162 = vmatprep.subr.mxu0 0.0
      %6163 = vmatpush1.msra.mxu0 0.0
      %6164 = vmatprep.subr.mxu0 0.0
      %6165 = vmatpush1.msra.mxu0 0.0
      %6166 = vmatprep.subr.mxu0 0.0
      %6167 = vmatpush1.msra.mxu0 0.0
      %6168 = vmatprep.subr.mxu0 0.0
      %6169 = vmatpush1.msra.mxu0 0.0
      %6170 = vmatprep.subr.mxu0 0.0
      %6171 = vmatpush1.msra.mxu0 0.0
      %6172 = vmatprep.subr.mxu0 0.0
      %6173 = vmatpush1.msra.mxu0 0.0
      %6174 = vmatprep.subr.mxu0 0.0
      %6175 = vmatpush1.msra.mxu0 0.0
      %6176 = vmatprep.subr.mxu0 0.0
      %6177 = vmatpush1.msra.mxu0 0.0
      %6178 = vmatprep.subr.mxu0 0.0
      %6179 = vmatpush1.msra.mxu0 0.0
      %6180 = vmatprep.subr.mxu0 0.0
      %6181 = vmatpush1.msra.mxu0 0.0
      %6182 = vmatprep.subr.mxu0 0.0
      %6183 = vmatpush1.msra.mxu0 0.0
      %6184 = vmatprep.subr.mxu0 0.0
      %6185 = vmatpush1.msra.mxu0 0.0
      %6186 = vmatprep.subr.mxu0 0.0
      %6187 = vmatpush1.msra.mxu0 0.0
      %6188 = vmatprep.subr.mxu0 0.0
      %6189 = vmatpush1.msra.mxu0 0.0
      %6190 = vmatprep.subr.mxu0 0.0
      %6191 = vmatpush1.msra.mxu0 0.0
      %6192 = vmatprep.subr.mxu0 0.0
      %6193 = vmatpush1.msra.mxu0 0.0
      %6194 = vmatprep.subr.mxu0 0.0
      %6195 = vmatpush1.msra.mxu0 0.0
      %6196 = vmatprep.subr.mxu0 0.0
      %6197 = vmatpush1.msra.mxu0 0.0
      %6198 = vmatprep.subr.mxu0 0.0
      %6199 = vmatpush1.msra.mxu0 0.0
      %6200 = vmatprep.subr.mxu0 0.0
      %6201 = vmatpush1.msra.mxu0 0.0
      %6202 = vmatprep.subr.mxu0 0.0
      %6203 = vmatpush1.msra.mxu0 0.0
      %6204 = vmatprep.subr.mxu0 0.0
      %6205 = vmatpush1.msra.mxu0 0.0
      %6206 = vmatprep.subr.mxu0 0.0
      %6207 = vmatpush1.msra.mxu0 0.0
      %6208 = vmatprep.subr.mxu0 0.0
      %6209 = vmatpush1.msra.mxu0 0.0
      %6210 = vmatprep.subr.mxu0 0.0
      %6211 = vmatpush1.msra.mxu0 0.0
      %6212 = vmatprep.subr.mxu0 0.0
      %6213 = vmatpush1.msra.mxu0 0.0
      %6214 = vmatprep.subr.mxu0 0.0
      %6215 = vmatpush1.msra.mxu0 0.0
      %6216 = vmatprep.subr.mxu0 0.0
      %6217 = vmatpush1.msra.mxu0 0.0
      %6218 = vmatprep.subr.mxu0 0.0
      %6219 = vmatpush1.msra.mxu0 0.0
      %6220 = vmatprep.mubr.f32.mxu0 0.0
      %6221 = vmatmul.mubr.f32.gmra.mrb[0].mxu0 %v6151
      %v6222 = vpop.f32.mrb[0].mxu0
      %v6223 = vadd.f32 0.0, %v6222
      %v6224 = vpop.f32.mrb[0].mxu0
      %6225 = vmatprep.mubr.f32.mxu0 0.0
      %6226 = vmatmul.mubr.f32.gmra.mrb[0].mxu0 %v6154
      %v6227 = vpop.f32.mrb[0].mxu0
      %v6228 = vadd.f32 0.0, %v6227
      %v6229 = vpop.f32.mrb[0].mxu0
      %6230 = vdwg.mxu0
      %v6233 = vrot.slane %v6223, 1
      %v6234 = vrot.slane %v6228, 1
      %v6235 = vsel %vm1454, %v6233, %v6234
      %v6239 = vsel %vm1454, %v6234, %v6233
      %6240 = vmatprep.subr.mxu0 0.0
      %6241 = vmatpush1.msra.mxu0 %v6145
      %6242 = vmatprep.subr.mxu0 0.0
      %6243 = vmatpush1.msra.mxu0 %v6146
      %6244 = vmatprep.subr.mxu0 0.0
      %6245 = vmatpush1.msra.mxu0 0.0
      %6246 = vmatprep.subr.mxu0 0.0
      %6247 = vmatpush1.msra.mxu0 0.0
      %6248 = vmatprep.subr.mxu0 0.0
      %6249 = vmatpush1.msra.mxu0 0.0
      %6250 = vmatprep.subr.mxu0 0.0
      %6251 = vmatpush1.msra.mxu0 0.0
      %6252 = vmatprep.subr.mxu0 0.0
      %6253 = vmatpush1.msra.mxu0 0.0
      %6254 = vmatprep.subr.mxu0 0.0
      %6255 = vmatpush1.msra.mxu0 0.0
      %6256 = vmatprep.subr.mxu0 0.0
      %6257 = vmatpush1.msra.mxu0 0.0
      %6258 = vmatprep.subr.mxu0 0.0
      %6259 = vmatpush1.msra.mxu0 0.0
      %6260 = vmatprep.subr.mxu0 0.0
      %6261 = vmatpush1.msra.mxu0 0.0
      %6262 = vmatprep.subr.mxu0 0.0
      %6263 = vmatpush1.msra.mxu0 0.0
      %6264 = vmatprep.subr.mxu0 0.0
      %6265 = vmatpush1.msra.mxu0 0.0
      %6266 = vmatprep.subr.mxu0 0.0
      %6267 = vmatpush1.msra.mxu0 0.0
      %6268 = vmatprep.subr.mxu0 0.0
      %6269 = vmatpush1.msra.mxu0 0.0
      %6270 = vmatprep.subr.mxu0 0.0
      %6271 = vmatpush1.msra.mxu0 0.0
      %6272 = vmatprep.subr.mxu0 0.0
      %6273 = vmatpush1.msra.mxu0 0.0
      %6274 = vmatprep.subr.mxu0 0.0
      %6275 = vmatpush1.msra.mxu0 0.0
      %6276 = vmatprep.subr.mxu0 0.0
      %6277 = vmatpush1.msra.mxu0 0.0
      %6278 = vmatprep.subr.mxu0 0.0
      %6279 = vmatpush1.msra.mxu0 0.0
      %6280 = vmatprep.subr.mxu0 0.0
      %6281 = vmatpush1.msra.mxu0 0.0
      %6282 = vmatprep.subr.mxu0 0.0
      %6283 = vmatpush1.msra.mxu0 0.0
      %6284 = vmatprep.subr.mxu0 0.0
      %6285 = vmatpush1.msra.mxu0 0.0
      %6286 = vmatprep.subr.mxu0 0.0
      %6287 = vmatpush1.msra.mxu0 0.0
      %6288 = vmatprep.subr.mxu0 0.0
      %6289 = vmatpush1.msra.mxu0 0.0
      %6290 = vmatprep.subr.mxu0 0.0
      %6291 = vmatpush1.msra.mxu0 0.0
      %6292 = vmatprep.subr.mxu0 0.0
      %6293 = vmatpush1.msra.mxu0 0.0
      %6294 = vmatprep.subr.mxu0 0.0
      %6295 = vmatpush1.msra.mxu0 0.0
      %6296 = vmatprep.subr.mxu0 0.0
      %6297 = vmatpush1.msra.mxu0 0.0
      %6298 = vmatprep.subr.mxu0 0.0
      %6299 = vmatpush1.msra.mxu0 0.0
      %6300 = vmatprep.subr.mxu0 0.0
      %6301 = vmatpush1.msra.mxu0 0.0
      %6302 = vmatprep.subr.mxu0 0.0
      %6303 = vmatpush1.msra.mxu0 0.0
      %6304 = vmatprep.mubr.f32.mxu0 0.0
      %6305 = vmatmul.mubr.f32.gmra.mrb[0].mxu0 %v6151
      %v6306 = vpop.f32.mrb[0].mxu0
      %v6307 = vadd.f32 %v6235, %v6306
      %v6308 = vpop.f32.mrb[0].mxu0
      %6309 = vmatprep.mubr.f32.mxu0 0.0
      %6310 = vmatmul.mubr.f32.gmra.mrb[0].mxu0 %v6154
      %v6311 = vpop.f32.mrb[0].mxu0
      %v6312 = vadd.f32 %v6239, %v6311
      %v6313 = vpop.f32.mrb[0].mxu0
      %6314 = vdwg.mxu0
      %v6315 = vld [vmem:[%s39] sm:$0x1]
      %v6317 = vlaneseq
      %v6318 = vshrl.u32 %v6317, 7
      %v6319 = vsub.s32 0, %v6318
      %v6320 = vrot.slane %v6315, %v6319
      %6322 = vmatprep.subr.mxu0 0.0
      %6323 = vmatpush1.msra.mxu0 %v6307
      %6324 = vmatprep.subr.mxu0 0.0
      %6325 = vmatpush1.msra.mxu0 %v6312
      %6326 = vmatprep.subr.mxu0 0.0
      %6327 = vmatpush1.msra.mxu0 0.0
      %6328 = vmatprep.subr.mxu0 0.0
      %6329 = vmatpush1.msra.mxu0 0.0
      %6330 = vmatprep.subr.mxu0 0.0
      %6331 = vmatpush1.msra.mxu0 0.0
      %6332 = vmatprep.subr.mxu0 0.0
      %6333 = vmatpush1.msra.mxu0 0.0
      %6334 = vmatprep.subr.mxu0 0.0
      %6335 = vmatpush1.msra.mxu0 0.0
      %6336 = vmatprep.subr.mxu0 0.0
      %6337 = vmatpush1.msra.mxu0 0.0
      %6338 = vmatprep.subr.mxu0 0.0
      %6339 = vmatpush1.msra.mxu0 0.0
      %6340 = vmatprep.subr.mxu0 0.0
      %6341 = vmatpush1.msra.mxu0 0.0
      %6342 = vmatprep.subr.mxu0 0.0
      %6343 = vmatpush1.msra.mxu0 0.0
      %6344 = vmatprep.subr.mxu0 0.0
      %6345 = vmatpush1.msra.mxu0 0.0
      %6346 = vmatprep.subr.mxu0 0.0
      %6347 = vmatpush1.msra.mxu0 0.0
      %6348 = vmatprep.subr.mxu0 0.0
      %6349 = vmatpush1.msra.mxu0 0.0
      %6350 = vmatprep.subr.mxu0 0.0
      %6351 = vmatpush1.msra.mxu0 0.0
      %6352 = vmatprep.subr.mxu0 0.0
      %6353 = vmatpush1.msra.mxu0 0.0
      %6354 = vmatprep.subr.mxu0 0.0
      %6355 = vmatpush1.msra.mxu0 0.0
      %6356 = vmatprep.subr.mxu0 0.0
      %6357 = vmatpush1.msra.mxu0 0.0
      %6358 = vmatprep.subr.mxu0 0.0
      %6359 = vmatpush1.msra.mxu0 0.0
      %6360 = vmatprep.subr.mxu0 0.0
      %6361 = vmatpush1.msra.mxu0 0.0
      %6362 = vmatprep.subr.mxu0 0.0
      %6363 = vmatpush1.msra.mxu0 0.0
      %6364 = vmatprep.subr.mxu0 0.0
      %6365 = vmatpush1.msra.mxu0 0.0
      %6366 = vmatprep.subr.mxu0 0.0
      %6367 = vmatpush1.msra.mxu0 0.0
      %6368 = vmatprep.subr.mxu0 0.0
      %6369 = vmatpush1.msra.mxu0 0.0
      %6370 = vmatprep.subr.mxu0 0.0
      %6371 = vmatpush1.msra.mxu0 0.0
      %6372 = vmatprep.subr.mxu0 0.0
      %6373 = vmatpush1.msra.mxu0 0.0
      %6374 = vmatprep.subr.mxu0 0.0
      %6375 = vmatpush1.msra.mxu0 0.0
      %6376 = vmatprep.subr.mxu0 0.0
      %6377 = vmatpush1.msra.mxu0 0.0
      %6378 = vmatprep.subr.mxu0 0.0
      %6379 = vmatpush1.msra.mxu0 0.0
      %6380 = vmatprep.subr.mxu0 0.0
      %6381 = vmatpush1.msra.mxu0 0.0
      %6382 = vmatprep.subr.mxu0 0.0
      %6383 = vmatpush1.msra.mxu0 0.0
      %6384 = vmatprep.subr.mxu0 0.0
      %6385 = vmatpush1.msra.mxu0 0.0
      %6386 = vmatprep.mubr.f32.mxu0 0.0
      %6387 = vmatmul.mubr.f32.gmra.mrb[0].mxu0 %v4812
      %v6388 = vpop.f32.mrb[0].mxu0
      %v6389 = vadd.f32 %v6320, %v6388
      %v6390 = vpop.f32.mrb[0].mxu0
      %6391 = vdwg.mxu0
      %v6392 = vmax.f32 %v6389, 0.0
      %v6393 = vld [vmem:[%s41] sm:$0xff]
      %v6394 = vld [vmem:[%s41 + $0x8] sm:$0xff]
      %v6395 = vld [vmem:[%s41 + $0x10] sm:$0xff]
      %v6396 = vld [vmem:[%s41 + $0x18] sm:$0xff]
      %v6397 = vld [vmem:[%s41 + $0x20] sm:$0xff]
      %v6398 = vld [vmem:[%s41 + $0x28] sm:$0xff]
      %v6399 = vld [vmem:[%s41 + $0x30] sm:$0xff]
      %v6401 = vsel %vm3991, %v3943, 0
      %v6404 = vsel %vm3991, %v3948, 0
      %v6407 = vsel %vm3991, %v3953, 0
      %v6410 = vsel %vm3991, %v3958, 0
      %v6413 = vsel %vm3991, %v3963, 0
      %v6416 = vsel %vm3991, %v3968, 0
      %v6419 = vsel %vm3991, %v3973, 0
      %6421 = vmatprep.subr.mxu0 0.0
      %6422 = vmatpush1.msra.mxu0 %v6393
      %6423 = vmatprep.subr.mxu0 0.0
      %6424 = vmatpush1.msra.mxu0 %v6394
      %6425 = vmatprep.subr.mxu0 0.0
      %6426 = vmatpush1.msra.mxu0 %v6395
      %6427 = vmatprep.subr.mxu0 0.0
      %6428 = vmatpush1.msra.mxu0 %v6396
      %6429 = vmatprep.subr.mxu0 0.0
      %6430 = vmatpush1.msra.mxu0 %v6397
      %6431 = vmatprep.subr.mxu0 0.0
      %6432 = vmatpush1.msra.mxu0 %v6398
      %6433 = vmatprep.subr.mxu0 0.0
      %6434 = vmatpush1.msra.mxu0 %v6399
      %6435 = vmatprep.subr.mxu0 0.0
      %6436 = vmatpush1.msra.mxu0 0.0
      %6437 = vmatprep.subr.mxu0 0.0
      %6438 = vmatpush1.msra.mxu0 0.0
      %6439 = vmatprep.subr.mxu0 0.0
      %6440 = vmatpush1.msra.mxu0 0.0
      %6441 = vmatprep.subr.mxu0 0.0
      %6442 = vmatpush1.msra.mxu0 0.0
      %6443 = vmatprep.subr.mxu0 0.0
      %6444 = vmatpush1.msra.mxu0 0.0
      %6445 = vmatprep.subr.mxu0 0.0
      %6446 = vmatpush1.msra.mxu0 0.0
      %6447 = vmatprep.subr.mxu0 0.0
      %6448 = vmatpush1.msra.mxu0 0.0
      %6449 = vmatprep.subr.mxu0 0.0
      %6450 = vmatpush1.msra.mxu0 0.0
      %6451 = vmatprep.subr.mxu0 0.0
      %6452 = vmatpush1.msra.mxu0 0.0
      %6453 = vmatprep.subr.mxu0 0.0
      %6454 = vmatpush1.msra.mxu0 0.0
      %6455 = vmatprep.subr.mxu0 0.0
      %6456 = vmatpush1.msra.mxu0 0.0
      %6457 = vmatprep.subr.mxu0 0.0
      %6458 = vmatpush1.msra.mxu0 0.0
      %6459 = vmatprep.subr.mxu0 0.0
      %6460 = vmatpush1.msra.mxu0 0.0
      %6461 = vmatprep.subr.mxu0 0.0
      %6462 = vmatpush1.msra.mxu0 0.0
      %6463 = vmatprep.subr.mxu0 0.0
      %6464 = vmatpush1.msra.mxu0 0.0
      %6465 = vmatprep.subr.mxu0 0.0
      %6466 = vmatpush1.msra.mxu0 0.0
      %6467 = vmatprep.subr.mxu0 0.0
      %6468 = vmatpush1.msra.mxu0 0.0
      %6469 = vmatprep.subr.mxu0 0.0
      %6470 = vmatpush1.msra.mxu0 0.0
      %6471 = vmatprep.subr.mxu0 0.0
      %6472 = vmatpush1.msra.mxu0 0.0
      %6473 = vmatprep.subr.mxu0 0.0
      %6474 = vmatpush1.msra.mxu0 0.0
      %6475 = vmatprep.subr.mxu0 0.0
      %6476 = vmatpush1.msra.mxu0 0.0
      %6477 = vmatprep.subr.mxu0 0.0
      %6478 = vmatpush1.msra.mxu0 0.0
      %6479 = vmatprep.subr.mxu0 0.0
      %6480 = vmatpush1.msra.mxu0 0.0
      %6481 = vmatprep.subr.mxu0 0.0
      %6482 = vmatpush1.msra.mxu0 0.0
      %6483 = vmatprep.subr.mxu0 0.0
      %6484 = vmatpush1.msra.mxu0 0.0
      %6485 = vmatprep.mubr.f32.mxu0 0.0
      %6486 = vmatmul.mubr.f32.gmra.mrb[0].mxu0 %v6401
      %v6487 = vpop.f32.mrb[0].mxu0
      %v6488 = vadd.f32 0.0, %v6487
      %v6489 = vpop.f32.mrb[0].mxu0
      %6490 = vmatprep.mubr.f32.mxu0 0.0
      %6491 = vmatmul.mubr.f32.gmra.mrb[0].mxu0 %v6404
      %v6492 = vpop.f32.mrb[0].mxu0
      %v6493 = vadd.f32 0.0, %v6492
      %v6494 = vpop.f32.mrb[0].mxu0
      %6495 = vmatprep.mubr.f32.mxu0 0.0
      %6496 = vmatmul.mubr.f32.gmra.mrb[0].mxu0 %v6407
      %v6497 = vpop.f32.mrb[0].mxu0
      %v6498 = vadd.f32 0.0, %v6497
      %v6499 = vpop.f32.mrb[0].mxu0
      %6500 = vmatprep.mubr.f32.mxu0 0.0
      %6501 = vmatmul.mubr.f32.gmra.mrb[0].mxu0 %v6410
      %v6502 = vpop.f32.mrb[0].mxu0
      %v6503 = vadd.f32 0.0, %v6502
      %v6504 = vpop.f32.mrb[0].mxu0
      %6505 = vmatprep.mubr.f32.mxu0 0.0
      %6506 = vmatmul.mubr.f32.gmra.mrb[0].mxu0 %v6413
      %v6507 = vpop.f32.mrb[0].mxu0
      %v6508 = vadd.f32 0.0, %v6507
      %v6509 = vpop.f32.mrb[0].mxu0
      %6510 = vmatprep.mubr.f32.mxu0 0.0
      %6511 = vmatmul.mubr.f32.gmra.mrb[0].mxu0 %v6416
      %v6512 = vpop.f32.mrb[0].mxu0
      %v6513 = vadd.f32 0.0, %v6512
      %v6514 = vpop.f32.mrb[0].mxu0
      %6515 = vmatprep.mubr.f32.mxu0 0.0
      %6516 = vmatmul.mubr.f32.gmra.mrb[0].mxu0 %v6419
      %v6517 = vpop.f32.mrb[0].mxu0
      %v6518 = vadd.f32 0.0, %v6517
      %v6519 = vpop.f32.mrb[0].mxu0
      %6520 = vdwg.mxu0
      %v6522 = vrot.slane %v6518, 7
      %v6530 = vrot.slane %v6488, 7
      %v6531 = vrot.slane %v6493, 7
      %v6532 = vsel %vm5022, %v6530, %v6531
      %v6533 = vrot.slane %v6498, 7
      %v6534 = vsel %vm5022, %v6531, %v6533
      %v6535 = vrot.slane %v6503, 7
      %v6536 = vsel %vm5022, %v6533, %v6535
      %v6537 = vrot.slane %v6508, 7
      %v6538 = vsel %vm5022, %v6535, %v6537
      %v6539 = vrot.slane %v6513, 7
      %v6540 = vsel %vm5022, %v6537, %v6539
      %v6541 = vsel %vm5022, %v6539, %v6522
      %v6549 = vsel %vm5022, %v6522, %v6530
      %s6550 = scalar_lea.vmem %s41, 56
      %v6551 = vld [vmem:[%s6550] sm:$0xff]
      %v6552 = vld [vmem:[%s6550 + $0x8] sm:$0xff]
      %v6553 = vld [vmem:[%s6550 + $0x10] sm:$0xff]
      %v6554 = vld [vmem:[%s6550 + $0x18] sm:$0xff]
      %v6555 = vld [vmem:[%s6550 + $0x20] sm:$0xff]
      %v6556 = vld [vmem:[%s6550 + $0x28] sm:$0xff]
      %v6557 = vld [vmem:[%s6550 + $0x30] sm:$0xff]
      %6558 = vmatprep.subr.mxu0 0.0
      %6559 = vmatpush1.msra.mxu0 %v6551
      %6560 = vmatprep.subr.mxu0 0.0
      %6561 = vmatpush1.msra.mxu0 %v6552
      %6562 = vmatprep.subr.mxu0 0.0
      %6563 = vmatpush1.msra.mxu0 %v6553
      %6564 = vmatprep.subr.mxu0 0.0
      %6565 = vmatpush1.msra.mxu0 %v6554
      %6566 = vmatprep.subr.mxu0 0.0
      %6567 = vmatpush1.msra.mxu0 %v6555
      %6568 = vmatprep.subr.mxu0 0.0
      %6569 = vmatpush1.msra.mxu0 %v6556
      %6570 = vmatprep.subr.mxu0 0.0
      %6571 = vmatpush1.msra.mxu0 %v6557
      %6572 = vmatprep.subr.mxu0 0.0
      %6573 = vmatpush1.msra.mxu0 0.0
      %6574 = vmatprep.subr.mxu0 0.0
      %6575 = vmatpush1.msra.mxu0 0.0
      %6576 = vmatprep.subr.mxu0 0.0
      %6577 = vmatpush1.msra.mxu0 0.0
      %6578 = vmatprep.subr.mxu0 0.0
      %6579 = vmatpush1.msra.mxu0 0.0
      %6580 = vmatprep.subr.mxu0 0.0
      %6581 = vmatpush1.msra.mxu0 0.0
      %6582 = vmatprep.subr.mxu0 0.0
      %6583 = vmatpush1.msra.mxu0 0.0
      %6584 = vmatprep.subr.mxu0 0.0
      %6585 = vmatpush1.msra.mxu0 0.0
      %6586 = vmatprep.subr.mxu0 0.0
      %6587 = vmatpush1.msra.mxu0 0.0
      %6588 = vmatprep.subr.mxu0 0.0
      %6589 = vmatpush1.msra.mxu0 0.0
      %6590 = vmatprep.subr.mxu0 0.0
      %6591 = vmatpush1.msra.mxu0 0.0
      %6592 = vmatprep.subr.mxu0 0.0
      %6593 = vmatpush1.msra.mxu0 0.0
      %6594 = vmatprep.subr.mxu0 0.0
      %6595 = vmatpush1.msra.mxu0 0.0
      %6596 = vmatprep.subr.mxu0 0.0
      %6597 = vmatpush1.msra.mxu0 0.0
      %6598 = vmatprep.subr.mxu0 0.0
      %6599 = vmatpush1.msra.mxu0 0.0
      %6600 = vmatprep.subr.mxu0 0.0
      %6601 = vmatpush1.msra.mxu0 0.0
      %6602 = vmatprep.subr.mxu0 0.0
      %6603 = vmatpush1.msra.mxu0 0.0
      %6604 = vmatprep.subr.mxu0 0.0
      %6605 = vmatpush1.msra.mxu0 0.0
      %6606 = vmatprep.subr.mxu0 0.0
      %6607 = vmatpush1.msra.mxu0 0.0
      %6608 = vmatprep.subr.mxu0 0.0
      %6609 = vmatpush1.msra.mxu0 0.0
      %6610 = vmatprep.subr.mxu0 0.0
      %6611 = vmatpush1.msra.mxu0 0.0
      %6612 = vmatprep.subr.mxu0 0.0
      %6613 = vmatpush1.msra.mxu0 0.0
      %6614 = vmatprep.subr.mxu0 0.0
      %6615 = vmatpush1.msra.mxu0 0.0
      %6616 = vmatprep.subr.mxu0 0.0
      %6617 = vmatpush1.msra.mxu0 0.0
      %6618 = vmatprep.subr.mxu0 0.0
      %6619 = vmatpush1.msra.mxu0 0.0
      %6620 = vmatprep.subr.mxu0 0.0
      %6621 = vmatpush1.msra.mxu0 0.0
      %6622 = vmatprep.mubr.f32.mxu0 0.0
      %6623 = vmatmul.mubr.f32.gmra.mrb[0].mxu0 %v6401
      %v6624 = vpop.f32.mrb[0].mxu0
      %v6625 = vadd.f32 0.0, %v6624
      %v6626 = vpop.f32.mrb[0].mxu0
      %6627 = vmatprep.mubr.f32.mxu0 0.0
      %6628 = vmatmul.mubr.f32.gmra.mrb[0].mxu0 %v6404
      %v6629 = vpop.f32.mrb[0].mxu0
      %v6630 = vadd.f32 0.0, %v6629
      %v6631 = vpop.f32.mrb[0].mxu0
      %6632 = vmatprep.mubr.f32.mxu0 0.0
      %6633 = vmatmul.mubr.f32.gmra.mrb[0].mxu0 %v6407
      %v6634 = vpop.f32.mrb[0].mxu0
      %v6635 = vadd.f32 0.0, %v6634
      %v6636 = vpop.f32.mrb[0].mxu0
      %6637 = vmatprep.mubr.f32.mxu0 0.0
      %6638 = vmatmul.mubr.f32.gmra.mrb[0].mxu0 %v6410
      %v6639 = vpop.f32.mrb[0].mxu0
      %v6640 = vadd.f32 0.0, %v6639
      %v6641 = vpop.f32.mrb[0].mxu0
      %6642 = vmatprep.mubr.f32.mxu0 0.0
      %6643 = vmatmul.mubr.f32.gmra.mrb[0].mxu0 %v6413
      %v6644 = vpop.f32.mrb[0].mxu0
      %v6645 = vadd.f32 0.0, %v6644
      %v6646 = vpop.f32.mrb[0].mxu0
      %6647 = vmatprep.mubr.f32.mxu0 0.0
      %6648 = vmatmul.mubr.f32.gmra.mrb[0].mxu0 %v6416
      %v6649 = vpop.f32.mrb[0].mxu0
      %v6650 = vadd.f32 0.0, %v6649
      %v6651 = vpop.f32.mrb[0].mxu0
      %6652 = vmatprep.mubr.f32.mxu0 0.0
      %6653 = vmatmul.mubr.f32.gmra.mrb[0].mxu0 %v6419
      %v6654 = vpop.f32.mrb[0].mxu0
      %v6655 = vadd.f32 0.0, %v6654
      %v6656 = vpop.f32.mrb[0].mxu0
      %6657 = vdwg.mxu0
      %s6658 = scalar_lea.vmem %s41, 112
      %v6659 = vld [vmem:[%s6658] sm:$0xff]
      %v6660 = vld [vmem:[%s6658 + $0x8] sm:$0xff]
      %v6661 = vld [vmem:[%s6658 + $0x10] sm:$0xff]
      %v6662 = vld [vmem:[%s6658 + $0x18] sm:$0xff]
      %v6663 = vld [vmem:[%s6658 + $0x20] sm:$0xff]
      %v6664 = vld [vmem:[%s6658 + $0x28] sm:$0xff]
      %v6665 = vld [vmem:[%s6658 + $0x30] sm:$0xff]
      %6666 = vmatprep.subr.mxu0 0.0
      %6667 = vmatpush1.msra.mxu0 %v6659
      %6668 = vmatprep.subr.mxu0 0.0
      %6669 = vmatpush1.msra.mxu0 %v6660
      %6670 = vmatprep.subr.mxu0 0.0
      %6671 = vmatpush1.msra.mxu0 %v6661
      %6672 = vmatprep.subr.mxu0 0.0
      %6673 = vmatpush1.msra.mxu0 %v6662
      %6674 = vmatprep.subr.mxu0 0.0
      %6675 = vmatpush1.msra.mxu0 %v6663
      %6676 = vmatprep.subr.mxu0 0.0
      %6677 = vmatpush1.msra.mxu0 %v6664
      %6678 = vmatprep.subr.mxu0 0.0
      %6679 = vmatpush1.msra.mxu0 %v6665
      %6680 = vmatprep.subr.mxu0 0.0
      %6681 = vmatpush1.msra.mxu0 0.0
      %6682 = vmatprep.subr.mxu0 0.0
      %6683 = vmatpush1.msra.mxu0 0.0
      %6684 = vmatprep.subr.mxu0 0.0
      %6685 = vmatpush1.msra.mxu0 0.0
      %6686 = vmatprep.subr.mxu0 0.0
      %6687 = vmatpush1.msra.mxu0 0.0
      %6688 = vmatprep.subr.mxu0 0.0
      %6689 = vmatpush1.msra.mxu0 0.0
      %6690 = vmatprep.subr.mxu0 0.0
      %6691 = vmatpush1.msra.mxu0 0.0
      %6692 = vmatprep.subr.mxu0 0.0
      %6693 = vmatpush1.msra.mxu0 0.0
      %6694 = vmatprep.subr.mxu0 0.0
      %6695 = vmatpush1.msra.mxu0 0.0
      %6696 = vmatprep.subr.mxu0 0.0
      %6697 = vmatpush1.msra.mxu0 0.0
      %6698 = vmatprep.subr.mxu0 0.0
      %6699 = vmatpush1.msra.mxu0 0.0
      %6700 = vmatprep.subr.mxu0 0.0
      %6701 = vmatpush1.msra.mxu0 0.0
      %6702 = vmatprep.subr.mxu0 0.0
      %6703 = vmatpush1.msra.mxu0 0.0
      %6704 = vmatprep.subr.mxu0 0.0
      %6705 = vmatpush1.msra.mxu0 0.0
      %6706 = vmatprep.subr.mxu0 0.0
      %6707 = vmatpush1.msra.mxu0 0.0
      %6708 = vmatprep.subr.mxu0 0.0
      %6709 = vmatpush1.msra.mxu0 0.0
      %6710 = vmatprep.subr.mxu0 0.0
      %6711 = vmatpush1.msra.mxu0 0.0
      %6712 = vmatprep.subr.mxu0 0.0
      %6713 = vmatpush1.msra.mxu0 0.0
      %6714 = vmatprep.subr.mxu0 0.0
      %6715 = vmatpush1.msra.mxu0 0.0
      %6716 = vmatprep.subr.mxu0 0.0
      %6717 = vmatpush1.msra.mxu0 0.0
      %6718 = vmatprep.subr.mxu0 0.0
      %6719 = vmatpush1.msra.mxu0 0.0
      %6720 = vmatprep.subr.mxu0 0.0
      %6721 = vmatpush1.msra.mxu0 0.0
      %6722 = vmatprep.subr.mxu0 0.0
      %6723 = vmatpush1.msra.mxu0 0.0
      %6724 = vmatprep.subr.mxu0 0.0
      %6725 = vmatpush1.msra.mxu0 0.0
      %6726 = vmatprep.subr.mxu0 0.0
      %6727 = vmatpush1.msra.mxu0 0.0
      %6728 = vmatprep.subr.mxu0 0.0
      %6729 = vmatpush1.msra.mxu0 0.0
      %6730 = vmatprep.mubr.f32.mxu0 0.0
      %6731 = vmatmul.mubr.f32.gmra.mrb[0].mxu0 %v6401
      %v6732 = vpop.f32.mrb[0].mxu0
      %v6733 = vadd.f32 0.0, %v6732
      %v6734 = vpop.f32.mrb[0].mxu0
      %6735 = vmatprep.mubr.f32.mxu0 0.0
      %6736 = vmatmul.mubr.f32.gmra.mrb[0].mxu0 %v6404
      %v6737 = vpop.f32.mrb[0].mxu0
      %v6738 = vadd.f32 0.0, %v6737
      %v6739 = vpop.f32.mrb[0].mxu0
      %6740 = vmatprep.mubr.f32.mxu0 0.0
      %6741 = vmatmul.mubr.f32.gmra.mrb[0].mxu0 %v6407
      %v6742 = vpop.f32.mrb[0].mxu0
      %v6743 = vadd.f32 0.0, %v6742
      %v6744 = vpop.f32.mrb[0].mxu0
      %6745 = vmatprep.mubr.f32.mxu0 0.0
      %6746 = vmatmul.mubr.f32.gmra.mrb[0].mxu0 %v6410
      %v6747 = vpop.f32.mrb[0].mxu0
      %v6748 = vadd.f32 0.0, %v6747
      %v6749 = vpop.f32.mrb[0].mxu0
      %6750 = vmatprep.mubr.f32.mxu0 0.0
      %6751 = vmatmul.mubr.f32.gmra.mrb[0].mxu0 %v6413
      %v6752 = vpop.f32.mrb[0].mxu0
      %v6753 = vadd.f32 0.0, %v6752
      %v6754 = vpop.f32.mrb[0].mxu0
      %6755 = vmatprep.mubr.f32.mxu0 0.0
      %6756 = vmatmul.mubr.f32.gmra.mrb[0].mxu0 %v6416
      %v6757 = vpop.f32.mrb[0].mxu0
      %v6758 = vadd.f32 0.0, %v6757
      %v6759 = vpop.f32.mrb[0].mxu0
      %6760 = vmatprep.mubr.f32.mxu0 0.0
      %6761 = vmatmul.mubr.f32.gmra.mrb[0].mxu0 %v6419
      %v6762 = vpop.f32.mrb[0].mxu0
      %v6763 = vadd.f32 0.0, %v6762
      %v6764 = vpop.f32.mrb[0].mxu0
      %6765 = vdwg.mxu0
      %v6773 = vrot.slane %v6733, 1
      %v6774 = vrot.slane %v6738, 1
      %v6775 = vsel %vm1454, %v6773, %v6774
      %v6776 = vrot.slane %v6743, 1
      %v6777 = vsel %vm1454, %v6774, %v6776
      %v6778 = vrot.slane %v6748, 1
      %v6779 = vsel %vm1454, %v6776, %v6778
      %v6780 = vrot.slane %v6753, 1
      %v6781 = vsel %vm1454, %v6778, %v6780
      %v6782 = vrot.slane %v6758, 1
      %v6783 = vsel %vm1454, %v6780, %v6782
      %v6784 = vrot.slane %v6763, 1
      %v6785 = vsel %vm1454, %v6782, %v6784
      %v6794 = vsel %vm1454, %v6784, %v6773
      %v6795 = vsel %vm5429, 0.0, %v6549
      %v6796 = vsel %vm5430, 0.0, %v6532
      %v6797 = vsel %vm5431, 0.0, %v6534
      %v6798 = vsel %vm5432, 0.0, %v6536
      %v6799 = vsel %vm5433, 0.0, %v6538
      %v6800 = vsel %vm5434, 0.0, %v6540
      %v6801 = vsel %vm5435, 0.0, %v6541
      %v6802 = vsel %vm5443, 0.0, %v6775
      %v6803 = vsel %vm5444, 0.0, %v6777
      %v6804 = vsel %vm5445, 0.0, %v6779
      %v6805 = vsel %vm5446, 0.0, %v6781
      %v6806 = vsel %vm5447, 0.0, %v6783
      %v6807 = vsel %vm5448, 0.0, %v6785
      %v6808 = vsel %vm5449, 0.0, %v6794
      %v6809 = vadd.f32 %v6795, %v6625
      %v6810 = vadd.f32 %v6796, %v6630
      %v6811 = vadd.f32 %v6797, %v6635
      %v6812 = vadd.f32 %v6798, %v6640
      %v6813 = vadd.f32 %v6799, %v6645
      %v6814 = vadd.f32 %v6800, %v6650
      %v6815 = vadd.f32 %v6801, %v6655
      %v6816 = vadd.f32 %v6809, %v6802
      %v6817 = vadd.f32 %v6810, %v6803
      %v6818 = vadd.f32 %v6811, %v6804
      %v6819 = vadd.f32 %v6812, %v6805
      %v6820 = vadd.f32 %v6813, %v6806
      %v6821 = vadd.f32 %v6814, %v6807
      %v6822 = vadd.f32 %v6815, %v6808
      %v6823 = vld [vmem:[%s43] sm:$0x1]
      %v6825 = vlaneseq
      %v6826 = vshrl.u32 %v6825, 7
      %v6827 = vsub.s32 0, %v6826
      %v6828 = vrot.slane %v6823, %v6827
      %v6830 = vadd.f32 %v6816, %v6828
      %v6831 = vadd.f32 %v6817, %v6828
      %v6832 = vadd.f32 %v6818, %v6828
      %v6833 = vadd.f32 %v6819, %v6828
      %v6834 = vadd.f32 %v6820, %v6828
      %v6835 = vadd.f32 %v6821, %v6828
      %v6836 = vadd.f32 %v6822, %v6828
      %v6837 = vmax.f32 %v6830, 0.0
      %v6838 = vmax.f32 %v6831, 0.0
      %v6839 = vmax.f32 %v6832, 0.0
      %v6840 = vmax.f32 %v6833, 0.0
      %v6841 = vmax.f32 %v6834, 0.0
      %v6842 = vmax.f32 %v6835, 0.0
      %v6843 = vmax.f32 %v6836, 0.0
      %v6844 = vld [vmem:[%s45] sm:$0xff]
      %v6845 = vld [vmem:[%s45 + $0x8] sm:$0xff]
      %v6846 = vld [vmem:[%s45 + $0x10] sm:$0xff]
      %v6847 = vld [vmem:[%s45 + $0x18] sm:$0xff]
      %v6848 = vld [vmem:[%s45 + $0x20] sm:$0xff]
      %v6849 = vld [vmem:[%s45 + $0x28] sm:$0xff]
      %v6850 = vld [vmem:[%s45 + $0x30] sm:$0xff]
      %v6852 = vsel %vm3991, %v6837, 0
      %v6855 = vsel %vm3991, %v6838, 0
      %v6858 = vsel %vm3991, %v6839, 0
      %v6861 = vsel %vm3991, %v6840, 0
      %v6864 = vsel %vm3991, %v6841, 0
      %v6867 = vsel %vm3991, %v6842, 0
      %v6870 = vsel %vm3991, %v6843, 0
      %6872 = vmatprep.subr.mxu0 0.0
      %6873 = vmatpush1.msra.mxu0 %v6844
      %6874 = vmatprep.subr.mxu0 0.0
      %6875 = vmatpush1.msra.mxu0 %v6845
      %6876 = vmatprep.subr.mxu0 0.0
      %6877 = vmatpush1.msra.mxu0 %v6846
      %6878 = vmatprep.subr.mxu0 0.0
      %6879 = vmatpush1.msra.mxu0 %v6847
      %6880 = vmatprep.subr.mxu0 0.0
      %6881 = vmatpush1.msra.mxu0 %v6848
      %6882 = vmatprep.subr.mxu0 0.0
      %6883 = vmatpush1.msra.mxu0 %v6849
      %6884 = vmatprep.subr.mxu0 0.0
      %6885 = vmatpush1.msra.mxu0 %v6850
      %6886 = vmatprep.subr.mxu0 0.0
      %6887 = vmatpush1.msra.mxu0 0.0
      %6888 = vmatprep.subr.mxu0 0.0
      %6889 = vmatpush1.msra.mxu0 0.0
      %6890 = vmatprep.subr.mxu0 0.0
      %6891 = vmatpush1.msra.mxu0 0.0
      %6892 = vmatprep.subr.mxu0 0.0
      %6893 = vmatpush1.msra.mxu0 0.0
      %6894 = vmatprep.subr.mxu0 0.0
      %6895 = vmatpush1.msra.mxu0 0.0
      %6896 = vmatprep.subr.mxu0 0.0
      %6897 = vmatpush1.msra.mxu0 0.0
      %6898 = vmatprep.subr.mxu0 0.0
      %6899 = vmatpush1.msra.mxu0 0.0
      %6900 = vmatprep.subr.mxu0 0.0
      %6901 = vmatpush1.msra.mxu0 0.0
      %6902 = vmatprep.subr.mxu0 0.0
      %6903 = vmatpush1.msra.mxu0 0.0
      %6904 = vmatprep.subr.mxu0 0.0
      %6905 = vmatpush1.msra.mxu0 0.0
      %6906 = vmatprep.subr.mxu0 0.0
      %6907 = vmatpush1.msra.mxu0 0.0
      %6908 = vmatprep.subr.mxu0 0.0
      %6909 = vmatpush1.msra.mxu0 0.0
      %6910 = vmatprep.subr.mxu0 0.0
      %6911 = vmatpush1.msra.mxu0 0.0
      %6912 = vmatprep.subr.mxu0 0.0
      %6913 = vmatpush1.msra.mxu0 0.0
      %6914 = vmatprep.subr.mxu0 0.0
      %6915 = vmatpush1.msra.mxu0 0.0
      %6916 = vmatprep.subr.mxu0 0.0
      %6917 = vmatpush1.msra.mxu0 0.0
      %6918 = vmatprep.subr.mxu0 0.0
      %6919 = vmatpush1.msra.mxu0 0.0
      %6920 = vmatprep.subr.mxu0 0.0
      %6921 = vmatpush1.msra.mxu0 0.0
      %6922 = vmatprep.subr.mxu0 0.0
      %6923 = vmatpush1.msra.mxu0 0.0
      %6924 = vmatprep.subr.mxu0 0.0
      %6925 = vmatpush1.msra.mxu0 0.0
      %6926 = vmatprep.subr.mxu0 0.0
      %6927 = vmatpush1.msra.mxu0 0.0
      %6928 = vmatprep.subr.mxu0 0.0
      %6929 = vmatpush1.msra.mxu0 0.0
      %6930 = vmatprep.subr.mxu0 0.0
      %6931 = vmatpush1.msra.mxu0 0.0
      %6932 = vmatprep.subr.mxu0 0.0
      %6933 = vmatpush1.msra.mxu0 0.0
      %6934 = vmatprep.subr.mxu0 0.0
      %6935 = vmatpush1.msra.mxu0 0.0
      %6936 = vmatprep.mubr.f32.mxu0 0.0
      %6937 = vmatmul.mubr.f32.gmra.mrb[0].mxu0 %v6852
      %v6938 = vpop.f32.mrb[0].mxu0
      %v6939 = vadd.f32 0.0, %v6938
      %v6940 = vpop.f32.mrb[0].mxu0
      %6941 = vmatprep.mubr.f32.mxu0 0.0
      %6942 = vmatmul.mubr.f32.gmra.mrb[0].mxu0 %v6855
      %v6943 = vpop.f32.mrb[0].mxu0
      %v6944 = vadd.f32 0.0, %v6943
      %v6945 = vpop.f32.mrb[0].mxu0
      %6946 = vmatprep.mubr.f32.mxu0 0.0
      %6947 = vmatmul.mubr.f32.gmra.mrb[0].mxu0 %v6858
      %v6948 = vpop.f32.mrb[0].mxu0
      %v6949 = vadd.f32 0.0, %v6948
      %v6950 = vpop.f32.mrb[0].mxu0
      %6951 = vmatprep.mubr.f32.mxu0 0.0
      %6952 = vmatmul.mubr.f32.gmra.mrb[0].mxu0 %v6861
      %v6953 = vpop.f32.mrb[0].mxu0
      %v6954 = vadd.f32 0.0, %v6953
      %v6955 = vpop.f32.mrb[0].mxu0
      %6956 = vmatprep.mubr.f32.mxu0 0.0
      %6957 = vmatmul.mubr.f32.gmra.mrb[0].mxu0 %v6864
      %v6958 = vpop.f32.mrb[0].mxu0
      %v6959 = vadd.f32 0.0, %v6958
      %v6960 = vpop.f32.mrb[0].mxu0
      %6961 = vmatprep.mubr.f32.mxu0 0.0
      %6962 = vmatmul.mubr.f32.gmra.mrb[0].mxu0 %v6867
      %v6963 = vpop.f32.mrb[0].mxu0
      %v6964 = vadd.f32 0.0, %v6963
      %v6965 = vpop.f32.mrb[0].mxu0
      %6966 = vmatprep.mubr.f32.mxu0 0.0
      %6967 = vmatmul.mubr.f32.gmra.mrb[0].mxu0 %v6870
      %v6968 = vpop.f32.mrb[0].mxu0
      %v6969 = vadd.f32 0.0, %v6968
      %v6970 = vpop.f32.mrb[0].mxu0
      %6971 = vdwg.mxu0
      %v6973 = vrot.slane %v6969, 7
      %v6981 = vrot.slane %v6939, 7
      %v6982 = vrot.slane %v6944, 7
      %v6983 = vsel %vm5022, %v6981, %v6982
      %v6984 = vrot.slane %v6949, 7
      %v6985 = vsel %vm5022, %v6982, %v6984
      %v6986 = vrot.slane %v6954, 7
      %v6987 = vsel %vm5022, %v6984, %v6986
      %v6988 = vrot.slane %v6959, 7
      %v6989 = vsel %vm5022, %v6986, %v6988
      %v6990 = vrot.slane %v6964, 7
      %v6991 = vsel %vm5022, %v6988, %v6990
      %v6992 = vsel %vm5022, %v6990, %v6973
      %v7000 = vsel %vm5022, %v6973, %v6981
      %s7001 = scalar_lea.vmem %s45, 56
      %v7002 = vld [vmem:[%s7001] sm:$0xff]
      %v7003 = vld [vmem:[%s7001 + $0x8] sm:$0xff]
      %v7004 = vld [vmem:[%s7001 + $0x10] sm:$0xff]
      %v7005 = vld [vmem:[%s7001 + $0x18] sm:$0xff]
      %v7006 = vld [vmem:[%s7001 + $0x20] sm:$0xff]
      %v7007 = vld [vmem:[%s7001 + $0x28] sm:$0xff]
      %v7008 = vld [vmem:[%s7001 + $0x30] sm:$0xff]
      %7009 = vmatprep.subr.mxu0 0.0
      %7010 = vmatpush1.msra.mxu0 %v7002
      %7011 = vmatprep.subr.mxu0 0.0
      %7012 = vmatpush1.msra.mxu0 %v7003
      %7013 = vmatprep.subr.mxu0 0.0
      %7014 = vmatpush1.msra.mxu0 %v7004
      %7015 = vmatprep.subr.mxu0 0.0
      %7016 = vmatpush1.msra.mxu0 %v7005
      %7017 = vmatprep.subr.mxu0 0.0
      %7018 = vmatpush1.msra.mxu0 %v7006
      %7019 = vmatprep.subr.mxu0 0.0
      %7020 = vmatpush1.msra.mxu0 %v7007
      %7021 = vmatprep.subr.mxu0 0.0
      %7022 = vmatpush1.msra.mxu0 %v7008
      %7023 = vmatprep.subr.mxu0 0.0
      %7024 = vmatpush1.msra.mxu0 0.0
      %7025 = vmatprep.subr.mxu0 0.0
      %7026 = vmatpush1.msra.mxu0 0.0
      %7027 = vmatprep.subr.mxu0 0.0
      %7028 = vmatpush1.msra.mxu0 0.0
      %7029 = vmatprep.subr.mxu0 0.0
      %7030 = vmatpush1.msra.mxu0 0.0
      %7031 = vmatprep.subr.mxu0 0.0
      %7032 = vmatpush1.msra.mxu0 0.0
      %7033 = vmatprep.subr.mxu0 0.0
      %7034 = vmatpush1.msra.mxu0 0.0
      %7035 = vmatprep.subr.mxu0 0.0
      %7036 = vmatpush1.msra.mxu0 0.0
      %7037 = vmatprep.subr.mxu0 0.0
      %7038 = vmatpush1.msra.mxu0 0.0
      %7039 = vmatprep.subr.mxu0 0.0
      %7040 = vmatpush1.msra.mxu0 0.0
      %7041 = vmatprep.subr.mxu0 0.0
      %7042 = vmatpush1.msra.mxu0 0.0
      %7043 = vmatprep.subr.mxu0 0.0
      %7044 = vmatpush1.msra.mxu0 0.0
      %7045 = vmatprep.subr.mxu0 0.0
      %7046 = vmatpush1.msra.mxu0 0.0
      %7047 = vmatprep.subr.mxu0 0.0
      %7048 = vmatpush1.msra.mxu0 0.0
      %7049 = vmatprep.subr.mxu0 0.0
      %7050 = vmatpush1.msra.mxu0 0.0
      %7051 = vmatprep.subr.mxu0 0.0
      %7052 = vmatpush1.msra.mxu0 0.0
      %7053 = vmatprep.subr.mxu0 0.0
      %7054 = vmatpush1.msra.mxu0 0.0
      %7055 = vmatprep.subr.mxu0 0.0
      %7056 = vmatpush1.msra.mxu0 0.0
      %7057 = vmatprep.subr.mxu0 0.0
      %7058 = vmatpush1.msra.mxu0 0.0
      %7059 = vmatprep.subr.mxu0 0.0
      %7060 = vmatpush1.msra.mxu0 0.0
      %7061 = vmatprep.subr.mxu0 0.0
      %7062 = vmatpush1.msra.mxu0 0.0
      %7063 = vmatprep.subr.mxu0 0.0
      %7064 = vmatpush1.msra.mxu0 0.0
      %7065 = vmatprep.subr.mxu0 0.0
      %7066 = vmatpush1.msra.mxu0 0.0
      %7067 = vmatprep.subr.mxu0 0.0
      %7068 = vmatpush1.msra.mxu0 0.0
      %7069 = vmatprep.subr.mxu0 0.0
      %7070 = vmatpush1.msra.mxu0 0.0
      %7071 = vmatprep.subr.mxu0 0.0
      %7072 = vmatpush1.msra.mxu0 0.0
      %7073 = vmatprep.mubr.f32.mxu0 0.0
      %7074 = vmatmul.mubr.f32.gmra.mrb[0].mxu0 %v6852
      %v7075 = vpop.f32.mrb[0].mxu0
      %v7076 = vadd.f32 0.0, %v7075
      %v7077 = vpop.f32.mrb[0].mxu0
      %7078 = vmatprep.mubr.f32.mxu0 0.0
      %7079 = vmatmul.mubr.f32.gmra.mrb[0].mxu0 %v6855
      %v7080 = vpop.f32.mrb[0].mxu0
      %v7081 = vadd.f32 0.0, %v7080
      %v7082 = vpop.f32.mrb[0].mxu0
      %7083 = vmatprep.mubr.f32.mxu0 0.0
      %7084 = vmatmul.mubr.f32.gmra.mrb[0].mxu0 %v6858
      %v7085 = vpop.f32.mrb[0].mxu0
      %v7086 = vadd.f32 0.0, %v7085
      %v7087 = vpop.f32.mrb[0].mxu0
      %7088 = vmatprep.mubr.f32.mxu0 0.0
      %7089 = vmatmul.mubr.f32.gmra.mrb[0].mxu0 %v6861
      %v7090 = vpop.f32.mrb[0].mxu0
      %v7091 = vadd.f32 0.0, %v7090
      %v7092 = vpop.f32.mrb[0].mxu0
      %7093 = vmatprep.mubr.f32.mxu0 0.0
      %7094 = vmatmul.mubr.f32.gmra.mrb[0].mxu0 %v6864
      %v7095 = vpop.f32.mrb[0].mxu0
      %v7096 = vadd.f32 0.0, %v7095
      %v7097 = vpop.f32.mrb[0].mxu0
      %7098 = vmatprep.mubr.f32.mxu0 0.0
      %7099 = vmatmul.mubr.f32.gmra.mrb[0].mxu0 %v6867
      %v7100 = vpop.f32.mrb[0].mxu0
      %v7101 = vadd.f32 0.0, %v7100
      %v7102 = vpop.f32.mrb[0].mxu0
      %7103 = vmatprep.mubr.f32.mxu0 0.0
      %7104 = vmatmul.mubr.f32.gmra.mrb[0].mxu0 %v6870
      %v7105 = vpop.f32.mrb[0].mxu0
      %v7106 = vadd.f32 0.0, %v7105
      %v7107 = vpop.f32.mrb[0].mxu0
      %7108 = vdwg.mxu0
      %s7109 = scalar_lea.vmem %s45, 112
      %v7110 = vld [vmem:[%s7109] sm:$0xff]
      %v7111 = vld [vmem:[%s7109 + $0x8] sm:$0xff]
      %v7112 = vld [vmem:[%s7109 + $0x10] sm:$0xff]
      %v7113 = vld [vmem:[%s7109 + $0x18] sm:$0xff]
      %v7114 = vld [vmem:[%s7109 + $0x20] sm:$0xff]
      %v7115 = vld [vmem:[%s7109 + $0x28] sm:$0xff]
      %v7116 = vld [vmem:[%s7109 + $0x30] sm:$0xff]
      %7117 = vmatprep.subr.mxu0 0.0
      %7118 = vmatpush1.msra.mxu0 %v7110
      %7119 = vmatprep.subr.mxu0 0.0
      %7120 = vmatpush1.msra.mxu0 %v7111
      %7121 = vmatprep.subr.mxu0 0.0
      %7122 = vmatpush1.msra.mxu0 %v7112
      %7123 = vmatprep.subr.mxu0 0.0
      %7124 = vmatpush1.msra.mxu0 %v7113
      %7125 = vmatprep.subr.mxu0 0.0
      %7126 = vmatpush1.msra.mxu0 %v7114
      %7127 = vmatprep.subr.mxu0 0.0
      %7128 = vmatpush1.msra.mxu0 %v7115
      %7129 = vmatprep.subr.mxu0 0.0
      %7130 = vmatpush1.msra.mxu0 %v7116
      %7131 = vmatprep.subr.mxu0 0.0
      %7132 = vmatpush1.msra.mxu0 0.0
      %7133 = vmatprep.subr.mxu0 0.0
      %7134 = vmatpush1.msra.mxu0 0.0
      %7135 = vmatprep.subr.mxu0 0.0
      %7136 = vmatpush1.msra.mxu0 0.0
      %7137 = vmatprep.subr.mxu0 0.0
      %7138 = vmatpush1.msra.mxu0 0.0
      %7139 = vmatprep.subr.mxu0 0.0
      %7140 = vmatpush1.msra.mxu0 0.0
      %7141 = vmatprep.subr.mxu0 0.0
      %7142 = vmatpush1.msra.mxu0 0.0
      %7143 = vmatprep.subr.mxu0 0.0
      %7144 = vmatpush1.msra.mxu0 0.0
      %7145 = vmatprep.subr.mxu0 0.0
      %7146 = vmatpush1.msra.mxu0 0.0
      %7147 = vmatprep.subr.mxu0 0.0
      %7148 = vmatpush1.msra.mxu0 0.0
      %7149 = vmatprep.subr.mxu0 0.0
      %7150 = vmatpush1.msra.mxu0 0.0
      %7151 = vmatprep.subr.mxu0 0.0
      %7152 = vmatpush1.msra.mxu0 0.0
      %7153 = vmatprep.subr.mxu0 0.0
      %7154 = vmatpush1.msra.mxu0 0.0
      %7155 = vmatprep.subr.mxu0 0.0
      %7156 = vmatpush1.msra.mxu0 0.0
      %7157 = vmatprep.subr.mxu0 0.0
      %7158 = vmatpush1.msra.mxu0 0.0
      %7159 = vmatprep.subr.mxu0 0.0
      %7160 = vmatpush1.msra.mxu0 0.0
      %7161 = vmatprep.subr.mxu0 0.0
      %7162 = vmatpush1.msra.mxu0 0.0
      %7163 = vmatprep.subr.mxu0 0.0
      %7164 = vmatpush1.msra.mxu0 0.0
      %7165 = vmatprep.subr.mxu0 0.0
      %7166 = vmatpush1.msra.mxu0 0.0
      %7167 = vmatprep.subr.mxu0 0.0
      %7168 = vmatpush1.msra.mxu0 0.0
      %7169 = vmatprep.subr.mxu0 0.0
      %7170 = vmatpush1.msra.mxu0 0.0
      %7171 = vmatprep.subr.mxu0 0.0
      %7172 = vmatpush1.msra.mxu0 0.0
      %7173 = vmatprep.subr.mxu0 0.0
      %7174 = vmatpush1.msra.mxu0 0.0
      %7175 = vmatprep.subr.mxu0 0.0
      %7176 = vmatpush1.msra.mxu0 0.0
      %7177 = vmatprep.subr.mxu0 0.0
      %7178 = vmatpush1.msra.mxu0 0.0
      %7179 = vmatprep.subr.mxu0 0.0
      %7180 = vmatpush1.msra.mxu0 0.0
      %7181 = vmatprep.mubr.f32.mxu0 0.0
      %7182 = vmatmul.mubr.f32.gmra.mrb[0].mxu0 %v6852
      %v7183 = vpop.f32.mrb[0].mxu0
      %v7184 = vadd.f32 0.0, %v7183
      %v7185 = vpop.f32.mrb[0].mxu0
      %7186 = vmatprep.mubr.f32.mxu0 0.0
      %7187 = vmatmul.mubr.f32.gmra.mrb[0].mxu0 %v6855
      %v7188 = vpop.f32.mrb[0].mxu0
      %v7189 = vadd.f32 0.0, %v7188
      %v7190 = vpop.f32.mrb[0].mxu0
      %7191 = vmatprep.mubr.f32.mxu0 0.0
      %7192 = vmatmul.mubr.f32.gmra.mrb[0].mxu0 %v6858
      %v7193 = vpop.f32.mrb[0].mxu0
      %v7194 = vadd.f32 0.0, %v7193
      %v7195 = vpop.f32.mrb[0].mxu0
      %7196 = vmatprep.mubr.f32.mxu0 0.0
      %7197 = vmatmul.mubr.f32.gmra.mrb[0].mxu0 %v6861
      %v7198 = vpop.f32.mrb[0].mxu0
      %v7199 = vadd.f32 0.0, %v7198
      %v7200 = vpop.f32.mrb[0].mxu0
      %7201 = vmatprep.mubr.f32.mxu0 0.0
      %7202 = vmatmul.mubr.f32.gmra.mrb[0].mxu0 %v6864
      %v7203 = vpop.f32.mrb[0].mxu0
      %v7204 = vadd.f32 0.0, %v7203
      %v7205 = vpop.f32.mrb[0].mxu0
      %7206 = vmatprep.mubr.f32.mxu0 0.0
      %7207 = vmatmul.mubr.f32.gmra.mrb[0].mxu0 %v6867
      %v7208 = vpop.f32.mrb[0].mxu0
      %v7209 = vadd.f32 0.0, %v7208
      %v7210 = vpop.f32.mrb[0].mxu0
      %7211 = vmatprep.mubr.f32.mxu0 0.0
      %7212 = vmatmul.mubr.f32.gmra.mrb[0].mxu0 %v6870
      %v7213 = vpop.f32.mrb[0].mxu0
      %v7214 = vadd.f32 0.0, %v7213
      %v7215 = vpop.f32.mrb[0].mxu0
      %7216 = vdwg.mxu0
      %v7224 = vrot.slane %v7184, 1
      %v7225 = vrot.slane %v7189, 1
      %v7226 = vsel %vm1454, %v7224, %v7225
      %v7227 = vrot.slane %v7194, 1
      %v7228 = vsel %vm1454, %v7225, %v7227
      %v7229 = vrot.slane %v7199, 1
      %v7230 = vsel %vm1454, %v7227, %v7229
      %v7231 = vrot.slane %v7204, 1
      %v7232 = vsel %vm1454, %v7229, %v7231
      %v7233 = vrot.slane %v7209, 1
      %v7234 = vsel %vm1454, %v7231, %v7233
      %v7235 = vrot.slane %v7214, 1
      %v7236 = vsel %vm1454, %v7233, %v7235
      %v7245 = vsel %vm1454, %v7235, %v7224
      %v7246 = vsel %vm5429, 0.0, %v7000
      %v7247 = vsel %vm5430, 0.0, %v6983
      %v7248 = vsel %vm5431, 0.0, %v6985
      %v7249 = vsel %vm5432, 0.0, %v6987
      %v7250 = vsel %vm5433, 0.0, %v6989
      %v7251 = vsel %vm5434, 0.0, %v6991
      %v7252 = vsel %vm5435, 0.0, %v6992
      %v7253 = vsel %vm5443, 0.0, %v7226
      %v7254 = vsel %vm5444, 0.0, %v7228
      %v7255 = vsel %vm5445, 0.0, %v7230
      %v7256 = vsel %vm5446, 0.0, %v7232
      %v7257 = vsel %vm5447, 0.0, %v7234
      %v7258 = vsel %vm5448, 0.0, %v7236
      %v7259 = vsel %vm5449, 0.0, %v7245
      %v7260 = vadd.f32 %v7246, %v7076
      %v7261 = vadd.f32 %v7247, %v7081
      %v7262 = vadd.f32 %v7248, %v7086
      %v7263 = vadd.f32 %v7249, %v7091
      %v7264 = vadd.f32 %v7250, %v7096
      %v7265 = vadd.f32 %v7251, %v7101
      %v7266 = vadd.f32 %v7252, %v7106
      %v7267 = vadd.f32 %v7260, %v7253
      %v7268 = vadd.f32 %v7261, %v7254
      %v7269 = vadd.f32 %v7262, %v7255
      %v7270 = vadd.f32 %v7263, %v7256
      %v7271 = vadd.f32 %v7264, %v7257
      %v7272 = vadd.f32 %v7265, %v7258
      %v7273 = vadd.f32 %v7266, %v7259
      %v7274 = vld [vmem:[%s47] sm:$0x1]
      %v7276 = vlaneseq
      %v7277 = vshrl.u32 %v7276, 7
      %v7278 = vsub.s32 0, %v7277
      %v7279 = vrot.slane %v7274, %v7278
      %v7281 = vadd.f32 %v7267, %v7279
      %v7282 = vadd.f32 %v7268, %v7279
      %v7283 = vadd.f32 %v7269, %v7279
      %v7284 = vadd.f32 %v7270, %v7279
      %v7285 = vadd.f32 %v7271, %v7279
      %v7286 = vadd.f32 %v7272, %v7279
      %v7287 = vadd.f32 %v7273, %v7279
      %v7288 = vmax.f32 %v7281, 0.0
      %v7289 = vmax.f32 %v7282, 0.0
      %v7290 = vmax.f32 %v7283, 0.0
      %v7291 = vmax.f32 %v7284, 0.0
      %v7292 = vmax.f32 %v7285, 0.0
      %v7293 = vmax.f32 %v7286, 0.0
      %v7294 = vmax.f32 %v7287, 0.0
      %v7295 = vld [vmem:[%s49] sm:$0xff]
      %v7296 = vld [vmem:[%s49 + $0x8] sm:$0xff]
      %v7297 = vld [vmem:[%s49 + $0x10] sm:$0xff]
      %v7298 = vld [vmem:[%s49 + $0x18] sm:$0xff]
      %v7299 = vld [vmem:[%s49 + $0x20] sm:$0xff]
      %v7300 = vld [vmem:[%s49 + $0x28] sm:$0xff]
      %v7301 = vld [vmem:[%s49 + $0x30] sm:$0xff]
      %s7302 = scalar_lea.vmem %s49, 56
      %v7303 = vld [vmem:[%s7302] sm:$0xff]
      %v7304 = vld [vmem:[%s7302 + $0x8] sm:$0xff]
      %v7305 = vld [vmem:[%s7302 + $0x10] sm:$0xff]
      %v7306 = vld [vmem:[%s7302 + $0x18] sm:$0xff]
      %v7307 = vld [vmem:[%s7302 + $0x20] sm:$0xff]
      %v7308 = vld [vmem:[%s7302 + $0x28] sm:$0xff]
      %v7309 = vld [vmem:[%s7302 + $0x30] sm:$0xff]
      %v7311 = vsel %vm3991, %v7288, 0
      %v7314 = vsel %vm3991, %v7289, 0
      %v7317 = vsel %vm3991, %v7290, 0
      %v7320 = vsel %vm3991, %v7291, 0
      %v7323 = vsel %vm3991, %v7292, 0
      %v7326 = vsel %vm3991, %v7293, 0
      %v7329 = vsel %vm3991, %v7294, 0
      %7331 = vmatprep.subr.mxu0 0.0
      %7332 = vmatpush1.msra.mxu0 %v7303
      %7333 = vmatprep.subr.mxu0 0.0
      %7334 = vmatpush1.msra.mxu0 %v7304
      %7335 = vmatprep.subr.mxu0 0.0
      %7336 = vmatpush1.msra.mxu0 %v7305
      %7337 = vmatprep.subr.mxu0 0.0
      %7338 = vmatpush1.msra.mxu0 %v7306
      %7339 = vmatprep.subr.mxu0 0.0
      %7340 = vmatpush1.msra.mxu0 %v7307
      %7341 = vmatprep.subr.mxu0 0.0
      %7342 = vmatpush1.msra.mxu0 %v7308
      %7343 = vmatprep.subr.mxu0 0.0
      %7344 = vmatpush1.msra.mxu0 %v7309
      %7345 = vmatprep.subr.mxu0 0.0
      %7346 = vmatpush1.msra.mxu0 0.0
      %7347 = vmatprep.subr.mxu0 0.0
      %7348 = vmatpush1.msra.mxu0 0.0
      %7349 = vmatprep.subr.mxu0 0.0
      %7350 = vmatpush1.msra.mxu0 0.0
      %7351 = vmatprep.subr.mxu0 0.0
      %7352 = vmatpush1.msra.mxu0 0.0
      %7353 = vmatprep.subr.mxu0 0.0
      %7354 = vmatpush1.msra.mxu0 0.0
      %7355 = vmatprep.subr.mxu0 0.0
      %7356 = vmatpush1.msra.mxu0 0.0
      %7357 = vmatprep.subr.mxu0 0.0
      %7358 = vmatpush1.msra.mxu0 0.0
      %7359 = vmatprep.subr.mxu0 0.0
      %7360 = vmatpush1.msra.mxu0 0.0
      %7361 = vmatprep.subr.mxu0 0.0
      %7362 = vmatpush1.msra.mxu0 0.0
      %7363 = vmatprep.subr.mxu0 0.0
      %7364 = vmatpush1.msra.mxu0 0.0
      %7365 = vmatprep.subr.mxu0 0.0
      %7366 = vmatpush1.msra.mxu0 0.0
      %7367 = vmatprep.subr.mxu0 0.0
      %7368 = vmatpush1.msra.mxu0 0.0
      %7369 = vmatprep.subr.mxu0 0.0
      %7370 = vmatpush1.msra.mxu0 0.0
      %7371 = vmatprep.subr.mxu0 0.0
      %7372 = vmatpush1.msra.mxu0 0.0
      %7373 = vmatprep.subr.mxu0 0.0
      %7374 = vmatpush1.msra.mxu0 0.0
      %7375 = vmatprep.subr.mxu0 0.0
      %7376 = vmatpush1.msra.mxu0 0.0
      %7377 = vmatprep.subr.mxu0 0.0
      %7378 = vmatpush1.msra.mxu0 0.0
      %7379 = vmatprep.subr.mxu0 0.0
      %7380 = vmatpush1.msra.mxu0 0.0
      %7381 = vmatprep.subr.mxu0 0.0
      %7382 = vmatpush1.msra.mxu0 0.0
      %7383 = vmatprep.subr.mxu0 0.0
      %7384 = vmatpush1.msra.mxu0 0.0
      %7385 = vmatprep.subr.mxu0 0.0
      %7386 = vmatpush1.msra.mxu0 0.0
      %7387 = vmatprep.subr.mxu0 0.0
      %7388 = vmatpush1.msra.mxu0 0.0
      %7389 = vmatprep.subr.mxu0 0.0
      %7390 = vmatpush1.msra.mxu0 0.0
      %7391 = vmatprep.subr.mxu0 0.0
      %7392 = vmatpush1.msra.mxu0 0.0
      %7393 = vmatprep.subr.mxu0 0.0
      %7394 = vmatpush1.msra.mxu0 0.0
      %7395 = vmatprep.mubr.f32.mxu0 0.0
      %7396 = vmatmul.mubr.f32.gmra.mrb[0].mxu0 %v7311
      %v7397 = vpop.f32.mrb[0].mxu0
      %v7398 = vadd.f32 0.0, %v7397
      %v7399 = vpop.f32.mrb[0].mxu0
      %7400 = vmatprep.mubr.f32.mxu0 0.0
      %7401 = vmatmul.mubr.f32.gmra.mrb[0].mxu0 %v7314
      %v7402 = vpop.f32.mrb[0].mxu0
      %v7403 = vadd.f32 0.0, %v7402
      %v7404 = vpop.f32.mrb[0].mxu0
      %7405 = vmatprep.mubr.f32.mxu0 0.0
      %7406 = vmatmul.mubr.f32.gmra.mrb[0].mxu0 %v7317
      %v7407 = vpop.f32.mrb[0].mxu0
      %v7408 = vadd.f32 0.0, %v7407
      %v7409 = vpop.f32.mrb[0].mxu0
      %7410 = vmatprep.mubr.f32.mxu0 0.0
      %7411 = vmatmul.mubr.f32.gmra.mrb[0].mxu0 %v7320
      %v7412 = vpop.f32.mrb[0].mxu0
      %v7413 = vadd.f32 0.0, %v7412
      %v7414 = vpop.f32.mrb[0].mxu0
      %7415 = vmatprep.mubr.f32.mxu0 0.0
      %7416 = vmatmul.mubr.f32.gmra.mrb[0].mxu0 %v7323
      %v7417 = vpop.f32.mrb[0].mxu0
      %v7418 = vadd.f32 0.0, %v7417
      %v7419 = vpop.f32.mrb[0].mxu0
      %7420 = vmatprep.mubr.f32.mxu0 0.0
      %7421 = vmatmul.mubr.f32.gmra.mrb[0].mxu0 %v7326
      %v7422 = vpop.f32.mrb[0].mxu0
      %v7423 = vadd.f32 0.0, %v7422
      %v7424 = vpop.f32.mrb[0].mxu0
      %7425 = vmatprep.mubr.f32.mxu0 0.0
      %7426 = vmatmul.mubr.f32.gmra.mrb[0].mxu0 %v7329
      %v7427 = vpop.f32.mrb[0].mxu0
      %v7428 = vadd.f32 0.0, %v7427
      %v7429 = vpop.f32.mrb[0].mxu0
      %7430 = vdwg.mxu0
      %v7438 = vrot.slane %v7398, 1
      %v7439 = vrot.slane %v7403, 1
      %v7440 = vsel %vm1454, %v7438, %v7439
      %v7441 = vrot.slane %v7408, 1
      %v7442 = vsel %vm1454, %v7439, %v7441
      %v7443 = vrot.slane %v7413, 1
      %v7444 = vsel %vm1454, %v7441, %v7443
      %v7445 = vrot.slane %v7418, 1
      %v7446 = vsel %vm1454, %v7443, %v7445
      %v7447 = vrot.slane %v7423, 1
      %v7448 = vsel %vm1454, %v7445, %v7447
      %v7449 = vrot.slane %v7428, 1
      %v7450 = vsel %vm1454, %v7447, %v7449
      %v7459 = vsel %vm1454, %v7449, %v7438
      %s7460 = scalar_lea.vmem %s49, 112
      %v7461 = vld [vmem:[%s7460] sm:$0xff]
      %v7462 = vld [vmem:[%s7460 + $0x8] sm:$0xff]
      %v7463 = vld [vmem:[%s7460 + $0x10] sm:$0xff]
      %v7464 = vld [vmem:[%s7460 + $0x18] sm:$0xff]
      %v7465 = vld [vmem:[%s7460 + $0x20] sm:$0xff]
      %v7466 = vld [vmem:[%s7460 + $0x28] sm:$0xff]
      %v7467 = vld [vmem:[%s7460 + $0x30] sm:$0xff]
      %7468 = vmatprep.subr.mxu0 0.0
      %7469 = vmatpush1.msra.mxu0 %v7461
      %7470 = vmatprep.subr.mxu0 0.0
      %7471 = vmatpush1.msra.mxu0 %v7462
      %7472 = vmatprep.subr.mxu0 0.0
      %7473 = vmatpush1.msra.mxu0 %v7463
      %7474 = vmatprep.subr.mxu0 0.0
      %7475 = vmatpush1.msra.mxu0 %v7464
      %7476 = vmatprep.subr.mxu0 0.0
      %7477 = vmatpush1.msra.mxu0 %v7465
      %7478 = vmatprep.subr.mxu0 0.0
      %7479 = vmatpush1.msra.mxu0 %v7466
      %7480 = vmatprep.subr.mxu0 0.0
      %7481 = vmatpush1.msra.mxu0 %v7467
      %7482 = vmatprep.subr.mxu0 0.0
      %7483 = vmatpush1.msra.mxu0 0.0
      %7484 = vmatprep.subr.mxu0 0.0
      %7485 = vmatpush1.msra.mxu0 0.0
      %7486 = vmatprep.subr.mxu0 0.0
      %7487 = vmatpush1.msra.mxu0 0.0
      %7488 = vmatprep.subr.mxu0 0.0
      %7489 = vmatpush1.msra.mxu0 0.0
      %7490 = vmatprep.subr.mxu0 0.0
      %7491 = vmatpush1.msra.mxu0 0.0
      %7492 = vmatprep.subr.mxu0 0.0
      %7493 = vmatpush1.msra.mxu0 0.0
      %7494 = vmatprep.subr.mxu0 0.0
      %7495 = vmatpush1.msra.mxu0 0.0
      %7496 = vmatprep.subr.mxu0 0.0
      %7497 = vmatpush1.msra.mxu0 0.0
      %7498 = vmatprep.subr.mxu0 0.0
      %7499 = vmatpush1.msra.mxu0 0.0
      %7500 = vmatprep.subr.mxu0 0.0
      %7501 = vmatpush1.msra.mxu0 0.0
      %7502 = vmatprep.subr.mxu0 0.0
      %7503 = vmatpush1.msra.mxu0 0.0
      %7504 = vmatprep.subr.mxu0 0.0
      %7505 = vmatpush1.msra.mxu0 0.0
      %7506 = vmatprep.subr.mxu0 0.0
      %7507 = vmatpush1.msra.mxu0 0.0
      %7508 = vmatprep.subr.mxu0 0.0
      %7509 = vmatpush1.msra.mxu0 0.0
      %7510 = vmatprep.subr.mxu0 0.0
      %7511 = vmatpush1.msra.mxu0 0.0
      %7512 = vmatprep.subr.mxu0 0.0
      %7513 = vmatpush1.msra.mxu0 0.0
      %7514 = vmatprep.subr.mxu0 0.0
      %7515 = vmatpush1.msra.mxu0 0.0
      %7516 = vmatprep.subr.mxu0 0.0
      %7517 = vmatpush1.msra.mxu0 0.0
      %7518 = vmatprep.subr.mxu0 0.0
      %7519 = vmatpush1.msra.mxu0 0.0
      %7520 = vmatprep.subr.mxu0 0.0
      %7521 = vmatpush1.msra.mxu0 0.0
      %7522 = vmatprep.subr.mxu0 0.0
      %7523 = vmatpush1.msra.mxu0 0.0
      %7524 = vmatprep.subr.mxu0 0.0
      %7525 = vmatpush1.msra.mxu0 0.0
      %7526 = vmatprep.subr.mxu0 0.0
      %7527 = vmatpush1.msra.mxu0 0.0
      %7528 = vmatprep.subr.mxu0 0.0
      %7529 = vmatpush1.msra.mxu0 0.0
      %7530 = vmatprep.subr.mxu0 0.0
      %7531 = vmatpush1.msra.mxu0 0.0
      %7532 = vmatprep.mubr.f32.mxu0 0.0
      %7533 = vmatmul.mubr.f32.gmra.mrb[0].mxu0 %v7311
      %v7534 = vpop.f32.mrb[0].mxu0
      %v7535 = vadd.f32 0.0, %v7534
      %v7536 = vpop.f32.mrb[0].mxu0
      %7537 = vmatprep.mubr.f32.mxu0 0.0
      %7538 = vmatmul.mubr.f32.gmra.mrb[0].mxu0 %v7314
      %v7539 = vpop.f32.mrb[0].mxu0
      %v7540 = vadd.f32 0.0, %v7539
      %v7541 = vpop.f32.mrb[0].mxu0
      %7542 = vmatprep.mubr.f32.mxu0 0.0
      %7543 = vmatmul.mubr.f32.gmra.mrb[0].mxu0 %v7317
      %v7544 = vpop.f32.mrb[0].mxu0
      %v7545 = vadd.f32 0.0, %v7544
      %v7546 = vpop.f32.mrb[0].mxu0
      %7547 = vmatprep.mubr.f32.mxu0 0.0
      %7548 = vmatmul.mubr.f32.gmra.mrb[0].mxu0 %v7320
      %v7549 = vpop.f32.mrb[0].mxu0
      %v7550 = vadd.f32 0.0, %v7549
      %v7551 = vpop.f32.mrb[0].mxu0
      %7552 = vmatprep.mubr.f32.mxu0 0.0
      %7553 = vmatmul.mubr.f32.gmra.mrb[0].mxu0 %v7323
      %v7554 = vpop.f32.mrb[0].mxu0
      %v7555 = vadd.f32 0.0, %v7554
      %v7556 = vpop.f32.mrb[0].mxu0
      %7557 = vmatprep.mubr.f32.mxu0 0.0
      %7558 = vmatmul.mubr.f32.gmra.mrb[0].mxu0 %v7326
      %v7559 = vpop.f32.mrb[0].mxu0
      %v7560 = vadd.f32 0.0, %v7559
      %v7561 = vpop.f32.mrb[0].mxu0
      %7562 = vmatprep.mubr.f32.mxu0 0.0
      %7563 = vmatmul.mubr.f32.gmra.mrb[0].mxu0 %v7329
      %v7564 = vpop.f32.mrb[0].mxu0
      %v7565 = vadd.f32 0.0, %v7564
      %v7566 = vpop.f32.mrb[0].mxu0
      %7567 = vdwg.mxu0
      %v7575 = vrot.slane %v7535, 2
      %v7576 = vrot.slane %v7540, 2
      %v7577 = vsel %vm2005, %v7575, %v7576
      %v7578 = vrot.slane %v7545, 2
      %v7579 = vsel %vm2005, %v7576, %v7578
      %v7580 = vrot.slane %v7550, 2
      %v7581 = vsel %vm2005, %v7578, %v7580
      %v7582 = vrot.slane %v7555, 2
      %v7583 = vsel %vm2005, %v7580, %v7582
      %v7584 = vrot.slane %v7560, 2
      %v7585 = vsel %vm2005, %v7582, %v7584
      %v7586 = vrot.slane %v7565, 2
      %v7587 = vsel %vm2005, %v7584, %v7586
      %v7596 = vsel %vm2005, %v7586, %v7575
      %7597 = vmatprep.subr.mxu0 0.0
      %7598 = vmatpush1.msra.mxu0 %v7295
      %7599 = vmatprep.subr.mxu0 0.0
      %7600 = vmatpush1.msra.mxu0 %v7296
      %7601 = vmatprep.subr.mxu0 0.0
      %7602 = vmatpush1.msra.mxu0 %v7297
      %7603 = vmatprep.subr.mxu0 0.0
      %7604 = vmatpush1.msra.mxu0 %v7298
      %7605 = vmatprep.subr.mxu0 0.0
      %7606 = vmatpush1.msra.mxu0 %v7299
      %7607 = vmatprep.subr.mxu0 0.0
      %7608 = vmatpush1.msra.mxu0 %v7300
      %7609 = vmatprep.subr.mxu0 0.0
      %7610 = vmatpush1.msra.mxu0 %v7301
      %7611 = vmatprep.subr.mxu0 0.0
      %7612 = vmatpush1.msra.mxu0 0.0
      %7613 = vmatprep.subr.mxu0 0.0
      %7614 = vmatpush1.msra.mxu0 0.0
      %7615 = vmatprep.subr.mxu0 0.0
      %7616 = vmatpush1.msra.mxu0 0.0
      %7617 = vmatprep.subr.mxu0 0.0
      %7618 = vmatpush1.msra.mxu0 0.0
      %7619 = vmatprep.subr.mxu0 0.0
      %7620 = vmatpush1.msra.mxu0 0.0
      %7621 = vmatprep.subr.mxu0 0.0
      %7622 = vmatpush1.msra.mxu0 0.0
      %7623 = vmatprep.subr.mxu0 0.0
      %7624 = vmatpush1.msra.mxu0 0.0
      %7625 = vmatprep.subr.mxu0 0.0
      %7626 = vmatpush1.msra.mxu0 0.0
      %7627 = vmatprep.subr.mxu0 0.0
      %7628 = vmatpush1.msra.mxu0 0.0
      %7629 = vmatprep.subr.mxu0 0.0
      %7630 = vmatpush1.msra.mxu0 0.0
      %7631 = vmatprep.subr.mxu0 0.0
      %7632 = vmatpush1.msra.mxu0 0.0
      %7633 = vmatprep.subr.mxu0 0.0
      %7634 = vmatpush1.msra.mxu0 0.0
      %7635 = vmatprep.subr.mxu0 0.0
      %7636 = vmatpush1.msra.mxu0 0.0
      %7637 = vmatprep.subr.mxu0 0.0
      %7638 = vmatpush1.msra.mxu0 0.0
      %7639 = vmatprep.subr.mxu0 0.0
      %7640 = vmatpush1.msra.mxu0 0.0
      %7641 = vmatprep.subr.mxu0 0.0
      %7642 = vmatpush1.msra.mxu0 0.0
      %7643 = vmatprep.subr.mxu0 0.0
      %7644 = vmatpush1.msra.mxu0 0.0
      %7645 = vmatprep.subr.mxu0 0.0
      %7646 = vmatpush1.msra.mxu0 0.0
      %7647 = vmatprep.subr.mxu0 0.0
      %7648 = vmatpush1.msra.mxu0 0.0
      %7649 = vmatprep.subr.mxu0 0.0
      %7650 = vmatpush1.msra.mxu0 0.0
      %7651 = vmatprep.subr.mxu0 0.0
      %7652 = vmatpush1.msra.mxu0 0.0
      %7653 = vmatprep.subr.mxu0 0.0
      %7654 = vmatpush1.msra.mxu0 0.0
      %7655 = vmatprep.subr.mxu0 0.0
      %7656 = vmatpush1.msra.mxu0 0.0
      %7657 = vmatprep.subr.mxu0 0.0
      %7658 = vmatpush1.msra.mxu0 0.0
      %7659 = vmatprep.subr.mxu0 0.0
      %7660 = vmatpush1.msra.mxu0 0.0
      %7661 = vmatprep.mubr.f32.mxu0 0.0
      %7662 = vmatmul.mubr.f32.gmra.mrb[0].mxu0 %v7311
      %v7663 = vpop.f32.mrb[0].mxu0
      %v7664 = vadd.f32 %v7440, %v7663
      %v7665 = vpop.f32.mrb[0].mxu0
      %7666 = vmatprep.mubr.f32.mxu0 0.0
      %7667 = vmatmul.mubr.f32.gmra.mrb[0].mxu0 %v7314
      %v7668 = vpop.f32.mrb[0].mxu0
      %v7669 = vadd.f32 %v7442, %v7668
      %v7670 = vpop.f32.mrb[0].mxu0
      %7671 = vmatprep.mubr.f32.mxu0 0.0
      %7672 = vmatmul.mubr.f32.gmra.mrb[0].mxu0 %v7317
      %v7673 = vpop.f32.mrb[0].mxu0
      %v7674 = vadd.f32 %v7444, %v7673
      %v7675 = vpop.f32.mrb[0].mxu0
      %7676 = vmatprep.mubr.f32.mxu0 0.0
      %7677 = vmatmul.mubr.f32.gmra.mrb[0].mxu0 %v7320
      %v7678 = vpop.f32.mrb[0].mxu0
      %v7679 = vadd.f32 %v7446, %v7678
      %v7680 = vpop.f32.mrb[0].mxu0
      %7681 = vmatprep.mubr.f32.mxu0 0.0
      %7682 = vmatmul.mubr.f32.gmra.mrb[0].mxu0 %v7323
      %v7683 = vpop.f32.mrb[0].mxu0
      %v7684 = vadd.f32 %v7448, %v7683
      %v7685 = vpop.f32.mrb[0].mxu0
      %7686 = vmatprep.mubr.f32.mxu0 0.0
      %7687 = vmatmul.mubr.f32.gmra.mrb[0].mxu0 %v7326
      %v7688 = vpop.f32.mrb[0].mxu0
      %v7689 = vadd.f32 %v7450, %v7688
      %v7690 = vpop.f32.mrb[0].mxu0
      %7691 = vmatprep.mubr.f32.mxu0 0.0
      %7692 = vmatmul.mubr.f32.gmra.mrb[0].mxu0 %v7329
      %v7693 = vpop.f32.mrb[0].mxu0
      %v7694 = vadd.f32 %v7459, %v7693
      %v7695 = vpop.f32.mrb[0].mxu0
      %7696 = vdwg.mxu0
      %v7697 = vadd.f32 %v7664, %v7577
      %v7698 = vadd.f32 %v7669, %v7579
      %v7699 = vadd.f32 %v7674, %v7581
      %v7700 = vadd.f32 %v7679, %v7583
      %v7701 = vadd.f32 %v7684, %v7585
      %v7702 = vadd.f32 %v7689, %v7587
      %v7703 = vadd.f32 %v7694, %v7596
      %v7704 = vld [vmem:[%s51] sm:$0x1]
      %v7706 = vlaneseq
      %v7707 = vshrl.u32 %v7706, 7
      %v7708 = vsub.s32 0, %v7707
      %v7709 = vrot.slane %v7704, %v7708
      %v7711 = vadd.f32 %v7697, %v7709
      %v7712 = vadd.f32 %v7698, %v7709
      %v7713 = vadd.f32 %v7699, %v7709
      %v7714 = vadd.f32 %v7700, %v7709
      %v7715 = vadd.f32 %v7701, %v7709
      %v7716 = vadd.f32 %v7702, %v7709
      %v7717 = vadd.f32 %v7703, %v7709
      %v7718 = vmax.f32 %v7711, 0.0
      %v7719 = vmax.f32 %v7712, 0.0
      %v7720 = vmax.f32 %v7713, 0.0
      %v7721 = vmax.f32 %v7714, 0.0
      %v7722 = vmax.f32 %v7715, 0.0
      %v7723 = vmax.f32 %v7716, 0.0
      %v7724 = vmax.f32 %v7717, 0.0
      %v7732 = vrot.slane %v7718, 1
      %v7733 = vrot.slane %v7719, 1
      %v7734 = vsel %vm1454, %v7732, %v7733
      %v7735 = vrot.slane %v7720, 1
      %v7736 = vsel %vm1454, %v7733, %v7735
      %v7737 = vrot.slane %v7721, 1
      %v7738 = vsel %vm1454, %v7735, %v7737
      %v7739 = vrot.slane %v7722, 1
      %v7740 = vsel %vm1454, %v7737, %v7739
      %v7741 = vrot.slane %v7723, 1
      %v7742 = vsel %vm1454, %v7739, %v7741
      %v7743 = vrot.slane %v7724, 1
      %v7744 = vsel %vm1454, %v7741, %v7743
      %v7753 = vsel %vm1454, %v7743, %v7732
      %v7754 = vmax.f32 %v7718, %v7734
      %v7755 = vmax.f32 %v7719, %v7736
      %v7756 = vmax.f32 %v7720, %v7738
      %v7757 = vmax.f32 %v7721, %v7740
      %v7758 = vmax.f32 %v7722, %v7742
      %v7759 = vmax.f32 %v7723, %v7744
      %v7760 = vmax.f32 %v7724, %v7753
      %v7761 = vld [vmem:[%s53] sm:$0xff]
      %v7762 = vld [vmem:[%s53 + $0x8] sm:$0xff]
      %v7764 = vsel %vm3991, %v7761, 0
      %v7767 = vsel %vm3991, %v7762, 0
      %7769 = vmatprep.subr.mxu0 0.0
      %7770 = vmatpush1.msra.mxu0 %v7754
      %7771 = vmatprep.subr.mxu0 0.0
      %7772 = vmatpush1.msra.mxu0 %v7755
      %7773 = vmatprep.subr.mxu0 0.0
      %7774 = vmatpush1.msra.mxu0 %v7756
      %7775 = vmatprep.subr.mxu0 0.0
      %7776 = vmatpush1.msra.mxu0 %v7757
      %7777 = vmatprep.subr.mxu0 0.0
      %7778 = vmatpush1.msra.mxu0 %v7758
      %7779 = vmatprep.subr.mxu0 0.0
      %7780 = vmatpush1.msra.mxu0 %v7759
      %7781 = vmatprep.subr.mxu0 0.0
      %7782 = vmatpush1.msra.mxu0 %v7760
      %7783 = vmatprep.subr.mxu0 0.0
      %7784 = vmatpush1.msra.mxu0 0.0
      %7785 = vmatprep.subr.mxu0 0.0
      %7786 = vmatpush1.msra.mxu0 0.0
      %7787 = vmatprep.subr.mxu0 0.0
      %7788 = vmatpush1.msra.mxu0 0.0
      %7789 = vmatprep.subr.mxu0 0.0
      %7790 = vmatpush1.msra.mxu0 0.0
      %7791 = vmatprep.subr.mxu0 0.0
      %7792 = vmatpush1.msra.mxu0 0.0
      %7793 = vmatprep.subr.mxu0 0.0
      %7794 = vmatpush1.msra.mxu0 0.0
      %7795 = vmatprep.subr.mxu0 0.0
      %7796 = vmatpush1.msra.mxu0 0.0
      %7797 = vmatprep.subr.mxu0 0.0
      %7798 = vmatpush1.msra.mxu0 0.0
      %7799 = vmatprep.subr.mxu0 0.0
      %7800 = vmatpush1.msra.mxu0 0.0
      %7801 = vmatprep.subr.mxu0 0.0
      %7802 = vmatpush1.msra.mxu0 0.0
      %7803 = vmatprep.subr.mxu0 0.0
      %7804 = vmatpush1.msra.mxu0 0.0
      %7805 = vmatprep.subr.mxu0 0.0
      %7806 = vmatpush1.msra.mxu0 0.0
      %7807 = vmatprep.subr.mxu0 0.0
      %7808 = vmatpush1.msra.mxu0 0.0
      %7809 = vmatprep.subr.mxu0 0.0
      %7810 = vmatpush1.msra.mxu0 0.0
      %7811 = vmatprep.subr.mxu0 0.0
      %7812 = vmatpush1.msra.mxu0 0.0
      %7813 = vmatprep.subr.mxu0 0.0
      %7814 = vmatpush1.msra.mxu0 0.0
      %7815 = vmatprep.subr.mxu0 0.0
      %7816 = vmatpush1.msra.mxu0 0.0
      %7817 = vmatprep.subr.mxu0 0.0
      %7818 = vmatpush1.msra.mxu0 0.0
      %7819 = vmatprep.subr.mxu0 0.0
      %7820 = vmatpush1.msra.mxu0 0.0
      %7821 = vmatprep.subr.mxu0 0.0
      %7822 = vmatpush1.msra.mxu0 0.0
      %7823 = vmatprep.subr.mxu0 0.0
      %7824 = vmatpush1.msra.mxu0 0.0
      %7825 = vmatprep.subr.mxu0 0.0
      %7826 = vmatpush1.msra.mxu0 0.0
      %7827 = vmatprep.subr.mxu0 0.0
      %7828 = vmatpush1.msra.mxu0 0.0
      %7829 = vmatprep.subr.mxu0 0.0
      %7830 = vmatpush1.msra.mxu0 0.0
      %7831 = vmatprep.subr.mxu0 0.0
      %7832 = vmatpush1.msra.mxu0 0.0
      %7833 = vmatprep.mubr.f32.mxu0 0.0
      %7834 = vmatmul.mubr.f32.gmra.mrb[0].mxu0 %v7764
      %v7835 = vpop.f32.mrb[0].mxu0
      %v7836 = vadd.f32 0.0, %v7835
      %v7837 = vpop.f32.mrb[0].mxu0
      %7838 = vmatprep.mubr.f32.mxu0 0.0
      %7839 = vmatmul.mubr.f32.gmra.mrb[0].mxu0 %v7767
      %v7840 = vpop.f32.mrb[0].mxu0
      %v7841 = vadd.f32 0.0, %v7840
      %v7842 = vpop.f32.mrb[0].mxu0
      %7843 = vdwg.mxu0
      %7846 = vrot.lane.b32.xlu0 %v7836, 120
      %v7847 = vpop.permute.xlu0 %7846
      %7848 = vrot.lane.b32.xlu0 %v7841, 120
      %v7849 = vpop.permute.xlu0 %7848
      %7852 = vrot.lane.b32.xlu0 %v7836, 32
      %v7853 = vpop.permute.xlu0 %7852
      %7854 = vrot.lane.b32.xlu0 %v7841, 32
      %v7855 = vpop.permute.xlu0 %7854
      %v7858 = vsel %vm4540, %v7847, %v7853
      %v7859 = vsel %vm4540, %v7849, %v7855
      %v7860 = vmax.f32 %v7836, %v7858
      %v7861 = vmax.f32 %v7841, %v7859
      %v7862 = vld [vmem:[%s55] sm:$0xff]
      %v7863 = vld [vmem:[%s55 + $0x8] sm:$0xff]
      %v7864 = vld [vmem:[%s55 + $0x10] sm:$0xff]
      %v7865 = vld [vmem:[%s55 + $0x18] sm:$0xff]
      %v7866 = vld [vmem:[%s55 + $0x20] sm:$0xff]
      %v7868 = vsel %vm4550, %v7860, 0
      %v7871 = vsel %vm4550, %v7861, 0
      %7873 = vmatprep.subr.mxu0 0.0
      %7874 = vmatpush1.msra.mxu0 %v7862
      %7875 = vmatprep.subr.mxu0 0.0
      %7876 = vmatpush1.msra.mxu0 %v7863
      %7877 = vmatprep.subr.mxu0 0.0
      %7878 = vmatpush1.msra.mxu0 %v7864
      %7879 = vmatprep.subr.mxu0 0.0
      %7880 = vmatpush1.msra.mxu0 %v7865
      %7881 = vmatprep.subr.mxu0 0.0
      %7882 = vmatpush1.msra.mxu0 %v7866
      %7883 = vmatprep.subr.mxu0 0.0
      %7884 = vmatpush1.msra.mxu0 0.0
      %7885 = vmatprep.subr.mxu0 0.0
      %7886 = vmatpush1.msra.mxu0 0.0
      %7887 = vmatprep.subr.mxu0 0.0
      %7888 = vmatpush1.msra.mxu0 0.0
      %7889 = vmatprep.subr.mxu0 0.0
      %7890 = vmatpush1.msra.mxu0 0.0
      %7891 = vmatprep.subr.mxu0 0.0
      %7892 = vmatpush1.msra.mxu0 0.0
      %7893 = vmatprep.subr.mxu0 0.0
      %7894 = vmatpush1.msra.mxu0 0.0
      %7895 = vmatprep.subr.mxu0 0.0
      %7896 = vmatpush1.msra.mxu0 0.0
      %7897 = vmatprep.subr.mxu0 0.0
      %7898 = vmatpush1.msra.mxu0 0.0
      %7899 = vmatprep.subr.mxu0 0.0
      %7900 = vmatpush1.msra.mxu0 0.0
      %7901 = vmatprep.subr.mxu0 0.0
      %7902 = vmatpush1.msra.mxu0 0.0
      %7903 = vmatprep.subr.mxu0 0.0
      %7904 = vmatpush1.msra.mxu0 0.0
      %7905 = vmatprep.subr.mxu0 0.0
      %7906 = vmatpush1.msra.mxu0 0.0
      %7907 = vmatprep.subr.mxu0 0.0
      %7908 = vmatpush1.msra.mxu0 0.0
      %7909 = vmatprep.subr.mxu0 0.0
      %7910 = vmatpush1.msra.mxu0 0.0
      %7911 = vmatprep.subr.mxu0 0.0
      %7912 = vmatpush1.msra.mxu0 0.0
      %7913 = vmatprep.subr.mxu0 0.0
      %7914 = vmatpush1.msra.mxu0 0.0
      %7915 = vmatprep.subr.mxu0 0.0
      %7916 = vmatpush1.msra.mxu0 0.0
      %7917 = vmatprep.subr.mxu0 0.0
      %7918 = vmatpush1.msra.mxu0 0.0
      %7919 = vmatprep.subr.mxu0 0.0
      %7920 = vmatpush1.msra.mxu0 0.0
      %7921 = vmatprep.subr.mxu0 0.0
      %7922 = vmatpush1.msra.mxu0 0.0
      %7923 = vmatprep.subr.mxu0 0.0
      %7924 = vmatpush1.msra.mxu0 0.0
      %7925 = vmatprep.subr.mxu0 0.0
      %7926 = vmatpush1.msra.mxu0 0.0
      %7927 = vmatprep.subr.mxu0 0.0
      %7928 = vmatpush1.msra.mxu0 0.0
      %7929 = vmatprep.subr.mxu0 0.0
      %7930 = vmatpush1.msra.mxu0 0.0
      %7931 = vmatprep.subr.mxu0 0.0
      %7932 = vmatpush1.msra.mxu0 0.0
      %7933 = vmatprep.subr.mxu0 0.0
      %7934 = vmatpush1.msra.mxu0 0.0
      %7935 = vmatprep.subr.mxu0 0.0
      %7936 = vmatpush1.msra.mxu0 0.0
      %7937 = vmatprep.mubr.f32.mxu0 0.0
      %7938 = vmatmul.mubr.f32.gmra.mrb[0].mxu0 %v7868
      %v7939 = vpop.f32.mrb[0].mxu0
      %v7940 = vadd.f32 0.0, %v7939
      %v7941 = vpop.f32.mrb[0].mxu0
      %7942 = vmatprep.mubr.f32.mxu0 0.0
      %7943 = vmatmul.mubr.f32.gmra.mrb[0].mxu0 %v7871
      %v7944 = vpop.f32.mrb[0].mxu0
      %v7945 = vadd.f32 0.0, %v7944
      %v7946 = vpop.f32.mrb[0].mxu0
      %7947 = vdwg.mxu0
      %v7948 = vld [vmem:[%s57] sm:$0xff]
      %v7949 = vld [vmem:[%s57 + $0x8] sm:$0xff]
      %s7950 = scalar_lea.vmem %s57, 16
      %v7951 = vld [vmem:[%s7950] sm:$0xff]
      %v7952 = vld [vmem:[%s7950 + $0x8] sm:$0xff]
      %v7954 = vsel %vm4637, %v7940, 0
      %v7957 = vsel %vm4637, %v7945, 0
      %7959 = vmatprep.subr.mxu0 0.0
      %7960 = vmatpush1.msra.mxu0 %v7951
      %7961 = vmatprep.subr.mxu0 0.0
      %7962 = vmatpush1.msra.mxu0 %v7952
      %7963 = vmatprep.subr.mxu0 0.0
      %7964 = vmatpush1.msra.mxu0 0.0
      %7965 = vmatprep.subr.mxu0 0.0
      %7966 = vmatpush1.msra.mxu0 0.0
      %7967 = vmatprep.subr.mxu0 0.0
      %7968 = vmatpush1.msra.mxu0 0.0
      %7969 = vmatprep.subr.mxu0 0.0
      %7970 = vmatpush1.msra.mxu0 0.0
      %7971 = vmatprep.subr.mxu0 0.0
      %7972 = vmatpush1.msra.mxu0 0.0
      %7973 = vmatprep.subr.mxu0 0.0
      %7974 = vmatpush1.msra.mxu0 0.0
      %7975 = vmatprep.subr.mxu0 0.0
      %7976 = vmatpush1.msra.mxu0 0.0
      %7977 = vmatprep.subr.mxu0 0.0
      %7978 = vmatpush1.msra.mxu0 0.0
      %7979 = vmatprep.subr.mxu0 0.0
      %7980 = vmatpush1.msra.mxu0 0.0
      %7981 = vmatprep.subr.mxu0 0.0
      %7982 = vmatpush1.msra.mxu0 0.0
      %7983 = vmatprep.subr.mxu0 0.0
      %7984 = vmatpush1.msra.mxu0 0.0
      %7985 = vmatprep.subr.mxu0 0.0
      %7986 = vmatpush1.msra.mxu0 0.0
      %7987 = vmatprep.subr.mxu0 0.0
      %7988 = vmatpush1.msra.mxu0 0.0
      %7989 = vmatprep.subr.mxu0 0.0
      %7990 = vmatpush1.msra.mxu0 0.0
      %7991 = vmatprep.subr.mxu0 0.0
      %7992 = vmatpush1.msra.mxu0 0.0
      %7993 = vmatprep.subr.mxu0 0.0
      %7994 = vmatpush1.msra.mxu0 0.0
      %7995 = vmatprep.subr.mxu0 0.0
      %7996 = vmatpush1.msra.mxu0 0.0
      %7997 = vmatprep.subr.mxu0 0.0
      %7998 = vmatpush1.msra.mxu0 0.0
      %7999 = vmatprep.subr.mxu0 0.0
      %8000 = vmatpush1.msra.mxu0 0.0
      %8001 = vmatprep.subr.mxu0 0.0
      %8002 = vmatpush1.msra.mxu0 0.0
      %8003 = vmatprep.subr.mxu0 0.0
      %8004 = vmatpush1.msra.mxu0 0.0
      %8005 = vmatprep.subr.mxu0 0.0
      %8006 = vmatpush1.msra.mxu0 0.0
      %8007 = vmatprep.subr.mxu0 0.0
      %8008 = vmatpush1.msra.mxu0 0.0
      %8009 = vmatprep.subr.mxu0 0.0
      %8010 = vmatpush1.msra.mxu0 0.0
      %8011 = vmatprep.subr.mxu0 0.0
      %8012 = vmatpush1.msra.mxu0 0.0
      %8013 = vmatprep.subr.mxu0 0.0
      %8014 = vmatpush1.msra.mxu0 0.0
      %8015 = vmatprep.subr.mxu0 0.0
      %8016 = vmatpush1.msra.mxu0 0.0
      %8017 = vmatprep.subr.mxu0 0.0
      %8018 = vmatpush1.msra.mxu0 0.0
      %8019 = vmatprep.subr.mxu0 0.0
      %8020 = vmatpush1.msra.mxu0 0.0
      %8021 = vmatprep.subr.mxu0 0.0
      %8022 = vmatpush1.msra.mxu0 0.0
      %8023 = vmatprep.mubr.f32.mxu0 0.0
      %8024 = vmatmul.mubr.f32.gmra.mrb[0].mxu0 %v7954
      %v8025 = vpop.f32.mrb[0].mxu0
      %v8026 = vadd.f32 0.0, %v8025
      %v8027 = vpop.f32.mrb[0].mxu0
      %8028 = vmatprep.mubr.f32.mxu0 0.0
      %8029 = vmatmul.mubr.f32.gmra.mrb[0].mxu0 %v7957
      %v8030 = vpop.f32.mrb[0].mxu0
      %v8031 = vadd.f32 0.0, %v8030
      %v8032 = vpop.f32.mrb[0].mxu0
      %8033 = vdwg.mxu0
      %v8036 = vrot.slane %v8026, 1
      %v8037 = vrot.slane %v8031, 1
      %v8038 = vsel %vm1454, %v8036, %v8037
      %v8042 = vsel %vm1454, %v8037, %v8036
      %8043 = vmatprep.subr.mxu0 0.0
      %8044 = vmatpush1.msra.mxu0 %v7948
      %8045 = vmatprep.subr.mxu0 0.0
      %8046 = vmatpush1.msra.mxu0 %v7949
      %8047 = vmatprep.subr.mxu0 0.0
      %8048 = vmatpush1.msra.mxu0 0.0
      %8049 = vmatprep.subr.mxu0 0.0
      %8050 = vmatpush1.msra.mxu0 0.0
      %8051 = vmatprep.subr.mxu0 0.0
      %8052 = vmatpush1.msra.mxu0 0.0
      %8053 = vmatprep.subr.mxu0 0.0
      %8054 = vmatpush1.msra.mxu0 0.0
      %8055 = vmatprep.subr.mxu0 0.0
      %8056 = vmatpush1.msra.mxu0 0.0
      %8057 = vmatprep.subr.mxu0 0.0
      %8058 = vmatpush1.msra.mxu0 0.0
      %8059 = vmatprep.subr.mxu0 0.0
      %8060 = vmatpush1.msra.mxu0 0.0
      %8061 = vmatprep.subr.mxu0 0.0
      %8062 = vmatpush1.msra.mxu0 0.0
      %8063 = vmatprep.subr.mxu0 0.0
      %8064 = vmatpush1.msra.mxu0 0.0
      %8065 = vmatprep.subr.mxu0 0.0
      %8066 = vmatpush1.msra.mxu0 0.0
      %8067 = vmatprep.subr.mxu0 0.0
      %8068 = vmatpush1.msra.mxu0 0.0
      %8069 = vmatprep.subr.mxu0 0.0
      %8070 = vmatpush1.msra.mxu0 0.0
      %8071 = vmatprep.subr.mxu0 0.0
      %8072 = vmatpush1.msra.mxu0 0.0
      %8073 = vmatprep.subr.mxu0 0.0
      %8074 = vmatpush1.msra.mxu0 0.0
      %8075 = vmatprep.subr.mxu0 0.0
      %8076 = vmatpush1.msra.mxu0 0.0
      %8077 = vmatprep.subr.mxu0 0.0
      %8078 = vmatpush1.msra.mxu0 0.0
      %8079 = vmatprep.subr.mxu0 0.0
      %8080 = vmatpush1.msra.mxu0 0.0
      %8081 = vmatprep.subr.mxu0 0.0
      %8082 = vmatpush1.msra.mxu0 0.0
      %8083 = vmatprep.subr.mxu0 0.0
      %8084 = vmatpush1.msra.mxu0 0.0
      %8085 = vmatprep.subr.mxu0 0.0
      %8086 = vmatpush1.msra.mxu0 0.0
      %8087 = vmatprep.subr.mxu0 0.0
      %8088 = vmatpush1.msra.mxu0 0.0
      %8089 = vmatprep.subr.mxu0 0.0
      %8090 = vmatpush1.msra.mxu0 0.0
      %8091 = vmatprep.subr.mxu0 0.0
      %8092 = vmatpush1.msra.mxu0 0.0
      %8093 = vmatprep.subr.mxu0 0.0
      %8094 = vmatpush1.msra.mxu0 0.0
      %8095 = vmatprep.subr.mxu0 0.0
      %8096 = vmatpush1.msra.mxu0 0.0
      %8097 = vmatprep.subr.mxu0 0.0
      %8098 = vmatpush1.msra.mxu0 0.0
      %8099 = vmatprep.subr.mxu0 0.0
      %8100 = vmatpush1.msra.mxu0 0.0
      %8101 = vmatprep.subr.mxu0 0.0
      %8102 = vmatpush1.msra.mxu0 0.0
      %8103 = vmatprep.subr.mxu0 0.0
      %8104 = vmatpush1.msra.mxu0 0.0
      %8105 = vmatprep.subr.mxu0 0.0
      %8106 = vmatpush1.msra.mxu0 0.0
      %8107 = vmatprep.mubr.f32.mxu0 0.0
      %8108 = vmatmul.mubr.f32.gmra.mrb[0].mxu0 %v7954
      %v8109 = vpop.f32.mrb[0].mxu0
      %v8110 = vadd.f32 %v8038, %v8109
      %v8111 = vpop.f32.mrb[0].mxu0
      %8112 = vmatprep.mubr.f32.mxu0 0.0
      %8113 = vmatmul.mubr.f32.gmra.mrb[0].mxu0 %v7957
      %v8114 = vpop.f32.mrb[0].mxu0
      %v8115 = vadd.f32 %v8042, %v8114
      %v8116 = vpop.f32.mrb[0].mxu0
      %8117 = vdwg.mxu0
      %v8118 = vld [vmem:[%s59] sm:$0x1]
      %v8120 = vlaneseq
      %v8121 = vshrl.u32 %v8120, 7
      %v8122 = vsub.s32 0, %v8121
      %v8123 = vrot.slane %v8118, %v8122
      %8125 = vmatprep.subr.mxu0 0.0
      %8126 = vmatpush1.msra.mxu0 %v8110
      %8127 = vmatprep.subr.mxu0 0.0
      %8128 = vmatpush1.msra.mxu0 %v8115
      %8129 = vmatprep.subr.mxu0 0.0
      %8130 = vmatpush1.msra.mxu0 0.0
      %8131 = vmatprep.subr.mxu0 0.0
      %8132 = vmatpush1.msra.mxu0 0.0
      %8133 = vmatprep.subr.mxu0 0.0
      %8134 = vmatpush1.msra.mxu0 0.0
      %8135 = vmatprep.subr.mxu0 0.0
      %8136 = vmatpush1.msra.mxu0 0.0
      %8137 = vmatprep.subr.mxu0 0.0
      %8138 = vmatpush1.msra.mxu0 0.0
      %8139 = vmatprep.subr.mxu0 0.0
      %8140 = vmatpush1.msra.mxu0 0.0
      %8141 = vmatprep.subr.mxu0 0.0
      %8142 = vmatpush1.msra.mxu0 0.0
      %8143 = vmatprep.subr.mxu0 0.0
      %8144 = vmatpush1.msra.mxu0 0.0
      %8145 = vmatprep.subr.mxu0 0.0
      %8146 = vmatpush1.msra.mxu0 0.0
      %8147 = vmatprep.subr.mxu0 0.0
      %8148 = vmatpush1.msra.mxu0 0.0
      %8149 = vmatprep.subr.mxu0 0.0
      %8150 = vmatpush1.msra.mxu0 0.0
      %8151 = vmatprep.subr.mxu0 0.0
      %8152 = vmatpush1.msra.mxu0 0.0
      %8153 = vmatprep.subr.mxu0 0.0
      %8154 = vmatpush1.msra.mxu0 0.0
      %8155 = vmatprep.subr.mxu0 0.0
      %8156 = vmatpush1.msra.mxu0 0.0
      %8157 = vmatprep.subr.mxu0 0.0
      %8158 = vmatpush1.msra.mxu0 0.0
      %8159 = vmatprep.subr.mxu0 0.0
      %8160 = vmatpush1.msra.mxu0 0.0
      %8161 = vmatprep.subr.mxu0 0.0
      %8162 = vmatpush1.msra.mxu0 0.0
      %8163 = vmatprep.subr.mxu0 0.0
      %8164 = vmatpush1.msra.mxu0 0.0
      %8165 = vmatprep.subr.mxu0 0.0
      %8166 = vmatpush1.msra.mxu0 0.0
      %8167 = vmatprep.subr.mxu0 0.0
      %8168 = vmatpush1.msra.mxu0 0.0
      %8169 = vmatprep.subr.mxu0 0.0
      %8170 = vmatpush1.msra.mxu0 0.0
      %8171 = vmatprep.subr.mxu0 0.0
      %8172 = vmatpush1.msra.mxu0 0.0
      %8173 = vmatprep.subr.mxu0 0.0
      %8174 = vmatpush1.msra.mxu0 0.0
      %8175 = vmatprep.subr.mxu0 0.0
      %8176 = vmatpush1.msra.mxu0 0.0
      %8177 = vmatprep.subr.mxu0 0.0
      %8178 = vmatpush1.msra.mxu0 0.0
      %8179 = vmatprep.subr.mxu0 0.0
      %8180 = vmatpush1.msra.mxu0 0.0
      %8181 = vmatprep.subr.mxu0 0.0
      %8182 = vmatpush1.msra.mxu0 0.0
      %8183 = vmatprep.subr.mxu0 0.0
      %8184 = vmatpush1.msra.mxu0 0.0
      %8185 = vmatprep.subr.mxu0 0.0
      %8186 = vmatpush1.msra.mxu0 0.0
      %8187 = vmatprep.subr.mxu0 0.0
      %8188 = vmatpush1.msra.mxu0 0.0
      %8189 = vmatprep.mubr.f32.mxu0 0.0
      %8190 = vmatmul.mubr.f32.gmra.mrb[0].mxu0 %v4812
      %v8191 = vpop.f32.mrb[0].mxu0
      %v8192 = vadd.f32 %v8123, %v8191
      %v8193 = vpop.f32.mrb[0].mxu0
      %8194 = vdwg.mxu0
      %v8195 = vmax.f32 %v8192, 0.0
      %v8196 = vld [vmem:[#allocation2] sm:$0x1]
      %v8197 = vld [vmem:[%s61] sm:$0x1]
      %v8199 = vlaneseq
      %v8200 = vshrl.u32 %v8199, 7
      %v8201 = vsub.s32 0, %v8200
      %v8202 = vrot.slane %v8197, %v8201
      %v8204 = vmul.f32 %v4884, %v8202
      %vm8205 = vcmask 64512
      %v8206 = vsel %vm8205, %v8204, 0.0
      %8207 = vadd.xlane.f32.xlu0 %v8206
      %v8208 = vpop.xlane.xlu0 %8207
      %v8210 = vlaneseq
      %v8211 = vshrl.u32 %v8210, 7
      %v8212 = vsub.s32 0, %v8211
      %v8213 = vrot.slane %v8196, %v8212
      %v8215 = vadd.f32 %v8213, %v8208
      %s8216 = scalar_lea.vmem %s61, 1
      %v8217 = vld [vmem:[%s8216] sm:$0x1]
      %v8219 = vlaneseq
      %v8220 = vshrl.u32 %v8219, 7
      %v8221 = vsub.s32 0, %v8220
      %v8222 = vrot.slane %v8217, %v8221
      %v8224 = vmul.f32 %v6392, %v8222
      %v8225 = vsel %vm8205, %v8224, 0.0
      %8226 = vadd.xlane.f32.xlu0 %v8225
      %v8227 = vpop.xlane.xlu0 %8226
      %v8228 = vadd.f32 %v8215, %v8227
      %s8229 = scalar_lea.vmem %s61, 2
      %v8230 = vld [vmem:[%s8229] sm:$0x1]
      %v8232 = vlaneseq
      %v8233 = vshrl.u32 %v8232, 7
      %v8234 = vsub.s32 0, %v8233
      %v8235 = vrot.slane %v8230, %v8234
      %v8237 = vmul.f32 %v8195, %v8235
      %v8238 = vsel %vm8205, %v8237, 0.0
      %8239 = vadd.xlane.f32.xlu0 %v8238
      %v8240 = vpop.xlane.xlu0 %8239
      %v8241 = vadd.f32 %v8228, %v8240
      %vm8242 = vcmask 7168
      %8243 = vst.msk [vmem:[%s986] sm:$0xff] %vm8242, %v8241
      %p8244 = scmp.lt.s32.totalorder %s78, 1
      %s8245 = scalar_select %p8244, %s78, 1
      %s8246 = smul.addr %s8245, 8
      %s8247 = scalar_lea.vmem %s65, %s8246
      // Predicated region
      $region149: #{_lambda_.1} parent=147 // pred_check
        %p8248 = pneg %p773
      $region150: #{_lambda_.1} parent=147 // pred_check_branch
        %8250 = sbr.rel (%p8248) target = $region152
      $region151: #{_lambda_.1} parent=147 // pred_region
        _
      $region152: #{_lambda_.1} parent=147 // pred_fallthru
        _
    $region148: #{_lambda_.1} parent=5 // pred_fallthru
      _
    %p8251 = scmp.le.s32.totalorder 2, %s73
    // Predicated region
    $region153: #{_lambda_.1} parent=5 // pred_check
      %p8252 = pneg %p8251
    $region154: #{_lambda_.1} parent=5 // pred_check_branch
      %8254 = sbr.rel (%p8252) target = $region156
    $region155: #{_lambda_.1} parent=5 // pred_region
      %s8255 = ssub.s32 %s73, 2
      // Predicated region
      $region157: #{_lambda_.1} parent=155 // pred_check
        %p8256 = pneg %p779
      $region158: #{_lambda_.1} parent=155 // pred_check_branch
        %8258 = sbr.rel (%p8256) target = $region160
      $region159: #{_lambda_.1} parent=155 // pred_region
        %p8259 = scmp.lt.s32.totalorder %s79, 1
        %s8260 = scalar_select %p8259, %s79, 1
        %s8261 = smul.addr %s8260, 8
        %s8262 = scalar_lea.vmem %s65, %s8261
      $region160: #{_lambda_.1} parent=155 // pred_fallthru
        _
    $region156: #{_lambda_.1} parent=5 // pred_fallthru
      _
  $region6: #{_lambda_.1} parent=0 // loop_footer
    %s77 = sadd.s32 1, %s73
  $region7: #{_lambda_.1} parent=0 // loop_footer_branch
    %72 = sbr.rel target = $region3
  $region8: #{_lambda_.1} parent=0 // loop_exit
    _

</llo_original>
